<compile_context>
chip_gen: v6e
topology: v6e:2x2x1
jax: 0.10.0
libtpu: 0.0.40
codegen_flags: <defaults>
</compile_context>

<pallas_src>
import numpy as np
import jax
import jax.numpy as jnp
from jax.experimental import pallas as pl
from jax.experimental.pallas import tpu as pltpu

# ----------------------- small deterministic config -----------------------
D_MODEL = 32          # encoder hidden size
NUM_HEADS = 4
D_KV = 8              # per-head dim (NUM_HEADS * D_KV == D_MODEL)
D_FF = 64
NUM_LAYERS = 2
VOCAB = 100
NUM_BUCKETS = 8       # relative attention buckets
MAX_DISTANCE = 20
PREFIX_LEN = 4
SMALL_DIM = 16
NUM_LABELS = 2
LN_EPS = 1e-6


def _rmsnorm(x, w):
    # T5 LayerNorm: no mean subtraction, no bias.
    var = jnp.mean(x * x, axis=-1, keepdims=True)
    return x * jax.lax.rsqrt(var + LN_EPS) * w


# --------------------------- fused Pallas kernel ----------------------------
def _fused_forward_kernel(
    pp_ref, pw_ref, pb_ref, pmask_ref,       # prefix params (seq-padded) + Linear + row mask
    tok_ref, pos_bias_ref, mask_ref, pool_ref,  # (B,S,D), (H,S,S), (B,S), (S,1)
    ln1_ref, wq_ref, wk_ref, wv_ref, wo_ref,  # (NL,1,D), 3x(NL,H,D,E), (NL,H,E,D)
    ln2_ref, wi_ref, wof_ref,                 # (NL,1,D), (NL,D,F), (NL,F,D)
    lnf_ref, cw_ref, cb_ref,                  # (1,D), (D,L), (1,L)
    logits_ref, pooled_ref,                   # outputs: (B,L), (B,D)
):
    B, S, D = tok_ref.shape
    NL, H, _, E = wq_ref.shape
    BS = B * S
    HB = H * B

    # prefix = Tanh(Linear(prefix_params)); padded rows (>= PREFIX_LEN) are
    # masked to zero, so merging with the zero-padded token embeddings is a
    # single broadcast add (no in-kernel concatenation needed).
    prefix = jnp.tanh(
        jnp.dot(pp_ref[...], pw_ref[...], preferred_element_type=jnp.float32)
        + pb_ref[...]) * pmask_ref[...]                               # (S, D)
    h = tok_ref[...] + prefix[None, :, :]                             # (B, S, D)

    # Additive attention bias (position bias + key mask), built once and
    # shared by all layers (HF T5 shares the layer-0 relative bias).
    neg = (1.0 - mask_ref[...]) * (-1e9)                              # (B, S)
    bias = (pos_bias_ref[...][:, None, :, :]
            + neg[None, :, None, :]).reshape(HB, S, S)                # (H*B,S,S)

    for l in range(NL):                            # static unroll over layers
        # --------------------- self-attention block ---------------------
        x2 = _rmsnorm(h, ln1_ref[l]).reshape(BS, D)                   # (B*S, D)

        scores, values = [], []
        for hh in range(H):                        # head-major weights: leading-dim index
            q = jnp.dot(x2, wq_ref[l, hh],
                        preferred_element_type=jnp.float32).reshape(B, S, E)
            k = jnp.dot(x2, wk_ref[l, hh],
                        preferred_element_type=jnp.float32).reshape(B, S, E)
            v = jnp.dot(x2, wv_ref[l, hh],
                        preferred_element_type=jnp.float32).reshape(B, S, E)
            # T5: no 1/sqrt(d_k) scaling; bias is added after stacking.
            scores.append(jnp.einsum('bqe,bke->bqk', q, k,
                                     preferred_element_type=jnp.float32))
            values.append(v)

        s = jnp.concatenate(scores, axis=0) + bias                    # (H*B,S,S)
        v = jnp.concatenate(values, axis=0)                           # (H*B,S,E)

        # One fused softmax over all heads/batches (exact divide for parity).
        m = jnp.max(s, axis=-1, keepdims=True)
        e = jnp.exp(s - m)
        p = e / jnp.sum(e, axis=-1, keepdims=True)
        ctx = jnp.einsum('nqk,nke->nqe', p, v,
                         preferred_element_type=jnp.float32)          # (H*B,S,E)

        # Accumulate the per-head output projection (no lane-axis concat).
        attn = jnp.dot(ctx[0:B].reshape(BS, E), wo_ref[l, 0],
                       preferred_element_type=jnp.float32)
        for hh in range(1, H):
            attn = attn + jnp.dot(ctx[hh * B:(hh + 1) * B].reshape(BS, E),
                                  wo_ref[l, hh],
                                  preferred_element_type=jnp.float32)
        h = h + attn.reshape(B, S, D)                                 # residual

        # --------------------------- FFN block ---------------------------
        x2 = _rmsnorm(h, ln2_ref[l]).reshape(BS, D)
        y = jnp.maximum(jnp.dot(x2, wi_ref[l],
                                preferred_element_type=jnp.float32), 0.0)
        h = h + jnp.dot(y, wof_ref[l],
                        preferred_element_type=jnp.float32).reshape(B, S, D)

    # ---- final RMSNorm -> mean pool -> clamp -> classifier ----
    # pool_ref holds 1/S_real on real rows and 0 on the alignment-padding
    # rows, so this equals the reference's last_hidden_state.mean(dim=1)
    # (which averages over prefix + ALL token positions, padded or not).
    xn = _rmsnorm(h, lnf_ref[...])                                    # (B,S,D)
    pooled = jnp.sum(xn * pool_ref[...][None, :, :], axis=1)          # (B, D)
    pooled = jnp.clip(pooled, -10000.0, 10000.0)
    pooled_ref[...] = pooled
    logits_ref[...] = (jnp.dot(pooled, cw_ref[...],
                               preferred_element_type=jnp.float32)
                       + cb_ref[...])


# -------------------- glue: position bias (integer math) --------------------
def compute_position_bias(rel_bias, seq_len):
    # HF T5 bidirectional relative position buckets (JAX-side glue).
    ctx = jnp.arange(seq_len)[:, None]
    mem = jnp.arange(seq_len)[None, :]
    rel = mem - ctx
    nb = NUM_BUCKETS // 2
    buckets = (rel > 0).astype(jnp.int32) * nb
    n = jnp.abs(rel)
    max_exact = nb // 2
    is_small = n < max_exact
    val_large = max_exact + (
        jnp.log(jnp.maximum(n, 1).astype(jnp.float32) / max_exact)
        / np.log(MAX_DISTANCE / max_exact)
        * (nb - max_exact)
    ).astype(jnp.int32)
    val_large = jnp.minimum(val_large, nb - 1)
    buckets = buckets + jnp.where(is_small, n, val_large)
    bias = rel_bias[buckets]                       # (S, S, H)
    return jnp.transpose(bias, (2, 0, 1))          # (H, S, S)


def precompute_static(params, num_tokens):
    """Everything that depends only on params and the static sequence length.

    Hoisted out of forward() so the per-step XLA glue around the fused kernel
    stays minimal (gather + pad + concat only).
    """
    s_real = PREFIX_LEN + num_tokens
    s_pad = ((s_real + 7) // 8) * 8        # sublane-aligned internal length
    pos_bias = compute_position_bias(params['rel_bias'], s_pad)       # (H,S,S)
    pp_pad = jnp.pad(params['prefix_params'],
                     ((0, s_pad - PREFIX_LEN), (0, 0)))               # (S, SMALL_DIM)
    pmask = (jnp.arange(s_pad) < PREFIX_LEN).astype(jnp.float32)[:, None]
    pool = ((jnp.arange(s_pad) < s_real).astype(jnp.float32)
            / float(s_real))[:, None]                                 # (S, 1)
    return {'pos_bias': pos_bias, 'pp_pad': pp_pad,
            'pmask': pmask, 'pool': pool}


# ------------------------------ forward -------------------------------------
def forward(params, static, input_ids, attention_mask):
    """BackdoorSinglePrefixModel.forward -> (logits, pooled). One pallas_call."""
    B, L = input_ids.shape
    s_real = PREFIX_LEN + L
    S = static['pp_pad'].shape[0]          # padded internal length (multiple of 8)

    # JAX-side glue: embedding gather + padding/concat of mask only.
    tok_emb = jnp.take(params['embedding'], input_ids, axis=0)        # (B, L, D)
    tok_padded = jnp.pad(tok_emb,
                         ((0, 0), (PREFIX_LEN, S - s_real), (0, 0)))  # (B, S, D)
    ext_mask = jnp.concatenate(
        [jnp.ones((B, PREFIX_LEN), jnp.float32),
         attention_mask.astype(jnp.float32),
         jnp.zeros((B, S - s_real), jnp.float32)], axis=1)            # (B, S)

    logits, pooled = pl.pallas_call(
        _fused_forward_kernel,
        out_shape=(jax.ShapeDtypeStruct((B, NUM_LABELS), jnp.float32),
                   jax.ShapeDtypeStruct((B, D_MODEL), jnp.float32)),
        compiler_params=pltpu.CompilerParams(
            vmem_limit_bytes=8 * 1024 * 1024),
    )(static['pp_pad'], params['prefix_w'], params['prefix_b'], static['pmask'],
      tok_padded, static['pos_bias'], ext_mask, static['pool'],
      params['ln1'], params['wq'], params['wk'], params['wv'], params['wo'],
      params['ln2'], params['wi'], params['wo_ff'],
      params['ln_f'], params['cls_w'], params['cls_b'])
    return logits, pooled


# ------------------------------ parameters ---------------------------------
def init_params(key):
    keys = iter(jax.random.split(key, 64))

    def nrm(shape, std):
        return jax.random.normal(next(keys), shape, jnp.float32) * std

    HE = NUM_HEADS * D_KV
    params = {
        'embedding': nrm((VOCAB, D_MODEL), 1.0),
        'rel_bias': nrm((NUM_BUCKETS, NUM_HEADS), 0.1),
        'prefix_params': jax.random.normal(next(keys), (PREFIX_LEN, SMALL_DIM),
                                           jnp.float32),              # ~ randn
        'prefix_w': nrm((SMALL_DIM, D_MODEL), 1.0 / np.sqrt(SMALL_DIM)),
        'prefix_b': jnp.zeros((1, D_MODEL), jnp.float32),
        'ln_f': jnp.ones((1, D_MODEL), jnp.float32),
        # classifier: xavier_normal weight, zero bias
        'cls_w': nrm((D_MODEL, NUM_LABELS), np.sqrt(2.0 / (D_MODEL + NUM_LABELS))),
        'cls_b': jnp.zeros((1, NUM_LABELS), jnp.float32),
    }
    ln1, ln2, wq, wk, wv, wo, wi, wof = ([] for _ in range(8))
    for _ in range(NUM_LAYERS):
        # head-major layouts: (H, D, E) for q/k/v, (H, E, D) for output proj.
        wq.append(nrm((NUM_HEADS, D_MODEL, D_KV), (D_MODEL * D_KV) ** -0.5))
        wk.append(nrm((NUM_HEADS, D_MODEL, D_KV), D_MODEL ** -0.5))
        wv.append(nrm((NUM_HEADS, D_MODEL, D_KV), D_MODEL ** -0.5))
        wo.append(nrm((NUM_HEADS, D_KV, D_MODEL), HE ** -0.5))
        ln1.append(jnp.ones((1, D_MODEL), jnp.float32))
        ln2.append(jnp.ones((1, D_MODEL), jnp.float32))
        wi.append(nrm((D_MODEL, D_FF), D_MODEL ** -0.5))
        wof.append(nrm((D_FF, D_MODEL), D_FF ** -0.5))
    params['ln1'] = jnp.stack(ln1)       # (NL, 1, D)
    params['wq'] = jnp.stack(wq)         # (NL, H, D, E)
    params['wk'] = jnp.stack(wk)         # (NL, H, D, E)
    params['wv'] = jnp.stack(wv)         # (NL, H, D, E)
    params['wo'] = jnp.stack(wo)         # (NL, H, E, D)
    params['ln2'] = jnp.stack(ln2)       # (NL, 1, D)
    params['wi'] = jnp.stack(wi)         # (NL, D, F)
    params['wo_ff'] = jnp.stack(wof)     # (NL, F, D)
    return params


# --------------------------------- main -------------------------------------
if __name__ == "__main__":
    B, L = 2, 8
    params = init_params(jax.random.PRNGKey(0))
    static = precompute_static(params, L)

    k_ids, _ = jax.random.split(jax.random.PRNGKey(0))
    input_ids = jax.random.randint(k_ids, (B, L), 0, VOCAB, dtype=jnp.int32)
    lengths = jnp.array([L, L - 2], dtype=jnp.int32)
    attention_mask = (jnp.arange(L)[None, :] < lengths[:, None]).astype(jnp.float32)

    fwd = jax.jit(forward)
    logits, pooled = fwd(params, static, input_ids, attention_mask)
    jax.block_until_ready((logits, pooled))
    assert logits.shape == (B, NUM_LABELS) and pooled.shape == (B, D_MODEL)
    assert bool(jnp.all(jnp.isfinite(logits))) and bool(jnp.all(jnp.isfinite(pooled)))
    print("KERNEL_OK")
</pallas_src>

<mosaic_0001>
module attributes {stable_mosaic.version = 11 : i64} {
  func.func @_fused_forward_kernel(%arg0: memref<16x16xf32, #tpu.memory_space<vmem>>, %arg1: memref<16x32xf32, #tpu.memory_space<vmem>>, %arg2: memref<1x32xf32, #tpu.memory_space<vmem>>, %arg3: memref<16x1xf32, #tpu.memory_space<vmem>>, %arg4: memref<2x16x32xf32, #tpu.memory_space<vmem>>, %arg5: memref<4x16x16xf32, #tpu.memory_space<vmem>>, %arg6: memref<2x16xf32, #tpu.memory_space<vmem>>, %arg7: memref<16x1xf32, #tpu.memory_space<vmem>>, %arg8: memref<2x1x32xf32, #tpu.memory_space<vmem>>, %arg9: memref<2x4x32x8xf32, #tpu.memory_space<vmem>>, %arg10: memref<2x4x32x8xf32, #tpu.memory_space<vmem>>, %arg11: memref<2x4x32x8xf32, #tpu.memory_space<vmem>>, %arg12: memref<2x4x8x32xf32, #tpu.memory_space<vmem>>, %arg13: memref<2x1x32xf32, #tpu.memory_space<vmem>>, %arg14: memref<2x32x64xf32, #tpu.memory_space<vmem>>, %arg15: memref<2x64x32xf32, #tpu.memory_space<vmem>>, %arg16: memref<1x32xf32, #tpu.memory_space<vmem>>, %arg17: memref<32x2xf32, #tpu.memory_space<vmem>>, %arg18: memref<1x2xf32, #tpu.memory_space<vmem>>, %arg19: memref<2x2xf32, #tpu.memory_space<vmem>>, %arg20: memref<2x32xf32, #tpu.memory_space<vmem>>) attributes {dimension_semantics = [], scalar_prefetch = 0 : i64, scratch_operands = 0 : i64, tpu.core_type = #tpu.core_type<tc>} {
    %c0 = arith.constant 0 : index
    %c0_0 = arith.constant 0 : index
    %0 = vector.load %arg0[%c0, %c0_0] : memref<16x16xf32, #tpu.memory_space<vmem>>, vector<16x16xf32>
    %c0_1 = arith.constant 0 : index
    %c0_2 = arith.constant 0 : index
    %1 = vector.load %arg1[%c0_1, %c0_2] : memref<16x32xf32, #tpu.memory_space<vmem>>, vector<16x32xf32>
    %cst = arith.constant dense<0.000000e+00> : vector<16x32xf32>
    %2 = tpu.matmul %0, %1, %cst {dimension_numbers = #tpu.dot_dimension_numbers<[1], [0], [0], [1], [0, 0, 1, 1], [], []>} : vector<16x16xf32>, vector<16x32xf32>, vector<16x32xf32> -> vector<16x32xf32>
    %c0_3 = arith.constant 0 : index
    %c0_4 = arith.constant 0 : index
    %3 = vector.load %arg2[%c0_3, %c0_4] : memref<1x32xf32, #tpu.memory_space<vmem>>, vector<1x32xf32>
    %4 = vector.broadcast %3 : vector<1x32xf32> to vector<16x32xf32>
    %5 = arith.addf %2, %4 : vector<16x32xf32>
    %6 = math.tanh %5 : vector<16x32xf32>
    %c0_5 = arith.constant 0 : index
    %c0_6 = arith.constant 0 : index
    %7 = vector.load %arg3[%c0_5, %c0_6] : memref<16x1xf32, #tpu.memory_space<vmem>>, vector<16x1xf32>
    %8 = vector.broadcast %7 : vector<16x1xf32> to vector<16x32xf32>
    %9 = arith.mulf %6, %8 : vector<16x32xf32>
    %c0_7 = arith.constant 0 : index
    %c0_8 = arith.constant 0 : index
    %c0_9 = arith.constant 0 : index
    %10 = vector.load %arg4[%c0_7, %c0_8, %c0_9] : memref<2x16x32xf32, #tpu.memory_space<vmem>>, vector<2x16x32xf32>
    %11 = vector.shape_cast %9 : vector<16x32xf32> to vector<1x16x32xf32>
    %12 = vector.broadcast %11 : vector<1x16x32xf32> to vector<2x16x32xf32>
    %13 = arith.addf %10, %12 : vector<2x16x32xf32>
    %c0_10 = arith.constant 0 : index
    %c0_11 = arith.constant 0 : index
    %14 = vector.load %arg6[%c0_10, %c0_11] : memref<2x16xf32, #tpu.memory_space<vmem>>, vector<2x16xf32>
    %cst_12 = arith.constant 1.000000e+00 : f32
    %15 = vector.broadcast %cst_12 : f32 to vector<2x16xf32>
    %16 = arith.subf %15, %14 : vector<2x16xf32>
    %cst_13 = arith.constant -1.000000e+09 : f32
    %17 = vector.broadcast %cst_13 : f32 to vector<2x16xf32>
    %18 = arith.mulf %16, %17 : vector<2x16xf32>
    %c0_14 = arith.constant 0 : index
    %c0_15 = arith.constant 0 : index
    %c0_16 = arith.constant 0 : index
    %19 = vector.load %arg5[%c0_14, %c0_15, %c0_16] : memref<4x16x16xf32, #tpu.memory_space<vmem>>, vector<4x16x16xf32>
    %20 = vector.shape_cast %19 : vector<4x16x16xf32> to vector<4x1x16x16xf32>
    %21 = vector.shape_cast %18 : vector<2x16xf32> to vector<1x2x1x16xf32>
    %22 = vector.broadcast %20 : vector<4x1x16x16xf32> to vector<4x2x16x16xf32>
    %23 = vector.broadcast %21 : vector<1x2x1x16xf32> to vector<4x2x16x16xf32>
    %24 = arith.addf %22, %23 : vector<4x2x16x16xf32>
    %25 = vector.shape_cast %24 : vector<4x2x16x16xf32> to vector<8x16x16xf32>
    %c0_17 = arith.constant 0 : index
    %c0_18 = arith.constant 0 : index
    %c0_19 = arith.constant 0 : index
    %26 = vector.load %arg8[%c0_17, %c0_18, %c0_19] : memref<2x1x32xf32, #tpu.memory_space<vmem>>, vector<1x1x32xf32>
    %27 = vector.shape_cast %26 : vector<1x1x32xf32> to vector<1x32xf32>
    %28 = arith.mulf %13, %13 : vector<2x16x32xf32>
    %cst_20 = arith.constant dense<0.000000e+00> : vector<2x16xf32>
    %29 = vector.multi_reduction <add>, %28, %cst_20 [2] : vector<2x16x32xf32> to vector<2x16xf32>
    %30 = vector.shape_cast %29 : vector<2x16xf32> to vector<2x16x1xf32>
    %cst_21 = arith.constant 3.200000e+01 : f32
    %31 = vector.broadcast %cst_21 : f32 to vector<2x16x1xf32>
    %32 = arith.divf %30, %31 : vector<2x16x1xf32>
    %cst_22 = arith.constant 9.99999997E-7 : f32
    %33 = vector.broadcast %cst_22 : f32 to vector<2x16x1xf32>
    %34 = arith.addf %32, %33 : vector<2x16x1xf32>
    %35 = math.rsqrt %34 : vector<2x16x1xf32>
    %36 = vector.broadcast %35 : vector<2x16x1xf32> to vector<2x16x32xf32>
    %37 = arith.mulf %13, %36 : vector<2x16x32xf32>
    %38 = vector.shape_cast %27 : vector<1x32xf32> to vector<1x1x32xf32>
    %39 = vector.broadcast %38 : vector<1x1x32xf32> to vector<2x16x32xf32>
    %40 = arith.mulf %37, %39 : vector<2x16x32xf32>
    %41 = vector.shape_cast %40 : vector<2x16x32xf32> to vector<32x32xf32>
    %c0_23 = arith.constant 0 : index
    %c0_24 = arith.constant 0 : index
    %c0_25 = arith.constant 0 : index
    %c0_26 = arith.constant 0 : index
    %42 = vector.load %arg9[%c0_23, %c0_24, %c0_25, %c0_26] : memref<2x4x32x8xf32, #tpu.memory_space<vmem>>, vector<1x1x32x8xf32>
    %43 = vector.shape_cast %42 : vector<1x1x32x8xf32> to vector<32x8xf32>
    %cst_27 = arith.constant dense<0.000000e+00> : vector<32x8xf32>
    %44 = tpu.matmul %41, %43, %cst_27 {dimension_numbers = #tpu.dot_dimension_numbers<[1], [0], [0], [1], [0, 0, 1, 1], [], []>} : vector<32x32xf32>, vector<32x8xf32>, vector<32x8xf32> -> vector<32x8xf32>
    %45 = vector.shape_cast %44 : vector<32x8xf32> to vector<2x16x8xf32>
    %c0_28 = arith.constant 0 : index
    %c0_29 = arith.constant 0 : index
    %c0_30 = arith.constant 0 : index
    %c0_31 = arith.constant 0 : index
    %46 = vector.load %arg10[%c0_28, %c0_29, %c0_30, %c0_31] : memref<2x4x32x8xf32, #tpu.memory_space<vmem>>, vector<1x1x32x8xf32>
    %47 = vector.shape_cast %46 : vector<1x1x32x8xf32> to vector<32x8xf32>
    %cst_32 = arith.constant dense<0.000000e+00> : vector<32x8xf32>
    %48 = tpu.matmul %41, %47, %cst_32 {dimension_numbers = #tpu.dot_dimension_numbers<[1], [0], [0], [1], [0, 0, 1, 1], [], []>} : vector<32x32xf32>, vector<32x8xf32>, vector<32x8xf32> -> vector<32x8xf32>
    %49 = vector.shape_cast %48 : vector<32x8xf32> to vector<2x16x8xf32>
    %c0_33 = arith.constant 0 : index
    %c0_34 = arith.constant 0 : index
    %c0_35 = arith.constant 0 : index
    %c0_36 = arith.constant 0 : index
    %50 = vector.load %arg11[%c0_33, %c0_34, %c0_35, %c0_36] : memref<2x4x32x8xf32, #tpu.memory_space<vmem>>, vector<1x1x32x8xf32>
    %51 = vector.shape_cast %50 : vector<1x1x32x8xf32> to vector<32x8xf32>
    %cst_37 = arith.constant dense<0.000000e+00> : vector<32x8xf32>
    %52 = tpu.matmul %41, %51, %cst_37 {dimension_numbers = #tpu.dot_dimension_numbers<[1], [0], [0], [1], [0, 0, 1, 1], [], []>} : vector<32x32xf32>, vector<32x8xf32>, vector<32x8xf32> -> vector<32x8xf32>
    %53 = vector.shape_cast %52 : vector<32x8xf32> to vector<2x16x8xf32>
    "tpu.trace_start"() <{level = 10 : i32, message = "bqe,bke->bqk"}> : () -> ()
    %cst_38 = arith.constant dense<0.000000e+00> : vector<2x16x16xf32>
    %54 = tpu.matmul %45, %49, %cst_38 {dimension_numbers = #tpu.dot_dimension_numbers<[2], [2], [1], [1], [0, 0, 0, 1, 1, 1], [0], [0]>} : vector<2x16x8xf32>, vector<2x16x8xf32>, vector<2x16x16xf32> -> vector<2x16x16xf32>
    "tpu.trace_stop"() : () -> ()
    %c0_39 = arith.constant 0 : index
    %c1 = arith.constant 1 : index
    %c0_40 = arith.constant 0 : index
    %c0_41 = arith.constant 0 : index
    %55 = vector.load %arg9[%c0_39, %c1, %c0_40, %c0_41] : memref<2x4x32x8xf32, #tpu.memory_space<vmem>>, vector<1x1x32x8xf32>
    %56 = vector.shape_cast %55 : vector<1x1x32x8xf32> to vector<32x8xf32>
    %cst_42 = arith.constant dense<0.000000e+00> : vector<32x8xf32>
    %57 = tpu.matmul %41, %56, %cst_42 {dimension_numbers = #tpu.dot_dimension_numbers<[1], [0], [0], [1], [0, 0, 1, 1], [], []>} : vector<32x32xf32>, vector<32x8xf32>, vector<32x8xf32> -> vector<32x8xf32>
    %58 = vector.shape_cast %57 : vector<32x8xf32> to vector<2x16x8xf32>
    %c0_43 = arith.constant 0 : index
    %c1_44 = arith.constant 1 : index
    %c0_45 = arith.constant 0 : index
    %c0_46 = arith.constant 0 : index
    %59 = vector.load %arg10[%c0_43, %c1_44, %c0_45, %c0_46] : memref<2x4x32x8xf32, #tpu.memory_space<vmem>>, vector<1x1x32x8xf32>
    %60 = vector.shape_cast %59 : vector<1x1x32x8xf32> to vector<32x8xf32>
    %cst_47 = arith.constant dense<0.000000e+00> : vector<32x8xf32>
    %61 = tpu.matmul %41, %60, %cst_47 {dimension_numbers = #tpu.dot_dimension_numbers<[1], [0], [0], [1], [0, 0, 1, 1], [], []>} : vector<32x32xf32>, vector<32x8xf32>, vector<32x8xf32> -> vector<32x8xf32>
    %62 = vector.shape_cast %61 : vector<32x8xf32> to vector<2x16x8xf32>
    %c0_48 = arith.constant 0 : index
    %c1_49 = arith.constant 1 : index
    %c0_50 = arith.constant 0 : index
    %c0_51 = arith.constant 0 : index
    %63 = vector.load %arg11[%c0_48, %c1_49, %c0_50, %c0_51] : memref<2x4x32x8xf32, #tpu.memory_space<vmem>>, vector<1x1x32x8xf32>
    %64 = vector.shape_cast %63 : vector<1x1x32x8xf32> to vector<32x8xf32>
    %cst_52 = arith.constant dense<0.000000e+00> : vector<32x8xf32>
    %65 = tpu.matmul %41, %64, %cst_52 {dimension_numbers = #tpu.dot_dimension_numbers<[1], [0], [0], [1], [0, 0, 1, 1], [], []>} : vector<32x32xf32>, vector<32x8xf32>, vector<32x8xf32> -> vector<32x8xf32>
    %66 = vector.shape_cast %65 : vector<32x8xf32> to vector<2x16x8xf32>
    "tpu.trace_start"() <{level = 10 : i32, message = "bqe,bke->bqk"}> : () -> ()
    %cst_53 = arith.constant dense<0.000000e+00> : vector<2x16x16xf32>
    %67 = tpu.matmul %58, %62, %cst_53 {dimension_numbers = #tpu.dot_dimension_numbers<[2], [2], [1], [1], [0, 0, 0, 1, 1, 1], [0], [0]>} : vector<2x16x8xf32>, vector<2x16x8xf32>, vector<2x16x16xf32> -> vector<2x16x16xf32>
    "tpu.trace_stop"() : () -> ()
    %c0_54 = arith.constant 0 : index
    %c2 = arith.constant 2 : index
    %c0_55 = arith.constant 0 : index
    %c0_56 = arith.constant 0 : index
    %68 = vector.load %arg9[%c0_54, %c2, %c0_55, %c0_56] : memref<2x4x32x8xf32, #tpu.memory_space<vmem>>, vector<1x1x32x8xf32>
    %69 = vector.shape_cast %68 : vector<1x1x32x8xf32> to vector<32x8xf32>
    %cst_57 = arith.constant dense<0.000000e+00> : vector<32x8xf32>
    %70 = tpu.matmul %41, %69, %cst_57 {dimension_numbers = #tpu.dot_dimension_numbers<[1], [0], [0], [1], [0, 0, 1, 1], [], []>} : vector<32x32xf32>, vector<32x8xf32>, vector<32x8xf32> -> vector<32x8xf32>
    %71 = vector.shape_cast %70 : vector<32x8xf32> to vector<2x16x8xf32>
    %c0_58 = arith.constant 0 : index
    %c2_59 = arith.constant 2 : index
    %c0_60 = arith.constant 0 : index
    %c0_61 = arith.constant 0 : index
    %72 = vector.load %arg10[%c0_58, %c2_59, %c0_60, %c0_61] : memref<2x4x32x8xf32, #tpu.memory_space<vmem>>, vector<1x1x32x8xf32>
    %73 = vector.shape_cast %72 : vector<1x1x32x8xf32> to vector<32x8xf32>
    %cst_62 = arith.constant dense<0.000000e+00> : vector<32x8xf32>
    %74 = tpu.matmul %41, %73, %cst_62 {dimension_numbers = #tpu.dot_dimension_numbers<[1], [0], [0], [1], [0, 0, 1, 1], [], []>} : vector<32x32xf32>, vector<32x8xf32>, vector<32x8xf32> -> vector<32x8xf32>
    %75 = vector.shape_cast %74 : vector<32x8xf32> to vector<2x16x8xf32>
    %c0_63 = arith.constant 0 : index
    %c2_64 = arith.constant 2 : index
    %c0_65 = arith.constant 0 : index
    %c0_66 = arith.constant 0 : index
    %76 = vector.load %arg11[%c0_63, %c2_64, %c0_65, %c0_66] : memref<2x4x32x8xf32, #tpu.memory_space<vmem>>, vector<1x1x32x8xf32>
    %77 = vector.shape_cast %76 : vector<1x1x32x8xf32> to vector<32x8xf32>
    %cst_67 = arith.constant dense<0.000000e+00> : vector<32x8xf32>
    %78 = tpu.matmul %41, %77, %cst_67 {dimension_numbers = #tpu.dot_dimension_numbers<[1], [0], [0], [1], [0, 0, 1, 1], [], []>} : vector<32x32xf32>, vector<32x8xf32>, vector<32x8xf32> -> vector<32x8xf32>
    %79 = vector.shape_cast %78 : vector<32x8xf32> to vector<2x16x8xf32>
    "tpu.trace_start"() <{level = 10 : i32, message = "bqe,bke->bqk"}> : () -> ()
    %cst_68 = arith.constant dense<0.000000e+00> : vector<2x16x16xf32>
    %80 = tpu.matmul %71, %75, %cst_68 {dimension_numbers = #tpu.dot_dimension_numbers<[2], [2], [1], [1], [0, 0, 0, 1, 1, 1], [0], [0]>} : vector<2x16x8xf32>, vector<2x16x8xf32>, vector<2x16x16xf32> -> vector<2x16x16xf32>
    "tpu.trace_stop"() : () -> ()
    %c0_69 = arith.constant 0 : index
    %c3 = arith.constant 3 : index
    %c0_70 = arith.constant 0 : index
    %c0_71 = arith.constant 0 : index
    %81 = vector.load %arg9[%c0_69, %c3, %c0_70, %c0_71] : memref<2x4x32x8xf32, #tpu.memory_space<vmem>>, vector<1x1x32x8xf32>
    %82 = vector.shape_cast %81 : vector<1x1x32x8xf32> to vector<32x8xf32>
    %cst_72 = arith.constant dense<0.000000e+00> : vector<32x8xf32>
    %83 = tpu.matmul %41, %82, %cst_72 {dimension_numbers = #tpu.dot_dimension_numbers<[1], [0], [0], [1], [0, 0, 1, 1], [], []>} : vector<32x32xf32>, vector<32x8xf32>, vector<32x8xf32> -> vector<32x8xf32>
    %84 = vector.shape_cast %83 : vector<32x8xf32> to vector<2x16x8xf32>
    %c0_73 = arith.constant 0 : index
    %c3_74 = arith.constant 3 : index
    %c0_75 = arith.constant 0 : index
    %c0_76 = arith.constant 0 : index
    %85 = vector.load %arg10[%c0_73, %c3_74, %c0_75, %c0_76] : memref<2x4x32x8xf32, #tpu.memory_space<vmem>>, vector<1x1x32x8xf32>
    %86 = vector.shape_cast %85 : vector<1x1x32x8xf32> to vector<32x8xf32>
    %cst_77 = arith.constant dense<0.000000e+00> : vector<32x8xf32>
    %87 = tpu.matmul %41, %86, %cst_77 {dimension_numbers = #tpu.dot_dimension_numbers<[1], [0], [0], [1], [0, 0, 1, 1], [], []>} : vector<32x32xf32>, vector<32x8xf32>, vector<32x8xf32> -> vector<32x8xf32>
    %88 = vector.shape_cast %87 : vector<32x8xf32> to vector<2x16x8xf32>
    %c0_78 = arith.constant 0 : index
    %c3_79 = arith.constant 3 : index
    %c0_80 = arith.constant 0 : index
    %c0_81 = arith.constant 0 : index
    %89 = vector.load %arg11[%c0_78, %c3_79, %c0_80, %c0_81] : memref<2x4x32x8xf32, #tpu.memory_space<vmem>>, vector<1x1x32x8xf32>
    %90 = vector.shape_cast %89 : vector<1x1x32x8xf32> to vector<32x8xf32>
    %cst_82 = arith.constant dense<0.000000e+00> : vector<32x8xf32>
    %91 = tpu.matmul %41, %90, %cst_82 {dimension_numbers = #tpu.dot_dimension_numbers<[1], [0], [0], [1], [0, 0, 1, 1], [], []>} : vector<32x32xf32>, vector<32x8xf32>, vector<32x8xf32> -> vector<32x8xf32>
    %92 = vector.shape_cast %91 : vector<32x8xf32> to vector<2x16x8xf32>
    "tpu.trace_start"() <{level = 10 : i32, message = "bqe,bke->bqk"}> : () -> ()
    %cst_83 = arith.constant dense<0.000000e+00> : vector<2x16x16xf32>
    %93 = tpu.matmul %84, %88, %cst_83 {dimension_numbers = #tpu.dot_dimension_numbers<[2], [2], [1], [1], [0, 0, 0, 1, 1, 1], [0], [0]>} : vector<2x16x8xf32>, vector<2x16x8xf32>, vector<2x16x16xf32> -> vector<2x16x16xf32>
    "tpu.trace_stop"() : () -> ()
    %94 = tpu.concatenate %54, %67, %80, %93 in 0 : vector<2x16x16xf32>, vector<2x16x16xf32>, vector<2x16x16xf32>, vector<2x16x16xf32> -> vector<8x16x16xf32>
    %95 = arith.addf %94, %25 : vector<8x16x16xf32>
    %96 = tpu.concatenate %53, %66, %79, %92 in 0 : vector<2x16x8xf32>, vector<2x16x8xf32>, vector<2x16x8xf32>, vector<2x16x8xf32> -> vector<8x16x8xf32>
    %cst_84 = arith.constant dense<0xFF800000> : vector<8x16xf32>
    %97 = vector.multi_reduction <maximumf>, %95, %cst_84 [2] : vector<8x16x16xf32> to vector<8x16xf32>
    %98 = vector.shape_cast %97 : vector<8x16xf32> to vector<8x16x1xf32>
    %99 = vector.broadcast %98 : vector<8x16x1xf32> to vector<8x16x16xf32>
    %100 = arith.subf %95, %99 : vector<8x16x16xf32>
    %101 = math.exp %100 : vector<8x16x16xf32>
    %cst_85 = arith.constant dense<0.000000e+00> : vector<8x16xf32>
    %102 = vector.multi_reduction <add>, %101, %cst_85 [2] : vector<8x16x16xf32> to vector<8x16xf32>
    %103 = vector.shape_cast %102 : vector<8x16xf32> to vector<8x16x1xf32>
    %104 = vector.broadcast %103 : vector<8x16x1xf32> to vector<8x16x16xf32>
    %105 = arith.divf %101, %104 : vector<8x16x16xf32>
    "tpu.trace_start"() <{level = 10 : i32, message = "nqk,nke->nqe"}> : () -> ()
    %cst_86 = arith.constant dense<0.000000e+00> : vector<8x16x8xf32>
    %106 = tpu.matmul %105, %96, %cst_86 {dimension_numbers = #tpu.dot_dimension_numbers<[2], [1], [1], [2], [0, 0, 0, 1, 1, 2], [0], [0]>} : vector<8x16x16xf32>, vector<8x16x8xf32>, vector<8x16x8xf32> -> vector<8x16x8xf32>
    "tpu.trace_stop"() : () -> ()
    %107 = vector.extract_strided_slice %106 {offsets = [0, 0, 0], sizes = [2, 16, 8], strides = [1, 1, 1]} : vector<8x16x8xf32> to vector<2x16x8xf32>
    %108 = vector.shape_cast %107 : vector<2x16x8xf32> to vector<32x8xf32>
    %c0_87 = arith.constant 0 : index
    %c0_88 = arith.constant 0 : index
    %c0_89 = arith.constant 0 : index
    %c0_90 = arith.constant 0 : index
    %109 = vector.load %arg12[%c0_87, %c0_88, %c0_89, %c0_90] : memref<2x4x8x32xf32, #tpu.memory_space<vmem>>, vector<1x1x8x32xf32>
    %110 = vector.shape_cast %109 : vector<1x1x8x32xf32> to vector<8x32xf32>
    %cst_91 = arith.constant dense<0.000000e+00> : vector<32x32xf32>
    %111 = tpu.matmul %108, %110, %cst_91 {dimension_numbers = #tpu.dot_dimension_numbers<[1], [0], [0], [1], [0, 0, 1, 1], [], []>} : vector<32x8xf32>, vector<8x32xf32>, vector<32x32xf32> -> vector<32x32xf32>
    %112 = vector.extract_strided_slice %106 {offsets = [2, 0, 0], sizes = [2, 16, 8], strides = [1, 1, 1]} : vector<8x16x8xf32> to vector<2x16x8xf32>
    %113 = vector.shape_cast %112 : vector<2x16x8xf32> to vector<32x8xf32>
    %c0_92 = arith.constant 0 : index
    %c1_93 = arith.constant 1 : index
    %c0_94 = arith.constant 0 : index
    %c0_95 = arith.constant 0 : index
    %114 = vector.load %arg12[%c0_92, %c1_93, %c0_94, %c0_95] : memref<2x4x8x32xf32, #tpu.memory_space<vmem>>, vector<1x1x8x32xf32>
    %115 = vector.shape_cast %114 : vector<1x1x8x32xf32> to vector<8x32xf32>
    %cst_96 = arith.constant dense<0.000000e+00> : vector<32x32xf32>
    %116 = tpu.matmul %113, %115, %cst_96 {dimension_numbers = #tpu.dot_dimension_numbers<[1], [0], [0], [1], [0, 0, 1, 1], [], []>} : vector<32x8xf32>, vector<8x32xf32>, vector<32x32xf32> -> vector<32x32xf32>
    %117 = arith.addf %111, %116 : vector<32x32xf32>
    %118 = vector.extract_strided_slice %106 {offsets = [4, 0, 0], sizes = [2, 16, 8], strides = [1, 1, 1]} : vector<8x16x8xf32> to vector<2x16x8xf32>
    %119 = vector.shape_cast %118 : vector<2x16x8xf32> to vector<32x8xf32>
    %c0_97 = arith.constant 0 : index
    %c2_98 = arith.constant 2 : index
    %c0_99 = arith.constant 0 : index
    %c0_100 = arith.constant 0 : index
    %120 = vector.load %arg12[%c0_97, %c2_98, %c0_99, %c0_100] : memref<2x4x8x32xf32, #tpu.memory_space<vmem>>, vector<1x1x8x32xf32>
    %121 = vector.shape_cast %120 : vector<1x1x8x32xf32> to vector<8x32xf32>
    %cst_101 = arith.constant dense<0.000000e+00> : vector<32x32xf32>
    %122 = tpu.matmul %119, %121, %cst_101 {dimension_numbers = #tpu.dot_dimension_numbers<[1], [0], [0], [1], [0, 0, 1, 1], [], []>} : vector<32x8xf32>, vector<8x32xf32>, vector<32x32xf32> -> vector<32x32xf32>
    %123 = arith.addf %117, %122 : vector<32x32xf32>
    %124 = vector.extract_strided_slice %106 {offsets = [6, 0, 0], sizes = [2, 16, 8], strides = [1, 1, 1]} : vector<8x16x8xf32> to vector<2x16x8xf32>
    %125 = vector.shape_cast %124 : vector<2x16x8xf32> to vector<32x8xf32>
    %c0_102 = arith.constant 0 : index
    %c3_103 = arith.constant 3 : index
    %c0_104 = arith.constant 0 : index
    %c0_105 = arith.constant 0 : index
    %126 = vector.load %arg12[%c0_102, %c3_103, %c0_104, %c0_105] : memref<2x4x8x32xf32, #tpu.memory_space<vmem>>, vector<1x1x8x32xf32>
    %127 = vector.shape_cast %126 : vector<1x1x8x32xf32> to vector<8x32xf32>
    %cst_106 = arith.constant dense<0.000000e+00> : vector<32x32xf32>
    %128 = tpu.matmul %125, %127, %cst_106 {dimension_numbers = #tpu.dot_dimension_numbers<[1], [0], [0], [1], [0, 0, 1, 1], [], []>} : vector<32x8xf32>, vector<8x32xf32>, vector<32x32xf32> -> vector<32x32xf32>
    %129 = arith.addf %123, %128 : vector<32x32xf32>
    %130 = vector.shape_cast %129 : vector<32x32xf32> to vector<2x16x32xf32>
    %131 = arith.addf %13, %130 : vector<2x16x32xf32>
    %c0_107 = arith.constant 0 : index
    %c0_108 = arith.constant 0 : index
    %c0_109 = arith.constant 0 : index
    %132 = vector.load %arg13[%c0_107, %c0_108, %c0_109] : memref<2x1x32xf32, #tpu.memory_space<vmem>>, vector<1x1x32xf32>
    %133 = vector.shape_cast %132 : vector<1x1x32xf32> to vector<1x32xf32>
    %134 = arith.mulf %131, %131 : vector<2x16x32xf32>
    %cst_110 = arith.constant dense<0.000000e+00> : vector<2x16xf32>
    %135 = vector.multi_reduction <add>, %134, %cst_110 [2] : vector<2x16x32xf32> to vector<2x16xf32>
    %136 = vector.shape_cast %135 : vector<2x16xf32> to vector<2x16x1xf32>
    %cst_111 = arith.constant 3.200000e+01 : f32
    %137 = vector.broadcast %cst_111 : f32 to vector<2x16x1xf32>
    %138 = arith.divf %136, %137 : vector<2x16x1xf32>
    %cst_112 = arith.constant 9.99999997E-7 : f32
    %139 = vector.broadcast %cst_112 : f32 to vector<2x16x1xf32>
    %140 = arith.addf %138, %139 : vector<2x16x1xf32>
    %141 = math.rsqrt %140 : vector<2x16x1xf32>
    %142 = vector.broadcast %141 : vector<2x16x1xf32> to vector<2x16x32xf32>
    %143 = arith.mulf %131, %142 : vector<2x16x32xf32>
    %144 = vector.shape_cast %133 : vector<1x32xf32> to vector<1x1x32xf32>
    %145 = vector.broadcast %144 : vector<1x1x32xf32> to vector<2x16x32xf32>
    %146 = arith.mulf %143, %145 : vector<2x16x32xf32>
    %147 = vector.shape_cast %146 : vector<2x16x32xf32> to vector<32x32xf32>
    %c0_113 = arith.constant 0 : index
    %c0_114 = arith.constant 0 : index
    %c0_115 = arith.constant 0 : index
    %148 = vector.load %arg14[%c0_113, %c0_114, %c0_115] : memref<2x32x64xf32, #tpu.memory_space<vmem>>, vector<1x32x64xf32>
    %149 = vector.shape_cast %148 : vector<1x32x64xf32> to vector<32x64xf32>
    %cst_116 = arith.constant dense<0.000000e+00> : vector<32x64xf32>
    %150 = tpu.matmul %147, %149, %cst_116 {dimension_numbers = #tpu.dot_dimension_numbers<[1], [0], [0], [1], [0, 0, 1, 1], [], []>} : vector<32x32xf32>, vector<32x64xf32>, vector<32x64xf32> -> vector<32x64xf32>
    %cst_117 = arith.constant 0.000000e+00 : f32
    %151 = vector.broadcast %cst_117 : f32 to vector<32x64xf32>
    %152 = arith.maximumf %150, %151 : vector<32x64xf32>
    %c0_118 = arith.constant 0 : index
    %c0_119 = arith.constant 0 : index
    %c0_120 = arith.constant 0 : index
    %153 = vector.load %arg15[%c0_118, %c0_119, %c0_120] : memref<2x64x32xf32, #tpu.memory_space<vmem>>, vector<1x64x32xf32>
    %154 = vector.shape_cast %153 : vector<1x64x32xf32> to vector<64x32xf32>
    %cst_121 = arith.constant dense<0.000000e+00> : vector<32x32xf32>
    %155 = tpu.matmul %152, %154, %cst_121 {dimension_numbers = #tpu.dot_dimension_numbers<[1], [0], [0], [1], [0, 0, 1, 1], [], []>} : vector<32x64xf32>, vector<64x32xf32>, vector<32x32xf32> -> vector<32x32xf32>
    %156 = vector.shape_cast %155 : vector<32x32xf32> to vector<2x16x32xf32>
    %157 = arith.addf %131, %156 : vector<2x16x32xf32>
    %c1_122 = arith.constant 1 : index
    %c0_123 = arith.constant 0 : index
    %c0_124 = arith.constant 0 : index
    %158 = vector.load %arg8[%c1_122, %c0_123, %c0_124] : memref<2x1x32xf32, #tpu.memory_space<vmem>>, vector<1x1x32xf32>
    %159 = vector.shape_cast %158 : vector<1x1x32xf32> to vector<1x32xf32>
    %160 = arith.mulf %157, %157 : vector<2x16x32xf32>
    %cst_125 = arith.constant dense<0.000000e+00> : vector<2x16xf32>
    %161 = vector.multi_reduction <add>, %160, %cst_125 [2] : vector<2x16x32xf32> to vector<2x16xf32>
    %162 = vector.shape_cast %161 : vector<2x16xf32> to vector<2x16x1xf32>
    %cst_126 = arith.constant 3.200000e+01 : f32
    %163 = vector.broadcast %cst_126 : f32 to vector<2x16x1xf32>
    %164 = arith.divf %162, %163 : vector<2x16x1xf32>
    %cst_127 = arith.constant 9.99999997E-7 : f32
    %165 = vector.broadcast %cst_127 : f32 to vector<2x16x1xf32>
    %166 = arith.addf %164, %165 : vector<2x16x1xf32>
    %167 = math.rsqrt %166 : vector<2x16x1xf32>
    %168 = vector.broadcast %167 : vector<2x16x1xf32> to vector<2x16x32xf32>
    %169 = arith.mulf %157, %168 : vector<2x16x32xf32>
    %170 = vector.shape_cast %159 : vector<1x32xf32> to vector<1x1x32xf32>
    %171 = vector.broadcast %170 : vector<1x1x32xf32> to vector<2x16x32xf32>
    %172 = arith.mulf %169, %171 : vector<2x16x32xf32>
    %173 = vector.shape_cast %172 : vector<2x16x32xf32> to vector<32x32xf32>
    %c1_128 = arith.constant 1 : index
    %c0_129 = arith.constant 0 : index
    %c0_130 = arith.constant 0 : index
    %c0_131 = arith.constant 0 : index
    %174 = vector.load %arg9[%c1_128, %c0_129, %c0_130, %c0_131] : memref<2x4x32x8xf32, #tpu.memory_space<vmem>>, vector<1x1x32x8xf32>
    %175 = vector.shape_cast %174 : vector<1x1x32x8xf32> to vector<32x8xf32>
    %cst_132 = arith.constant dense<0.000000e+00> : vector<32x8xf32>
    %176 = tpu.matmul %173, %175, %cst_132 {dimension_numbers = #tpu.dot_dimension_numbers<[1], [0], [0], [1], [0, 0, 1, 1], [], []>} : vector<32x32xf32>, vector<32x8xf32>, vector<32x8xf32> -> vector<32x8xf32>
    %177 = vector.shape_cast %176 : vector<32x8xf32> to vector<2x16x8xf32>
    %c1_133 = arith.constant 1 : index
    %c0_134 = arith.constant 0 : index
    %c0_135 = arith.constant 0 : index
    %c0_136 = arith.constant 0 : index
    %178 = vector.load %arg10[%c1_133, %c0_134, %c0_135, %c0_136] : memref<2x4x32x8xf32, #tpu.memory_space<vmem>>, vector<1x1x32x8xf32>
    %179 = vector.shape_cast %178 : vector<1x1x32x8xf32> to vector<32x8xf32>
    %cst_137 = arith.constant dense<0.000000e+00> : vector<32x8xf32>
    %180 = tpu.matmul %173, %179, %cst_137 {dimension_numbers = #tpu.dot_dimension_numbers<[1], [0], [0], [1], [0, 0, 1, 1], [], []>} : vector<32x32xf32>, vector<32x8xf32>, vector<32x8xf32> -> vector<32x8xf32>
    %181 = vector.shape_cast %180 : vector<32x8xf32> to vector<2x16x8xf32>
    %c1_138 = arith.constant 1 : index
    %c0_139 = arith.constant 0 : index
    %c0_140 = arith.constant 0 : index
    %c0_141 = arith.constant 0 : index
    %182 = vector.load %arg11[%c1_138, %c0_139, %c0_140, %c0_141] : memref<2x4x32x8xf32, #tpu.memory_space<vmem>>, vector<1x1x32x8xf32>
    %183 = vector.shape_cast %182 : vector<1x1x32x8xf32> to vector<32x8xf32>
    %cst_142 = arith.constant dense<0.000000e+00> : vector<32x8xf32>
    %184 = tpu.matmul %173, %183, %cst_142 {dimension_numbers = #tpu.dot_dimension_numbers<[1], [0], [0], [1], [0, 0, 1, 1], [], []>} : vector<32x32xf32>, vector<32x8xf32>, vector<32x8xf32> -> vector<32x8xf32>
    %185 = vector.shape_cast %184 : vector<32x8xf32> to vector<2x16x8xf32>
    "tpu.trace_start"() <{level = 10 : i32, message = "bqe,bke->bqk"}> : () -> ()
    %cst_143 = arith.constant dense<0.000000e+00> : vector<2x16x16xf32>
    %186 = tpu.matmul %177, %181, %cst_143 {dimension_numbers = #tpu.dot_dimension_numbers<[2], [2], [1], [1], [0, 0, 0, 1, 1, 1], [0], [0]>} : vector<2x16x8xf32>, vector<2x16x8xf32>, vector<2x16x16xf32> -> vector<2x16x16xf32>
    "tpu.trace_stop"() : () -> ()
    %c1_144 = arith.constant 1 : index
    %c1_145 = arith.constant 1 : index
    %c0_146 = arith.constant 0 : index
    %c0_147 = arith.constant 0 : index
    %187 = vector.load %arg9[%c1_144, %c1_145, %c0_146, %c0_147] : memref<2x4x32x8xf32, #tpu.memory_space<vmem>>, vector<1x1x32x8xf32>
    %188 = vector.shape_cast %187 : vector<1x1x32x8xf32> to vector<32x8xf32>
    %cst_148 = arith.constant dense<0.000000e+00> : vector<32x8xf32>
    %189 = tpu.matmul %173, %188, %cst_148 {dimension_numbers = #tpu.dot_dimension_numbers<[1], [0], [0], [1], [0, 0, 1, 1], [], []>} : vector<32x32xf32>, vector<32x8xf32>, vector<32x8xf32> -> vector<32x8xf32>
    %190 = vector.shape_cast %189 : vector<32x8xf32> to vector<2x16x8xf32>
    %c1_149 = arith.constant 1 : index
    %c1_150 = arith.constant 1 : index
    %c0_151 = arith.constant 0 : index
    %c0_152 = arith.constant 0 : index
    %191 = vector.load %arg10[%c1_149, %c1_150, %c0_151, %c0_152] : memref<2x4x32x8xf32, #tpu.memory_space<vmem>>, vector<1x1x32x8xf32>
    %192 = vector.shape_cast %191 : vector<1x1x32x8xf32> to vector<32x8xf32>
    %cst_153 = arith.constant dense<0.000000e+00> : vector<32x8xf32>
    %193 = tpu.matmul %173, %192, %cst_153 {dimension_numbers = #tpu.dot_dimension_numbers<[1], [0], [0], [1], [0, 0, 1, 1], [], []>} : vector<32x32xf32>, vector<32x8xf32>, vector<32x8xf32> -> vector<32x8xf32>
    %194 = vector.shape_cast %193 : vector<32x8xf32> to vector<2x16x8xf32>
    %c1_154 = arith.constant 1 : index
    %c1_155 = arith.constant 1 : index
    %c0_156 = arith.constant 0 : index
    %c0_157 = arith.constant 0 : index
    %195 = vector.load %arg11[%c1_154, %c1_155, %c0_156, %c0_157] : memref<2x4x32x8xf32, #tpu.memory_space<vmem>>, vector<1x1x32x8xf32>
    %196 = vector.shape_cast %195 : vector<1x1x32x8xf32> to vector<32x8xf32>
    %cst_158 = arith.constant dense<0.000000e+00> : vector<32x8xf32>
    %197 = tpu.matmul %173, %196, %cst_158 {dimension_numbers = #tpu.dot_dimension_numbers<[1], [0], [0], [1], [0, 0, 1, 1], [], []>} : vector<32x32xf32>, vector<32x8xf32>, vector<32x8xf32> -> vector<32x8xf32>
    %198 = vector.shape_cast %197 : vector<32x8xf32> to vector<2x16x8xf32>
    "tpu.trace_start"() <{level = 10 : i32, message = "bqe,bke->bqk"}> : () -> ()
    %cst_159 = arith.constant dense<0.000000e+00> : vector<2x16x16xf32>
    %199 = tpu.matmul %190, %194, %cst_159 {dimension_numbers = #tpu.dot_dimension_numbers<[2], [2], [1], [1], [0, 0, 0, 1, 1, 1], [0], [0]>} : vector<2x16x8xf32>, vector<2x16x8xf32>, vector<2x16x16xf32> -> vector<2x16x16xf32>
    "tpu.trace_stop"() : () -> ()
    %c1_160 = arith.constant 1 : index
    %c2_161 = arith.constant 2 : index
    %c0_162 = arith.constant 0 : index
    %c0_163 = arith.constant 0 : index
    %200 = vector.load %arg9[%c1_160, %c2_161, %c0_162, %c0_163] : memref<2x4x32x8xf32, #tpu.memory_space<vmem>>, vector<1x1x32x8xf32>
    %201 = vector.shape_cast %200 : vector<1x1x32x8xf32> to vector<32x8xf32>
    %cst_164 = arith.constant dense<0.000000e+00> : vector<32x8xf32>
    %202 = tpu.matmul %173, %201, %cst_164 {dimension_numbers = #tpu.dot_dimension_numbers<[1], [0], [0], [1], [0, 0, 1, 1], [], []>} : vector<32x32xf32>, vector<32x8xf32>, vector<32x8xf32> -> vector<32x8xf32>
    %203 = vector.shape_cast %202 : vector<32x8xf32> to vector<2x16x8xf32>
    %c1_165 = arith.constant 1 : index
    %c2_166 = arith.constant 2 : index
    %c0_167 = arith.constant 0 : index
    %c0_168 = arith.constant 0 : index
    %204 = vector.load %arg10[%c1_165, %c2_166, %c0_167, %c0_168] : memref<2x4x32x8xf32, #tpu.memory_space<vmem>>, vector<1x1x32x8xf32>
    %205 = vector.shape_cast %204 : vector<1x1x32x8xf32> to vector<32x8xf32>
    %cst_169 = arith.constant dense<0.000000e+00> : vector<32x8xf32>
    %206 = tpu.matmul %173, %205, %cst_169 {dimension_numbers = #tpu.dot_dimension_numbers<[1], [0], [0], [1], [0, 0, 1, 1], [], []>} : vector<32x32xf32>, vector<32x8xf32>, vector<32x8xf32> -> vector<32x8xf32>
    %207 = vector.shape_cast %206 : vector<32x8xf32> to vector<2x16x8xf32>
    %c1_170 = arith.constant 1 : index
    %c2_171 = arith.constant 2 : index
    %c0_172 = arith.constant 0 : index
    %c0_173 = arith.constant 0 : index
    %208 = vector.load %arg11[%c1_170, %c2_171, %c0_172, %c0_173] : memref<2x4x32x8xf32, #tpu.memory_space<vmem>>, vector<1x1x32x8xf32>
    %209 = vector.shape_cast %208 : vector<1x1x32x8xf32> to vector<32x8xf32>
    %cst_174 = arith.constant dense<0.000000e+00> : vector<32x8xf32>
    %210 = tpu.matmul %173, %209, %cst_174 {dimension_numbers = #tpu.dot_dimension_numbers<[1], [0], [0], [1], [0, 0, 1, 1], [], []>} : vector<32x32xf32>, vector<32x8xf32>, vector<32x8xf32> -> vector<32x8xf32>
    %211 = vector.shape_cast %210 : vector<32x8xf32> to vector<2x16x8xf32>
    "tpu.trace_start"() <{level = 10 : i32, message = "bqe,bke->bqk"}> : () -> ()
    %cst_175 = arith.constant dense<0.000000e+00> : vector<2x16x16xf32>
    %212 = tpu.matmul %203, %207, %cst_175 {dimension_numbers = #tpu.dot_dimension_numbers<[2], [2], [1], [1], [0, 0, 0, 1, 1, 1], [0], [0]>} : vector<2x16x8xf32>, vector<2x16x8xf32>, vector<2x16x16xf32> -> vector<2x16x16xf32>
    "tpu.trace_stop"() : () -> ()
    %c1_176 = arith.constant 1 : index
    %c3_177 = arith.constant 3 : index
    %c0_178 = arith.constant 0 : index
    %c0_179 = arith.constant 0 : index
    %213 = vector.load %arg9[%c1_176, %c3_177, %c0_178, %c0_179] : memref<2x4x32x8xf32, #tpu.memory_space<vmem>>, vector<1x1x32x8xf32>
    %214 = vector.shape_cast %213 : vector<1x1x32x8xf32> to vector<32x8xf32>
    %cst_180 = arith.constant dense<0.000000e+00> : vector<32x8xf32>
    %215 = tpu.matmul %173, %214, %cst_180 {dimension_numbers = #tpu.dot_dimension_numbers<[1], [0], [0], [1], [0, 0, 1, 1], [], []>} : vector<32x32xf32>, vector<32x8xf32>, vector<32x8xf32> -> vector<32x8xf32>
    %216 = vector.shape_cast %215 : vector<32x8xf32> to vector<2x16x8xf32>
    %c1_181 = arith.constant 1 : index
    %c3_182 = arith.constant 3 : index
    %c0_183 = arith.constant 0 : index
    %c0_184 = arith.constant 0 : index
    %217 = vector.load %arg10[%c1_181, %c3_182, %c0_183, %c0_184] : memref<2x4x32x8xf32, #tpu.memory_space<vmem>>, vector<1x1x32x8xf32>
    %218 = vector.shape_cast %217 : vector<1x1x32x8xf32> to vector<32x8xf32>
    %cst_185 = arith.constant dense<0.000000e+00> : vector<32x8xf32>
    %219 = tpu.matmul %173, %218, %cst_185 {dimension_numbers = #tpu.dot_dimension_numbers<[1], [0], [0], [1], [0, 0, 1, 1], [], []>} : vector<32x32xf32>, vector<32x8xf32>, vector<32x8xf32> -> vector<32x8xf32>
    %220 = vector.shape_cast %219 : vector<32x8xf32> to vector<2x16x8xf32>
    %c1_186 = arith.constant 1 : index
    %c3_187 = arith.constant 3 : index
    %c0_188 = arith.constant 0 : index
    %c0_189 = arith.constant 0 : index
    %221 = vector.load %arg11[%c1_186, %c3_187, %c0_188, %c0_189] : memref<2x4x32x8xf32, #tpu.memory_space<vmem>>, vector<1x1x32x8xf32>
    %222 = vector.shape_cast %221 : vector<1x1x32x8xf32> to vector<32x8xf32>
    %cst_190 = arith.constant dense<0.000000e+00> : vector<32x8xf32>
    %223 = tpu.matmul %173, %222, %cst_190 {dimension_numbers = #tpu.dot_dimension_numbers<[1], [0], [0], [1], [0, 0, 1, 1], [], []>} : vector<32x32xf32>, vector<32x8xf32>, vector<32x8xf32> -> vector<32x8xf32>
    %224 = vector.shape_cast %223 : vector<32x8xf32> to vector<2x16x8xf32>
    "tpu.trace_start"() <{level = 10 : i32, message = "bqe,bke->bqk"}> : () -> ()
    %cst_191 = arith.constant dense<0.000000e+00> : vector<2x16x16xf32>
    %225 = tpu.matmul %216, %220, %cst_191 {dimension_numbers = #tpu.dot_dimension_numbers<[2], [2], [1], [1], [0, 0, 0, 1, 1, 1], [0], [0]>} : vector<2x16x8xf32>, vector<2x16x8xf32>, vector<2x16x16xf32> -> vector<2x16x16xf32>
    "tpu.trace_stop"() : () -> ()
    %226 = tpu.concatenate %186, %199, %212, %225 in 0 : vector<2x16x16xf32>, vector<2x16x16xf32>, vector<2x16x16xf32>, vector<2x16x16xf32> -> vector<8x16x16xf32>
    %227 = arith.addf %226, %25 : vector<8x16x16xf32>
    %228 = tpu.concatenate %185, %198, %211, %224 in 0 : vector<2x16x8xf32>, vector<2x16x8xf32>, vector<2x16x8xf32>, vector<2x16x8xf32> -> vector<8x16x8xf32>
    %cst_192 = arith.constant dense<0xFF800000> : vector<8x16xf32>
    %229 = vector.multi_reduction <maximumf>, %227, %cst_192 [2] : vector<8x16x16xf32> to vector<8x16xf32>
    %230 = vector.shape_cast %229 : vector<8x16xf32> to vector<8x16x1xf32>
    %231 = vector.broadcast %230 : vector<8x16x1xf32> to vector<8x16x16xf32>
    %232 = arith.subf %227, %231 : vector<8x16x16xf32>
    %233 = math.exp %232 : vector<8x16x16xf32>
    %cst_193 = arith.constant dense<0.000000e+00> : vector<8x16xf32>
    %234 = vector.multi_reduction <add>, %233, %cst_193 [2] : vector<8x16x16xf32> to vector<8x16xf32>
    %235 = vector.shape_cast %234 : vector<8x16xf32> to vector<8x16x1xf32>
    %236 = vector.broadcast %235 : vector<8x16x1xf32> to vector<8x16x16xf32>
    %237 = arith.divf %233, %236 : vector<8x16x16xf32>
    "tpu.trace_start"() <{level = 10 : i32, message = "nqk,nke->nqe"}> : () -> ()
    %cst_194 = arith.constant dense<0.000000e+00> : vector<8x16x8xf32>
    %238 = tpu.matmul %237, %228, %cst_194 {dimension_numbers = #tpu.dot_dimension_numbers<[2], [1], [1], [2], [0, 0, 0, 1, 1, 2], [0], [0]>} : vector<8x16x16xf32>, vector<8x16x8xf32>, vector<8x16x8xf32> -> vector<8x16x8xf32>
    "tpu.trace_stop"() : () -> ()
    %239 = vector.extract_strided_slice %238 {offsets = [0, 0, 0], sizes = [2, 16, 8], strides = [1, 1, 1]} : vector<8x16x8xf32> to vector<2x16x8xf32>
    %240 = vector.shape_cast %239 : vector<2x16x8xf32> to vector<32x8xf32>
    %c1_195 = arith.constant 1 : index
    %c0_196 = arith.constant 0 : index
    %c0_197 = arith.constant 0 : index
    %c0_198 = arith.constant 0 : index
    %241 = vector.load %arg12[%c1_195, %c0_196, %c0_197, %c0_198] : memref<2x4x8x32xf32, #tpu.memory_space<vmem>>, vector<1x1x8x32xf32>
    %242 = vector.shape_cast %241 : vector<1x1x8x32xf32> to vector<8x32xf32>
    %cst_199 = arith.constant dense<0.000000e+00> : vector<32x32xf32>
    %243 = tpu.matmul %240, %242, %cst_199 {dimension_numbers = #tpu.dot_dimension_numbers<[1], [0], [0], [1], [0, 0, 1, 1], [], []>} : vector<32x8xf32>, vector<8x32xf32>, vector<32x32xf32> -> vector<32x32xf32>
    %244 = vector.extract_strided_slice %238 {offsets = [2, 0, 0], sizes = [2, 16, 8], strides = [1, 1, 1]} : vector<8x16x8xf32> to vector<2x16x8xf32>
    %245 = vector.shape_cast %244 : vector<2x16x8xf32> to vector<32x8xf32>
    %c1_200 = arith.constant 1 : index
    %c1_201 = arith.constant 1 : index
    %c0_202 = arith.constant 0 : index
    %c0_203 = arith.constant 0 : index
    %246 = vector.load %arg12[%c1_200, %c1_201, %c0_202, %c0_203] : memref<2x4x8x32xf32, #tpu.memory_space<vmem>>, vector<1x1x8x32xf32>
    %247 = vector.shape_cast %246 : vector<1x1x8x32xf32> to vector<8x32xf32>
    %cst_204 = arith.constant dense<0.000000e+00> : vector<32x32xf32>
    %248 = tpu.matmul %245, %247, %cst_204 {dimension_numbers = #tpu.dot_dimension_numbers<[1], [0], [0], [1], [0, 0, 1, 1], [], []>} : vector<32x8xf32>, vector<8x32xf32>, vector<32x32xf32> -> vector<32x32xf32>
    %249 = arith.addf %243, %248 : vector<32x32xf32>
    %250 = vector.extract_strided_slice %238 {offsets = [4, 0, 0], sizes = [2, 16, 8], strides = [1, 1, 1]} : vector<8x16x8xf32> to vector<2x16x8xf32>
    %251 = vector.shape_cast %250 : vector<2x16x8xf32> to vector<32x8xf32>
    %c1_205 = arith.constant 1 : index
    %c2_206 = arith.constant 2 : index
    %c0_207 = arith.constant 0 : index
    %c0_208 = arith.constant 0 : index
    %252 = vector.load %arg12[%c1_205, %c2_206, %c0_207, %c0_208] : memref<2x4x8x32xf32, #tpu.memory_space<vmem>>, vector<1x1x8x32xf32>
    %253 = vector.shape_cast %252 : vector<1x1x8x32xf32> to vector<8x32xf32>
    %cst_209 = arith.constant dense<0.000000e+00> : vector<32x32xf32>
    %254 = tpu.matmul %251, %253, %cst_209 {dimension_numbers = #tpu.dot_dimension_numbers<[1], [0], [0], [1], [0, 0, 1, 1], [], []>} : vector<32x8xf32>, vector<8x32xf32>, vector<32x32xf32> -> vector<32x32xf32>
    %255 = arith.addf %249, %254 : vector<32x32xf32>
    %256 = vector.extract_strided_slice %238 {offsets = [6, 0, 0], sizes = [2, 16, 8], strides = [1, 1, 1]} : vector<8x16x8xf32> to vector<2x16x8xf32>
    %257 = vector.shape_cast %256 : vector<2x16x8xf32> to vector<32x8xf32>
    %c1_210 = arith.constant 1 : index
    %c3_211 = arith.constant 3 : index
    %c0_212 = arith.constant 0 : index
    %c0_213 = arith.constant 0 : index
    %258 = vector.load %arg12[%c1_210, %c3_211, %c0_212, %c0_213] : memref<2x4x8x32xf32, #tpu.memory_space<vmem>>, vector<1x1x8x32xf32>
    %259 = vector.shape_cast %258 : vector<1x1x8x32xf32> to vector<8x32xf32>
    %cst_214 = arith.constant dense<0.000000e+00> : vector<32x32xf32>
    %260 = tpu.matmul %257, %259, %cst_214 {dimension_numbers = #tpu.dot_dimension_numbers<[1], [0], [0], [1], [0, 0, 1, 1], [], []>} : vector<32x8xf32>, vector<8x32xf32>, vector<32x32xf32> -> vector<32x32xf32>
    %261 = arith.addf %255, %260 : vector<32x32xf32>
    %262 = vector.shape_cast %261 : vector<32x32xf32> to vector<2x16x32xf32>
    %263 = arith.addf %157, %262 : vector<2x16x32xf32>
    %c1_215 = arith.constant 1 : index
    %c0_216 = arith.constant 0 : index
    %c0_217 = arith.constant 0 : index
    %264 = vector.load %arg13[%c1_215, %c0_216, %c0_217] : memref<2x1x32xf32, #tpu.memory_space<vmem>>, vector<1x1x32xf32>
    %265 = vector.shape_cast %264 : vector<1x1x32xf32> to vector<1x32xf32>
    %266 = arith.mulf %263, %263 : vector<2x16x32xf32>
    %cst_218 = arith.constant dense<0.000000e+00> : vector<2x16xf32>
    %267 = vector.multi_reduction <add>, %266, %cst_218 [2] : vector<2x16x32xf32> to vector<2x16xf32>
    %268 = vector.shape_cast %267 : vector<2x16xf32> to vector<2x16x1xf32>
    %cst_219 = arith.constant 3.200000e+01 : f32
    %269 = vector.broadcast %cst_219 : f32 to vector<2x16x1xf32>
    %270 = arith.divf %268, %269 : vector<2x16x1xf32>
    %cst_220 = arith.constant 9.99999997E-7 : f32
    %271 = vector.broadcast %cst_220 : f32 to vector<2x16x1xf32>
    %272 = arith.addf %270, %271 : vector<2x16x1xf32>
    %273 = math.rsqrt %272 : vector<2x16x1xf32>
    %274 = vector.broadcast %273 : vector<2x16x1xf32> to vector<2x16x32xf32>
    %275 = arith.mulf %263, %274 : vector<2x16x32xf32>
    %276 = vector.shape_cast %265 : vector<1x32xf32> to vector<1x1x32xf32>
    %277 = vector.broadcast %276 : vector<1x1x32xf32> to vector<2x16x32xf32>
    %278 = arith.mulf %275, %277 : vector<2x16x32xf32>
    %279 = vector.shape_cast %278 : vector<2x16x32xf32> to vector<32x32xf32>
    %c1_221 = arith.constant 1 : index
    %c0_222 = arith.constant 0 : index
    %c0_223 = arith.constant 0 : index
    %280 = vector.load %arg14[%c1_221, %c0_222, %c0_223] : memref<2x32x64xf32, #tpu.memory_space<vmem>>, vector<1x32x64xf32>
    %281 = vector.shape_cast %280 : vector<1x32x64xf32> to vector<32x64xf32>
    %cst_224 = arith.constant dense<0.000000e+00> : vector<32x64xf32>
    %282 = tpu.matmul %279, %281, %cst_224 {dimension_numbers = #tpu.dot_dimension_numbers<[1], [0], [0], [1], [0, 0, 1, 1], [], []>} : vector<32x32xf32>, vector<32x64xf32>, vector<32x64xf32> -> vector<32x64xf32>
    %cst_225 = arith.constant 0.000000e+00 : f32
    %283 = vector.broadcast %cst_225 : f32 to vector<32x64xf32>
    %284 = arith.maximumf %282, %283 : vector<32x64xf32>
    %c1_226 = arith.constant 1 : index
    %c0_227 = arith.constant 0 : index
    %c0_228 = arith.constant 0 : index
    %285 = vector.load %arg15[%c1_226, %c0_227, %c0_228] : memref<2x64x32xf32, #tpu.memory_space<vmem>>, vector<1x64x32xf32>
    %286 = vector.shape_cast %285 : vector<1x64x32xf32> to vector<64x32xf32>
    %cst_229 = arith.constant dense<0.000000e+00> : vector<32x32xf32>
    %287 = tpu.matmul %284, %286, %cst_229 {dimension_numbers = #tpu.dot_dimension_numbers<[1], [0], [0], [1], [0, 0, 1, 1], [], []>} : vector<32x64xf32>, vector<64x32xf32>, vector<32x32xf32> -> vector<32x32xf32>
    %288 = vector.shape_cast %287 : vector<32x32xf32> to vector<2x16x32xf32>
    %289 = arith.addf %263, %288 : vector<2x16x32xf32>
    %c0_230 = arith.constant 0 : index
    %c0_231 = arith.constant 0 : index
    %290 = vector.load %arg16[%c0_230, %c0_231] : memref<1x32xf32, #tpu.memory_space<vmem>>, vector<1x32xf32>
    %291 = arith.mulf %289, %289 : vector<2x16x32xf32>
    %cst_232 = arith.constant dense<0.000000e+00> : vector<2x16xf32>
    %292 = vector.multi_reduction <add>, %291, %cst_232 [2] : vector<2x16x32xf32> to vector<2x16xf32>
    %293 = vector.shape_cast %292 : vector<2x16xf32> to vector<2x16x1xf32>
    %cst_233 = arith.constant 3.200000e+01 : f32
    %294 = vector.broadcast %cst_233 : f32 to vector<2x16x1xf32>
    %295 = arith.divf %293, %294 : vector<2x16x1xf32>
    %cst_234 = arith.constant 9.99999997E-7 : f32
    %296 = vector.broadcast %cst_234 : f32 to vector<2x16x1xf32>
    %297 = arith.addf %295, %296 : vector<2x16x1xf32>
    %298 = math.rsqrt %297 : vector<2x16x1xf32>
    %299 = vector.broadcast %298 : vector<2x16x1xf32> to vector<2x16x32xf32>
    %300 = arith.mulf %289, %299 : vector<2x16x32xf32>
    %301 = vector.shape_cast %290 : vector<1x32xf32> to vector<1x1x32xf32>
    %302 = vector.broadcast %301 : vector<1x1x32xf32> to vector<2x16x32xf32>
    %303 = arith.mulf %300, %302 : vector<2x16x32xf32>
    %c0_235 = arith.constant 0 : index
    %c0_236 = arith.constant 0 : index
    %304 = vector.load %arg7[%c0_235, %c0_236] : memref<16x1xf32, #tpu.memory_space<vmem>>, vector<16x1xf32>
    %305 = vector.shape_cast %304 : vector<16x1xf32> to vector<1x16x1xf32>
    %306 = vector.broadcast %305 : vector<1x16x1xf32> to vector<2x16x32xf32>
    %307 = arith.mulf %303, %306 : vector<2x16x32xf32>
    %cst_237 = arith.constant dense<0.000000e+00> : vector<2x32xf32>
    %308 = vector.multi_reduction <add>, %307, %cst_237 [1] : vector<2x16x32xf32> to vector<2x32xf32>
    %cst_238 = arith.constant -1.000000e+04 : f32
    %cst_239 = arith.constant 1.000000e+04 : f32
    %309 = vector.broadcast %cst_238 : f32 to vector<2x32xf32>
    %310 = arith.maximumf %309, %308 : vector<2x32xf32>
    %311 = vector.broadcast %cst_239 : f32 to vector<2x32xf32>
    %312 = arith.minimumf %311, %310 : vector<2x32xf32>
    %c0_240 = arith.constant 0 : index
    %c0_241 = arith.constant 0 : index
    %313 = vector.load %arg20[%c0_240, %c0_241] : memref<2x32xf32, #tpu.memory_space<vmem>>, vector<2x32xf32>
    tpu.vector_store %arg20[%c0_240, %c0_241], %312 {strides = array<i32>} : memref<2x32xf32, #tpu.memory_space<vmem>>, vector<2x32xf32>,
    %c0_242 = arith.constant 0 : index
    %c0_243 = arith.constant 0 : index
    %314 = vector.load %arg17[%c0_242, %c0_243] : memref<32x2xf32, #tpu.memory_space<vmem>>, vector<32x2xf32>
    %cst_244 = arith.constant dense<0.000000e+00> : vector<2x2xf32>
    %315 = tpu.matmul %312, %314, %cst_244 {dimension_numbers = #tpu.dot_dimension_numbers<[1], [0], [0], [1], [0, 0, 1, 1], [], []>} : vector<2x32xf32>, vector<32x2xf32>, vector<2x2xf32> -> vector<2x2xf32>
    %c0_245 = arith.constant 0 : index
    %c0_246 = arith.constant 0 : index
    %316 = vector.load %arg18[%c0_245, %c0_246] : memref<1x2xf32, #tpu.memory_space<vmem>>, vector<1x2xf32>
    %317 = vector.broadcast %316 : vector<1x2xf32> to vector<2x2xf32>
    %318 = arith.addf %315, %317 : vector<2x2xf32>
    %c0_247 = arith.constant 0 : index
    %c0_248 = arith.constant 0 : index
    %319 = vector.load %arg19[%c0_247, %c0_248] : memref<2x2xf32, #tpu.memory_space<vmem>>, vector<2x2xf32>
    tpu.vector_store %arg19[%c0_247, %c0_248], %318 {strides = array<i32>} : memref<2x2xf32, #tpu.memory_space<vmem>>, vector<2x2xf32>,
    return
  }
}

</mosaic_0001>

<llo_original>
// kernel: forward.1
$region0: #{forward.1}
  #allocation0 [shape = 'u32[]', space=smem, size = 0x4, offset = 0x4, fixed_abs, tag = 'smem constant byte address 0x4 - core index']
  #allocation1 [shape = 'u32[144,128]{1,0:T(1,128)}', space=vmem, size = 0x12000, scoped, tag = 'internal scratch']
  %s0 = inlined_call_operand.vmem [shape: f32[16,16], index: 0, kind: input, shape index: {}]
  %s1 = inlined_call_operand.vmem [shape: f32[16,32], index: 1, kind: input, shape index: {}]
  %s2 = inlined_call_operand.vmem [shape: f32[1,32], index: 2, kind: input, shape index: {}]
  %s3 = inlined_call_operand.vmem [shape: f32[16,1], index: 3, kind: input, shape index: {}]
  %s4 = inlined_call_operand.vmem [shape: f32[2,16,32], index: 4, kind: input, shape index: {}]
  %s5 = inlined_call_operand.vmem [shape: f32[4,16,16], index: 5, kind: input, shape index: {}]
  %s6 = inlined_call_operand.vmem [shape: f32[2,16], index: 6, kind: input, shape index: {}]
  %s7 = inlined_call_operand.vmem [shape: f32[16,1], index: 7, kind: input, shape index: {}]
  %s8 = inlined_call_operand.vmem [shape: f32[2,1,32], index: 8, kind: input, shape index: {}]
  %s9 = inlined_call_operand.vmem [shape: f32[2,4,32,8], index: 9, kind: input, shape index: {}]
  %s10 = inlined_call_operand.vmem [shape: f32[2,4,32,8], index: 10, kind: input, shape index: {}]
  %s11 = inlined_call_operand.vmem [shape: f32[2,4,32,8], index: 11, kind: input, shape index: {}]
  %s12 = inlined_call_operand.vmem [shape: f32[2,4,8,32], index: 12, kind: input, shape index: {}]
  %s13 = inlined_call_operand.vmem [shape: f32[2,1,32], index: 13, kind: input, shape index: {}]
  %s14 = inlined_call_operand.vmem [shape: f32[2,32,64], index: 14, kind: input, shape index: {}]
  %s15 = inlined_call_operand.vmem [shape: f32[2,64,32], index: 15, kind: input, shape index: {}]
  %s16 = inlined_call_operand.vmem [shape: f32[1,32], index: 16, kind: input, shape index: {}]
  %s17 = inlined_call_operand.vmem [shape: f32[32,2], index: 17, kind: input, shape index: {}]
  %s18 = inlined_call_operand.vmem [shape: f32[1,2], index: 18, kind: input, shape index: {}]
  %s19 = inlined_call_operand.hbm [shape: f32[2,2], index: 19, kind: output, shape index: {0}]
  %s20 = inlined_call_operand.hbm [shape: f32[2,32], index: 20, kind: output, shape index: {1}]
  %21 = xla_tuple %s19, %s20
  %s22 = sld [smem:[#allocation0]]
  $region94: #{forward.1} parent=0
    _
  %s24 = ssub.s32 1, %s22
  %s25 = scalar_select 0, %s24, %s22
  $region1: #{forward.1} parent=0
    #allocation2 [shape = 'u8[1024]{0}', space=vmem, size = 0x400, scoped, tag = 'output window, operand 0, single buffered']
    #allocation3 [shape = 's32[1]{0}', space=sflag, size = 0x4, scoped, tag = 'scoped memory for forward.1']
    #allocation4 [shape = 'u8[1024]{0}', space=vmem, size = 0x400, scoped, tag = 'output window, operand 1, single buffered']
    #allocation5 [shape = 's32[1]{0}', space=sflag, size = 0x4, scoped, tag = 'scoped memory for forward.1']
    %26 = vsyncpa [#allocation3], 0
    %27 = vsyncpa [#allocation5], 0
    // Predicated region
    $region2: #{forward.1} parent=1 // pred_check
      _
    $region3: #{forward.1} parent=1 // pred_check_branch
      %29 = sbr.rel (0) target = $region5
    $region4: #{forward.1} parent=1 // pred_region
      _
    $region5: #{forward.1} parent=1 // pred_fallthru
      _
    // Predicated region
    $region6: #{forward.1} parent=1 // pred_check
      _
    $region7: #{forward.1} parent=1 // pred_check_branch
      %31 = sbr.rel (0) target = $region9
    $region8: #{forward.1} parent=1 // pred_region
      _
    $region9: #{forward.1} parent=1 // pred_fallthru
      _
    // Predicated region
    $region10: #{forward.1} parent=1 // pred_check
      _
    $region11: #{forward.1} parent=1 // pred_check_branch
      %33 = sbr.rel (0) target = $region13
    $region12: #{forward.1} parent=1 // pred_region
      _
    $region13: #{forward.1} parent=1 // pred_fallthru
      _
    // Predicated region
    $region14: #{forward.1} parent=1 // pred_check
      _
    $region15: #{forward.1} parent=1 // pred_check_branch
      %35 = sbr.rel (0) target = $region17
    $region16: #{forward.1} parent=1 // pred_region
      _
    $region17: #{forward.1} parent=1 // pred_fallthru
      _
    // Predicated region
    $region18: #{forward.1} parent=1 // pred_check
      _
    $region19: #{forward.1} parent=1 // pred_check_branch
      %37 = sbr.rel (0) target = $region21
    $region20: #{forward.1} parent=1 // pred_region
      _
    $region21: #{forward.1} parent=1 // pred_fallthru
      _
    // Predicated region
    $region22: #{forward.1} parent=1 // pred_check
      _
    $region23: #{forward.1} parent=1 // pred_check_branch
      %39 = sbr.rel (0) target = $region25
    $region24: #{forward.1} parent=1 // pred_region
      _
    $region25: #{forward.1} parent=1 // pred_fallthru
      _
    // Predicated region
    $region26: #{forward.1} parent=1 // pred_check
      _
    $region27: #{forward.1} parent=1 // pred_check_branch
      %41 = sbr.rel (0) target = $region29
    $region28: #{forward.1} parent=1 // pred_region
      _
    $region29: #{forward.1} parent=1 // pred_fallthru
      _
    // Predicated region
    $region30: #{forward.1} parent=1 // pred_check
      _
    $region31: #{forward.1} parent=1 // pred_check_branch
      %43 = sbr.rel (0) target = $region33
    $region32: #{forward.1} parent=1 // pred_region
      _
    $region33: #{forward.1} parent=1 // pred_fallthru
      _
    // Predicated region
    $region34: #{forward.1} parent=1 // pred_check
      _
    $region35: #{forward.1} parent=1 // pred_check_branch
      %45 = sbr.rel (0) target = $region37
    $region36: #{forward.1} parent=1 // pred_region
      _
    $region37: #{forward.1} parent=1 // pred_fallthru
      _
    // Predicated region
    $region38: #{forward.1} parent=1 // pred_check
      _
    $region39: #{forward.1} parent=1 // pred_check_branch
      %47 = sbr.rel (0) target = $region41
    $region40: #{forward.1} parent=1 // pred_region
      _
    $region41: #{forward.1} parent=1 // pred_fallthru
      _
    // Predicated region
    $region42: #{forward.1} parent=1 // pred_check
      _
    $region43: #{forward.1} parent=1 // pred_check_branch
      %49 = sbr.rel (0) target = $region45
    $region44: #{forward.1} parent=1 // pred_region
      _
    $region45: #{forward.1} parent=1 // pred_fallthru
      _
    // Predicated region
    $region46: #{forward.1} parent=1 // pred_check
      _
    $region47: #{forward.1} parent=1 // pred_check_branch
      %51 = sbr.rel (0) target = $region49
    $region48: #{forward.1} parent=1 // pred_region
      _
    $region49: #{forward.1} parent=1 // pred_fallthru
      _
    // Predicated region
    $region50: #{forward.1} parent=1 // pred_check
      _
    $region51: #{forward.1} parent=1 // pred_check_branch
      %53 = sbr.rel (0) target = $region53
    $region52: #{forward.1} parent=1 // pred_region
      _
    $region53: #{forward.1} parent=1 // pred_fallthru
      _
    // Predicated region
    $region54: #{forward.1} parent=1 // pred_check
      _
    $region55: #{forward.1} parent=1 // pred_check_branch
      %55 = sbr.rel (0) target = $region57
    $region56: #{forward.1} parent=1 // pred_region
      _
    $region57: #{forward.1} parent=1 // pred_fallthru
      _
    // Predicated region
    $region58: #{forward.1} parent=1 // pred_check
      _
    $region59: #{forward.1} parent=1 // pred_check_branch
      %57 = sbr.rel (0) target = $region61
    $region60: #{forward.1} parent=1 // pred_region
      _
    $region61: #{forward.1} parent=1 // pred_fallthru
      _
    // Predicated region
    $region62: #{forward.1} parent=1 // pred_check
      _
    $region63: #{forward.1} parent=1 // pred_check_branch
      %59 = sbr.rel (0) target = $region65
    $region64: #{forward.1} parent=1 // pred_region
      _
    $region65: #{forward.1} parent=1 // pred_fallthru
      _
    // Predicated region
    $region66: #{forward.1} parent=1 // pred_check
      _
    $region67: #{forward.1} parent=1 // pred_check_branch
      %61 = sbr.rel (0) target = $region69
    $region68: #{forward.1} parent=1 // pred_region
      _
    $region69: #{forward.1} parent=1 // pred_fallthru
      _
    // Predicated region
    $region70: #{forward.1} parent=1 // pred_check
      _
    $region71: #{forward.1} parent=1 // pred_check_branch
      %63 = sbr.rel (0) target = $region73
    $region72: #{forward.1} parent=1 // pred_region
      _
    $region73: #{forward.1} parent=1 // pred_fallthru
      _
    // Predicated region
    $region74: #{forward.1} parent=1 // pred_check
      _
    $region75: #{forward.1} parent=1 // pred_check_branch
      %65 = sbr.rel (0) target = $region77
    $region76: #{forward.1} parent=1 // pred_region
      _
    $region77: #{forward.1} parent=1 // pred_fallthru
      _
    %v66 = vld [vmem:[%s0] sm:$0xff]
    %v67 = vld [vmem:[%s0 + $0x8] sm:$0xff]
    %v68 = vld [vmem:[%s1] sm:$0xff]
    %v69 = vld [vmem:[%s1 + $0x8] sm:$0xff]
    %v70 = vld [vmem:[%s2] sm:$0x1]
    %v72 = vlaneseq
    %v73 = vshrl.u32 %v72, 7
    %v74 = vsub.s32 0, %v73
    %v75 = vrot.slane %v70, %v74
    %vm77 = vcmask 130048
    %v79 = vsel %vm77, %v66, 0
    %v82 = vsel %vm77, %v67, 0
    %84 = vmatprep.subr.mxu0 0.0
    %85 = vmatpush1.msra.mxu0 0.0
    %86 = vmatprep.subr.mxu0 0.0
    %87 = vmatpush1.msra.mxu0 0.0
    %88 = vmatprep.subr.mxu0 0.0
    %89 = vmatpush1.msra.mxu0 0.0
    %90 = vmatprep.subr.mxu0 0.0
    %91 = vmatpush1.msra.mxu0 0.0
    %92 = vmatprep.subr.mxu0 0.0
    %93 = vmatpush1.msra.mxu0 0.0
    %94 = vmatprep.subr.mxu0 0.0
    %95 = vmatpush1.msra.mxu0 0.0
    %96 = vmatprep.subr.mxu0 0.0
    %97 = vmatpush1.msra.mxu0 0.0
    %98 = vmatprep.subr.mxu0 0.0
    %99 = vmatpush1.msra.mxu0 0.0
    %100 = vmatprep.subr.mxu0 0.0
    %101 = vmatpush1.msra.mxu0 0.0
    %102 = vmatprep.subr.mxu0 0.0
    %103 = vmatpush1.msra.mxu0 0.0
    %104 = vmatprep.subr.mxu0 0.0
    %105 = vmatpush1.msra.mxu0 0.0
    %106 = vmatprep.subr.mxu0 0.0
    %107 = vmatpush1.msra.mxu0 0.0
    %108 = vmatprep.subr.mxu0 0.0
    %109 = vmatpush1.msra.mxu0 0.0
    %110 = vmatprep.subr.mxu0 0.0
    %111 = vmatpush1.msra.mxu0 0.0
    %112 = vmatprep.subr.mxu0 0.0
    %113 = vmatpush1.msra.mxu0 %v69
    %114 = vmatprep.subr.mxu0 0.0
    %115 = vmatpush1.msra.mxu0 %v68
    %116 = vmatprep.subr.mxu0 0.0
    %117 = vmatpush2.msra.mxu0 0.0
    %118 = vmatprep.subr.mxu0 0.0
    %119 = vmatpush2.msra.mxu0 0.0
    %120 = vmatprep.subr.mxu0 0.0
    %121 = vmatpush2.msra.mxu0 0.0
    %122 = vmatprep.subr.mxu0 0.0
    %123 = vmatpush2.msra.mxu0 0.0
    %124 = vmatprep.subr.mxu0 0.0
    %125 = vmatpush2.msra.mxu0 0.0
    %126 = vmatprep.subr.mxu0 0.0
    %127 = vmatpush2.msra.mxu0 0.0
    %128 = vmatprep.subr.mxu0 0.0
    %129 = vmatpush2.msra.mxu0 0.0
    %130 = vmatprep.subr.mxu0 0.0
    %131 = vmatpush2.msra.mxu0 0.0
    %132 = vmatprep.subr.mxu0 0.0
    %133 = vmatpush2.msra.mxu0 0.0
    %134 = vmatprep.subr.mxu0 0.0
    %135 = vmatpush2.msra.mxu0 0.0
    %136 = vmatprep.subr.mxu0 0.0
    %137 = vmatpush2.msra.mxu0 0.0
    %138 = vmatprep.subr.mxu0 0.0
    %139 = vmatpush2.msra.mxu0 0.0
    %140 = vmatprep.subr.mxu0 0.0
    %141 = vmatpush2.msra.mxu0 0.0
    %142 = vmatprep.subr.mxu0 0.0
    %143 = vmatpush2.msra.mxu0 0.0
    %144 = vmatprep.subr.mxu0 0.0
    %145 = vmatpush2.msra.mxu0 0.0
    %146 = vmatprep.subr.mxu0 0.0
    %147 = vmatpush2.msra.mxu0 0.0
    %148 = vmatprep.mubr.f32.mxu0 0.0
    %149 = vmatmul.mubr.f32.gmra.mxu0 %v79
    %v150 = vpop.f32.mrf.mxu0
    %v151 = vadd.f32 %v75, %v150
    %v152 = vpop.f32.mrf.mxu0
    %153 = vmatprep.mubr.f32.mxu0 0.0
    %154 = vmatmul.mubr.f32.gmra.mxu0 %v82
    %v155 = vpop.f32.mrf.mxu0
    %v156 = vadd.f32 %v75, %v155
    %v157 = vpop.f32.mrf.mxu0
    %158 = vdwg.mxu0
    %v159 = vtanh.pop %v151
    %v160 = vtanh.pop %v156
    %v161 = vld [vmem:[%s3] sm:$0xff]
    %v162 = vld [vmem:[%s3 + $0x8] sm:$0xff]
    %164 = vset.pattern.permute.xlu0 0
    %165 = vperm.xlu0 %164, %v161
    %v166 = vpop.permute.xlu0 %165
    %169 = vset.pattern.permute.xlu0 0
    %170 = vperm.xlu0 %169, %v162
    %v171 = vpop.permute.xlu0 %170
    %v173 = vmul.f32 %v159, %v166
    %v174 = vmul.f32 %v160, %v171
    %v175 = vld [vmem:[%s4] sm:$0xff]
    %v176 = vld [vmem:[%s4 + $0x8] sm:$0xff]
    %v177 = vld [vmem:[%s4 + $0x10] sm:$0xff]
    %v178 = vld [vmem:[%s4 + $0x18] sm:$0xff]
    %v179 = vadd.f32 %v175, %v173
    %v180 = vadd.f32 %v176, %v174
    %v181 = vadd.f32 %v177, %v173
    %v182 = vadd.f32 %v178, %v174
    %v183 = vld [vmem:[%s6] sm:$0x3]
    %v184 = vsub.f32 1.0, %v183
    %v185 = vmul.f32 %v184, -1e+09
    %v186 = vld [vmem:[%s5] sm:$0xff]
    %v187 = vld [vmem:[%s5 + $0x8] sm:$0xff]
    %v188 = vld [vmem:[%s5 + $0x10] sm:$0xff]
    %v189 = vld [vmem:[%s5 + $0x18] sm:$0xff]
    %v190 = vld [vmem:[%s5 + $0x20] sm:$0xff]
    %v191 = vld [vmem:[%s5 + $0x28] sm:$0xff]
    %v192 = vld [vmem:[%s5 + $0x30] sm:$0xff]
    %v193 = vld [vmem:[%s5 + $0x38] sm:$0xff]
    %v196 = vunpack.c.l.s4 1966171168
    %v197 = vunpack.c.0.s8 %v196
    %v198 = vlaneseq
    %v199 = vshrl.u32 %v198, 7
    %v200 = vsub.s32 %v197, %v199
    %v201 = vrot.slane %v185, %v200
    %v202 = vcombine.high %v201, %v201
    %v204 = vunpack.c.l.s4 1966171168
    %v205 = vunpack.c.0.s8 %v204
    %v206 = vlaneseq
    %v207 = vshrl.u32 %v206, 7
    %v208 = vsub.s32 %v205, %v207
    %v209 = vrot.slane %v201, %v208
    %v211 = vunpack.c.l.s4 1966171168
    %v212 = vunpack.c.0.s8 %v211
    %v213 = vlaneseq
    %v214 = vshrl.u32 %v213, 7
    %v215 = vsub.s32 %v212, %v214
    %v216 = vrot.slane %v202, %v215
    %v217 = vlaneseq
    %v218 = vshrl.u32 %v217, 7
    %v219 = vsub.s32 0, %v218
    %v220 = vrot.slane %v209, %v219
    %v221 = vlaneseq
    %v222 = vshrl.u32 %v221, 7
    %v223 = vsub.s32 0, %v222
    %v224 = vrot.slane %v216, %v223
    %v227 = vadd.f32 %v186, %v220
    %v228 = vadd.f32 %v187, %v220
    %v229 = vadd.f32 %v186, %v224
    %v230 = vadd.f32 %v187, %v224
    %v231 = vadd.f32 %v188, %v220
    %v232 = vadd.f32 %v189, %v220
    %v233 = vadd.f32 %v188, %v224
    %v234 = vadd.f32 %v189, %v224
    %v235 = vadd.f32 %v190, %v220
    %v236 = vadd.f32 %v191, %v220
    %v237 = vadd.f32 %v190, %v224
    %v238 = vadd.f32 %v191, %v224
    %v239 = vadd.f32 %v192, %v220
    %v240 = vadd.f32 %v193, %v220
    %v241 = vadd.f32 %v192, %v224
    %v242 = vadd.f32 %v193, %v224
    %v243 = vld [vmem:[%s8] sm:$0x1]
    %v244 = vmul.f32 %v179, %v179
    %v245 = vmul.f32 %v180, %v180
    %v246 = vmul.f32 %v181, %v181
    %v247 = vmul.f32 %v182, %v182
    %vm248 = vcmask 261120
    %v249 = vsel %vm248, %v244, 0.0
    %250 = vadd.xlane.f32.xlu0 %v249
    %v251 = vpop.xlane.xlu0 %250
    %v252 = vsel %vm248, %v245, 0.0
    %253 = vadd.xlane.f32.xlu0 %v252
    %v254 = vpop.xlane.xlu0 %253
    %v255 = vsel %vm248, %v246, 0.0
    %256 = vadd.xlane.f32.xlu0 %v255
    %v257 = vpop.xlane.xlu0 %256
    %v258 = vsel %vm248, %v247, 0.0
    %259 = vadd.xlane.f32.xlu0 %v258
    %v260 = vpop.xlane.xlu0 %259
    %v261 = vrcp.pop 32.0
    %v262 = vmul.f32 %v251, %v261
    %v263 = vmul.f32 %v254, %v261
    %v264 = vmul.f32 %v257, %v261
    %v265 = vmul.f32 %v260, %v261
    %v266 = vadd.f32 %v262, 1e-06
    %v267 = vadd.f32 %v263, 1e-06
    %v268 = vadd.f32 %v264, 1e-06
    %v269 = vadd.f32 %v265, 1e-06
    %v270 = vrsqrt.pop %v266
    %v271 = vrsqrt.pop %v267
    %v272 = vrsqrt.pop %v268
    %v273 = vrsqrt.pop %v269
    %v274 = vmul.f32 %v179, %v270
    %v275 = vmul.f32 %v180, %v271
    %v276 = vmul.f32 %v181, %v272
    %v277 = vmul.f32 %v182, %v273
    %v279 = vlaneseq
    %v280 = vshrl.u32 %v279, 7
    %v281 = vsub.s32 0, %v280
    %v282 = vrot.slane %v243, %v281
    %v284 = vmul.f32 %v274, %v282
    %v285 = vmul.f32 %v275, %v282
    %v286 = vmul.f32 %v276, %v282
    %v287 = vmul.f32 %v277, %v282
    %v288 = vld [vmem:[%s9] sm:$0xff]
    %v289 = vld [vmem:[%s9 + $0x8] sm:$0xff]
    %v290 = vld [vmem:[%s9 + $0x10] sm:$0xff]
    %v291 = vld [vmem:[%s9 + $0x18] sm:$0xff]
    %v293 = vsel %vm248, %v284, 0
    %v296 = vsel %vm248, %v285, 0
    %v299 = vsel %vm248, %v286, 0
    %v302 = vsel %vm248, %v287, 0
    %304 = vmatprep.subr.mxu0 0.0
    %305 = vmatpush1.msra.mxu0 0.0
    %306 = vmatprep.subr.mxu0 0.0
    %307 = vmatpush1.msra.mxu0 0.0
    %308 = vmatprep.subr.mxu0 0.0
    %309 = vmatpush1.msra.mxu0 0.0
    %310 = vmatprep.subr.mxu0 0.0
    %311 = vmatpush1.msra.mxu0 0.0
    %312 = vmatprep.subr.mxu0 0.0
    %313 = vmatpush1.msra.mxu0 0.0
    %314 = vmatprep.subr.mxu0 0.0
    %315 = vmatpush1.msra.mxu0 0.0
    %316 = vmatprep.subr.mxu0 0.0
    %317 = vmatpush1.msra.mxu0 0.0
    %318 = vmatprep.subr.mxu0 0.0
    %319 = vmatpush1.msra.mxu0 0.0
    %320 = vmatprep.subr.mxu0 0.0
    %321 = vmatpush1.msra.mxu0 0.0
    %322 = vmatprep.subr.mxu0 0.0
    %323 = vmatpush1.msra.mxu0 0.0
    %324 = vmatprep.subr.mxu0 0.0
    %325 = vmatpush1.msra.mxu0 0.0
    %326 = vmatprep.subr.mxu0 0.0
    %327 = vmatpush1.msra.mxu0 0.0
    %328 = vmatprep.subr.mxu0 0.0
    %329 = vmatpush1.msra.mxu0 %v291
    %330 = vmatprep.subr.mxu0 0.0
    %331 = vmatpush1.msra.mxu0 %v290
    %332 = vmatprep.subr.mxu0 0.0
    %333 = vmatpush1.msra.mxu0 %v289
    %334 = vmatprep.subr.mxu0 0.0
    %335 = vmatpush1.msra.mxu0 %v288
    %336 = vmatprep.subr.mxu0 0.0
    %337 = vmatpush2.msra.mxu0 0.0
    %338 = vmatprep.subr.mxu0 0.0
    %339 = vmatpush2.msra.mxu0 0.0
    %340 = vmatprep.subr.mxu0 0.0
    %341 = vmatpush2.msra.mxu0 0.0
    %342 = vmatprep.subr.mxu0 0.0
    %343 = vmatpush2.msra.mxu0 0.0
    %344 = vmatprep.subr.mxu0 0.0
    %345 = vmatpush2.msra.mxu0 0.0
    %346 = vmatprep.subr.mxu0 0.0
    %347 = vmatpush2.msra.mxu0 0.0
    %348 = vmatprep.subr.mxu0 0.0
    %349 = vmatpush2.msra.mxu0 0.0
    %350 = vmatprep.subr.mxu0 0.0
    %351 = vmatpush2.msra.mxu0 0.0
    %352 = vmatprep.subr.mxu0 0.0
    %353 = vmatpush2.msra.mxu0 0.0
    %354 = vmatprep.subr.mxu0 0.0
    %355 = vmatpush2.msra.mxu0 0.0
    %356 = vmatprep.subr.mxu0 0.0
    %357 = vmatpush2.msra.mxu0 0.0
    %358 = vmatprep.subr.mxu0 0.0
    %359 = vmatpush2.msra.mxu0 0.0
    %360 = vmatprep.subr.mxu0 0.0
    %361 = vmatpush2.msra.mxu0 0.0
    %362 = vmatprep.subr.mxu0 0.0
    %363 = vmatpush2.msra.mxu0 0.0
    %364 = vmatprep.subr.mxu0 0.0
    %365 = vmatpush2.msra.mxu0 0.0
    %366 = vmatprep.subr.mxu0 0.0
    %367 = vmatpush2.msra.mxu0 0.0
    %368 = vmatprep.mubr.f32.mxu0 0.0
    %369 = vmatmul.mubr.f32.gmra.mxu0 %v293
    %v370 = vpop.f32.mrf.mxu0
    %v371 = vadd.f32 0.0, %v370
    %v372 = vpop.f32.mrf.mxu0
    %373 = vmatprep.mubr.f32.mxu0 0.0
    %374 = vmatmul.mubr.f32.gmra.mxu0 %v296
    %v375 = vpop.f32.mrf.mxu0
    %v376 = vadd.f32 0.0, %v375
    %v377 = vpop.f32.mrf.mxu0
    %378 = vmatprep.mubr.f32.mxu0 0.0
    %379 = vmatmul.mubr.f32.gmra.mxu0 %v299
    %v380 = vpop.f32.mrf.mxu0
    %v381 = vadd.f32 0.0, %v380
    %v382 = vpop.f32.mrf.mxu0
    %383 = vmatprep.mubr.f32.mxu0 0.0
    %384 = vmatmul.mubr.f32.gmra.mxu0 %v302
    %v385 = vpop.f32.mrf.mxu0
    %v386 = vadd.f32 0.0, %v385
    %v387 = vpop.f32.mrf.mxu0
    %388 = vdwg.mxu0
    %v389 = vld [vmem:[%s10] sm:$0xff]
    %v390 = vld [vmem:[%s10 + $0x8] sm:$0xff]
    %v391 = vld [vmem:[%s10 + $0x10] sm:$0xff]
    %v392 = vld [vmem:[%s10 + $0x18] sm:$0xff]
    %393 = vmatprep.subr.mxu0 0.0
    %394 = vmatpush1.msra.mxu0 0.0
    %395 = vmatprep.subr.mxu0 0.0
    %396 = vmatpush1.msra.mxu0 0.0
    %397 = vmatprep.subr.mxu0 0.0
    %398 = vmatpush1.msra.mxu0 0.0
    %399 = vmatprep.subr.mxu0 0.0
    %400 = vmatpush1.msra.mxu0 0.0
    %401 = vmatprep.subr.mxu0 0.0
    %402 = vmatpush1.msra.mxu0 0.0
    %403 = vmatprep.subr.mxu0 0.0
    %404 = vmatpush1.msra.mxu0 0.0
    %405 = vmatprep.subr.mxu0 0.0
    %406 = vmatpush1.msra.mxu0 0.0
    %407 = vmatprep.subr.mxu0 0.0
    %408 = vmatpush1.msra.mxu0 0.0
    %409 = vmatprep.subr.mxu0 0.0
    %410 = vmatpush1.msra.mxu0 0.0
    %411 = vmatprep.subr.mxu0 0.0
    %412 = vmatpush1.msra.mxu0 0.0
    %413 = vmatprep.subr.mxu0 0.0
    %414 = vmatpush1.msra.mxu0 0.0
    %415 = vmatprep.subr.mxu0 0.0
    %416 = vmatpush1.msra.mxu0 0.0
    %417 = vmatprep.subr.mxu0 0.0
    %418 = vmatpush1.msra.mxu0 %v392
    %419 = vmatprep.subr.mxu0 0.0
    %420 = vmatpush1.msra.mxu0 %v391
    %421 = vmatprep.subr.mxu0 0.0
    %422 = vmatpush1.msra.mxu0 %v390
    %423 = vmatprep.subr.mxu0 0.0
    %424 = vmatpush1.msra.mxu0 %v389
    %425 = vmatprep.subr.mxu0 0.0
    %426 = vmatpush2.msra.mxu0 0.0
    %427 = vmatprep.subr.mxu0 0.0
    %428 = vmatpush2.msra.mxu0 0.0
    %429 = vmatprep.subr.mxu0 0.0
    %430 = vmatpush2.msra.mxu0 0.0
    %431 = vmatprep.subr.mxu0 0.0
    %432 = vmatpush2.msra.mxu0 0.0
    %433 = vmatprep.subr.mxu0 0.0
    %434 = vmatpush2.msra.mxu0 0.0
    %435 = vmatprep.subr.mxu0 0.0
    %436 = vmatpush2.msra.mxu0 0.0
    %437 = vmatprep.subr.mxu0 0.0
    %438 = vmatpush2.msra.mxu0 0.0
    %439 = vmatprep.subr.mxu0 0.0
    %440 = vmatpush2.msra.mxu0 0.0
    %441 = vmatprep.subr.mxu0 0.0
    %442 = vmatpush2.msra.mxu0 0.0
    %443 = vmatprep.subr.mxu0 0.0
    %444 = vmatpush2.msra.mxu0 0.0
    %445 = vmatprep.subr.mxu0 0.0
    %446 = vmatpush2.msra.mxu0 0.0
    %447 = vmatprep.subr.mxu0 0.0
    %448 = vmatpush2.msra.mxu0 0.0
    %449 = vmatprep.subr.mxu0 0.0
    %450 = vmatpush2.msra.mxu0 0.0
    %451 = vmatprep.subr.mxu0 0.0
    %452 = vmatpush2.msra.mxu0 0.0
    %453 = vmatprep.subr.mxu0 0.0
    %454 = vmatpush2.msra.mxu0 0.0
    %455 = vmatprep.subr.mxu0 0.0
    %456 = vmatpush2.msra.mxu0 0.0
    %457 = vmatprep.mubr.f32.mxu0 0.0
    %458 = vmatmul.mubr.f32.gmra.mxu0 %v293
    %v459 = vpop.f32.mrf.mxu0
    %v460 = vadd.f32 0.0, %v459
    %v461 = vpop.f32.mrf.mxu0
    %462 = vmatprep.mubr.f32.mxu0 0.0
    %463 = vmatmul.mubr.f32.gmra.mxu0 %v296
    %v464 = vpop.f32.mrf.mxu0
    %v465 = vadd.f32 0.0, %v464
    %v466 = vpop.f32.mrf.mxu0
    %467 = vmatprep.mubr.f32.mxu0 0.0
    %468 = vmatmul.mubr.f32.gmra.mxu0 %v299
    %v469 = vpop.f32.mrf.mxu0
    %v470 = vadd.f32 0.0, %v469
    %v471 = vpop.f32.mrf.mxu0
    %472 = vmatprep.mubr.f32.mxu0 0.0
    %473 = vmatmul.mubr.f32.gmra.mxu0 %v302
    %v474 = vpop.f32.mrf.mxu0
    %v475 = vadd.f32 0.0, %v474
    %v476 = vpop.f32.mrf.mxu0
    %477 = vdwg.mxu0
    %v478 = vld [vmem:[%s11] sm:$0xff]
    %v479 = vld [vmem:[%s11 + $0x8] sm:$0xff]
    %v480 = vld [vmem:[%s11 + $0x10] sm:$0xff]
    %v481 = vld [vmem:[%s11 + $0x18] sm:$0xff]
    %482 = vmatprep.subr.mxu0 0.0
    %483 = vmatpush1.msra.mxu0 0.0
    %484 = vmatprep.subr.mxu0 0.0
    %485 = vmatpush1.msra.mxu0 0.0
    %486 = vmatprep.subr.mxu0 0.0
    %487 = vmatpush1.msra.mxu0 0.0
    %488 = vmatprep.subr.mxu0 0.0
    %489 = vmatpush1.msra.mxu0 0.0
    %490 = vmatprep.subr.mxu0 0.0
    %491 = vmatpush1.msra.mxu0 0.0
    %492 = vmatprep.subr.mxu0 0.0
    %493 = vmatpush1.msra.mxu0 0.0
    %494 = vmatprep.subr.mxu0 0.0
    %495 = vmatpush1.msra.mxu0 0.0
    %496 = vmatprep.subr.mxu0 0.0
    %497 = vmatpush1.msra.mxu0 0.0
    %498 = vmatprep.subr.mxu0 0.0
    %499 = vmatpush1.msra.mxu0 0.0
    %500 = vmatprep.subr.mxu0 0.0
    %501 = vmatpush1.msra.mxu0 0.0
    %502 = vmatprep.subr.mxu0 0.0
    %503 = vmatpush1.msra.mxu0 0.0
    %504 = vmatprep.subr.mxu0 0.0
    %505 = vmatpush1.msra.mxu0 0.0
    %506 = vmatprep.subr.mxu0 0.0
    %507 = vmatpush1.msra.mxu0 %v481
    %508 = vmatprep.subr.mxu0 0.0
    %509 = vmatpush1.msra.mxu0 %v480
    %510 = vmatprep.subr.mxu0 0.0
    %511 = vmatpush1.msra.mxu0 %v479
    %512 = vmatprep.subr.mxu0 0.0
    %513 = vmatpush1.msra.mxu0 %v478
    %514 = vmatprep.subr.mxu0 0.0
    %515 = vmatpush2.msra.mxu0 0.0
    %516 = vmatprep.subr.mxu0 0.0
    %517 = vmatpush2.msra.mxu0 0.0
    %518 = vmatprep.subr.mxu0 0.0
    %519 = vmatpush2.msra.mxu0 0.0
    %520 = vmatprep.subr.mxu0 0.0
    %521 = vmatpush2.msra.mxu0 0.0
    %522 = vmatprep.subr.mxu0 0.0
    %523 = vmatpush2.msra.mxu0 0.0
    %524 = vmatprep.subr.mxu0 0.0
    %525 = vmatpush2.msra.mxu0 0.0
    %526 = vmatprep.subr.mxu0 0.0
    %527 = vmatpush2.msra.mxu0 0.0
    %528 = vmatprep.subr.mxu0 0.0
    %529 = vmatpush2.msra.mxu0 0.0
    %530 = vmatprep.subr.mxu0 0.0
    %531 = vmatpush2.msra.mxu0 0.0
    %532 = vmatprep.subr.mxu0 0.0
    %533 = vmatpush2.msra.mxu0 0.0
    %534 = vmatprep.subr.mxu0 0.0
    %535 = vmatpush2.msra.mxu0 0.0
    %536 = vmatprep.subr.mxu0 0.0
    %537 = vmatpush2.msra.mxu0 0.0
    %538 = vmatprep.subr.mxu0 0.0
    %539 = vmatpush2.msra.mxu0 0.0
    %540 = vmatprep.subr.mxu0 0.0
    %541 = vmatpush2.msra.mxu0 0.0
    %542 = vmatprep.subr.mxu0 0.0
    %543 = vmatpush2.msra.mxu0 0.0
    %544 = vmatprep.subr.mxu0 0.0
    %545 = vmatpush2.msra.mxu0 0.0
    %546 = vmatprep.mubr.f32.mxu0 0.0
    %547 = vmatmul.mubr.f32.gmra.mxu0 %v293
    %v548 = vpop.f32.mrf.mxu0
    %v549 = vadd.f32 0.0, %v548
    %v550 = vpop.f32.mrf.mxu0
    %551 = vmatprep.mubr.f32.mxu0 0.0
    %552 = vmatmul.mubr.f32.gmra.mxu0 %v296
    %v553 = vpop.f32.mrf.mxu0
    %v554 = vadd.f32 0.0, %v553
    %v555 = vpop.f32.mrf.mxu0
    %556 = vmatprep.mubr.f32.mxu0 0.0
    %557 = vmatmul.mubr.f32.gmra.mxu0 %v299
    %v558 = vpop.f32.mrf.mxu0
    %v559 = vadd.f32 0.0, %v558
    %v560 = vpop.f32.mrf.mxu0
    %561 = vmatprep.mubr.f32.mxu0 0.0
    %562 = vmatmul.mubr.f32.gmra.mxu0 %v302
    %v563 = vpop.f32.mrf.mxu0
    %v564 = vadd.f32 0.0, %v563
    %v565 = vpop.f32.mrf.mxu0
    %566 = vdwg.mxu0
    %vm567 = vcmask 64512
    %v569 = vsel %vm567, %v371, 0
    %v572 = vsel %vm567, %v376, 0
    %v575 = vsel %vm567, %v460, 0
    %v578 = vsel %vm567, %v465, 0
    %580 = vmatprep.subr.mxu0 0.0
    %581 = vmatpush1.xpose.msra.mxu0 0.0
    %582 = vmatprep.subr.mxu0 0.0
    %583 = vmatpush1.xpose.msra.mxu0 0.0
    %584 = vmatprep.subr.mxu0 0.0
    %585 = vmatpush1.xpose.msra.mxu0 0.0
    %586 = vmatprep.subr.mxu0 0.0
    %587 = vmatpush1.xpose.msra.mxu0 0.0
    %588 = vmatprep.subr.mxu0 0.0
    %589 = vmatpush1.xpose.msra.mxu0 0.0
    %590 = vmatprep.subr.mxu0 0.0
    %591 = vmatpush1.xpose.msra.mxu0 0.0
    %592 = vmatprep.subr.mxu0 0.0
    %593 = vmatpush1.xpose.msra.mxu0 0.0
    %594 = vmatprep.subr.mxu0 0.0
    %595 = vmatpush1.xpose.msra.mxu0 0.0
    %596 = vmatprep.subr.mxu0 0.0
    %597 = vmatpush1.xpose.msra.mxu0 0.0
    %598 = vmatprep.subr.mxu0 0.0
    %599 = vmatpush1.xpose.msra.mxu0 0.0
    %600 = vmatprep.subr.mxu0 0.0
    %601 = vmatpush1.xpose.msra.mxu0 0.0
    %602 = vmatprep.subr.mxu0 0.0
    %603 = vmatpush1.xpose.msra.mxu0 0.0
    %604 = vmatprep.subr.mxu0 0.0
    %605 = vmatpush1.xpose.msra.mxu0 0.0
    %606 = vmatprep.subr.mxu0 0.0
    %607 = vmatpush1.xpose.msra.mxu0 0.0
    %608 = vmatprep.subr.mxu0 0.0
    %609 = vmatpush1.xpose.msra.mxu0 %v578
    %610 = vmatprep.subr.mxu0 0.0
    %611 = vmatpush1.xpose.msra.mxu0 %v575
    %612 = vmatprep.subr.mxu0 0.0
    %613 = vmatpush2.xpose.msra.mxu0 0.0
    %614 = vmatprep.subr.mxu0 0.0
    %615 = vmatpush2.xpose.msra.mxu0 0.0
    %616 = vmatprep.subr.mxu0 0.0
    %617 = vmatpush2.xpose.msra.mxu0 0.0
    %618 = vmatprep.subr.mxu0 0.0
    %619 = vmatpush2.xpose.msra.mxu0 0.0
    %620 = vmatprep.subr.mxu0 0.0
    %621 = vmatpush2.xpose.msra.mxu0 0.0
    %622 = vmatprep.subr.mxu0 0.0
    %623 = vmatpush2.xpose.msra.mxu0 0.0
    %624 = vmatprep.subr.mxu0 0.0
    %625 = vmatpush2.xpose.msra.mxu0 0.0
    %626 = vmatprep.subr.mxu0 0.0
    %627 = vmatpush2.xpose.msra.mxu0 0.0
    %628 = vmatprep.subr.mxu0 0.0
    %629 = vmatpush2.xpose.msra.mxu0 0.0
    %630 = vmatprep.subr.mxu0 0.0
    %631 = vmatpush2.xpose.msra.mxu0 0.0
    %632 = vmatprep.subr.mxu0 0.0
    %633 = vmatpush2.xpose.msra.mxu0 0.0
    %634 = vmatprep.subr.mxu0 0.0
    %635 = vmatpush2.xpose.msra.mxu0 0.0
    %636 = vmatprep.subr.mxu0 0.0
    %637 = vmatpush2.xpose.msra.mxu0 0.0
    %638 = vmatprep.subr.mxu0 0.0
    %639 = vmatpush2.xpose.msra.mxu0 0.0
    %640 = vmatprep.subr.mxu0 0.0
    %641 = vmatpush2.xpose.msra.mxu0 0.0
    %642 = vmatprep.subr.mxu0 0.0
    %643 = vmatpush2.xpose.msra.mxu0 0.0
    %644 = vmatprep.mubr.f32.mxu0 0.0
    %645 = vmatmul.mubr.f32.gmra.mxu0 %v569
    %v646 = vpop.f32.mrf.mxu0
    %v647 = vadd.f32 0.0, %v646
    %v648 = vpop.f32.mrf.mxu0
    %649 = vmatprep.mubr.f32.mxu0 0.0
    %650 = vmatmul.mubr.f32.gmra.mxu0 %v572
    %v651 = vpop.f32.mrf.mxu0
    %v652 = vadd.f32 0.0, %v651
    %v653 = vpop.f32.mrf.mxu0
    %654 = vdwg.mxu0
    %v656 = vsel %vm567, %v381, 0
    %v659 = vsel %vm567, %v386, 0
    %v662 = vsel %vm567, %v470, 0
    %v665 = vsel %vm567, %v475, 0
    %667 = vmatprep.subr.mxu0 0.0
    %668 = vmatpush1.xpose.msra.mxu0 0.0
    %669 = vmatprep.subr.mxu0 0.0
    %670 = vmatpush1.xpose.msra.mxu0 0.0
    %671 = vmatprep.subr.mxu0 0.0
    %672 = vmatpush1.xpose.msra.mxu0 0.0
    %673 = vmatprep.subr.mxu0 0.0
    %674 = vmatpush1.xpose.msra.mxu0 0.0
    %675 = vmatprep.subr.mxu0 0.0
    %676 = vmatpush1.xpose.msra.mxu0 0.0
    %677 = vmatprep.subr.mxu0 0.0
    %678 = vmatpush1.xpose.msra.mxu0 0.0
    %679 = vmatprep.subr.mxu0 0.0
    %680 = vmatpush1.xpose.msra.mxu0 0.0
    %681 = vmatprep.subr.mxu0 0.0
    %682 = vmatpush1.xpose.msra.mxu0 0.0
    %683 = vmatprep.subr.mxu0 0.0
    %684 = vmatpush1.xpose.msra.mxu0 0.0
    %685 = vmatprep.subr.mxu0 0.0
    %686 = vmatpush1.xpose.msra.mxu0 0.0
    %687 = vmatprep.subr.mxu0 0.0
    %688 = vmatpush1.xpose.msra.mxu0 0.0
    %689 = vmatprep.subr.mxu0 0.0
    %690 = vmatpush1.xpose.msra.mxu0 0.0
    %691 = vmatprep.subr.mxu0 0.0
    %692 = vmatpush1.xpose.msra.mxu0 0.0
    %693 = vmatprep.subr.mxu0 0.0
    %694 = vmatpush1.xpose.msra.mxu0 0.0
    %695 = vmatprep.subr.mxu0 0.0
    %696 = vmatpush1.xpose.msra.mxu0 %v665
    %697 = vmatprep.subr.mxu0 0.0
    %698 = vmatpush1.xpose.msra.mxu0 %v662
    %699 = vmatprep.subr.mxu0 0.0
    %700 = vmatpush2.xpose.msra.mxu0 0.0
    %701 = vmatprep.subr.mxu0 0.0
    %702 = vmatpush2.xpose.msra.mxu0 0.0
    %703 = vmatprep.subr.mxu0 0.0
    %704 = vmatpush2.xpose.msra.mxu0 0.0
    %705 = vmatprep.subr.mxu0 0.0
    %706 = vmatpush2.xpose.msra.mxu0 0.0
    %707 = vmatprep.subr.mxu0 0.0
    %708 = vmatpush2.xpose.msra.mxu0 0.0
    %709 = vmatprep.subr.mxu0 0.0
    %710 = vmatpush2.xpose.msra.mxu0 0.0
    %711 = vmatprep.subr.mxu0 0.0
    %712 = vmatpush2.xpose.msra.mxu0 0.0
    %713 = vmatprep.subr.mxu0 0.0
    %714 = vmatpush2.xpose.msra.mxu0 0.0
    %715 = vmatprep.subr.mxu0 0.0
    %716 = vmatpush2.xpose.msra.mxu0 0.0
    %717 = vmatprep.subr.mxu0 0.0
    %718 = vmatpush2.xpose.msra.mxu0 0.0
    %719 = vmatprep.subr.mxu0 0.0
    %720 = vmatpush2.xpose.msra.mxu0 0.0
    %721 = vmatprep.subr.mxu0 0.0
    %722 = vmatpush2.xpose.msra.mxu0 0.0
    %723 = vmatprep.subr.mxu0 0.0
    %724 = vmatpush2.xpose.msra.mxu0 0.0
    %725 = vmatprep.subr.mxu0 0.0
    %726 = vmatpush2.xpose.msra.mxu0 0.0
    %727 = vmatprep.subr.mxu0 0.0
    %728 = vmatpush2.xpose.msra.mxu0 0.0
    %729 = vmatprep.subr.mxu0 0.0
    %730 = vmatpush2.xpose.msra.mxu0 0.0
    %731 = vmatprep.mubr.f32.mxu0 0.0
    %732 = vmatmul.mubr.f32.gmra.mxu0 %v656
    %v733 = vpop.f32.mrf.mxu0
    %v734 = vadd.f32 0.0, %v733
    %v735 = vpop.f32.mrf.mxu0
    %736 = vmatprep.mubr.f32.mxu0 0.0
    %737 = vmatmul.mubr.f32.gmra.mxu0 %v659
    %v738 = vpop.f32.mrf.mxu0
    %v739 = vadd.f32 0.0, %v738
    %v740 = vpop.f32.mrf.mxu0
    %741 = vdwg.mxu0
    %s742 = scalar_lea.vmem %s9, 32
    %v743 = vld [vmem:[%s742] sm:$0xff]
    %v744 = vld [vmem:[%s742 + $0x8] sm:$0xff]
    %v745 = vld [vmem:[%s742 + $0x10] sm:$0xff]
    %v746 = vld [vmem:[%s742 + $0x18] sm:$0xff]
    %747 = vmatprep.subr.mxu0 0.0
    %748 = vmatpush1.msra.mxu0 0.0
    %749 = vmatprep.subr.mxu0 0.0
    %750 = vmatpush1.msra.mxu0 0.0
    %751 = vmatprep.subr.mxu0 0.0
    %752 = vmatpush1.msra.mxu0 0.0
    %753 = vmatprep.subr.mxu0 0.0
    %754 = vmatpush1.msra.mxu0 0.0
    %755 = vmatprep.subr.mxu0 0.0
    %756 = vmatpush1.msra.mxu0 0.0
    %757 = vmatprep.subr.mxu0 0.0
    %758 = vmatpush1.msra.mxu0 0.0
    %759 = vmatprep.subr.mxu0 0.0
    %760 = vmatpush1.msra.mxu0 0.0
    %761 = vmatprep.subr.mxu0 0.0
    %762 = vmatpush1.msra.mxu0 0.0
    %763 = vmatprep.subr.mxu0 0.0
    %764 = vmatpush1.msra.mxu0 0.0
    %765 = vmatprep.subr.mxu0 0.0
    %766 = vmatpush1.msra.mxu0 0.0
    %767 = vmatprep.subr.mxu0 0.0
    %768 = vmatpush1.msra.mxu0 0.0
    %769 = vmatprep.subr.mxu0 0.0
    %770 = vmatpush1.msra.mxu0 0.0
    %771 = vmatprep.subr.mxu0 0.0
    %772 = vmatpush1.msra.mxu0 %v746
    %773 = vmatprep.subr.mxu0 0.0
    %774 = vmatpush1.msra.mxu0 %v745
    %775 = vmatprep.subr.mxu0 0.0
    %776 = vmatpush1.msra.mxu0 %v744
    %777 = vmatprep.subr.mxu0 0.0
    %778 = vmatpush1.msra.mxu0 %v743
    %779 = vmatprep.subr.mxu0 0.0
    %780 = vmatpush2.msra.mxu0 0.0
    %781 = vmatprep.subr.mxu0 0.0
    %782 = vmatpush2.msra.mxu0 0.0
    %783 = vmatprep.subr.mxu0 0.0
    %784 = vmatpush2.msra.mxu0 0.0
    %785 = vmatprep.subr.mxu0 0.0
    %786 = vmatpush2.msra.mxu0 0.0
    %787 = vmatprep.subr.mxu0 0.0
    %788 = vmatpush2.msra.mxu0 0.0
    %789 = vmatprep.subr.mxu0 0.0
    %790 = vmatpush2.msra.mxu0 0.0
    %791 = vmatprep.subr.mxu0 0.0
    %792 = vmatpush2.msra.mxu0 0.0
    %793 = vmatprep.subr.mxu0 0.0
    %794 = vmatpush2.msra.mxu0 0.0
    %795 = vmatprep.subr.mxu0 0.0
    %796 = vmatpush2.msra.mxu0 0.0
    %797 = vmatprep.subr.mxu0 0.0
    %798 = vmatpush2.msra.mxu0 0.0
    %799 = vmatprep.subr.mxu0 0.0
    %800 = vmatpush2.msra.mxu0 0.0
    %801 = vmatprep.subr.mxu0 0.0
    %802 = vmatpush2.msra.mxu0 0.0
    %803 = vmatprep.subr.mxu0 0.0
    %804 = vmatpush2.msra.mxu0 0.0
    %805 = vmatprep.subr.mxu0 0.0
    %806 = vmatpush2.msra.mxu0 0.0
    %807 = vmatprep.subr.mxu0 0.0
    %808 = vmatpush2.msra.mxu0 0.0
    %809 = vmatprep.subr.mxu0 0.0
    %810 = vmatpush2.msra.mxu0 0.0
    %811 = vmatprep.mubr.f32.mxu0 0.0
    %812 = vmatmul.mubr.f32.gmra.mxu0 %v293
    %v813 = vpop.f32.mrf.mxu0
    %v814 = vadd.f32 0.0, %v813
    %v815 = vpop.f32.mrf.mxu0
    %816 = vmatprep.mubr.f32.mxu0 0.0
    %817 = vmatmul.mubr.f32.gmra.mxu0 %v296
    %v818 = vpop.f32.mrf.mxu0
    %v819 = vadd.f32 0.0, %v818
    %v820 = vpop.f32.mrf.mxu0
    %821 = vmatprep.mubr.f32.mxu0 0.0
    %822 = vmatmul.mubr.f32.gmra.mxu0 %v299
    %v823 = vpop.f32.mrf.mxu0
    %v824 = vadd.f32 0.0, %v823
    %v825 = vpop.f32.mrf.mxu0
    %826 = vmatprep.mubr.f32.mxu0 0.0
    %827 = vmatmul.mubr.f32.gmra.mxu0 %v302
    %v828 = vpop.f32.mrf.mxu0
    %v829 = vadd.f32 0.0, %v828
    %v830 = vpop.f32.mrf.mxu0
    %831 = vdwg.mxu0
    %s832 = scalar_lea.vmem %s10, 32
    %v833 = vld [vmem:[%s832] sm:$0xff]
    %v834 = vld [vmem:[%s832 + $0x8] sm:$0xff]
    %v835 = vld [vmem:[%s832 + $0x10] sm:$0xff]
    %v836 = vld [vmem:[%s832 + $0x18] sm:$0xff]
    %837 = vmatprep.subr.mxu0 0.0
    %838 = vmatpush1.msra.mxu0 0.0
    %839 = vmatprep.subr.mxu0 0.0
    %840 = vmatpush1.msra.mxu0 0.0
    %841 = vmatprep.subr.mxu0 0.0
    %842 = vmatpush1.msra.mxu0 0.0
    %843 = vmatprep.subr.mxu0 0.0
    %844 = vmatpush1.msra.mxu0 0.0
    %845 = vmatprep.subr.mxu0 0.0
    %846 = vmatpush1.msra.mxu0 0.0
    %847 = vmatprep.subr.mxu0 0.0
    %848 = vmatpush1.msra.mxu0 0.0
    %849 = vmatprep.subr.mxu0 0.0
    %850 = vmatpush1.msra.mxu0 0.0
    %851 = vmatprep.subr.mxu0 0.0
    %852 = vmatpush1.msra.mxu0 0.0
    %853 = vmatprep.subr.mxu0 0.0
    %854 = vmatpush1.msra.mxu0 0.0
    %855 = vmatprep.subr.mxu0 0.0
    %856 = vmatpush1.msra.mxu0 0.0
    %857 = vmatprep.subr.mxu0 0.0
    %858 = vmatpush1.msra.mxu0 0.0
    %859 = vmatprep.subr.mxu0 0.0
    %860 = vmatpush1.msra.mxu0 0.0
    %861 = vmatprep.subr.mxu0 0.0
    %862 = vmatpush1.msra.mxu0 %v836
    %863 = vmatprep.subr.mxu0 0.0
    %864 = vmatpush1.msra.mxu0 %v835
    %865 = vmatprep.subr.mxu0 0.0
    %866 = vmatpush1.msra.mxu0 %v834
    %867 = vmatprep.subr.mxu0 0.0
    %868 = vmatpush1.msra.mxu0 %v833
    %869 = vmatprep.subr.mxu0 0.0
    %870 = vmatpush2.msra.mxu0 0.0
    %871 = vmatprep.subr.mxu0 0.0
    %872 = vmatpush2.msra.mxu0 0.0
    %873 = vmatprep.subr.mxu0 0.0
    %874 = vmatpush2.msra.mxu0 0.0
    %875 = vmatprep.subr.mxu0 0.0
    %876 = vmatpush2.msra.mxu0 0.0
    %877 = vmatprep.subr.mxu0 0.0
    %878 = vmatpush2.msra.mxu0 0.0
    %879 = vmatprep.subr.mxu0 0.0
    %880 = vmatpush2.msra.mxu0 0.0
    %881 = vmatprep.subr.mxu0 0.0
    %882 = vmatpush2.msra.mxu0 0.0
    %883 = vmatprep.subr.mxu0 0.0
    %884 = vmatpush2.msra.mxu0 0.0
    %885 = vmatprep.subr.mxu0 0.0
    %886 = vmatpush2.msra.mxu0 0.0
    %887 = vmatprep.subr.mxu0 0.0
    %888 = vmatpush2.msra.mxu0 0.0
    %889 = vmatprep.subr.mxu0 0.0
    %890 = vmatpush2.msra.mxu0 0.0
    %891 = vmatprep.subr.mxu0 0.0
    %892 = vmatpush2.msra.mxu0 0.0
    %893 = vmatprep.subr.mxu0 0.0
    %894 = vmatpush2.msra.mxu0 0.0
    %895 = vmatprep.subr.mxu0 0.0
    %896 = vmatpush2.msra.mxu0 0.0
    %897 = vmatprep.subr.mxu0 0.0
    %898 = vmatpush2.msra.mxu0 0.0
    %899 = vmatprep.subr.mxu0 0.0
    %900 = vmatpush2.msra.mxu0 0.0
    %901 = vmatprep.mubr.f32.mxu0 0.0
    %902 = vmatmul.mubr.f32.gmra.mxu0 %v293
    %v903 = vpop.f32.mrf.mxu0
    %v904 = vadd.f32 0.0, %v903
    %v905 = vpop.f32.mrf.mxu0
    %906 = vmatprep.mubr.f32.mxu0 0.0
    %907 = vmatmul.mubr.f32.gmra.mxu0 %v296
    %v908 = vpop.f32.mrf.mxu0
    %v909 = vadd.f32 0.0, %v908
    %v910 = vpop.f32.mrf.mxu0
    %911 = vmatprep.mubr.f32.mxu0 0.0
    %912 = vmatmul.mubr.f32.gmra.mxu0 %v299
    %v913 = vpop.f32.mrf.mxu0
    %v914 = vadd.f32 0.0, %v913
    %v915 = vpop.f32.mrf.mxu0
    %916 = vmatprep.mubr.f32.mxu0 0.0
    %917 = vmatmul.mubr.f32.gmra.mxu0 %v302
    %v918 = vpop.f32.mrf.mxu0
    %v919 = vadd.f32 0.0, %v918
    %v920 = vpop.f32.mrf.mxu0
    %921 = vdwg.mxu0
    %s922 = scalar_lea.vmem %s11, 32
    %v923 = vld [vmem:[%s922] sm:$0xff]
    %v924 = vld [vmem:[%s922 + $0x8] sm:$0xff]
    %v925 = vld [vmem:[%s922 + $0x10] sm:$0xff]
    %v926 = vld [vmem:[%s922 + $0x18] sm:$0xff]
    %927 = vmatprep.subr.mxu0 0.0
    %928 = vmatpush1.msra.mxu0 0.0
    %929 = vmatprep.subr.mxu0 0.0
    %930 = vmatpush1.msra.mxu0 0.0
    %931 = vmatprep.subr.mxu0 0.0
    %932 = vmatpush1.msra.mxu0 0.0
    %933 = vmatprep.subr.mxu0 0.0
    %934 = vmatpush1.msra.mxu0 0.0
    %935 = vmatprep.subr.mxu0 0.0
    %936 = vmatpush1.msra.mxu0 0.0
    %937 = vmatprep.subr.mxu0 0.0
    %938 = vmatpush1.msra.mxu0 0.0
    %939 = vmatprep.subr.mxu0 0.0
    %940 = vmatpush1.msra.mxu0 0.0
    %941 = vmatprep.subr.mxu0 0.0
    %942 = vmatpush1.msra.mxu0 0.0
    %943 = vmatprep.subr.mxu0 0.0
    %944 = vmatpush1.msra.mxu0 0.0
    %945 = vmatprep.subr.mxu0 0.0
    %946 = vmatpush1.msra.mxu0 0.0
    %947 = vmatprep.subr.mxu0 0.0
    %948 = vmatpush1.msra.mxu0 0.0
    %949 = vmatprep.subr.mxu0 0.0
    %950 = vmatpush1.msra.mxu0 0.0
    %951 = vmatprep.subr.mxu0 0.0
    %952 = vmatpush1.msra.mxu0 %v926
    %953 = vmatprep.subr.mxu0 0.0
    %954 = vmatpush1.msra.mxu0 %v925
    %955 = vmatprep.subr.mxu0 0.0
    %956 = vmatpush1.msra.mxu0 %v924
    %957 = vmatprep.subr.mxu0 0.0
    %958 = vmatpush1.msra.mxu0 %v923
    %959 = vmatprep.subr.mxu0 0.0
    %960 = vmatpush2.msra.mxu0 0.0
    %961 = vmatprep.subr.mxu0 0.0
    %962 = vmatpush2.msra.mxu0 0.0
    %963 = vmatprep.subr.mxu0 0.0
    %964 = vmatpush2.msra.mxu0 0.0
    %965 = vmatprep.subr.mxu0 0.0
    %966 = vmatpush2.msra.mxu0 0.0
    %967 = vmatprep.subr.mxu0 0.0
    %968 = vmatpush2.msra.mxu0 0.0
    %969 = vmatprep.subr.mxu0 0.0
    %970 = vmatpush2.msra.mxu0 0.0
    %971 = vmatprep.subr.mxu0 0.0
    %972 = vmatpush2.msra.mxu0 0.0
    %973 = vmatprep.subr.mxu0 0.0
    %974 = vmatpush2.msra.mxu0 0.0
    %975 = vmatprep.subr.mxu0 0.0
    %976 = vmatpush2.msra.mxu0 0.0
    %977 = vmatprep.subr.mxu0 0.0
    %978 = vmatpush2.msra.mxu0 0.0
    %979 = vmatprep.subr.mxu0 0.0
    %980 = vmatpush2.msra.mxu0 0.0
    %981 = vmatprep.subr.mxu0 0.0
    %982 = vmatpush2.msra.mxu0 0.0
    %983 = vmatprep.subr.mxu0 0.0
    %984 = vmatpush2.msra.mxu0 0.0
    %985 = vmatprep.subr.mxu0 0.0
    %986 = vmatpush2.msra.mxu0 0.0
    %987 = vmatprep.subr.mxu0 0.0
    %988 = vmatpush2.msra.mxu0 0.0
    %989 = vmatprep.subr.mxu0 0.0
    %990 = vmatpush2.msra.mxu0 0.0
    %991 = vmatprep.mubr.f32.mxu0 0.0
    %992 = vmatmul.mubr.f32.gmra.mxu0 %v293
    %v993 = vpop.f32.mrf.mxu0
    %v994 = vadd.f32 0.0, %v993
    %v995 = vpop.f32.mrf.mxu0
    %996 = vmatprep.mubr.f32.mxu0 0.0
    %997 = vmatmul.mubr.f32.gmra.mxu0 %v296
    %v998 = vpop.f32.mrf.mxu0
    %v999 = vadd.f32 0.0, %v998
    %v1000 = vpop.f32.mrf.mxu0
    %1001 = vmatprep.mubr.f32.mxu0 0.0
    %1002 = vmatmul.mubr.f32.gmra.mxu0 %v299
    %v1003 = vpop.f32.mrf.mxu0
    %v1004 = vadd.f32 0.0, %v1003
    %v1005 = vpop.f32.mrf.mxu0
    %1006 = vmatprep.mubr.f32.mxu0 0.0
    %1007 = vmatmul.mubr.f32.gmra.mxu0 %v302
    %v1008 = vpop.f32.mrf.mxu0
    %v1009 = vadd.f32 0.0, %v1008
    %v1010 = vpop.f32.mrf.mxu0
    %1011 = vdwg.mxu0
    %v1013 = vsel %vm567, %v814, 0
    %v1016 = vsel %vm567, %v819, 0
    %v1019 = vsel %vm567, %v904, 0
    %v1022 = vsel %vm567, %v909, 0
    %1024 = vmatprep.subr.mxu0 0.0
    %1025 = vmatpush1.xpose.msra.mxu0 0.0
    %1026 = vmatprep.subr.mxu0 0.0
    %1027 = vmatpush1.xpose.msra.mxu0 0.0
    %1028 = vmatprep.subr.mxu0 0.0
    %1029 = vmatpush1.xpose.msra.mxu0 0.0
    %1030 = vmatprep.subr.mxu0 0.0
    %1031 = vmatpush1.xpose.msra.mxu0 0.0
    %1032 = vmatprep.subr.mxu0 0.0
    %1033 = vmatpush1.xpose.msra.mxu0 0.0
    %1034 = vmatprep.subr.mxu0 0.0
    %1035 = vmatpush1.xpose.msra.mxu0 0.0
    %1036 = vmatprep.subr.mxu0 0.0
    %1037 = vmatpush1.xpose.msra.mxu0 0.0
    %1038 = vmatprep.subr.mxu0 0.0
    %1039 = vmatpush1.xpose.msra.mxu0 0.0
    %1040 = vmatprep.subr.mxu0 0.0
    %1041 = vmatpush1.xpose.msra.mxu0 0.0
    %1042 = vmatprep.subr.mxu0 0.0
    %1043 = vmatpush1.xpose.msra.mxu0 0.0
    %1044 = vmatprep.subr.mxu0 0.0
    %1045 = vmatpush1.xpose.msra.mxu0 0.0
    %1046 = vmatprep.subr.mxu0 0.0
    %1047 = vmatpush1.xpose.msra.mxu0 0.0
    %1048 = vmatprep.subr.mxu0 0.0
    %1049 = vmatpush1.xpose.msra.mxu0 0.0
    %1050 = vmatprep.subr.mxu0 0.0
    %1051 = vmatpush1.xpose.msra.mxu0 0.0
    %1052 = vmatprep.subr.mxu0 0.0
    %1053 = vmatpush1.xpose.msra.mxu0 %v1022
    %1054 = vmatprep.subr.mxu0 0.0
    %1055 = vmatpush1.xpose.msra.mxu0 %v1019
    %1056 = vmatprep.subr.mxu0 0.0
    %1057 = vmatpush2.xpose.msra.mxu0 0.0
    %1058 = vmatprep.subr.mxu0 0.0
    %1059 = vmatpush2.xpose.msra.mxu0 0.0
    %1060 = vmatprep.subr.mxu0 0.0
    %1061 = vmatpush2.xpose.msra.mxu0 0.0
    %1062 = vmatprep.subr.mxu0 0.0
    %1063 = vmatpush2.xpose.msra.mxu0 0.0
    %1064 = vmatprep.subr.mxu0 0.0
    %1065 = vmatpush2.xpose.msra.mxu0 0.0
    %1066 = vmatprep.subr.mxu0 0.0
    %1067 = vmatpush2.xpose.msra.mxu0 0.0
    %1068 = vmatprep.subr.mxu0 0.0
    %1069 = vmatpush2.xpose.msra.mxu0 0.0
    %1070 = vmatprep.subr.mxu0 0.0
    %1071 = vmatpush2.xpose.msra.mxu0 0.0
    %1072 = vmatprep.subr.mxu0 0.0
    %1073 = vmatpush2.xpose.msra.mxu0 0.0
    %1074 = vmatprep.subr.mxu0 0.0
    %1075 = vmatpush2.xpose.msra.mxu0 0.0
    %1076 = vmatprep.subr.mxu0 0.0
    %1077 = vmatpush2.xpose.msra.mxu0 0.0
    %1078 = vmatprep.subr.mxu0 0.0
    %1079 = vmatpush2.xpose.msra.mxu0 0.0
    %1080 = vmatprep.subr.mxu0 0.0
    %1081 = vmatpush2.xpose.msra.mxu0 0.0
    %1082 = vmatprep.subr.mxu0 0.0
    %1083 = vmatpush2.xpose.msra.mxu0 0.0
    %1084 = vmatprep.subr.mxu0 0.0
    %1085 = vmatpush2.xpose.msra.mxu0 0.0
    %1086 = vmatprep.subr.mxu0 0.0
    %1087 = vmatpush2.xpose.msra.mxu0 0.0
    %1088 = vmatprep.mubr.f32.mxu0 0.0
    %1089 = vmatmul.mubr.f32.gmra.mxu0 %v1013
    %v1090 = vpop.f32.mrf.mxu0
    %v1091 = vadd.f32 0.0, %v1090
    %v1092 = vpop.f32.mrf.mxu0
    %1093 = vmatprep.mubr.f32.mxu0 0.0
    %1094 = vmatmul.mubr.f32.gmra.mxu0 %v1016
    %v1095 = vpop.f32.mrf.mxu0
    %v1096 = vadd.f32 0.0, %v1095
    %v1097 = vpop.f32.mrf.mxu0
    %1098 = vdwg.mxu0
    %v1100 = vsel %vm567, %v824, 0
    %v1103 = vsel %vm567, %v829, 0
    %v1106 = vsel %vm567, %v914, 0
    %v1109 = vsel %vm567, %v919, 0
    %1111 = vmatprep.subr.mxu0 0.0
    %1112 = vmatpush1.xpose.msra.mxu0 0.0
    %1113 = vmatprep.subr.mxu0 0.0
    %1114 = vmatpush1.xpose.msra.mxu0 0.0
    %1115 = vmatprep.subr.mxu0 0.0
    %1116 = vmatpush1.xpose.msra.mxu0 0.0
    %1117 = vmatprep.subr.mxu0 0.0
    %1118 = vmatpush1.xpose.msra.mxu0 0.0
    %1119 = vmatprep.subr.mxu0 0.0
    %1120 = vmatpush1.xpose.msra.mxu0 0.0
    %1121 = vmatprep.subr.mxu0 0.0
    %1122 = vmatpush1.xpose.msra.mxu0 0.0
    %1123 = vmatprep.subr.mxu0 0.0
    %1124 = vmatpush1.xpose.msra.mxu0 0.0
    %1125 = vmatprep.subr.mxu0 0.0
    %1126 = vmatpush1.xpose.msra.mxu0 0.0
    %1127 = vmatprep.subr.mxu0 0.0
    %1128 = vmatpush1.xpose.msra.mxu0 0.0
    %1129 = vmatprep.subr.mxu0 0.0
    %1130 = vmatpush1.xpose.msra.mxu0 0.0
    %1131 = vmatprep.subr.mxu0 0.0
    %1132 = vmatpush1.xpose.msra.mxu0 0.0
    %1133 = vmatprep.subr.mxu0 0.0
    %1134 = vmatpush1.xpose.msra.mxu0 0.0
    %1135 = vmatprep.subr.mxu0 0.0
    %1136 = vmatpush1.xpose.msra.mxu0 0.0
    %1137 = vmatprep.subr.mxu0 0.0
    %1138 = vmatpush1.xpose.msra.mxu0 0.0
    %1139 = vmatprep.subr.mxu0 0.0
    %1140 = vmatpush1.xpose.msra.mxu0 %v1109
    %1141 = vmatprep.subr.mxu0 0.0
    %1142 = vmatpush1.xpose.msra.mxu0 %v1106
    %1143 = vmatprep.subr.mxu0 0.0
    %1144 = vmatpush2.xpose.msra.mxu0 0.0
    %1145 = vmatprep.subr.mxu0 0.0
    %1146 = vmatpush2.xpose.msra.mxu0 0.0
    %1147 = vmatprep.subr.mxu0 0.0
    %1148 = vmatpush2.xpose.msra.mxu0 0.0
    %1149 = vmatprep.subr.mxu0 0.0
    %1150 = vmatpush2.xpose.msra.mxu0 0.0
    %1151 = vmatprep.subr.mxu0 0.0
    %1152 = vmatpush2.xpose.msra.mxu0 0.0
    %1153 = vmatprep.subr.mxu0 0.0
    %1154 = vmatpush2.xpose.msra.mxu0 0.0
    %1155 = vmatprep.subr.mxu0 0.0
    %1156 = vmatpush2.xpose.msra.mxu0 0.0
    %1157 = vmatprep.subr.mxu0 0.0
    %1158 = vmatpush2.xpose.msra.mxu0 0.0
    %1159 = vmatprep.subr.mxu0 0.0
    %1160 = vmatpush2.xpose.msra.mxu0 0.0
    %1161 = vmatprep.subr.mxu0 0.0
    %1162 = vmatpush2.xpose.msra.mxu0 0.0
    %1163 = vmatprep.subr.mxu0 0.0
    %1164 = vmatpush2.xpose.msra.mxu0 0.0
    %1165 = vmatprep.subr.mxu0 0.0
    %1166 = vmatpush2.xpose.msra.mxu0 0.0
    %1167 = vmatprep.subr.mxu0 0.0
    %1168 = vmatpush2.xpose.msra.mxu0 0.0
    %1169 = vmatprep.subr.mxu0 0.0
    %1170 = vmatpush2.xpose.msra.mxu0 0.0
    %1171 = vmatprep.subr.mxu0 0.0
    %1172 = vmatpush2.xpose.msra.mxu0 0.0
    %1173 = vmatprep.subr.mxu0 0.0
    %1174 = vmatpush2.xpose.msra.mxu0 0.0
    %1175 = vmatprep.mubr.f32.mxu0 0.0
    %1176 = vmatmul.mubr.f32.gmra.mxu0 %v1100
    %v1177 = vpop.f32.mrf.mxu0
    %v1178 = vadd.f32 0.0, %v1177
    %v1179 = vpop.f32.mrf.mxu0
    %1180 = vmatprep.mubr.f32.mxu0 0.0
    %1181 = vmatmul.mubr.f32.gmra.mxu0 %v1103
    %v1182 = vpop.f32.mrf.mxu0
    %v1183 = vadd.f32 0.0, %v1182
    %v1184 = vpop.f32.mrf.mxu0
    %1185 = vdwg.mxu0
    %s1186 = scalar_lea.vmem %s9, 64
    %v1187 = vld [vmem:[%s1186] sm:$0xff]
    %v1188 = vld [vmem:[%s1186 + $0x8] sm:$0xff]
    %v1189 = vld [vmem:[%s1186 + $0x10] sm:$0xff]
    %v1190 = vld [vmem:[%s1186 + $0x18] sm:$0xff]
    %1191 = vmatprep.subr.mxu0 0.0
    %1192 = vmatpush1.msra.mxu0 0.0
    %1193 = vmatprep.subr.mxu0 0.0
    %1194 = vmatpush1.msra.mxu0 0.0
    %1195 = vmatprep.subr.mxu0 0.0
    %1196 = vmatpush1.msra.mxu0 0.0
    %1197 = vmatprep.subr.mxu0 0.0
    %1198 = vmatpush1.msra.mxu0 0.0
    %1199 = vmatprep.subr.mxu0 0.0
    %1200 = vmatpush1.msra.mxu0 0.0
    %1201 = vmatprep.subr.mxu0 0.0
    %1202 = vmatpush1.msra.mxu0 0.0
    %1203 = vmatprep.subr.mxu0 0.0
    %1204 = vmatpush1.msra.mxu0 0.0
    %1205 = vmatprep.subr.mxu0 0.0
    %1206 = vmatpush1.msra.mxu0 0.0
    %1207 = vmatprep.subr.mxu0 0.0
    %1208 = vmatpush1.msra.mxu0 0.0
    %1209 = vmatprep.subr.mxu0 0.0
    %1210 = vmatpush1.msra.mxu0 0.0
    %1211 = vmatprep.subr.mxu0 0.0
    %1212 = vmatpush1.msra.mxu0 0.0
    %1213 = vmatprep.subr.mxu0 0.0
    %1214 = vmatpush1.msra.mxu0 0.0
    %1215 = vmatprep.subr.mxu0 0.0
    %1216 = vmatpush1.msra.mxu0 %v1190
    %1217 = vmatprep.subr.mxu0 0.0
    %1218 = vmatpush1.msra.mxu0 %v1189
    %1219 = vmatprep.subr.mxu0 0.0
    %1220 = vmatpush1.msra.mxu0 %v1188
    %1221 = vmatprep.subr.mxu0 0.0
    %1222 = vmatpush1.msra.mxu0 %v1187
    %1223 = vmatprep.subr.mxu0 0.0
    %1224 = vmatpush2.msra.mxu0 0.0
    %1225 = vmatprep.subr.mxu0 0.0
    %1226 = vmatpush2.msra.mxu0 0.0
    %1227 = vmatprep.subr.mxu0 0.0
    %1228 = vmatpush2.msra.mxu0 0.0
    %1229 = vmatprep.subr.mxu0 0.0
    %1230 = vmatpush2.msra.mxu0 0.0
    %1231 = vmatprep.subr.mxu0 0.0
    %1232 = vmatpush2.msra.mxu0 0.0
    %1233 = vmatprep.subr.mxu0 0.0
    %1234 = vmatpush2.msra.mxu0 0.0
    %1235 = vmatprep.subr.mxu0 0.0
    %1236 = vmatpush2.msra.mxu0 0.0
    %1237 = vmatprep.subr.mxu0 0.0
    %1238 = vmatpush2.msra.mxu0 0.0
    %1239 = vmatprep.subr.mxu0 0.0
    %1240 = vmatpush2.msra.mxu0 0.0
    %1241 = vmatprep.subr.mxu0 0.0
    %1242 = vmatpush2.msra.mxu0 0.0
    %1243 = vmatprep.subr.mxu0 0.0
    %1244 = vmatpush2.msra.mxu0 0.0
    %1245 = vmatprep.subr.mxu0 0.0
    %1246 = vmatpush2.msra.mxu0 0.0
    %1247 = vmatprep.subr.mxu0 0.0
    %1248 = vmatpush2.msra.mxu0 0.0
    %1249 = vmatprep.subr.mxu0 0.0
    %1250 = vmatpush2.msra.mxu0 0.0
    %1251 = vmatprep.subr.mxu0 0.0
    %1252 = vmatpush2.msra.mxu0 0.0
    %1253 = vmatprep.subr.mxu0 0.0
    %1254 = vmatpush2.msra.mxu0 0.0
    %1255 = vmatprep.mubr.f32.mxu0 0.0
    %1256 = vmatmul.mubr.f32.gmra.mxu0 %v293
    %v1257 = vpop.f32.mrf.mxu0
    %v1258 = vadd.f32 0.0, %v1257
    %v1259 = vpop.f32.mrf.mxu0
    %1260 = vmatprep.mubr.f32.mxu0 0.0
    %1261 = vmatmul.mubr.f32.gmra.mxu0 %v296
    %v1262 = vpop.f32.mrf.mxu0
    %v1263 = vadd.f32 0.0, %v1262
    %v1264 = vpop.f32.mrf.mxu0
    %1265 = vmatprep.mubr.f32.mxu0 0.0
    %1266 = vmatmul.mubr.f32.gmra.mxu0 %v299
    %v1267 = vpop.f32.mrf.mxu0
    %v1268 = vadd.f32 0.0, %v1267
    %v1269 = vpop.f32.mrf.mxu0
    %1270 = vmatprep.mubr.f32.mxu0 0.0
    %1271 = vmatmul.mubr.f32.gmra.mxu0 %v302
    %v1272 = vpop.f32.mrf.mxu0
    %v1273 = vadd.f32 0.0, %v1272
    %v1274 = vpop.f32.mrf.mxu0
    %1275 = vdwg.mxu0
    %s1276 = scalar_lea.vmem %s10, 64
    %v1277 = vld [vmem:[%s1276] sm:$0xff]
    %v1278 = vld [vmem:[%s1276 + $0x8] sm:$0xff]
    %v1279 = vld [vmem:[%s1276 + $0x10] sm:$0xff]
    %v1280 = vld [vmem:[%s1276 + $0x18] sm:$0xff]
    %1281 = vmatprep.subr.mxu0 0.0
    %1282 = vmatpush1.msra.mxu0 0.0
    %1283 = vmatprep.subr.mxu0 0.0
    %1284 = vmatpush1.msra.mxu0 0.0
    %1285 = vmatprep.subr.mxu0 0.0
    %1286 = vmatpush1.msra.mxu0 0.0
    %1287 = vmatprep.subr.mxu0 0.0
    %1288 = vmatpush1.msra.mxu0 0.0
    %1289 = vmatprep.subr.mxu0 0.0
    %1290 = vmatpush1.msra.mxu0 0.0
    %1291 = vmatprep.subr.mxu0 0.0
    %1292 = vmatpush1.msra.mxu0 0.0
    %1293 = vmatprep.subr.mxu0 0.0
    %1294 = vmatpush1.msra.mxu0 0.0
    %1295 = vmatprep.subr.mxu0 0.0
    %1296 = vmatpush1.msra.mxu0 0.0
    %1297 = vmatprep.subr.mxu0 0.0
    %1298 = vmatpush1.msra.mxu0 0.0
    %1299 = vmatprep.subr.mxu0 0.0
    %1300 = vmatpush1.msra.mxu0 0.0
    %1301 = vmatprep.subr.mxu0 0.0
    %1302 = vmatpush1.msra.mxu0 0.0
    %1303 = vmatprep.subr.mxu0 0.0
    %1304 = vmatpush1.msra.mxu0 0.0
    %1305 = vmatprep.subr.mxu0 0.0
    %1306 = vmatpush1.msra.mxu0 %v1280
    %1307 = vmatprep.subr.mxu0 0.0
    %1308 = vmatpush1.msra.mxu0 %v1279
    %1309 = vmatprep.subr.mxu0 0.0
    %1310 = vmatpush1.msra.mxu0 %v1278
    %1311 = vmatprep.subr.mxu0 0.0
    %1312 = vmatpush1.msra.mxu0 %v1277
    %1313 = vmatprep.subr.mxu0 0.0
    %1314 = vmatpush2.msra.mxu0 0.0
    %1315 = vmatprep.subr.mxu0 0.0
    %1316 = vmatpush2.msra.mxu0 0.0
    %1317 = vmatprep.subr.mxu0 0.0
    %1318 = vmatpush2.msra.mxu0 0.0
    %1319 = vmatprep.subr.mxu0 0.0
    %1320 = vmatpush2.msra.mxu0 0.0
    %1321 = vmatprep.subr.mxu0 0.0
    %1322 = vmatpush2.msra.mxu0 0.0
    %1323 = vmatprep.subr.mxu0 0.0
    %1324 = vmatpush2.msra.mxu0 0.0
    %1325 = vmatprep.subr.mxu0 0.0
    %1326 = vmatpush2.msra.mxu0 0.0
    %1327 = vmatprep.subr.mxu0 0.0
    %1328 = vmatpush2.msra.mxu0 0.0
    %1329 = vmatprep.subr.mxu0 0.0
    %1330 = vmatpush2.msra.mxu0 0.0
    %1331 = vmatprep.subr.mxu0 0.0
    %1332 = vmatpush2.msra.mxu0 0.0
    %1333 = vmatprep.subr.mxu0 0.0
    %1334 = vmatpush2.msra.mxu0 0.0
    %1335 = vmatprep.subr.mxu0 0.0
    %1336 = vmatpush2.msra.mxu0 0.0
    %1337 = vmatprep.subr.mxu0 0.0
    %1338 = vmatpush2.msra.mxu0 0.0
    %1339 = vmatprep.subr.mxu0 0.0
    %1340 = vmatpush2.msra.mxu0 0.0
    %1341 = vmatprep.subr.mxu0 0.0
    %1342 = vmatpush2.msra.mxu0 0.0
    %1343 = vmatprep.subr.mxu0 0.0
    %1344 = vmatpush2.msra.mxu0 0.0
    %1345 = vmatprep.mubr.f32.mxu0 0.0
    %1346 = vmatmul.mubr.f32.gmra.mxu0 %v293
    %v1347 = vpop.f32.mrf.mxu0
    %v1348 = vadd.f32 0.0, %v1347
    %v1349 = vpop.f32.mrf.mxu0
    %1350 = vmatprep.mubr.f32.mxu0 0.0
    %1351 = vmatmul.mubr.f32.gmra.mxu0 %v296
    %v1352 = vpop.f32.mrf.mxu0
    %v1353 = vadd.f32 0.0, %v1352
    %v1354 = vpop.f32.mrf.mxu0
    %1355 = vmatprep.mubr.f32.mxu0 0.0
    %1356 = vmatmul.mubr.f32.gmra.mxu0 %v299
    %v1357 = vpop.f32.mrf.mxu0
    %v1358 = vadd.f32 0.0, %v1357
    %v1359 = vpop.f32.mrf.mxu0
    %1360 = vmatprep.mubr.f32.mxu0 0.0
    %1361 = vmatmul.mubr.f32.gmra.mxu0 %v302
    %v1362 = vpop.f32.mrf.mxu0
    %v1363 = vadd.f32 0.0, %v1362
    %v1364 = vpop.f32.mrf.mxu0
    %1365 = vdwg.mxu0
    %s1366 = scalar_lea.vmem %s11, 64
    %v1367 = vld [vmem:[%s1366] sm:$0xff]
    %v1368 = vld [vmem:[%s1366 + $0x8] sm:$0xff]
    %v1369 = vld [vmem:[%s1366 + $0x10] sm:$0xff]
    %v1370 = vld [vmem:[%s1366 + $0x18] sm:$0xff]
    %1371 = vmatprep.subr.mxu0 0.0
    %1372 = vmatpush1.msra.mxu0 0.0
    %1373 = vmatprep.subr.mxu0 0.0
    %1374 = vmatpush1.msra.mxu0 0.0
    %1375 = vmatprep.subr.mxu0 0.0
    %1376 = vmatpush1.msra.mxu0 0.0
    %1377 = vmatprep.subr.mxu0 0.0
    %1378 = vmatpush1.msra.mxu0 0.0
    %1379 = vmatprep.subr.mxu0 0.0
    %1380 = vmatpush1.msra.mxu0 0.0
    %1381 = vmatprep.subr.mxu0 0.0
    %1382 = vmatpush1.msra.mxu0 0.0
    %1383 = vmatprep.subr.mxu0 0.0
    %1384 = vmatpush1.msra.mxu0 0.0
    %1385 = vmatprep.subr.mxu0 0.0
    %1386 = vmatpush1.msra.mxu0 0.0
    %1387 = vmatprep.subr.mxu0 0.0
    %1388 = vmatpush1.msra.mxu0 0.0
    %1389 = vmatprep.subr.mxu0 0.0
    %1390 = vmatpush1.msra.mxu0 0.0
    %1391 = vmatprep.subr.mxu0 0.0
    %1392 = vmatpush1.msra.mxu0 0.0
    %1393 = vmatprep.subr.mxu0 0.0
    %1394 = vmatpush1.msra.mxu0 0.0
    %1395 = vmatprep.subr.mxu0 0.0
    %1396 = vmatpush1.msra.mxu0 %v1370
    %1397 = vmatprep.subr.mxu0 0.0
    %1398 = vmatpush1.msra.mxu0 %v1369
    %1399 = vmatprep.subr.mxu0 0.0
    %1400 = vmatpush1.msra.mxu0 %v1368
    %1401 = vmatprep.subr.mxu0 0.0
    %1402 = vmatpush1.msra.mxu0 %v1367
    %1403 = vmatprep.subr.mxu0 0.0
    %1404 = vmatpush2.msra.mxu0 0.0
    %1405 = vmatprep.subr.mxu0 0.0
    %1406 = vmatpush2.msra.mxu0 0.0
    %1407 = vmatprep.subr.mxu0 0.0
    %1408 = vmatpush2.msra.mxu0 0.0
    %1409 = vmatprep.subr.mxu0 0.0
    %1410 = vmatpush2.msra.mxu0 0.0
    %1411 = vmatprep.subr.mxu0 0.0
    %1412 = vmatpush2.msra.mxu0 0.0
    %1413 = vmatprep.subr.mxu0 0.0
    %1414 = vmatpush2.msra.mxu0 0.0
    %1415 = vmatprep.subr.mxu0 0.0
    %1416 = vmatpush2.msra.mxu0 0.0
    %1417 = vmatprep.subr.mxu0 0.0
    %1418 = vmatpush2.msra.mxu0 0.0
    %1419 = vmatprep.subr.mxu0 0.0
    %1420 = vmatpush2.msra.mxu0 0.0
    %1421 = vmatprep.subr.mxu0 0.0
    %1422 = vmatpush2.msra.mxu0 0.0
    %1423 = vmatprep.subr.mxu0 0.0
    %1424 = vmatpush2.msra.mxu0 0.0
    %1425 = vmatprep.subr.mxu0 0.0
    %1426 = vmatpush2.msra.mxu0 0.0
    %1427 = vmatprep.subr.mxu0 0.0
    %1428 = vmatpush2.msra.mxu0 0.0
    %1429 = vmatprep.subr.mxu0 0.0
    %1430 = vmatpush2.msra.mxu0 0.0
    %1431 = vmatprep.subr.mxu0 0.0
    %1432 = vmatpush2.msra.mxu0 0.0
    %1433 = vmatprep.subr.mxu0 0.0
    %1434 = vmatpush2.msra.mxu0 0.0
    %1435 = vmatprep.mubr.f32.mxu0 0.0
    %1436 = vmatmul.mubr.f32.gmra.mxu0 %v293
    %v1437 = vpop.f32.mrf.mxu0
    %v1438 = vadd.f32 0.0, %v1437
    %v1439 = vpop.f32.mrf.mxu0
    %1440 = vmatprep.mubr.f32.mxu0 0.0
    %1441 = vmatmul.mubr.f32.gmra.mxu0 %v296
    %v1442 = vpop.f32.mrf.mxu0
    %v1443 = vadd.f32 0.0, %v1442
    %v1444 = vpop.f32.mrf.mxu0
    %1445 = vmatprep.mubr.f32.mxu0 0.0
    %1446 = vmatmul.mubr.f32.gmra.mxu0 %v299
    %v1447 = vpop.f32.mrf.mxu0
    %v1448 = vadd.f32 0.0, %v1447
    %v1449 = vpop.f32.mrf.mxu0
    %1450 = vmatprep.mubr.f32.mxu0 0.0
    %1451 = vmatmul.mubr.f32.gmra.mxu0 %v302
    %v1452 = vpop.f32.mrf.mxu0
    %v1453 = vadd.f32 0.0, %v1452
    %v1454 = vpop.f32.mrf.mxu0
    %1455 = vdwg.mxu0
    %v1457 = vsel %vm567, %v1258, 0
    %v1460 = vsel %vm567, %v1263, 0
    %v1463 = vsel %vm567, %v1348, 0
    %v1466 = vsel %vm567, %v1353, 0
    %1468 = vmatprep.subr.mxu0 0.0
    %1469 = vmatpush1.xpose.msra.mxu0 0.0
    %1470 = vmatprep.subr.mxu0 0.0
    %1471 = vmatpush1.xpose.msra.mxu0 0.0
    %1472 = vmatprep.subr.mxu0 0.0
    %1473 = vmatpush1.xpose.msra.mxu0 0.0
    %1474 = vmatprep.subr.mxu0 0.0
    %1475 = vmatpush1.xpose.msra.mxu0 0.0
    %1476 = vmatprep.subr.mxu0 0.0
    %1477 = vmatpush1.xpose.msra.mxu0 0.0
    %1478 = vmatprep.subr.mxu0 0.0
    %1479 = vmatpush1.xpose.msra.mxu0 0.0
    %1480 = vmatprep.subr.mxu0 0.0
    %1481 = vmatpush1.xpose.msra.mxu0 0.0
    %1482 = vmatprep.subr.mxu0 0.0
    %1483 = vmatpush1.xpose.msra.mxu0 0.0
    %1484 = vmatprep.subr.mxu0 0.0
    %1485 = vmatpush1.xpose.msra.mxu0 0.0
    %1486 = vmatprep.subr.mxu0 0.0
    %1487 = vmatpush1.xpose.msra.mxu0 0.0
    %1488 = vmatprep.subr.mxu0 0.0
    %1489 = vmatpush1.xpose.msra.mxu0 0.0
    %1490 = vmatprep.subr.mxu0 0.0
    %1491 = vmatpush1.xpose.msra.mxu0 0.0
    %1492 = vmatprep.subr.mxu0 0.0
    %1493 = vmatpush1.xpose.msra.mxu0 0.0
    %1494 = vmatprep.subr.mxu0 0.0
    %1495 = vmatpush1.xpose.msra.mxu0 0.0
    %1496 = vmatprep.subr.mxu0 0.0
    %1497 = vmatpush1.xpose.msra.mxu0 %v1466
    %1498 = vmatprep.subr.mxu0 0.0
    %1499 = vmatpush1.xpose.msra.mxu0 %v1463
    %1500 = vmatprep.subr.mxu0 0.0
    %1501 = vmatpush2.xpose.msra.mxu0 0.0
    %1502 = vmatprep.subr.mxu0 0.0
    %1503 = vmatpush2.xpose.msra.mxu0 0.0
    %1504 = vmatprep.subr.mxu0 0.0
    %1505 = vmatpush2.xpose.msra.mxu0 0.0
    %1506 = vmatprep.subr.mxu0 0.0
    %1507 = vmatpush2.xpose.msra.mxu0 0.0
    %1508 = vmatprep.subr.mxu0 0.0
    %1509 = vmatpush2.xpose.msra.mxu0 0.0
    %1510 = vmatprep.subr.mxu0 0.0
    %1511 = vmatpush2.xpose.msra.mxu0 0.0
    %1512 = vmatprep.subr.mxu0 0.0
    %1513 = vmatpush2.xpose.msra.mxu0 0.0
    %1514 = vmatprep.subr.mxu0 0.0
    %1515 = vmatpush2.xpose.msra.mxu0 0.0
    %1516 = vmatprep.subr.mxu0 0.0
    %1517 = vmatpush2.xpose.msra.mxu0 0.0
    %1518 = vmatprep.subr.mxu0 0.0
    %1519 = vmatpush2.xpose.msra.mxu0 0.0
    %1520 = vmatprep.subr.mxu0 0.0
    %1521 = vmatpush2.xpose.msra.mxu0 0.0
    %1522 = vmatprep.subr.mxu0 0.0
    %1523 = vmatpush2.xpose.msra.mxu0 0.0
    %1524 = vmatprep.subr.mxu0 0.0
    %1525 = vmatpush2.xpose.msra.mxu0 0.0
    %1526 = vmatprep.subr.mxu0 0.0
    %1527 = vmatpush2.xpose.msra.mxu0 0.0
    %1528 = vmatprep.subr.mxu0 0.0
    %1529 = vmatpush2.xpose.msra.mxu0 0.0
    %1530 = vmatprep.subr.mxu0 0.0
    %1531 = vmatpush2.xpose.msra.mxu0 0.0
    %1532 = vmatprep.mubr.f32.mxu0 0.0
    %1533 = vmatmul.mubr.f32.gmra.mxu0 %v1457
    %v1534 = vpop.f32.mrf.mxu0
    %v1535 = vadd.f32 0.0, %v1534
    %v1536 = vpop.f32.mrf.mxu0
    %1537 = vmatprep.mubr.f32.mxu0 0.0
    %1538 = vmatmul.mubr.f32.gmra.mxu0 %v1460
    %v1539 = vpop.f32.mrf.mxu0
    %v1540 = vadd.f32 0.0, %v1539
    %v1541 = vpop.f32.mrf.mxu0
    %1542 = vdwg.mxu0
    %v1544 = vsel %vm567, %v1268, 0
    %v1547 = vsel %vm567, %v1273, 0
    %v1550 = vsel %vm567, %v1358, 0
    %v1553 = vsel %vm567, %v1363, 0
    %1555 = vmatprep.subr.mxu0 0.0
    %1556 = vmatpush1.xpose.msra.mxu0 0.0
    %1557 = vmatprep.subr.mxu0 0.0
    %1558 = vmatpush1.xpose.msra.mxu0 0.0
    %1559 = vmatprep.subr.mxu0 0.0
    %1560 = vmatpush1.xpose.msra.mxu0 0.0
    %1561 = vmatprep.subr.mxu0 0.0
    %1562 = vmatpush1.xpose.msra.mxu0 0.0
    %1563 = vmatprep.subr.mxu0 0.0
    %1564 = vmatpush1.xpose.msra.mxu0 0.0
    %1565 = vmatprep.subr.mxu0 0.0
    %1566 = vmatpush1.xpose.msra.mxu0 0.0
    %1567 = vmatprep.subr.mxu0 0.0
    %1568 = vmatpush1.xpose.msra.mxu0 0.0
    %1569 = vmatprep.subr.mxu0 0.0
    %1570 = vmatpush1.xpose.msra.mxu0 0.0
    %1571 = vmatprep.subr.mxu0 0.0
    %1572 = vmatpush1.xpose.msra.mxu0 0.0
    %1573 = vmatprep.subr.mxu0 0.0
    %1574 = vmatpush1.xpose.msra.mxu0 0.0
    %1575 = vmatprep.subr.mxu0 0.0
    %1576 = vmatpush1.xpose.msra.mxu0 0.0
    %1577 = vmatprep.subr.mxu0 0.0
    %1578 = vmatpush1.xpose.msra.mxu0 0.0
    %1579 = vmatprep.subr.mxu0 0.0
    %1580 = vmatpush1.xpose.msra.mxu0 0.0
    %1581 = vmatprep.subr.mxu0 0.0
    %1582 = vmatpush1.xpose.msra.mxu0 0.0
    %1583 = vmatprep.subr.mxu0 0.0
    %1584 = vmatpush1.xpose.msra.mxu0 %v1553
    %1585 = vmatprep.subr.mxu0 0.0
    %1586 = vmatpush1.xpose.msra.mxu0 %v1550
    %1587 = vmatprep.subr.mxu0 0.0
    %1588 = vmatpush2.xpose.msra.mxu0 0.0
    %1589 = vmatprep.subr.mxu0 0.0
    %1590 = vmatpush2.xpose.msra.mxu0 0.0
    %1591 = vmatprep.subr.mxu0 0.0
    %1592 = vmatpush2.xpose.msra.mxu0 0.0
    %1593 = vmatprep.subr.mxu0 0.0
    %1594 = vmatpush2.xpose.msra.mxu0 0.0
    %1595 = vmatprep.subr.mxu0 0.0
    %1596 = vmatpush2.xpose.msra.mxu0 0.0
    %1597 = vmatprep.subr.mxu0 0.0
    %1598 = vmatpush2.xpose.msra.mxu0 0.0
    %1599 = vmatprep.subr.mxu0 0.0
    %1600 = vmatpush2.xpose.msra.mxu0 0.0
    %1601 = vmatprep.subr.mxu0 0.0
    %1602 = vmatpush2.xpose.msra.mxu0 0.0
    %1603 = vmatprep.subr.mxu0 0.0
    %1604 = vmatpush2.xpose.msra.mxu0 0.0
    %1605 = vmatprep.subr.mxu0 0.0
    %1606 = vmatpush2.xpose.msra.mxu0 0.0
    %1607 = vmatprep.subr.mxu0 0.0
    %1608 = vmatpush2.xpose.msra.mxu0 0.0
    %1609 = vmatprep.subr.mxu0 0.0
    %1610 = vmatpush2.xpose.msra.mxu0 0.0
    %1611 = vmatprep.subr.mxu0 0.0
    %1612 = vmatpush2.xpose.msra.mxu0 0.0
    %1613 = vmatprep.subr.mxu0 0.0
    %1614 = vmatpush2.xpose.msra.mxu0 0.0
    %1615 = vmatprep.subr.mxu0 0.0
    %1616 = vmatpush2.xpose.msra.mxu0 0.0
    %1617 = vmatprep.subr.mxu0 0.0
    %1618 = vmatpush2.xpose.msra.mxu0 0.0
    %1619 = vmatprep.mubr.f32.mxu0 0.0
    %1620 = vmatmul.mubr.f32.gmra.mxu0 %v1544
    %v1621 = vpop.f32.mrf.mxu0
    %v1622 = vadd.f32 0.0, %v1621
    %v1623 = vpop.f32.mrf.mxu0
    %1624 = vmatprep.mubr.f32.mxu0 0.0
    %1625 = vmatmul.mubr.f32.gmra.mxu0 %v1547
    %v1626 = vpop.f32.mrf.mxu0
    %v1627 = vadd.f32 0.0, %v1626
    %v1628 = vpop.f32.mrf.mxu0
    %1629 = vdwg.mxu0
    %s1630 = scalar_lea.vmem %s9, 96
    %v1631 = vld [vmem:[%s1630] sm:$0xff]
    %v1632 = vld [vmem:[%s1630 + $0x8] sm:$0xff]
    %v1633 = vld [vmem:[%s1630 + $0x10] sm:$0xff]
    %v1634 = vld [vmem:[%s1630 + $0x18] sm:$0xff]
    %1635 = vmatprep.subr.mxu0 0.0
    %1636 = vmatpush1.msra.mxu0 0.0
    %1637 = vmatprep.subr.mxu0 0.0
    %1638 = vmatpush1.msra.mxu0 0.0
    %1639 = vmatprep.subr.mxu0 0.0
    %1640 = vmatpush1.msra.mxu0 0.0
    %1641 = vmatprep.subr.mxu0 0.0
    %1642 = vmatpush1.msra.mxu0 0.0
    %1643 = vmatprep.subr.mxu0 0.0
    %1644 = vmatpush1.msra.mxu0 0.0
    %1645 = vmatprep.subr.mxu0 0.0
    %1646 = vmatpush1.msra.mxu0 0.0
    %1647 = vmatprep.subr.mxu0 0.0
    %1648 = vmatpush1.msra.mxu0 0.0
    %1649 = vmatprep.subr.mxu0 0.0
    %1650 = vmatpush1.msra.mxu0 0.0
    %1651 = vmatprep.subr.mxu0 0.0
    %1652 = vmatpush1.msra.mxu0 0.0
    %1653 = vmatprep.subr.mxu0 0.0
    %1654 = vmatpush1.msra.mxu0 0.0
    %1655 = vmatprep.subr.mxu0 0.0
    %1656 = vmatpush1.msra.mxu0 0.0
    %1657 = vmatprep.subr.mxu0 0.0
    %1658 = vmatpush1.msra.mxu0 0.0
    %1659 = vmatprep.subr.mxu0 0.0
    %1660 = vmatpush1.msra.mxu0 %v1634
    %1661 = vmatprep.subr.mxu0 0.0
    %1662 = vmatpush1.msra.mxu0 %v1633
    %1663 = vmatprep.subr.mxu0 0.0
    %1664 = vmatpush1.msra.mxu0 %v1632
    %1665 = vmatprep.subr.mxu0 0.0
    %1666 = vmatpush1.msra.mxu0 %v1631
    %1667 = vmatprep.subr.mxu0 0.0
    %1668 = vmatpush2.msra.mxu0 0.0
    %1669 = vmatprep.subr.mxu0 0.0
    %1670 = vmatpush2.msra.mxu0 0.0
    %1671 = vmatprep.subr.mxu0 0.0
    %1672 = vmatpush2.msra.mxu0 0.0
    %1673 = vmatprep.subr.mxu0 0.0
    %1674 = vmatpush2.msra.mxu0 0.0
    %1675 = vmatprep.subr.mxu0 0.0
    %1676 = vmatpush2.msra.mxu0 0.0
    %1677 = vmatprep.subr.mxu0 0.0
    %1678 = vmatpush2.msra.mxu0 0.0
    %1679 = vmatprep.subr.mxu0 0.0
    %1680 = vmatpush2.msra.mxu0 0.0
    %1681 = vmatprep.subr.mxu0 0.0
    %1682 = vmatpush2.msra.mxu0 0.0
    %1683 = vmatprep.subr.mxu0 0.0
    %1684 = vmatpush2.msra.mxu0 0.0
    %1685 = vmatprep.subr.mxu0 0.0
    %1686 = vmatpush2.msra.mxu0 0.0
    %1687 = vmatprep.subr.mxu0 0.0
    %1688 = vmatpush2.msra.mxu0 0.0
    %1689 = vmatprep.subr.mxu0 0.0
    %1690 = vmatpush2.msra.mxu0 0.0
    %1691 = vmatprep.subr.mxu0 0.0
    %1692 = vmatpush2.msra.mxu0 0.0
    %1693 = vmatprep.subr.mxu0 0.0
    %1694 = vmatpush2.msra.mxu0 0.0
    %1695 = vmatprep.subr.mxu0 0.0
    %1696 = vmatpush2.msra.mxu0 0.0
    %1697 = vmatprep.subr.mxu0 0.0
    %1698 = vmatpush2.msra.mxu0 0.0
    %1699 = vmatprep.mubr.f32.mxu0 0.0
    %1700 = vmatmul.mubr.f32.gmra.mxu0 %v293
    %v1701 = vpop.f32.mrf.mxu0
    %v1702 = vadd.f32 0.0, %v1701
    %v1703 = vpop.f32.mrf.mxu0
    %1704 = vmatprep.mubr.f32.mxu0 0.0
    %1705 = vmatmul.mubr.f32.gmra.mxu0 %v296
    %v1706 = vpop.f32.mrf.mxu0
    %v1707 = vadd.f32 0.0, %v1706
    %v1708 = vpop.f32.mrf.mxu0
    %1709 = vmatprep.mubr.f32.mxu0 0.0
    %1710 = vmatmul.mubr.f32.gmra.mxu0 %v299
    %v1711 = vpop.f32.mrf.mxu0
    %v1712 = vadd.f32 0.0, %v1711
    %v1713 = vpop.f32.mrf.mxu0
    %1714 = vmatprep.mubr.f32.mxu0 0.0
    %1715 = vmatmul.mubr.f32.gmra.mxu0 %v302
    %v1716 = vpop.f32.mrf.mxu0
    %v1717 = vadd.f32 0.0, %v1716
    %v1718 = vpop.f32.mrf.mxu0
    %1719 = vdwg.mxu0
    %s1720 = scalar_lea.vmem %s10, 96
    %v1721 = vld [vmem:[%s1720] sm:$0xff]
    %v1722 = vld [vmem:[%s1720 + $0x8] sm:$0xff]
    %v1723 = vld [vmem:[%s1720 + $0x10] sm:$0xff]
    %v1724 = vld [vmem:[%s1720 + $0x18] sm:$0xff]
    %1725 = vmatprep.subr.mxu0 0.0
    %1726 = vmatpush1.msra.mxu0 0.0
    %1727 = vmatprep.subr.mxu0 0.0
    %1728 = vmatpush1.msra.mxu0 0.0
    %1729 = vmatprep.subr.mxu0 0.0
    %1730 = vmatpush1.msra.mxu0 0.0
    %1731 = vmatprep.subr.mxu0 0.0
    %1732 = vmatpush1.msra.mxu0 0.0
    %1733 = vmatprep.subr.mxu0 0.0
    %1734 = vmatpush1.msra.mxu0 0.0
    %1735 = vmatprep.subr.mxu0 0.0
    %1736 = vmatpush1.msra.mxu0 0.0
    %1737 = vmatprep.subr.mxu0 0.0
    %1738 = vmatpush1.msra.mxu0 0.0
    %1739 = vmatprep.subr.mxu0 0.0
    %1740 = vmatpush1.msra.mxu0 0.0
    %1741 = vmatprep.subr.mxu0 0.0
    %1742 = vmatpush1.msra.mxu0 0.0
    %1743 = vmatprep.subr.mxu0 0.0
    %1744 = vmatpush1.msra.mxu0 0.0
    %1745 = vmatprep.subr.mxu0 0.0
    %1746 = vmatpush1.msra.mxu0 0.0
    %1747 = vmatprep.subr.mxu0 0.0
    %1748 = vmatpush1.msra.mxu0 0.0
    %1749 = vmatprep.subr.mxu0 0.0
    %1750 = vmatpush1.msra.mxu0 %v1724
    %1751 = vmatprep.subr.mxu0 0.0
    %1752 = vmatpush1.msra.mxu0 %v1723
    %1753 = vmatprep.subr.mxu0 0.0
    %1754 = vmatpush1.msra.mxu0 %v1722
    %1755 = vmatprep.subr.mxu0 0.0
    %1756 = vmatpush1.msra.mxu0 %v1721
    %1757 = vmatprep.subr.mxu0 0.0
    %1758 = vmatpush2.msra.mxu0 0.0
    %1759 = vmatprep.subr.mxu0 0.0
    %1760 = vmatpush2.msra.mxu0 0.0
    %1761 = vmatprep.subr.mxu0 0.0
    %1762 = vmatpush2.msra.mxu0 0.0
    %1763 = vmatprep.subr.mxu0 0.0
    %1764 = vmatpush2.msra.mxu0 0.0
    %1765 = vmatprep.subr.mxu0 0.0
    %1766 = vmatpush2.msra.mxu0 0.0
    %1767 = vmatprep.subr.mxu0 0.0
    %1768 = vmatpush2.msra.mxu0 0.0
    %1769 = vmatprep.subr.mxu0 0.0
    %1770 = vmatpush2.msra.mxu0 0.0
    %1771 = vmatprep.subr.mxu0 0.0
    %1772 = vmatpush2.msra.mxu0 0.0
    %1773 = vmatprep.subr.mxu0 0.0
    %1774 = vmatpush2.msra.mxu0 0.0
    %1775 = vmatprep.subr.mxu0 0.0
    %1776 = vmatpush2.msra.mxu0 0.0
    %1777 = vmatprep.subr.mxu0 0.0
    %1778 = vmatpush2.msra.mxu0 0.0
    %1779 = vmatprep.subr.mxu0 0.0
    %1780 = vmatpush2.msra.mxu0 0.0
    %1781 = vmatprep.subr.mxu0 0.0
    %1782 = vmatpush2.msra.mxu0 0.0
    %1783 = vmatprep.subr.mxu0 0.0
    %1784 = vmatpush2.msra.mxu0 0.0
    %1785 = vmatprep.subr.mxu0 0.0
    %1786 = vmatpush2.msra.mxu0 0.0
    %1787 = vmatprep.subr.mxu0 0.0
    %1788 = vmatpush2.msra.mxu0 0.0
    %1789 = vmatprep.mubr.f32.mxu0 0.0
    %1790 = vmatmul.mubr.f32.gmra.mxu0 %v293
    %v1791 = vpop.f32.mrf.mxu0
    %v1792 = vadd.f32 0.0, %v1791
    %v1793 = vpop.f32.mrf.mxu0
    %1794 = vmatprep.mubr.f32.mxu0 0.0
    %1795 = vmatmul.mubr.f32.gmra.mxu0 %v296
    %v1796 = vpop.f32.mrf.mxu0
    %v1797 = vadd.f32 0.0, %v1796
    %v1798 = vpop.f32.mrf.mxu0
    %1799 = vmatprep.mubr.f32.mxu0 0.0
    %1800 = vmatmul.mubr.f32.gmra.mxu0 %v299
    %v1801 = vpop.f32.mrf.mxu0
    %v1802 = vadd.f32 0.0, %v1801
    %v1803 = vpop.f32.mrf.mxu0
    %1804 = vmatprep.mubr.f32.mxu0 0.0
    %1805 = vmatmul.mubr.f32.gmra.mxu0 %v302
    %v1806 = vpop.f32.mrf.mxu0
    %v1807 = vadd.f32 0.0, %v1806
    %v1808 = vpop.f32.mrf.mxu0
    %1809 = vdwg.mxu0
    %s1810 = scalar_lea.vmem %s11, 96
    %v1811 = vld [vmem:[%s1810] sm:$0xff]
    %v1812 = vld [vmem:[%s1810 + $0x8] sm:$0xff]
    %v1813 = vld [vmem:[%s1810 + $0x10] sm:$0xff]
    %v1814 = vld [vmem:[%s1810 + $0x18] sm:$0xff]
    %1815 = vmatprep.subr.mxu0 0.0
    %1816 = vmatpush1.msra.mxu0 0.0
    %1817 = vmatprep.subr.mxu0 0.0
    %1818 = vmatpush1.msra.mxu0 0.0
    %1819 = vmatprep.subr.mxu0 0.0
    %1820 = vmatpush1.msra.mxu0 0.0
    %1821 = vmatprep.subr.mxu0 0.0
    %1822 = vmatpush1.msra.mxu0 0.0
    %1823 = vmatprep.subr.mxu0 0.0
    %1824 = vmatpush1.msra.mxu0 0.0
    %1825 = vmatprep.subr.mxu0 0.0
    %1826 = vmatpush1.msra.mxu0 0.0
    %1827 = vmatprep.subr.mxu0 0.0
    %1828 = vmatpush1.msra.mxu0 0.0
    %1829 = vmatprep.subr.mxu0 0.0
    %1830 = vmatpush1.msra.mxu0 0.0
    %1831 = vmatprep.subr.mxu0 0.0
    %1832 = vmatpush1.msra.mxu0 0.0
    %1833 = vmatprep.subr.mxu0 0.0
    %1834 = vmatpush1.msra.mxu0 0.0
    %1835 = vmatprep.subr.mxu0 0.0
    %1836 = vmatpush1.msra.mxu0 0.0
    %1837 = vmatprep.subr.mxu0 0.0
    %1838 = vmatpush1.msra.mxu0 0.0
    %1839 = vmatprep.subr.mxu0 0.0
    %1840 = vmatpush1.msra.mxu0 %v1814
    %1841 = vmatprep.subr.mxu0 0.0
    %1842 = vmatpush1.msra.mxu0 %v1813
    %1843 = vmatprep.subr.mxu0 0.0
    %1844 = vmatpush1.msra.mxu0 %v1812
    %1845 = vmatprep.subr.mxu0 0.0
    %1846 = vmatpush1.msra.mxu0 %v1811
    %1847 = vmatprep.subr.mxu0 0.0
    %1848 = vmatpush2.msra.mxu0 0.0
    %1849 = vmatprep.subr.mxu0 0.0
    %1850 = vmatpush2.msra.mxu0 0.0
    %1851 = vmatprep.subr.mxu0 0.0
    %1852 = vmatpush2.msra.mxu0 0.0
    %1853 = vmatprep.subr.mxu0 0.0
    %1854 = vmatpush2.msra.mxu0 0.0
    %1855 = vmatprep.subr.mxu0 0.0
    %1856 = vmatpush2.msra.mxu0 0.0
    %1857 = vmatprep.subr.mxu0 0.0
    %1858 = vmatpush2.msra.mxu0 0.0
    %1859 = vmatprep.subr.mxu0 0.0
    %1860 = vmatpush2.msra.mxu0 0.0
    %1861 = vmatprep.subr.mxu0 0.0
    %1862 = vmatpush2.msra.mxu0 0.0
    %1863 = vmatprep.subr.mxu0 0.0
    %1864 = vmatpush2.msra.mxu0 0.0
    %1865 = vmatprep.subr.mxu0 0.0
    %1866 = vmatpush2.msra.mxu0 0.0
    %1867 = vmatprep.subr.mxu0 0.0
    %1868 = vmatpush2.msra.mxu0 0.0
    %1869 = vmatprep.subr.mxu0 0.0
    %1870 = vmatpush2.msra.mxu0 0.0
    %1871 = vmatprep.subr.mxu0 0.0
    %1872 = vmatpush2.msra.mxu0 0.0
    %1873 = vmatprep.subr.mxu0 0.0
    %1874 = vmatpush2.msra.mxu0 0.0
    %1875 = vmatprep.subr.mxu0 0.0
    %1876 = vmatpush2.msra.mxu0 0.0
    %1877 = vmatprep.subr.mxu0 0.0
    %1878 = vmatpush2.msra.mxu0 0.0
    %1879 = vmatprep.mubr.f32.mxu0 0.0
    %1880 = vmatmul.mubr.f32.gmra.mxu0 %v293
    %v1881 = vpop.f32.mrf.mxu0
    %v1882 = vadd.f32 0.0, %v1881
    %v1883 = vpop.f32.mrf.mxu0
    %1884 = vmatprep.mubr.f32.mxu0 0.0
    %1885 = vmatmul.mubr.f32.gmra.mxu0 %v296
    %v1886 = vpop.f32.mrf.mxu0
    %v1887 = vadd.f32 0.0, %v1886
    %v1888 = vpop.f32.mrf.mxu0
    %1889 = vmatprep.mubr.f32.mxu0 0.0
    %1890 = vmatmul.mubr.f32.gmra.mxu0 %v299
    %v1891 = vpop.f32.mrf.mxu0
    %v1892 = vadd.f32 0.0, %v1891
    %v1893 = vpop.f32.mrf.mxu0
    %1894 = vmatprep.mubr.f32.mxu0 0.0
    %1895 = vmatmul.mubr.f32.gmra.mxu0 %v302
    %v1896 = vpop.f32.mrf.mxu0
    %v1897 = vadd.f32 0.0, %v1896
    %v1898 = vpop.f32.mrf.mxu0
    %1899 = vdwg.mxu0
    %v1901 = vsel %vm567, %v1702, 0
    %v1904 = vsel %vm567, %v1707, 0
    %v1907 = vsel %vm567, %v1792, 0
    %v1910 = vsel %vm567, %v1797, 0
    %1912 = vmatprep.subr.mxu0 0.0
    %1913 = vmatpush1.xpose.msra.mxu0 0.0
    %1914 = vmatprep.subr.mxu0 0.0
    %1915 = vmatpush1.xpose.msra.mxu0 0.0
    %1916 = vmatprep.subr.mxu0 0.0
    %1917 = vmatpush1.xpose.msra.mxu0 0.0
    %1918 = vmatprep.subr.mxu0 0.0
    %1919 = vmatpush1.xpose.msra.mxu0 0.0
    %1920 = vmatprep.subr.mxu0 0.0
    %1921 = vmatpush1.xpose.msra.mxu0 0.0
    %1922 = vmatprep.subr.mxu0 0.0
    %1923 = vmatpush1.xpose.msra.mxu0 0.0
    %1924 = vmatprep.subr.mxu0 0.0
    %1925 = vmatpush1.xpose.msra.mxu0 0.0
    %1926 = vmatprep.subr.mxu0 0.0
    %1927 = vmatpush1.xpose.msra.mxu0 0.0
    %1928 = vmatprep.subr.mxu0 0.0
    %1929 = vmatpush1.xpose.msra.mxu0 0.0
    %1930 = vmatprep.subr.mxu0 0.0
    %1931 = vmatpush1.xpose.msra.mxu0 0.0
    %1932 = vmatprep.subr.mxu0 0.0
    %1933 = vmatpush1.xpose.msra.mxu0 0.0
    %1934 = vmatprep.subr.mxu0 0.0
    %1935 = vmatpush1.xpose.msra.mxu0 0.0
    %1936 = vmatprep.subr.mxu0 0.0
    %1937 = vmatpush1.xpose.msra.mxu0 0.0
    %1938 = vmatprep.subr.mxu0 0.0
    %1939 = vmatpush1.xpose.msra.mxu0 0.0
    %1940 = vmatprep.subr.mxu0 0.0
    %1941 = vmatpush1.xpose.msra.mxu0 %v1910
    %1942 = vmatprep.subr.mxu0 0.0
    %1943 = vmatpush1.xpose.msra.mxu0 %v1907
    %1944 = vmatprep.subr.mxu0 0.0
    %1945 = vmatpush2.xpose.msra.mxu0 0.0
    %1946 = vmatprep.subr.mxu0 0.0
    %1947 = vmatpush2.xpose.msra.mxu0 0.0
    %1948 = vmatprep.subr.mxu0 0.0
    %1949 = vmatpush2.xpose.msra.mxu0 0.0
    %1950 = vmatprep.subr.mxu0 0.0
    %1951 = vmatpush2.xpose.msra.mxu0 0.0
    %1952 = vmatprep.subr.mxu0 0.0
    %1953 = vmatpush2.xpose.msra.mxu0 0.0
    %1954 = vmatprep.subr.mxu0 0.0
    %1955 = vmatpush2.xpose.msra.mxu0 0.0
    %1956 = vmatprep.subr.mxu0 0.0
    %1957 = vmatpush2.xpose.msra.mxu0 0.0
    %1958 = vmatprep.subr.mxu0 0.0
    %1959 = vmatpush2.xpose.msra.mxu0 0.0
    %1960 = vmatprep.subr.mxu0 0.0
    %1961 = vmatpush2.xpose.msra.mxu0 0.0
    %1962 = vmatprep.subr.mxu0 0.0
    %1963 = vmatpush2.xpose.msra.mxu0 0.0
    %1964 = vmatprep.subr.mxu0 0.0
    %1965 = vmatpush2.xpose.msra.mxu0 0.0
    %1966 = vmatprep.subr.mxu0 0.0
    %1967 = vmatpush2.xpose.msra.mxu0 0.0
    %1968 = vmatprep.subr.mxu0 0.0
    %1969 = vmatpush2.xpose.msra.mxu0 0.0
    %1970 = vmatprep.subr.mxu0 0.0
    %1971 = vmatpush2.xpose.msra.mxu0 0.0
    %1972 = vmatprep.subr.mxu0 0.0
    %1973 = vmatpush2.xpose.msra.mxu0 0.0
    %1974 = vmatprep.subr.mxu0 0.0
    %1975 = vmatpush2.xpose.msra.mxu0 0.0
    %1976 = vmatprep.mubr.f32.mxu0 0.0
    %1977 = vmatmul.mubr.f32.gmra.mxu0 %v1901
    %v1978 = vpop.f32.mrf.mxu0
    %v1979 = vadd.f32 0.0, %v1978
    %v1980 = vpop.f32.mrf.mxu0
    %1981 = vmatprep.mubr.f32.mxu0 0.0
    %1982 = vmatmul.mubr.f32.gmra.mxu0 %v1904
    %v1983 = vpop.f32.mrf.mxu0
    %v1984 = vadd.f32 0.0, %v1983
    %v1985 = vpop.f32.mrf.mxu0
    %1986 = vdwg.mxu0
    %v1988 = vsel %vm567, %v1712, 0
    %v1991 = vsel %vm567, %v1717, 0
    %v1994 = vsel %vm567, %v1802, 0
    %v1997 = vsel %vm567, %v1807, 0
    %1999 = vmatprep.subr.mxu0 0.0
    %2000 = vmatpush1.xpose.msra.mxu0 0.0
    %2001 = vmatprep.subr.mxu0 0.0
    %2002 = vmatpush1.xpose.msra.mxu0 0.0
    %2003 = vmatprep.subr.mxu0 0.0
    %2004 = vmatpush1.xpose.msra.mxu0 0.0
    %2005 = vmatprep.subr.mxu0 0.0
    %2006 = vmatpush1.xpose.msra.mxu0 0.0
    %2007 = vmatprep.subr.mxu0 0.0
    %2008 = vmatpush1.xpose.msra.mxu0 0.0
    %2009 = vmatprep.subr.mxu0 0.0
    %2010 = vmatpush1.xpose.msra.mxu0 0.0
    %2011 = vmatprep.subr.mxu0 0.0
    %2012 = vmatpush1.xpose.msra.mxu0 0.0
    %2013 = vmatprep.subr.mxu0 0.0
    %2014 = vmatpush1.xpose.msra.mxu0 0.0
    %2015 = vmatprep.subr.mxu0 0.0
    %2016 = vmatpush1.xpose.msra.mxu0 0.0
    %2017 = vmatprep.subr.mxu0 0.0
    %2018 = vmatpush1.xpose.msra.mxu0 0.0
    %2019 = vmatprep.subr.mxu0 0.0
    %2020 = vmatpush1.xpose.msra.mxu0 0.0
    %2021 = vmatprep.subr.mxu0 0.0
    %2022 = vmatpush1.xpose.msra.mxu0 0.0
    %2023 = vmatprep.subr.mxu0 0.0
    %2024 = vmatpush1.xpose.msra.mxu0 0.0
    %2025 = vmatprep.subr.mxu0 0.0
    %2026 = vmatpush1.xpose.msra.mxu0 0.0
    %2027 = vmatprep.subr.mxu0 0.0
    %2028 = vmatpush1.xpose.msra.mxu0 %v1997
    %2029 = vmatprep.subr.mxu0 0.0
    %2030 = vmatpush1.xpose.msra.mxu0 %v1994
    %2031 = vmatprep.subr.mxu0 0.0
    %2032 = vmatpush2.xpose.msra.mxu0 0.0
    %2033 = vmatprep.subr.mxu0 0.0
    %2034 = vmatpush2.xpose.msra.mxu0 0.0
    %2035 = vmatprep.subr.mxu0 0.0
    %2036 = vmatpush2.xpose.msra.mxu0 0.0
    %2037 = vmatprep.subr.mxu0 0.0
    %2038 = vmatpush2.xpose.msra.mxu0 0.0
    %2039 = vmatprep.subr.mxu0 0.0
    %2040 = vmatpush2.xpose.msra.mxu0 0.0
    %2041 = vmatprep.subr.mxu0 0.0
    %2042 = vmatpush2.xpose.msra.mxu0 0.0
    %2043 = vmatprep.subr.mxu0 0.0
    %2044 = vmatpush2.xpose.msra.mxu0 0.0
    %2045 = vmatprep.subr.mxu0 0.0
    %2046 = vmatpush2.xpose.msra.mxu0 0.0
    %2047 = vmatprep.subr.mxu0 0.0
    %2048 = vmatpush2.xpose.msra.mxu0 0.0
    %2049 = vmatprep.subr.mxu0 0.0
    %2050 = vmatpush2.xpose.msra.mxu0 0.0
    %2051 = vmatprep.subr.mxu0 0.0
    %2052 = vmatpush2.xpose.msra.mxu0 0.0
    %2053 = vmatprep.subr.mxu0 0.0
    %2054 = vmatpush2.xpose.msra.mxu0 0.0
    %2055 = vmatprep.subr.mxu0 0.0
    %2056 = vmatpush2.xpose.msra.mxu0 0.0
    %2057 = vmatprep.subr.mxu0 0.0
    %2058 = vmatpush2.xpose.msra.mxu0 0.0
    %2059 = vmatprep.subr.mxu0 0.0
    %2060 = vmatpush2.xpose.msra.mxu0 0.0
    %2061 = vmatprep.subr.mxu0 0.0
    %2062 = vmatpush2.xpose.msra.mxu0 0.0
    %2063 = vmatprep.mubr.f32.mxu0 0.0
    %2064 = vmatmul.mubr.f32.gmra.mxu0 %v1988
    %v2065 = vpop.f32.mrf.mxu0
    %v2066 = vadd.f32 0.0, %v2065
    %v2067 = vpop.f32.mrf.mxu0
    %2068 = vmatprep.mubr.f32.mxu0 0.0
    %2069 = vmatmul.mubr.f32.gmra.mxu0 %v1991
    %v2070 = vpop.f32.mrf.mxu0
    %v2071 = vadd.f32 0.0, %v2070
    %v2072 = vpop.f32.mrf.mxu0
    %2073 = vdwg.mxu0
    %v2074 = vadd.f32 %v647, %v227
    %v2075 = vadd.f32 %v652, %v228
    %v2076 = vadd.f32 %v734, %v229
    %v2077 = vadd.f32 %v739, %v230
    %v2078 = vadd.f32 %v1091, %v231
    %v2079 = vadd.f32 %v1096, %v232
    %v2080 = vadd.f32 %v1178, %v233
    %v2081 = vadd.f32 %v1183, %v234
    %v2082 = vadd.f32 %v1535, %v235
    %v2083 = vadd.f32 %v1540, %v236
    %v2084 = vadd.f32 %v1622, %v237
    %v2085 = vadd.f32 %v1627, %v238
    %v2086 = vadd.f32 %v1979, %v239
    %v2087 = vadd.f32 %v1984, %v240
    %v2088 = vadd.f32 %v2066, %v241
    %v2089 = vadd.f32 %v2071, %v242
    %v2090 = vsel %vm77, %v2074, -inf
    %2091 = vmax.xlane.f32.xlu0 %v2090
    %v2092 = vpop.xlane.xlu0 %2091
    %v2093 = vsel %vm77, %v2075, -inf
    %2094 = vmax.xlane.f32.xlu0 %v2093
    %v2095 = vpop.xlane.xlu0 %2094
    %v2096 = vsel %vm77, %v2076, -inf
    %2097 = vmax.xlane.f32.xlu0 %v2096
    %v2098 = vpop.xlane.xlu0 %2097
    %v2099 = vsel %vm77, %v2077, -inf
    %2100 = vmax.xlane.f32.xlu0 %v2099
    %v2101 = vpop.xlane.xlu0 %2100
    %v2102 = vsel %vm77, %v2078, -inf
    %2103 = vmax.xlane.f32.xlu0 %v2102
    %v2104 = vpop.xlane.xlu0 %2103
    %v2105 = vsel %vm77, %v2079, -inf
    %2106 = vmax.xlane.f32.xlu0 %v2105
    %v2107 = vpop.xlane.xlu0 %2106
    %v2108 = vsel %vm77, %v2080, -inf
    %2109 = vmax.xlane.f32.xlu0 %v2108
    %v2110 = vpop.xlane.xlu0 %2109
    %v2111 = vsel %vm77, %v2081, -inf
    %2112 = vmax.xlane.f32.xlu0 %v2111
    %v2113 = vpop.xlane.xlu0 %2112
    %v2114 = vsel %vm77, %v2082, -inf
    %2115 = vmax.xlane.f32.xlu0 %v2114
    %v2116 = vpop.xlane.xlu0 %2115
    %v2117 = vsel %vm77, %v2083, -inf
    %2118 = vmax.xlane.f32.xlu0 %v2117
    %v2119 = vpop.xlane.xlu0 %2118
    %v2120 = vsel %vm77, %v2084, -inf
    %2121 = vmax.xlane.f32.xlu0 %v2120
    %v2122 = vpop.xlane.xlu0 %2121
    %v2123 = vsel %vm77, %v2085, -inf
    %2124 = vmax.xlane.f32.xlu0 %v2123
    %v2125 = vpop.xlane.xlu0 %2124
    %v2126 = vsel %vm77, %v2086, -inf
    %2127 = vmax.xlane.f32.xlu0 %v2126
    %v2128 = vpop.xlane.xlu0 %2127
    %v2129 = vsel %vm77, %v2087, -inf
    %2130 = vmax.xlane.f32.xlu0 %v2129
    %v2131 = vpop.xlane.xlu0 %2130
    %v2132 = vsel %vm77, %v2088, -inf
    %2133 = vmax.xlane.f32.xlu0 %v2132
    %v2134 = vpop.xlane.xlu0 %2133
    %v2135 = vsel %vm77, %v2089, -inf
    %2136 = vmax.xlane.f32.xlu0 %v2135
    %v2137 = vpop.xlane.xlu0 %2136
    %v2138 = vsub.f32 %v2074, %v2092
    %v2139 = vsub.f32 %v2075, %v2095
    %v2140 = vsub.f32 %v2076, %v2098
    %v2141 = vsub.f32 %v2077, %v2101
    %v2142 = vsub.f32 %v2078, %v2104
    %v2143 = vsub.f32 %v2079, %v2107
    %v2144 = vsub.f32 %v2080, %v2110
    %v2145 = vsub.f32 %v2081, %v2113
    %v2146 = vsub.f32 %v2082, %v2116
    %v2147 = vsub.f32 %v2083, %v2119
    %v2148 = vsub.f32 %v2084, %v2122
    %v2149 = vsub.f32 %v2085, %v2125
    %v2150 = vsub.f32 %v2086, %v2128
    %v2151 = vsub.f32 %v2087, %v2131
    %v2152 = vsub.f32 %v2088, %v2134
    %v2153 = vsub.f32 %v2089, %v2137
    %v2154 = vmul.f32 %v2138, 1.442695
    %v2155 = vpow.pop %v2154
    %v2156 = vmul.f32 %v2139, 1.442695
    %v2157 = vpow.pop %v2156
    %v2158 = vmul.f32 %v2140, 1.442695
    %v2159 = vpow.pop %v2158
    %v2160 = vmul.f32 %v2141, 1.442695
    %v2161 = vpow.pop %v2160
    %v2162 = vmul.f32 %v2142, 1.442695
    %v2163 = vpow.pop %v2162
    %v2164 = vmul.f32 %v2143, 1.442695
    %v2165 = vpow.pop %v2164
    %v2166 = vmul.f32 %v2144, 1.442695
    %v2167 = vpow.pop %v2166
    %v2168 = vmul.f32 %v2145, 1.442695
    %v2169 = vpow.pop %v2168
    %v2170 = vmul.f32 %v2146, 1.442695
    %v2171 = vpow.pop %v2170
    %v2172 = vmul.f32 %v2147, 1.442695
    %v2173 = vpow.pop %v2172
    %v2174 = vmul.f32 %v2148, 1.442695
    %v2175 = vpow.pop %v2174
    %v2176 = vmul.f32 %v2149, 1.442695
    %v2177 = vpow.pop %v2176
    %v2178 = vmul.f32 %v2150, 1.442695
    %v2179 = vpow.pop %v2178
    %v2180 = vmul.f32 %v2151, 1.442695
    %v2181 = vpow.pop %v2180
    %v2182 = vmul.f32 %v2152, 1.442695
    %v2183 = vpow.pop %v2182
    %v2184 = vmul.f32 %v2153, 1.442695
    %v2185 = vpow.pop %v2184
    %v2186 = vsel %vm77, %v2155, 0.0
    %2187 = vadd.xlane.f32.xlu0 %v2186
    %v2188 = vpop.xlane.xlu0 %2187
    %v2189 = vsel %vm77, %v2157, 0.0
    %2190 = vadd.xlane.f32.xlu0 %v2189
    %v2191 = vpop.xlane.xlu0 %2190
    %v2192 = vsel %vm77, %v2159, 0.0
    %2193 = vadd.xlane.f32.xlu0 %v2192
    %v2194 = vpop.xlane.xlu0 %2193
    %v2195 = vsel %vm77, %v2161, 0.0
    %2196 = vadd.xlane.f32.xlu0 %v2195
    %v2197 = vpop.xlane.xlu0 %2196
    %v2198 = vsel %vm77, %v2163, 0.0
    %2199 = vadd.xlane.f32.xlu0 %v2198
    %v2200 = vpop.xlane.xlu0 %2199
    %v2201 = vsel %vm77, %v2165, 0.0
    %2202 = vadd.xlane.f32.xlu0 %v2201
    %v2203 = vpop.xlane.xlu0 %2202
    %v2204 = vsel %vm77, %v2167, 0.0
    %2205 = vadd.xlane.f32.xlu0 %v2204
    %v2206 = vpop.xlane.xlu0 %2205
    %v2207 = vsel %vm77, %v2169, 0.0
    %2208 = vadd.xlane.f32.xlu0 %v2207
    %v2209 = vpop.xlane.xlu0 %2208
    %v2210 = vsel %vm77, %v2171, 0.0
    %2211 = vadd.xlane.f32.xlu0 %v2210
    %v2212 = vpop.xlane.xlu0 %2211
    %v2213 = vsel %vm77, %v2173, 0.0
    %2214 = vadd.xlane.f32.xlu0 %v2213
    %v2215 = vpop.xlane.xlu0 %2214
    %v2216 = vsel %vm77, %v2175, 0.0
    %2217 = vadd.xlane.f32.xlu0 %v2216
    %v2218 = vpop.xlane.xlu0 %2217
    %v2219 = vsel %vm77, %v2177, 0.0
    %2220 = vadd.xlane.f32.xlu0 %v2219
    %v2221 = vpop.xlane.xlu0 %2220
    %v2222 = vsel %vm77, %v2179, 0.0
    %2223 = vadd.xlane.f32.xlu0 %v2222
    %v2224 = vpop.xlane.xlu0 %2223
    %v2225 = vsel %vm77, %v2181, 0.0
    %2226 = vadd.xlane.f32.xlu0 %v2225
    %v2227 = vpop.xlane.xlu0 %2226
    %v2228 = vsel %vm77, %v2183, 0.0
    %2229 = vadd.xlane.f32.xlu0 %v2228
    %v2230 = vpop.xlane.xlu0 %2229
    %v2231 = vsel %vm77, %v2185, 0.0
    %2232 = vadd.xlane.f32.xlu0 %v2231
    %v2233 = vpop.xlane.xlu0 %2232
    %v2234 = vrcp.pop %v2188
    %v2235 = vmul.f32 %v2155, %v2234
    %v2236 = vrcp.pop %v2191
    %v2237 = vmul.f32 %v2157, %v2236
    %v2238 = vrcp.pop %v2194
    %v2239 = vmul.f32 %v2159, %v2238
    %v2240 = vrcp.pop %v2197
    %v2241 = vmul.f32 %v2161, %v2240
    %v2242 = vrcp.pop %v2200
    %v2243 = vmul.f32 %v2163, %v2242
    %v2244 = vrcp.pop %v2203
    %v2245 = vmul.f32 %v2165, %v2244
    %v2246 = vrcp.pop %v2206
    %v2247 = vmul.f32 %v2167, %v2246
    %v2248 = vrcp.pop %v2209
    %v2249 = vmul.f32 %v2169, %v2248
    %v2250 = vrcp.pop %v2212
    %v2251 = vmul.f32 %v2171, %v2250
    %v2252 = vrcp.pop %v2215
    %v2253 = vmul.f32 %v2173, %v2252
    %v2254 = vrcp.pop %v2218
    %v2255 = vmul.f32 %v2175, %v2254
    %v2256 = vrcp.pop %v2221
    %v2257 = vmul.f32 %v2177, %v2256
    %v2258 = vrcp.pop %v2224
    %v2259 = vmul.f32 %v2179, %v2258
    %v2260 = vrcp.pop %v2227
    %v2261 = vmul.f32 %v2181, %v2260
    %v2262 = vrcp.pop %v2230
    %v2263 = vmul.f32 %v2183, %v2262
    %v2264 = vrcp.pop %v2233
    %v2265 = vmul.f32 %v2185, %v2264
    %v2267 = vsel %vm77, %v2235, 0
    %v2270 = vsel %vm77, %v2237, 0
    %2272 = vmatprep.subr.mxu0 0.0
    %2273 = vmatpush1.msra.mxu0 0.0
    %2274 = vmatprep.subr.mxu0 0.0
    %2275 = vmatpush1.msra.mxu0 0.0
    %2276 = vmatprep.subr.mxu0 0.0
    %2277 = vmatpush1.msra.mxu0 0.0
    %2278 = vmatprep.subr.mxu0 0.0
    %2279 = vmatpush1.msra.mxu0 0.0
    %2280 = vmatprep.subr.mxu0 0.0
    %2281 = vmatpush1.msra.mxu0 0.0
    %2282 = vmatprep.subr.mxu0 0.0
    %2283 = vmatpush1.msra.mxu0 0.0
    %2284 = vmatprep.subr.mxu0 0.0
    %2285 = vmatpush1.msra.mxu0 0.0
    %2286 = vmatprep.subr.mxu0 0.0
    %2287 = vmatpush1.msra.mxu0 0.0
    %2288 = vmatprep.subr.mxu0 0.0
    %2289 = vmatpush1.msra.mxu0 0.0
    %2290 = vmatprep.subr.mxu0 0.0
    %2291 = vmatpush1.msra.mxu0 0.0
    %2292 = vmatprep.subr.mxu0 0.0
    %2293 = vmatpush1.msra.mxu0 0.0
    %2294 = vmatprep.subr.mxu0 0.0
    %2295 = vmatpush1.msra.mxu0 0.0
    %2296 = vmatprep.subr.mxu0 0.0
    %2297 = vmatpush1.msra.mxu0 0.0
    %2298 = vmatprep.subr.mxu0 0.0
    %2299 = vmatpush1.msra.mxu0 0.0
    %2300 = vmatprep.subr.mxu0 0.0
    %2301 = vmatpush1.msra.mxu0 %v554
    %2302 = vmatprep.subr.mxu0 0.0
    %2303 = vmatpush1.msra.mxu0 %v549
    %2304 = vmatprep.subr.mxu0 0.0
    %2305 = vmatpush2.msra.mxu0 0.0
    %2306 = vmatprep.subr.mxu0 0.0
    %2307 = vmatpush2.msra.mxu0 0.0
    %2308 = vmatprep.subr.mxu0 0.0
    %2309 = vmatpush2.msra.mxu0 0.0
    %2310 = vmatprep.subr.mxu0 0.0
    %2311 = vmatpush2.msra.mxu0 0.0
    %2312 = vmatprep.subr.mxu0 0.0
    %2313 = vmatpush2.msra.mxu0 0.0
    %2314 = vmatprep.subr.mxu0 0.0
    %2315 = vmatpush2.msra.mxu0 0.0
    %2316 = vmatprep.subr.mxu0 0.0
    %2317 = vmatpush2.msra.mxu0 0.0
    %2318 = vmatprep.subr.mxu0 0.0
    %2319 = vmatpush2.msra.mxu0 0.0
    %2320 = vmatprep.subr.mxu0 0.0
    %2321 = vmatpush2.msra.mxu0 0.0
    %2322 = vmatprep.subr.mxu0 0.0
    %2323 = vmatpush2.msra.mxu0 0.0
    %2324 = vmatprep.subr.mxu0 0.0
    %2325 = vmatpush2.msra.mxu0 0.0
    %2326 = vmatprep.subr.mxu0 0.0
    %2327 = vmatpush2.msra.mxu0 0.0
    %2328 = vmatprep.subr.mxu0 0.0
    %2329 = vmatpush2.msra.mxu0 0.0
    %2330 = vmatprep.subr.mxu0 0.0
    %2331 = vmatpush2.msra.mxu0 0.0
    %2332 = vmatprep.subr.mxu0 0.0
    %2333 = vmatpush2.msra.mxu0 0.0
    %2334 = vmatprep.subr.mxu0 0.0
    %2335 = vmatpush2.msra.mxu0 0.0
    %2336 = vmatprep.mubr.f32.mxu0 0.0
    %2337 = vmatmul.mubr.f32.gmra.mxu0 %v2267
    %v2338 = vpop.f32.mrf.mxu0
    %v2339 = vadd.f32 0.0, %v2338
    %v2340 = vpop.f32.mrf.mxu0
    %2341 = vmatprep.mubr.f32.mxu0 0.0
    %2342 = vmatmul.mubr.f32.gmra.mxu0 %v2270
    %v2343 = vpop.f32.mrf.mxu0
    %v2344 = vadd.f32 0.0, %v2343
    %v2345 = vpop.f32.mrf.mxu0
    %2346 = vdwg.mxu0
    %v2348 = vsel %vm77, %v2239, 0
    %v2351 = vsel %vm77, %v2241, 0
    %2353 = vmatprep.subr.mxu0 0.0
    %2354 = vmatpush1.msra.mxu0 0.0
    %2355 = vmatprep.subr.mxu0 0.0
    %2356 = vmatpush1.msra.mxu0 0.0
    %2357 = vmatprep.subr.mxu0 0.0
    %2358 = vmatpush1.msra.mxu0 0.0
    %2359 = vmatprep.subr.mxu0 0.0
    %2360 = vmatpush1.msra.mxu0 0.0
    %2361 = vmatprep.subr.mxu0 0.0
    %2362 = vmatpush1.msra.mxu0 0.0
    %2363 = vmatprep.subr.mxu0 0.0
    %2364 = vmatpush1.msra.mxu0 0.0
    %2365 = vmatprep.subr.mxu0 0.0
    %2366 = vmatpush1.msra.mxu0 0.0
    %2367 = vmatprep.subr.mxu0 0.0
    %2368 = vmatpush1.msra.mxu0 0.0
    %2369 = vmatprep.subr.mxu0 0.0
    %2370 = vmatpush1.msra.mxu0 0.0
    %2371 = vmatprep.subr.mxu0 0.0
    %2372 = vmatpush1.msra.mxu0 0.0
    %2373 = vmatprep.subr.mxu0 0.0
    %2374 = vmatpush1.msra.mxu0 0.0
    %2375 = vmatprep.subr.mxu0 0.0
    %2376 = vmatpush1.msra.mxu0 0.0
    %2377 = vmatprep.subr.mxu0 0.0
    %2378 = vmatpush1.msra.mxu0 0.0
    %2379 = vmatprep.subr.mxu0 0.0
    %2380 = vmatpush1.msra.mxu0 0.0
    %2381 = vmatprep.subr.mxu0 0.0
    %2382 = vmatpush1.msra.mxu0 %v564
    %2383 = vmatprep.subr.mxu0 0.0
    %2384 = vmatpush1.msra.mxu0 %v559
    %2385 = vmatprep.subr.mxu0 0.0
    %2386 = vmatpush2.msra.mxu0 0.0
    %2387 = vmatprep.subr.mxu0 0.0
    %2388 = vmatpush2.msra.mxu0 0.0
    %2389 = vmatprep.subr.mxu0 0.0
    %2390 = vmatpush2.msra.mxu0 0.0
    %2391 = vmatprep.subr.mxu0 0.0
    %2392 = vmatpush2.msra.mxu0 0.0
    %2393 = vmatprep.subr.mxu0 0.0
    %2394 = vmatpush2.msra.mxu0 0.0
    %2395 = vmatprep.subr.mxu0 0.0
    %2396 = vmatpush2.msra.mxu0 0.0
    %2397 = vmatprep.subr.mxu0 0.0
    %2398 = vmatpush2.msra.mxu0 0.0
    %2399 = vmatprep.subr.mxu0 0.0
    %2400 = vmatpush2.msra.mxu0 0.0
    %2401 = vmatprep.subr.mxu0 0.0
    %2402 = vmatpush2.msra.mxu0 0.0
    %2403 = vmatprep.subr.mxu0 0.0
    %2404 = vmatpush2.msra.mxu0 0.0
    %2405 = vmatprep.subr.mxu0 0.0
    %2406 = vmatpush2.msra.mxu0 0.0
    %2407 = vmatprep.subr.mxu0 0.0
    %2408 = vmatpush2.msra.mxu0 0.0
    %2409 = vmatprep.subr.mxu0 0.0
    %2410 = vmatpush2.msra.mxu0 0.0
    %2411 = vmatprep.subr.mxu0 0.0
    %2412 = vmatpush2.msra.mxu0 0.0
    %2413 = vmatprep.subr.mxu0 0.0
    %2414 = vmatpush2.msra.mxu0 0.0
    %2415 = vmatprep.subr.mxu0 0.0
    %2416 = vmatpush2.msra.mxu0 0.0
    %2417 = vmatprep.mubr.f32.mxu0 0.0
    %2418 = vmatmul.mubr.f32.gmra.mxu0 %v2348
    %v2419 = vpop.f32.mrf.mxu0
    %v2420 = vadd.f32 0.0, %v2419
    %v2421 = vpop.f32.mrf.mxu0
    %2422 = vmatprep.mubr.f32.mxu0 0.0
    %2423 = vmatmul.mubr.f32.gmra.mxu0 %v2351
    %v2424 = vpop.f32.mrf.mxu0
    %v2425 = vadd.f32 0.0, %v2424
    %v2426 = vpop.f32.mrf.mxu0
    %2427 = vdwg.mxu0
    %v2429 = vsel %vm77, %v2243, 0
    %v2432 = vsel %vm77, %v2245, 0
    %2434 = vmatprep.subr.mxu0 0.0
    %2435 = vmatpush1.msra.mxu0 0.0
    %2436 = vmatprep.subr.mxu0 0.0
    %2437 = vmatpush1.msra.mxu0 0.0
    %2438 = vmatprep.subr.mxu0 0.0
    %2439 = vmatpush1.msra.mxu0 0.0
    %2440 = vmatprep.subr.mxu0 0.0
    %2441 = vmatpush1.msra.mxu0 0.0
    %2442 = vmatprep.subr.mxu0 0.0
    %2443 = vmatpush1.msra.mxu0 0.0
    %2444 = vmatprep.subr.mxu0 0.0
    %2445 = vmatpush1.msra.mxu0 0.0
    %2446 = vmatprep.subr.mxu0 0.0
    %2447 = vmatpush1.msra.mxu0 0.0
    %2448 = vmatprep.subr.mxu0 0.0
    %2449 = vmatpush1.msra.mxu0 0.0
    %2450 = vmatprep.subr.mxu0 0.0
    %2451 = vmatpush1.msra.mxu0 0.0
    %2452 = vmatprep.subr.mxu0 0.0
    %2453 = vmatpush1.msra.mxu0 0.0
    %2454 = vmatprep.subr.mxu0 0.0
    %2455 = vmatpush1.msra.mxu0 0.0
    %2456 = vmatprep.subr.mxu0 0.0
    %2457 = vmatpush1.msra.mxu0 0.0
    %2458 = vmatprep.subr.mxu0 0.0
    %2459 = vmatpush1.msra.mxu0 0.0
    %2460 = vmatprep.subr.mxu0 0.0
    %2461 = vmatpush1.msra.mxu0 0.0
    %2462 = vmatprep.subr.mxu0 0.0
    %2463 = vmatpush1.msra.mxu0 %v999
    %2464 = vmatprep.subr.mxu0 0.0
    %2465 = vmatpush1.msra.mxu0 %v994
    %2466 = vmatprep.subr.mxu0 0.0
    %2467 = vmatpush2.msra.mxu0 0.0
    %2468 = vmatprep.subr.mxu0 0.0
    %2469 = vmatpush2.msra.mxu0 0.0
    %2470 = vmatprep.subr.mxu0 0.0
    %2471 = vmatpush2.msra.mxu0 0.0
    %2472 = vmatprep.subr.mxu0 0.0
    %2473 = vmatpush2.msra.mxu0 0.0
    %2474 = vmatprep.subr.mxu0 0.0
    %2475 = vmatpush2.msra.mxu0 0.0
    %2476 = vmatprep.subr.mxu0 0.0
    %2477 = vmatpush2.msra.mxu0 0.0
    %2478 = vmatprep.subr.mxu0 0.0
    %2479 = vmatpush2.msra.mxu0 0.0
    %2480 = vmatprep.subr.mxu0 0.0
    %2481 = vmatpush2.msra.mxu0 0.0
    %2482 = vmatprep.subr.mxu0 0.0
    %2483 = vmatpush2.msra.mxu0 0.0
    %2484 = vmatprep.subr.mxu0 0.0
    %2485 = vmatpush2.msra.mxu0 0.0
    %2486 = vmatprep.subr.mxu0 0.0
    %2487 = vmatpush2.msra.mxu0 0.0
    %2488 = vmatprep.subr.mxu0 0.0
    %2489 = vmatpush2.msra.mxu0 0.0
    %2490 = vmatprep.subr.mxu0 0.0
    %2491 = vmatpush2.msra.mxu0 0.0
    %2492 = vmatprep.subr.mxu0 0.0
    %2493 = vmatpush2.msra.mxu0 0.0
    %2494 = vmatprep.subr.mxu0 0.0
    %2495 = vmatpush2.msra.mxu0 0.0
    %2496 = vmatprep.subr.mxu0 0.0
    %2497 = vmatpush2.msra.mxu0 0.0
    %2498 = vmatprep.mubr.f32.mxu0 0.0
    %2499 = vmatmul.mubr.f32.gmra.mxu0 %v2429
    %v2500 = vpop.f32.mrf.mxu0
    %v2501 = vadd.f32 0.0, %v2500
    %v2502 = vpop.f32.mrf.mxu0
    %2503 = vmatprep.mubr.f32.mxu0 0.0
    %2504 = vmatmul.mubr.f32.gmra.mxu0 %v2432
    %v2505 = vpop.f32.mrf.mxu0
    %v2506 = vadd.f32 0.0, %v2505
    %v2507 = vpop.f32.mrf.mxu0
    %2508 = vdwg.mxu0
    %v2510 = vsel %vm77, %v2247, 0
    %v2513 = vsel %vm77, %v2249, 0
    %2515 = vmatprep.subr.mxu0 0.0
    %2516 = vmatpush1.msra.mxu0 0.0
    %2517 = vmatprep.subr.mxu0 0.0
    %2518 = vmatpush1.msra.mxu0 0.0
    %2519 = vmatprep.subr.mxu0 0.0
    %2520 = vmatpush1.msra.mxu0 0.0
    %2521 = vmatprep.subr.mxu0 0.0
    %2522 = vmatpush1.msra.mxu0 0.0
    %2523 = vmatprep.subr.mxu0 0.0
    %2524 = vmatpush1.msra.mxu0 0.0
    %2525 = vmatprep.subr.mxu0 0.0
    %2526 = vmatpush1.msra.mxu0 0.0
    %2527 = vmatprep.subr.mxu0 0.0
    %2528 = vmatpush1.msra.mxu0 0.0
    %2529 = vmatprep.subr.mxu0 0.0
    %2530 = vmatpush1.msra.mxu0 0.0
    %2531 = vmatprep.subr.mxu0 0.0
    %2532 = vmatpush1.msra.mxu0 0.0
    %2533 = vmatprep.subr.mxu0 0.0
    %2534 = vmatpush1.msra.mxu0 0.0
    %2535 = vmatprep.subr.mxu0 0.0
    %2536 = vmatpush1.msra.mxu0 0.0
    %2537 = vmatprep.subr.mxu0 0.0
    %2538 = vmatpush1.msra.mxu0 0.0
    %2539 = vmatprep.subr.mxu0 0.0
    %2540 = vmatpush1.msra.mxu0 0.0
    %2541 = vmatprep.subr.mxu0 0.0
    %2542 = vmatpush1.msra.mxu0 0.0
    %2543 = vmatprep.subr.mxu0 0.0
    %2544 = vmatpush1.msra.mxu0 %v1009
    %2545 = vmatprep.subr.mxu0 0.0
    %2546 = vmatpush1.msra.mxu0 %v1004
    %2547 = vmatprep.subr.mxu0 0.0
    %2548 = vmatpush2.msra.mxu0 0.0
    %2549 = vmatprep.subr.mxu0 0.0
    %2550 = vmatpush2.msra.mxu0 0.0
    %2551 = vmatprep.subr.mxu0 0.0
    %2552 = vmatpush2.msra.mxu0 0.0
    %2553 = vmatprep.subr.mxu0 0.0
    %2554 = vmatpush2.msra.mxu0 0.0
    %2555 = vmatprep.subr.mxu0 0.0
    %2556 = vmatpush2.msra.mxu0 0.0
    %2557 = vmatprep.subr.mxu0 0.0
    %2558 = vmatpush2.msra.mxu0 0.0
    %2559 = vmatprep.subr.mxu0 0.0
    %2560 = vmatpush2.msra.mxu0 0.0
    %2561 = vmatprep.subr.mxu0 0.0
    %2562 = vmatpush2.msra.mxu0 0.0
    %2563 = vmatprep.subr.mxu0 0.0
    %2564 = vmatpush2.msra.mxu0 0.0
    %2565 = vmatprep.subr.mxu0 0.0
    %2566 = vmatpush2.msra.mxu0 0.0
    %2567 = vmatprep.subr.mxu0 0.0
    %2568 = vmatpush2.msra.mxu0 0.0
    %2569 = vmatprep.subr.mxu0 0.0
    %2570 = vmatpush2.msra.mxu0 0.0
    %2571 = vmatprep.subr.mxu0 0.0
    %2572 = vmatpush2.msra.mxu0 0.0
    %2573 = vmatprep.subr.mxu0 0.0
    %2574 = vmatpush2.msra.mxu0 0.0
    %2575 = vmatprep.subr.mxu0 0.0
    %2576 = vmatpush2.msra.mxu0 0.0
    %2577 = vmatprep.subr.mxu0 0.0
    %2578 = vmatpush2.msra.mxu0 0.0
    %2579 = vmatprep.mubr.f32.mxu0 0.0
    %2580 = vmatmul.mubr.f32.gmra.mxu0 %v2510
    %v2581 = vpop.f32.mrf.mxu0
    %v2582 = vadd.f32 0.0, %v2581
    %v2583 = vpop.f32.mrf.mxu0
    %2584 = vmatprep.mubr.f32.mxu0 0.0
    %2585 = vmatmul.mubr.f32.gmra.mxu0 %v2513
    %v2586 = vpop.f32.mrf.mxu0
    %v2587 = vadd.f32 0.0, %v2586
    %v2588 = vpop.f32.mrf.mxu0
    %2589 = vdwg.mxu0
    %v2591 = vsel %vm77, %v2251, 0
    %v2594 = vsel %vm77, %v2253, 0
    %2596 = vmatprep.subr.mxu0 0.0
    %2597 = vmatpush1.msra.mxu0 0.0
    %2598 = vmatprep.subr.mxu0 0.0
    %2599 = vmatpush1.msra.mxu0 0.0
    %2600 = vmatprep.subr.mxu0 0.0
    %2601 = vmatpush1.msra.mxu0 0.0
    %2602 = vmatprep.subr.mxu0 0.0
    %2603 = vmatpush1.msra.mxu0 0.0
    %2604 = vmatprep.subr.mxu0 0.0
    %2605 = vmatpush1.msra.mxu0 0.0
    %2606 = vmatprep.subr.mxu0 0.0
    %2607 = vmatpush1.msra.mxu0 0.0
    %2608 = vmatprep.subr.mxu0 0.0
    %2609 = vmatpush1.msra.mxu0 0.0
    %2610 = vmatprep.subr.mxu0 0.0
    %2611 = vmatpush1.msra.mxu0 0.0
    %2612 = vmatprep.subr.mxu0 0.0
    %2613 = vmatpush1.msra.mxu0 0.0
    %2614 = vmatprep.subr.mxu0 0.0
    %2615 = vmatpush1.msra.mxu0 0.0
    %2616 = vmatprep.subr.mxu0 0.0
    %2617 = vmatpush1.msra.mxu0 0.0
    %2618 = vmatprep.subr.mxu0 0.0
    %2619 = vmatpush1.msra.mxu0 0.0
    %2620 = vmatprep.subr.mxu0 0.0
    %2621 = vmatpush1.msra.mxu0 0.0
    %2622 = vmatprep.subr.mxu0 0.0
    %2623 = vmatpush1.msra.mxu0 0.0
    %2624 = vmatprep.subr.mxu0 0.0
    %2625 = vmatpush1.msra.mxu0 %v1443
    %2626 = vmatprep.subr.mxu0 0.0
    %2627 = vmatpush1.msra.mxu0 %v1438
    %2628 = vmatprep.subr.mxu0 0.0
    %2629 = vmatpush2.msra.mxu0 0.0
    %2630 = vmatprep.subr.mxu0 0.0
    %2631 = vmatpush2.msra.mxu0 0.0
    %2632 = vmatprep.subr.mxu0 0.0
    %2633 = vmatpush2.msra.mxu0 0.0
    %2634 = vmatprep.subr.mxu0 0.0
    %2635 = vmatpush2.msra.mxu0 0.0
    %2636 = vmatprep.subr.mxu0 0.0
    %2637 = vmatpush2.msra.mxu0 0.0
    %2638 = vmatprep.subr.mxu0 0.0
    %2639 = vmatpush2.msra.mxu0 0.0
    %2640 = vmatprep.subr.mxu0 0.0
    %2641 = vmatpush2.msra.mxu0 0.0
    %2642 = vmatprep.subr.mxu0 0.0
    %2643 = vmatpush2.msra.mxu0 0.0
    %2644 = vmatprep.subr.mxu0 0.0
    %2645 = vmatpush2.msra.mxu0 0.0
    %2646 = vmatprep.subr.mxu0 0.0
    %2647 = vmatpush2.msra.mxu0 0.0
    %2648 = vmatprep.subr.mxu0 0.0
    %2649 = vmatpush2.msra.mxu0 0.0
    %2650 = vmatprep.subr.mxu0 0.0
    %2651 = vmatpush2.msra.mxu0 0.0
    %2652 = vmatprep.subr.mxu0 0.0
    %2653 = vmatpush2.msra.mxu0 0.0
    %2654 = vmatprep.subr.mxu0 0.0
    %2655 = vmatpush2.msra.mxu0 0.0
    %2656 = vmatprep.subr.mxu0 0.0
    %2657 = vmatpush2.msra.mxu0 0.0
    %2658 = vmatprep.subr.mxu0 0.0
    %2659 = vmatpush2.msra.mxu0 0.0
    %2660 = vmatprep.mubr.f32.mxu0 0.0
    %2661 = vmatmul.mubr.f32.gmra.mxu0 %v2591
    %v2662 = vpop.f32.mrf.mxu0
    %v2663 = vadd.f32 0.0, %v2662
    %v2664 = vpop.f32.mrf.mxu0
    %2665 = vmatprep.mubr.f32.mxu0 0.0
    %2666 = vmatmul.mubr.f32.gmra.mxu0 %v2594
    %v2667 = vpop.f32.mrf.mxu0
    %v2668 = vadd.f32 0.0, %v2667
    %v2669 = vpop.f32.mrf.mxu0
    %2670 = vdwg.mxu0
    %v2672 = vsel %vm77, %v2255, 0
    %v2675 = vsel %vm77, %v2257, 0
    %2677 = vmatprep.subr.mxu0 0.0
    %2678 = vmatpush1.msra.mxu0 0.0
    %2679 = vmatprep.subr.mxu0 0.0
    %2680 = vmatpush1.msra.mxu0 0.0
    %2681 = vmatprep.subr.mxu0 0.0
    %2682 = vmatpush1.msra.mxu0 0.0
    %2683 = vmatprep.subr.mxu0 0.0
    %2684 = vmatpush1.msra.mxu0 0.0
    %2685 = vmatprep.subr.mxu0 0.0
    %2686 = vmatpush1.msra.mxu0 0.0
    %2687 = vmatprep.subr.mxu0 0.0
    %2688 = vmatpush1.msra.mxu0 0.0
    %2689 = vmatprep.subr.mxu0 0.0
    %2690 = vmatpush1.msra.mxu0 0.0
    %2691 = vmatprep.subr.mxu0 0.0
    %2692 = vmatpush1.msra.mxu0 0.0
    %2693 = vmatprep.subr.mxu0 0.0
    %2694 = vmatpush1.msra.mxu0 0.0
    %2695 = vmatprep.subr.mxu0 0.0
    %2696 = vmatpush1.msra.mxu0 0.0
    %2697 = vmatprep.subr.mxu0 0.0
    %2698 = vmatpush1.msra.mxu0 0.0
    %2699 = vmatprep.subr.mxu0 0.0
    %2700 = vmatpush1.msra.mxu0 0.0
    %2701 = vmatprep.subr.mxu0 0.0
    %2702 = vmatpush1.msra.mxu0 0.0
    %2703 = vmatprep.subr.mxu0 0.0
    %2704 = vmatpush1.msra.mxu0 0.0
    %2705 = vmatprep.subr.mxu0 0.0
    %2706 = vmatpush1.msra.mxu0 %v1453
    %2707 = vmatprep.subr.mxu0 0.0
    %2708 = vmatpush1.msra.mxu0 %v1448
    %2709 = vmatprep.subr.mxu0 0.0
    %2710 = vmatpush2.msra.mxu0 0.0
    %2711 = vmatprep.subr.mxu0 0.0
    %2712 = vmatpush2.msra.mxu0 0.0
    %2713 = vmatprep.subr.mxu0 0.0
    %2714 = vmatpush2.msra.mxu0 0.0
    %2715 = vmatprep.subr.mxu0 0.0
    %2716 = vmatpush2.msra.mxu0 0.0
    %2717 = vmatprep.subr.mxu0 0.0
    %2718 = vmatpush2.msra.mxu0 0.0
    %2719 = vmatprep.subr.mxu0 0.0
    %2720 = vmatpush2.msra.mxu0 0.0
    %2721 = vmatprep.subr.mxu0 0.0
    %2722 = vmatpush2.msra.mxu0 0.0
    %2723 = vmatprep.subr.mxu0 0.0
    %2724 = vmatpush2.msra.mxu0 0.0
    %2725 = vmatprep.subr.mxu0 0.0
    %2726 = vmatpush2.msra.mxu0 0.0
    %2727 = vmatprep.subr.mxu0 0.0
    %2728 = vmatpush2.msra.mxu0 0.0
    %2729 = vmatprep.subr.mxu0 0.0
    %2730 = vmatpush2.msra.mxu0 0.0
    %2731 = vmatprep.subr.mxu0 0.0
    %2732 = vmatpush2.msra.mxu0 0.0
    %2733 = vmatprep.subr.mxu0 0.0
    %2734 = vmatpush2.msra.mxu0 0.0
    %2735 = vmatprep.subr.mxu0 0.0
    %2736 = vmatpush2.msra.mxu0 0.0
    %2737 = vmatprep.subr.mxu0 0.0
    %2738 = vmatpush2.msra.mxu0 0.0
    %2739 = vmatprep.subr.mxu0 0.0
    %2740 = vmatpush2.msra.mxu0 0.0
    %2741 = vmatprep.mubr.f32.mxu0 0.0
    %2742 = vmatmul.mubr.f32.gmra.mxu0 %v2672
    %v2743 = vpop.f32.mrf.mxu0
    %v2744 = vadd.f32 0.0, %v2743
    %v2745 = vpop.f32.mrf.mxu0
    %2746 = vmatprep.mubr.f32.mxu0 0.0
    %2747 = vmatmul.mubr.f32.gmra.mxu0 %v2675
    %v2748 = vpop.f32.mrf.mxu0
    %v2749 = vadd.f32 0.0, %v2748
    %v2750 = vpop.f32.mrf.mxu0
    %2751 = vdwg.mxu0
    %v2753 = vsel %vm77, %v2259, 0
    %v2756 = vsel %vm77, %v2261, 0
    %2758 = vmatprep.subr.mxu0 0.0
    %2759 = vmatpush1.msra.mxu0 0.0
    %2760 = vmatprep.subr.mxu0 0.0
    %2761 = vmatpush1.msra.mxu0 0.0
    %2762 = vmatprep.subr.mxu0 0.0
    %2763 = vmatpush1.msra.mxu0 0.0
    %2764 = vmatprep.subr.mxu0 0.0
    %2765 = vmatpush1.msra.mxu0 0.0
    %2766 = vmatprep.subr.mxu0 0.0
    %2767 = vmatpush1.msra.mxu0 0.0
    %2768 = vmatprep.subr.mxu0 0.0
    %2769 = vmatpush1.msra.mxu0 0.0
    %2770 = vmatprep.subr.mxu0 0.0
    %2771 = vmatpush1.msra.mxu0 0.0
    %2772 = vmatprep.subr.mxu0 0.0
    %2773 = vmatpush1.msra.mxu0 0.0
    %2774 = vmatprep.subr.mxu0 0.0
    %2775 = vmatpush1.msra.mxu0 0.0
    %2776 = vmatprep.subr.mxu0 0.0
    %2777 = vmatpush1.msra.mxu0 0.0
    %2778 = vmatprep.subr.mxu0 0.0
    %2779 = vmatpush1.msra.mxu0 0.0
    %2780 = vmatprep.subr.mxu0 0.0
    %2781 = vmatpush1.msra.mxu0 0.0
    %2782 = vmatprep.subr.mxu0 0.0
    %2783 = vmatpush1.msra.mxu0 0.0
    %2784 = vmatprep.subr.mxu0 0.0
    %2785 = vmatpush1.msra.mxu0 0.0
    %2786 = vmatprep.subr.mxu0 0.0
    %2787 = vmatpush1.msra.mxu0 %v1887
    %2788 = vmatprep.subr.mxu0 0.0
    %2789 = vmatpush1.msra.mxu0 %v1882
    %2790 = vmatprep.subr.mxu0 0.0
    %2791 = vmatpush2.msra.mxu0 0.0
    %2792 = vmatprep.subr.mxu0 0.0
    %2793 = vmatpush2.msra.mxu0 0.0
    %2794 = vmatprep.subr.mxu0 0.0
    %2795 = vmatpush2.msra.mxu0 0.0
    %2796 = vmatprep.subr.mxu0 0.0
    %2797 = vmatpush2.msra.mxu0 0.0
    %2798 = vmatprep.subr.mxu0 0.0
    %2799 = vmatpush2.msra.mxu0 0.0
    %2800 = vmatprep.subr.mxu0 0.0
    %2801 = vmatpush2.msra.mxu0 0.0
    %2802 = vmatprep.subr.mxu0 0.0
    %2803 = vmatpush2.msra.mxu0 0.0
    %2804 = vmatprep.subr.mxu0 0.0
    %2805 = vmatpush2.msra.mxu0 0.0
    %2806 = vmatprep.subr.mxu0 0.0
    %2807 = vmatpush2.msra.mxu0 0.0
    %2808 = vmatprep.subr.mxu0 0.0
    %2809 = vmatpush2.msra.mxu0 0.0
    %2810 = vmatprep.subr.mxu0 0.0
    %2811 = vmatpush2.msra.mxu0 0.0
    %2812 = vmatprep.subr.mxu0 0.0
    %2813 = vmatpush2.msra.mxu0 0.0
    %2814 = vmatprep.subr.mxu0 0.0
    %2815 = vmatpush2.msra.mxu0 0.0
    %2816 = vmatprep.subr.mxu0 0.0
    %2817 = vmatpush2.msra.mxu0 0.0
    %2818 = vmatprep.subr.mxu0 0.0
    %2819 = vmatpush2.msra.mxu0 0.0
    %2820 = vmatprep.subr.mxu0 0.0
    %2821 = vmatpush2.msra.mxu0 0.0
    %2822 = vmatprep.mubr.f32.mxu0 0.0
    %2823 = vmatmul.mubr.f32.gmra.mxu0 %v2753
    %v2824 = vpop.f32.mrf.mxu0
    %v2825 = vadd.f32 0.0, %v2824
    %v2826 = vpop.f32.mrf.mxu0
    %2827 = vmatprep.mubr.f32.mxu0 0.0
    %2828 = vmatmul.mubr.f32.gmra.mxu0 %v2756
    %v2829 = vpop.f32.mrf.mxu0
    %v2830 = vadd.f32 0.0, %v2829
    %v2831 = vpop.f32.mrf.mxu0
    %2832 = vdwg.mxu0
    %v2834 = vsel %vm77, %v2263, 0
    %v2837 = vsel %vm77, %v2265, 0
    %2839 = vmatprep.subr.mxu0 0.0
    %2840 = vmatpush1.msra.mxu0 0.0
    %2841 = vmatprep.subr.mxu0 0.0
    %2842 = vmatpush1.msra.mxu0 0.0
    %2843 = vmatprep.subr.mxu0 0.0
    %2844 = vmatpush1.msra.mxu0 0.0
    %2845 = vmatprep.subr.mxu0 0.0
    %2846 = vmatpush1.msra.mxu0 0.0
    %2847 = vmatprep.subr.mxu0 0.0
    %2848 = vmatpush1.msra.mxu0 0.0
    %2849 = vmatprep.subr.mxu0 0.0
    %2850 = vmatpush1.msra.mxu0 0.0
    %2851 = vmatprep.subr.mxu0 0.0
    %2852 = vmatpush1.msra.mxu0 0.0
    %2853 = vmatprep.subr.mxu0 0.0
    %2854 = vmatpush1.msra.mxu0 0.0
    %2855 = vmatprep.subr.mxu0 0.0
    %2856 = vmatpush1.msra.mxu0 0.0
    %2857 = vmatprep.subr.mxu0 0.0
    %2858 = vmatpush1.msra.mxu0 0.0
    %2859 = vmatprep.subr.mxu0 0.0
    %2860 = vmatpush1.msra.mxu0 0.0
    %2861 = vmatprep.subr.mxu0 0.0
    %2862 = vmatpush1.msra.mxu0 0.0
    %2863 = vmatprep.subr.mxu0 0.0
    %2864 = vmatpush1.msra.mxu0 0.0
    %2865 = vmatprep.subr.mxu0 0.0
    %2866 = vmatpush1.msra.mxu0 0.0
    %2867 = vmatprep.subr.mxu0 0.0
    %2868 = vmatpush1.msra.mxu0 %v1897
    %2869 = vmatprep.subr.mxu0 0.0
    %2870 = vmatpush1.msra.mxu0 %v1892
    %2871 = vmatprep.subr.mxu0 0.0
    %2872 = vmatpush2.msra.mxu0 0.0
    %2873 = vmatprep.subr.mxu0 0.0
    %2874 = vmatpush2.msra.mxu0 0.0
    %2875 = vmatprep.subr.mxu0 0.0
    %2876 = vmatpush2.msra.mxu0 0.0
    %2877 = vmatprep.subr.mxu0 0.0
    %2878 = vmatpush2.msra.mxu0 0.0
    %2879 = vmatprep.subr.mxu0 0.0
    %2880 = vmatpush2.msra.mxu0 0.0
    %2881 = vmatprep.subr.mxu0 0.0
    %2882 = vmatpush2.msra.mxu0 0.0
    %2883 = vmatprep.subr.mxu0 0.0
    %2884 = vmatpush2.msra.mxu0 0.0
    %2885 = vmatprep.subr.mxu0 0.0
    %2886 = vmatpush2.msra.mxu0 0.0
    %2887 = vmatprep.subr.mxu0 0.0
    %2888 = vmatpush2.msra.mxu0 0.0
    %2889 = vmatprep.subr.mxu0 0.0
    %2890 = vmatpush2.msra.mxu0 0.0
    %2891 = vmatprep.subr.mxu0 0.0
    %2892 = vmatpush2.msra.mxu0 0.0
    %2893 = vmatprep.subr.mxu0 0.0
    %2894 = vmatpush2.msra.mxu0 0.0
    %2895 = vmatprep.subr.mxu0 0.0
    %2896 = vmatpush2.msra.mxu0 0.0
    %2897 = vmatprep.subr.mxu0 0.0
    %2898 = vmatpush2.msra.mxu0 0.0
    %2899 = vmatprep.subr.mxu0 0.0
    %2900 = vmatpush2.msra.mxu0 0.0
    %2901 = vmatprep.subr.mxu0 0.0
    %2902 = vmatpush2.msra.mxu0 0.0
    %2903 = vmatprep.mubr.f32.mxu0 0.0
    %2904 = vmatmul.mubr.f32.gmra.mxu0 %v2834
    %v2905 = vpop.f32.mrf.mxu0
    %v2906 = vadd.f32 0.0, %v2905
    %v2907 = vpop.f32.mrf.mxu0
    %2908 = vmatprep.mubr.f32.mxu0 0.0
    %2909 = vmatmul.mubr.f32.gmra.mxu0 %v2837
    %v2910 = vpop.f32.mrf.mxu0
    %v2911 = vadd.f32 0.0, %v2910
    %v2912 = vpop.f32.mrf.mxu0
    %2913 = vdwg.mxu0
    %v2914 = vld [vmem:[%s12] sm:$0xff]
    %s2915 = scalar_lea.vmem %s12, 8
    %v2916 = vld [vmem:[%s2915] sm:$0xff]
    %v2918 = vsel %vm567, %v2501, 0
    %v2921 = vsel %vm567, %v2506, 0
    %v2924 = vsel %vm567, %v2582, 0
    %v2927 = vsel %vm567, %v2587, 0
    %2929 = vmatprep.subr.mxu0 0.0
    %2930 = vmatpush1.msra.mxu0 0.0
    %2931 = vmatprep.subr.mxu0 0.0
    %2932 = vmatpush1.msra.mxu0 0.0
    %2933 = vmatprep.subr.mxu0 0.0
    %2934 = vmatpush1.msra.mxu0 0.0
    %2935 = vmatprep.subr.mxu0 0.0
    %2936 = vmatpush1.msra.mxu0 0.0
    %2937 = vmatprep.subr.mxu0 0.0
    %2938 = vmatpush1.msra.mxu0 0.0
    %2939 = vmatprep.subr.mxu0 0.0
    %2940 = vmatpush1.msra.mxu0 0.0
    %2941 = vmatprep.subr.mxu0 0.0
    %2942 = vmatpush1.msra.mxu0 0.0
    %2943 = vmatprep.subr.mxu0 0.0
    %2944 = vmatpush1.msra.mxu0 0.0
    %2945 = vmatprep.subr.mxu0 0.0
    %2946 = vmatpush1.msra.mxu0 0.0
    %2947 = vmatprep.subr.mxu0 0.0
    %2948 = vmatpush1.msra.mxu0 0.0
    %2949 = vmatprep.subr.mxu0 0.0
    %2950 = vmatpush1.msra.mxu0 0.0
    %2951 = vmatprep.subr.mxu0 0.0
    %2952 = vmatpush1.msra.mxu0 0.0
    %2953 = vmatprep.subr.mxu0 0.0
    %2954 = vmatpush1.msra.mxu0 0.0
    %2955 = vmatprep.subr.mxu0 0.0
    %2956 = vmatpush1.msra.mxu0 0.0
    %2957 = vmatprep.subr.mxu0 0.0
    %2958 = vmatpush1.msra.mxu0 0.0
    %2959 = vmatprep.subr.mxu0 0.0
    %2960 = vmatpush1.msra.mxu0 %v2916
    %2961 = vmatprep.subr.mxu0 0.0
    %2962 = vmatpush2.msra.mxu0 0.0
    %2963 = vmatprep.subr.mxu0 0.0
    %2964 = vmatpush2.msra.mxu0 0.0
    %2965 = vmatprep.subr.mxu0 0.0
    %2966 = vmatpush2.msra.mxu0 0.0
    %2967 = vmatprep.subr.mxu0 0.0
    %2968 = vmatpush2.msra.mxu0 0.0
    %2969 = vmatprep.subr.mxu0 0.0
    %2970 = vmatpush2.msra.mxu0 0.0
    %2971 = vmatprep.subr.mxu0 0.0
    %2972 = vmatpush2.msra.mxu0 0.0
    %2973 = vmatprep.subr.mxu0 0.0
    %2974 = vmatpush2.msra.mxu0 0.0
    %2975 = vmatprep.subr.mxu0 0.0
    %2976 = vmatpush2.msra.mxu0 0.0
    %2977 = vmatprep.subr.mxu0 0.0
    %2978 = vmatpush2.msra.mxu0 0.0
    %2979 = vmatprep.subr.mxu0 0.0
    %2980 = vmatpush2.msra.mxu0 0.0
    %2981 = vmatprep.subr.mxu0 0.0
    %2982 = vmatpush2.msra.mxu0 0.0
    %2983 = vmatprep.subr.mxu0 0.0
    %2984 = vmatpush2.msra.mxu0 0.0
    %2985 = vmatprep.subr.mxu0 0.0
    %2986 = vmatpush2.msra.mxu0 0.0
    %2987 = vmatprep.subr.mxu0 0.0
    %2988 = vmatpush2.msra.mxu0 0.0
    %2989 = vmatprep.subr.mxu0 0.0
    %2990 = vmatpush2.msra.mxu0 0.0
    %2991 = vmatprep.subr.mxu0 0.0
    %2992 = vmatpush2.msra.mxu0 0.0
    %2993 = vmatprep.mubr.f32.mxu0 0.0
    %2994 = vmatmul.mubr.f32.gmra.mxu0 %v2918
    %v2995 = vpop.f32.mrf.mxu0
    %v2996 = vadd.f32 0.0, %v2995
    %v2997 = vpop.f32.mrf.mxu0
    %2998 = vmatprep.mubr.f32.mxu0 0.0
    %2999 = vmatmul.mubr.f32.gmra.mxu0 %v2921
    %v3000 = vpop.f32.mrf.mxu0
    %v3001 = vadd.f32 0.0, %v3000
    %v3002 = vpop.f32.mrf.mxu0
    %3003 = vmatprep.mubr.f32.mxu0 0.0
    %3004 = vmatmul.mubr.f32.gmra.mxu0 %v2924
    %v3005 = vpop.f32.mrf.mxu0
    %v3006 = vadd.f32 0.0, %v3005
    %v3007 = vpop.f32.mrf.mxu0
    %3008 = vmatprep.mubr.f32.mxu0 0.0
    %3009 = vmatmul.mubr.f32.gmra.mxu0 %v2927
    %v3010 = vpop.f32.mrf.mxu0
    %v3011 = vadd.f32 0.0, %v3010
    %v3012 = vpop.f32.mrf.mxu0
    %3013 = vdwg.mxu0
    %v3015 = vsel %vm567, %v2339, 0
    %v3018 = vsel %vm567, %v2344, 0
    %v3021 = vsel %vm567, %v2420, 0
    %v3024 = vsel %vm567, %v2425, 0
    %3026 = vmatprep.subr.mxu0 0.0
    %3027 = vmatpush1.msra.mxu0 0.0
    %3028 = vmatprep.subr.mxu0 0.0
    %3029 = vmatpush1.msra.mxu0 0.0
    %3030 = vmatprep.subr.mxu0 0.0
    %3031 = vmatpush1.msra.mxu0 0.0
    %3032 = vmatprep.subr.mxu0 0.0
    %3033 = vmatpush1.msra.mxu0 0.0
    %3034 = vmatprep.subr.mxu0 0.0
    %3035 = vmatpush1.msra.mxu0 0.0
    %3036 = vmatprep.subr.mxu0 0.0
    %3037 = vmatpush1.msra.mxu0 0.0
    %3038 = vmatprep.subr.mxu0 0.0
    %3039 = vmatpush1.msra.mxu0 0.0
    %3040 = vmatprep.subr.mxu0 0.0
    %3041 = vmatpush1.msra.mxu0 0.0
    %3042 = vmatprep.subr.mxu0 0.0
    %3043 = vmatpush1.msra.mxu0 0.0
    %3044 = vmatprep.subr.mxu0 0.0
    %3045 = vmatpush1.msra.mxu0 0.0
    %3046 = vmatprep.subr.mxu0 0.0
    %3047 = vmatpush1.msra.mxu0 0.0
    %3048 = vmatprep.subr.mxu0 0.0
    %3049 = vmatpush1.msra.mxu0 0.0
    %3050 = vmatprep.subr.mxu0 0.0
    %3051 = vmatpush1.msra.mxu0 0.0
    %3052 = vmatprep.subr.mxu0 0.0
    %3053 = vmatpush1.msra.mxu0 0.0
    %3054 = vmatprep.subr.mxu0 0.0
    %3055 = vmatpush1.msra.mxu0 0.0
    %3056 = vmatprep.subr.mxu0 0.0
    %3057 = vmatpush1.msra.mxu0 %v2914
    %3058 = vmatprep.subr.mxu0 0.0
    %3059 = vmatpush2.msra.mxu0 0.0
    %3060 = vmatprep.subr.mxu0 0.0
    %3061 = vmatpush2.msra.mxu0 0.0
    %3062 = vmatprep.subr.mxu0 0.0
    %3063 = vmatpush2.msra.mxu0 0.0
    %3064 = vmatprep.subr.mxu0 0.0
    %3065 = vmatpush2.msra.mxu0 0.0
    %3066 = vmatprep.subr.mxu0 0.0
    %3067 = vmatpush2.msra.mxu0 0.0
    %3068 = vmatprep.subr.mxu0 0.0
    %3069 = vmatpush2.msra.mxu0 0.0
    %3070 = vmatprep.subr.mxu0 0.0
    %3071 = vmatpush2.msra.mxu0 0.0
    %3072 = vmatprep.subr.mxu0 0.0
    %3073 = vmatpush2.msra.mxu0 0.0
    %3074 = vmatprep.subr.mxu0 0.0
    %3075 = vmatpush2.msra.mxu0 0.0
    %3076 = vmatprep.subr.mxu0 0.0
    %3077 = vmatpush2.msra.mxu0 0.0
    %3078 = vmatprep.subr.mxu0 0.0
    %3079 = vmatpush2.msra.mxu0 0.0
    %3080 = vmatprep.subr.mxu0 0.0
    %3081 = vmatpush2.msra.mxu0 0.0
    %3082 = vmatprep.subr.mxu0 0.0
    %3083 = vmatpush2.msra.mxu0 0.0
    %3084 = vmatprep.subr.mxu0 0.0
    %3085 = vmatpush2.msra.mxu0 0.0
    %3086 = vmatprep.subr.mxu0 0.0
    %3087 = vmatpush2.msra.mxu0 0.0
    %3088 = vmatprep.subr.mxu0 0.0
    %3089 = vmatpush2.msra.mxu0 0.0
    %3090 = vmatprep.mubr.f32.mxu0 0.0
    %3091 = vmatmul.mubr.f32.gmra.mxu0 %v3015
    %v3092 = vpop.f32.mrf.mxu0
    %v3093 = vadd.f32 %v2996, %v3092
    %v3094 = vpop.f32.mrf.mxu0
    %3095 = vmatprep.mubr.f32.mxu0 0.0
    %3096 = vmatmul.mubr.f32.gmra.mxu0 %v3018
    %v3097 = vpop.f32.mrf.mxu0
    %v3098 = vadd.f32 %v3001, %v3097
    %v3099 = vpop.f32.mrf.mxu0
    %3100 = vmatprep.mubr.f32.mxu0 0.0
    %3101 = vmatmul.mubr.f32.gmra.mxu0 %v3021
    %v3102 = vpop.f32.mrf.mxu0
    %v3103 = vadd.f32 %v3006, %v3102
    %v3104 = vpop.f32.mrf.mxu0
    %3105 = vmatprep.mubr.f32.mxu0 0.0
    %3106 = vmatmul.mubr.f32.gmra.mxu0 %v3024
    %v3107 = vpop.f32.mrf.mxu0
    %v3108 = vadd.f32 %v3011, %v3107
    %v3109 = vpop.f32.mrf.mxu0
    %3110 = vdwg.mxu0
    %s3111 = scalar_lea.vmem %s12, 16
    %v3112 = vld [vmem:[%s3111] sm:$0xff]
    %v3114 = vsel %vm567, %v2663, 0
    %v3117 = vsel %vm567, %v2668, 0
    %v3120 = vsel %vm567, %v2744, 0
    %v3123 = vsel %vm567, %v2749, 0
    %3125 = vmatprep.subr.mxu0 0.0
    %3126 = vmatpush1.msra.mxu0 0.0
    %3127 = vmatprep.subr.mxu0 0.0
    %3128 = vmatpush1.msra.mxu0 0.0
    %3129 = vmatprep.subr.mxu0 0.0
    %3130 = vmatpush1.msra.mxu0 0.0
    %3131 = vmatprep.subr.mxu0 0.0
    %3132 = vmatpush1.msra.mxu0 0.0
    %3133 = vmatprep.subr.mxu0 0.0
    %3134 = vmatpush1.msra.mxu0 0.0
    %3135 = vmatprep.subr.mxu0 0.0
    %3136 = vmatpush1.msra.mxu0 0.0
    %3137 = vmatprep.subr.mxu0 0.0
    %3138 = vmatpush1.msra.mxu0 0.0
    %3139 = vmatprep.subr.mxu0 0.0
    %3140 = vmatpush1.msra.mxu0 0.0
    %3141 = vmatprep.subr.mxu0 0.0
    %3142 = vmatpush1.msra.mxu0 0.0
    %3143 = vmatprep.subr.mxu0 0.0
    %3144 = vmatpush1.msra.mxu0 0.0
    %3145 = vmatprep.subr.mxu0 0.0
    %3146 = vmatpush1.msra.mxu0 0.0
    %3147 = vmatprep.subr.mxu0 0.0
    %3148 = vmatpush1.msra.mxu0 0.0
    %3149 = vmatprep.subr.mxu0 0.0
    %3150 = vmatpush1.msra.mxu0 0.0
    %3151 = vmatprep.subr.mxu0 0.0
    %3152 = vmatpush1.msra.mxu0 0.0
    %3153 = vmatprep.subr.mxu0 0.0
    %3154 = vmatpush1.msra.mxu0 0.0
    %3155 = vmatprep.subr.mxu0 0.0
    %3156 = vmatpush1.msra.mxu0 %v3112
    %3157 = vmatprep.subr.mxu0 0.0
    %3158 = vmatpush2.msra.mxu0 0.0
    %3159 = vmatprep.subr.mxu0 0.0
    %3160 = vmatpush2.msra.mxu0 0.0
    %3161 = vmatprep.subr.mxu0 0.0
    %3162 = vmatpush2.msra.mxu0 0.0
    %3163 = vmatprep.subr.mxu0 0.0
    %3164 = vmatpush2.msra.mxu0 0.0
    %3165 = vmatprep.subr.mxu0 0.0
    %3166 = vmatpush2.msra.mxu0 0.0
    %3167 = vmatprep.subr.mxu0 0.0
    %3168 = vmatpush2.msra.mxu0 0.0
    %3169 = vmatprep.subr.mxu0 0.0
    %3170 = vmatpush2.msra.mxu0 0.0
    %3171 = vmatprep.subr.mxu0 0.0
    %3172 = vmatpush2.msra.mxu0 0.0
    %3173 = vmatprep.subr.mxu0 0.0
    %3174 = vmatpush2.msra.mxu0 0.0
    %3175 = vmatprep.subr.mxu0 0.0
    %3176 = vmatpush2.msra.mxu0 0.0
    %3177 = vmatprep.subr.mxu0 0.0
    %3178 = vmatpush2.msra.mxu0 0.0
    %3179 = vmatprep.subr.mxu0 0.0
    %3180 = vmatpush2.msra.mxu0 0.0
    %3181 = vmatprep.subr.mxu0 0.0
    %3182 = vmatpush2.msra.mxu0 0.0
    %3183 = vmatprep.subr.mxu0 0.0
    %3184 = vmatpush2.msra.mxu0 0.0
    %3185 = vmatprep.subr.mxu0 0.0
    %3186 = vmatpush2.msra.mxu0 0.0
    %3187 = vmatprep.subr.mxu0 0.0
    %3188 = vmatpush2.msra.mxu0 0.0
    %3189 = vmatprep.mubr.f32.mxu0 0.0
    %3190 = vmatmul.mubr.f32.gmra.mxu0 %v3114
    %v3191 = vpop.f32.mrf.mxu0
    %v3192 = vadd.f32 0.0, %v3191
    %v3193 = vpop.f32.mrf.mxu0
    %3194 = vmatprep.mubr.f32.mxu0 0.0
    %3195 = vmatmul.mubr.f32.gmra.mxu0 %v3117
    %v3196 = vpop.f32.mrf.mxu0
    %v3197 = vadd.f32 0.0, %v3196
    %v3198 = vpop.f32.mrf.mxu0
    %3199 = vmatprep.mubr.f32.mxu0 0.0
    %3200 = vmatmul.mubr.f32.gmra.mxu0 %v3120
    %v3201 = vpop.f32.mrf.mxu0
    %v3202 = vadd.f32 0.0, %v3201
    %v3203 = vpop.f32.mrf.mxu0
    %3204 = vmatprep.mubr.f32.mxu0 0.0
    %3205 = vmatmul.mubr.f32.gmra.mxu0 %v3123
    %v3206 = vpop.f32.mrf.mxu0
    %v3207 = vadd.f32 0.0, %v3206
    %v3208 = vpop.f32.mrf.mxu0
    %3209 = vdwg.mxu0
    %v3210 = vadd.f32 %v3093, %v3192
    %v3211 = vadd.f32 %v3098, %v3197
    %v3212 = vadd.f32 %v3103, %v3202
    %v3213 = vadd.f32 %v3108, %v3207
    %s3214 = scalar_lea.vmem %s12, 24
    %v3215 = vld [vmem:[%s3214] sm:$0xff]
    %v3217 = vsel %vm567, %v2825, 0
    %v3220 = vsel %vm567, %v2830, 0
    %v3223 = vsel %vm567, %v2906, 0
    %v3226 = vsel %vm567, %v2911, 0
    %3228 = vmatprep.subr.mxu0 0.0
    %3229 = vmatpush1.msra.mxu0 0.0
    %3230 = vmatprep.subr.mxu0 0.0
    %3231 = vmatpush1.msra.mxu0 0.0
    %3232 = vmatprep.subr.mxu0 0.0
    %3233 = vmatpush1.msra.mxu0 0.0
    %3234 = vmatprep.subr.mxu0 0.0
    %3235 = vmatpush1.msra.mxu0 0.0
    %3236 = vmatprep.subr.mxu0 0.0
    %3237 = vmatpush1.msra.mxu0 0.0
    %3238 = vmatprep.subr.mxu0 0.0
    %3239 = vmatpush1.msra.mxu0 0.0
    %3240 = vmatprep.subr.mxu0 0.0
    %3241 = vmatpush1.msra.mxu0 0.0
    %3242 = vmatprep.subr.mxu0 0.0
    %3243 = vmatpush1.msra.mxu0 0.0
    %3244 = vmatprep.subr.mxu0 0.0
    %3245 = vmatpush1.msra.mxu0 0.0
    %3246 = vmatprep.subr.mxu0 0.0
    %3247 = vmatpush1.msra.mxu0 0.0
    %3248 = vmatprep.subr.mxu0 0.0
    %3249 = vmatpush1.msra.mxu0 0.0
    %3250 = vmatprep.subr.mxu0 0.0
    %3251 = vmatpush1.msra.mxu0 0.0
    %3252 = vmatprep.subr.mxu0 0.0
    %3253 = vmatpush1.msra.mxu0 0.0
    %3254 = vmatprep.subr.mxu0 0.0
    %3255 = vmatpush1.msra.mxu0 0.0
    %3256 = vmatprep.subr.mxu0 0.0
    %3257 = vmatpush1.msra.mxu0 0.0
    %3258 = vmatprep.subr.mxu0 0.0
    %3259 = vmatpush1.msra.mxu0 %v3215
    %3260 = vmatprep.subr.mxu0 0.0
    %3261 = vmatpush2.msra.mxu0 0.0
    %3262 = vmatprep.subr.mxu0 0.0
    %3263 = vmatpush2.msra.mxu0 0.0
    %3264 = vmatprep.subr.mxu0 0.0
    %3265 = vmatpush2.msra.mxu0 0.0
    %3266 = vmatprep.subr.mxu0 0.0
    %3267 = vmatpush2.msra.mxu0 0.0
    %3268 = vmatprep.subr.mxu0 0.0
    %3269 = vmatpush2.msra.mxu0 0.0
    %3270 = vmatprep.subr.mxu0 0.0
    %3271 = vmatpush2.msra.mxu0 0.0
    %3272 = vmatprep.subr.mxu0 0.0
    %3273 = vmatpush2.msra.mxu0 0.0
    %3274 = vmatprep.subr.mxu0 0.0
    %3275 = vmatpush2.msra.mxu0 0.0
    %3276 = vmatprep.subr.mxu0 0.0
    %3277 = vmatpush2.msra.mxu0 0.0
    %3278 = vmatprep.subr.mxu0 0.0
    %3279 = vmatpush2.msra.mxu0 0.0
    %3280 = vmatprep.subr.mxu0 0.0
    %3281 = vmatpush2.msra.mxu0 0.0
    %3282 = vmatprep.subr.mxu0 0.0
    %3283 = vmatpush2.msra.mxu0 0.0
    %3284 = vmatprep.subr.mxu0 0.0
    %3285 = vmatpush2.msra.mxu0 0.0
    %3286 = vmatprep.subr.mxu0 0.0
    %3287 = vmatpush2.msra.mxu0 0.0
    %3288 = vmatprep.subr.mxu0 0.0
    %3289 = vmatpush2.msra.mxu0 0.0
    %3290 = vmatprep.subr.mxu0 0.0
    %3291 = vmatpush2.msra.mxu0 0.0
    %3292 = vmatprep.mubr.f32.mxu0 0.0
    %3293 = vmatmul.mubr.f32.gmra.mxu0 %v3217
    %v3294 = vpop.f32.mrf.mxu0
    %v3295 = vadd.f32 0.0, %v3294
    %v3296 = vpop.f32.mrf.mxu0
    %3297 = vmatprep.mubr.f32.mxu0 0.0
    %3298 = vmatmul.mubr.f32.gmra.mxu0 %v3220
    %v3299 = vpop.f32.mrf.mxu0
    %v3300 = vadd.f32 0.0, %v3299
    %v3301 = vpop.f32.mrf.mxu0
    %3302 = vmatprep.mubr.f32.mxu0 0.0
    %3303 = vmatmul.mubr.f32.gmra.mxu0 %v3223
    %v3304 = vpop.f32.mrf.mxu0
    %v3305 = vadd.f32 0.0, %v3304
    %v3306 = vpop.f32.mrf.mxu0
    %3307 = vmatprep.mubr.f32.mxu0 0.0
    %3308 = vmatmul.mubr.f32.gmra.mxu0 %v3226
    %v3309 = vpop.f32.mrf.mxu0
    %v3310 = vadd.f32 0.0, %v3309
    %v3311 = vpop.f32.mrf.mxu0
    %3312 = vdwg.mxu0
    %v3313 = vadd.f32 %v3210, %v3295
    %v3314 = vadd.f32 %v3211, %v3300
    %v3315 = vadd.f32 %v3212, %v3305
    %v3316 = vadd.f32 %v3213, %v3310
    %v3317 = vadd.f32 %v179, %v3313
    %v3318 = vadd.f32 %v180, %v3314
    %v3319 = vadd.f32 %v181, %v3315
    %v3320 = vadd.f32 %v182, %v3316
    %v3321 = vld [vmem:[%s13] sm:$0x1]
    %v3322 = vmul.f32 %v3317, %v3317
    %v3323 = vmul.f32 %v3318, %v3318
    %v3324 = vmul.f32 %v3319, %v3319
    %v3325 = vmul.f32 %v3320, %v3320
    %v3326 = vsel %vm248, %v3322, 0.0
    %3327 = vadd.xlane.f32.xlu0 %v3326
    %v3328 = vpop.xlane.xlu0 %3327
    %v3329 = vsel %vm248, %v3323, 0.0
    %3330 = vadd.xlane.f32.xlu0 %v3329
    %v3331 = vpop.xlane.xlu0 %3330
    %v3332 = vsel %vm248, %v3324, 0.0
    %3333 = vadd.xlane.f32.xlu0 %v3332
    %v3334 = vpop.xlane.xlu0 %3333
    %v3335 = vsel %vm248, %v3325, 0.0
    %3336 = vadd.xlane.f32.xlu0 %v3335
    %v3337 = vpop.xlane.xlu0 %3336
    %v3338 = vmul.f32 %v3328, %v261
    %v3339 = vmul.f32 %v3331, %v261
    %v3340 = vmul.f32 %v3334, %v261
    %v3341 = vmul.f32 %v3337, %v261
    %v3342 = vadd.f32 %v3338, 1e-06
    %v3343 = vadd.f32 %v3339, 1e-06
    %v3344 = vadd.f32 %v3340, 1e-06
    %v3345 = vadd.f32 %v3341, 1e-06
    %v3346 = vrsqrt.pop %v3342
    %v3347 = vrsqrt.pop %v3343
    %v3348 = vrsqrt.pop %v3344
    %v3349 = vrsqrt.pop %v3345
    %v3350 = vmul.f32 %v3317, %v3346
    %v3351 = vmul.f32 %v3318, %v3347
    %v3352 = vmul.f32 %v3319, %v3348
    %v3353 = vmul.f32 %v3320, %v3349
    %v3355 = vlaneseq
    %v3356 = vshrl.u32 %v3355, 7
    %v3357 = vsub.s32 0, %v3356
    %v3358 = vrot.slane %v3321, %v3357
    %v3360 = vmul.f32 %v3350, %v3358
    %v3361 = vmul.f32 %v3351, %v3358
    %v3362 = vmul.f32 %v3352, %v3358
    %v3363 = vmul.f32 %v3353, %v3358
    %v3364 = vld [vmem:[%s14] sm:$0xff]
    %v3365 = vld [vmem:[%s14 + $0x8] sm:$0xff]
    %v3366 = vld [vmem:[%s14 + $0x10] sm:$0xff]
    %v3367 = vld [vmem:[%s14 + $0x18] sm:$0xff]
    %v3369 = vsel %vm248, %v3360, 0
    %v3372 = vsel %vm248, %v3361, 0
    %v3375 = vsel %vm248, %v3362, 0
    %v3378 = vsel %vm248, %v3363, 0
    %3380 = vmatprep.subr.mxu0 0.0
    %3381 = vmatpush1.msra.mxu0 0.0
    %3382 = vmatprep.subr.mxu0 0.0
    %3383 = vmatpush1.msra.mxu0 0.0
    %3384 = vmatprep.subr.mxu0 0.0
    %3385 = vmatpush1.msra.mxu0 0.0
    %3386 = vmatprep.subr.mxu0 0.0
    %3387 = vmatpush1.msra.mxu0 0.0
    %3388 = vmatprep.subr.mxu0 0.0
    %3389 = vmatpush1.msra.mxu0 0.0
    %3390 = vmatprep.subr.mxu0 0.0
    %3391 = vmatpush1.msra.mxu0 0.0
    %3392 = vmatprep.subr.mxu0 0.0
    %3393 = vmatpush1.msra.mxu0 0.0
    %3394 = vmatprep.subr.mxu0 0.0
    %3395 = vmatpush1.msra.mxu0 0.0
    %3396 = vmatprep.subr.mxu0 0.0
    %3397 = vmatpush1.msra.mxu0 0.0
    %3398 = vmatprep.subr.mxu0 0.0
    %3399 = vmatpush1.msra.mxu0 0.0
    %3400 = vmatprep.subr.mxu0 0.0
    %3401 = vmatpush1.msra.mxu0 0.0
    %3402 = vmatprep.subr.mxu0 0.0
    %3403 = vmatpush1.msra.mxu0 0.0
    %3404 = vmatprep.subr.mxu0 0.0
    %3405 = vmatpush1.msra.mxu0 %v3367
    %3406 = vmatprep.subr.mxu0 0.0
    %3407 = vmatpush1.msra.mxu0 %v3366
    %3408 = vmatprep.subr.mxu0 0.0
    %3409 = vmatpush1.msra.mxu0 %v3365
    %3410 = vmatprep.subr.mxu0 0.0
    %3411 = vmatpush1.msra.mxu0 %v3364
    %3412 = vmatprep.subr.mxu0 0.0
    %3413 = vmatpush2.msra.mxu0 0.0
    %3414 = vmatprep.subr.mxu0 0.0
    %3415 = vmatpush2.msra.mxu0 0.0
    %3416 = vmatprep.subr.mxu0 0.0
    %3417 = vmatpush2.msra.mxu0 0.0
    %3418 = vmatprep.subr.mxu0 0.0
    %3419 = vmatpush2.msra.mxu0 0.0
    %3420 = vmatprep.subr.mxu0 0.0
    %3421 = vmatpush2.msra.mxu0 0.0
    %3422 = vmatprep.subr.mxu0 0.0
    %3423 = vmatpush2.msra.mxu0 0.0
    %3424 = vmatprep.subr.mxu0 0.0
    %3425 = vmatpush2.msra.mxu0 0.0
    %3426 = vmatprep.subr.mxu0 0.0
    %3427 = vmatpush2.msra.mxu0 0.0
    %3428 = vmatprep.subr.mxu0 0.0
    %3429 = vmatpush2.msra.mxu0 0.0
    %3430 = vmatprep.subr.mxu0 0.0
    %3431 = vmatpush2.msra.mxu0 0.0
    %3432 = vmatprep.subr.mxu0 0.0
    %3433 = vmatpush2.msra.mxu0 0.0
    %3434 = vmatprep.subr.mxu0 0.0
    %3435 = vmatpush2.msra.mxu0 0.0
    %3436 = vmatprep.subr.mxu0 0.0
    %3437 = vmatpush2.msra.mxu0 0.0
    %3438 = vmatprep.subr.mxu0 0.0
    %3439 = vmatpush2.msra.mxu0 0.0
    %3440 = vmatprep.subr.mxu0 0.0
    %3441 = vmatpush2.msra.mxu0 0.0
    %3442 = vmatprep.subr.mxu0 0.0
    %3443 = vmatpush2.msra.mxu0 0.0
    %3444 = vmatprep.mubr.f32.mxu0 0.0
    %3445 = vmatmul.mubr.f32.gmra.mxu0 %v3369
    %v3446 = vpop.f32.mrf.mxu0
    %v3447 = vadd.f32 0.0, %v3446
    %v3448 = vpop.f32.mrf.mxu0
    %3449 = vmatprep.mubr.f32.mxu0 0.0
    %3450 = vmatmul.mubr.f32.gmra.mxu0 %v3372
    %v3451 = vpop.f32.mrf.mxu0
    %v3452 = vadd.f32 0.0, %v3451
    %v3453 = vpop.f32.mrf.mxu0
    %3454 = vmatprep.mubr.f32.mxu0 0.0
    %3455 = vmatmul.mubr.f32.gmra.mxu0 %v3375
    %v3456 = vpop.f32.mrf.mxu0
    %v3457 = vadd.f32 0.0, %v3456
    %v3458 = vpop.f32.mrf.mxu0
    %3459 = vmatprep.mubr.f32.mxu0 0.0
    %3460 = vmatmul.mubr.f32.gmra.mxu0 %v3378
    %v3461 = vpop.f32.mrf.mxu0
    %v3462 = vadd.f32 0.0, %v3461
    %v3463 = vpop.f32.mrf.mxu0
    %3464 = vdwg.mxu0
    %v3465 = vmax.f32 %v3447, 0.0
    %v3466 = vmax.f32 %v3452, 0.0
    %v3467 = vmax.f32 %v3457, 0.0
    %v3468 = vmax.f32 %v3462, 0.0
    %v3469 = vld [vmem:[%s15] sm:$0xff]
    %v3470 = vld [vmem:[%s15 + $0x8] sm:$0xff]
    %v3471 = vld [vmem:[%s15 + $0x10] sm:$0xff]
    %v3472 = vld [vmem:[%s15 + $0x18] sm:$0xff]
    %v3473 = vld [vmem:[%s15 + $0x20] sm:$0xff]
    %v3474 = vld [vmem:[%s15 + $0x28] sm:$0xff]
    %v3475 = vld [vmem:[%s15 + $0x30] sm:$0xff]
    %v3476 = vld [vmem:[%s15 + $0x38] sm:$0xff]
    %vm3477 = vcmask 523264
    %v3479 = vsel %vm3477, %v3465, 0
    %v3482 = vsel %vm3477, %v3466, 0
    %v3485 = vsel %vm3477, %v3467, 0
    %v3488 = vsel %vm3477, %v3468, 0
    %3490 = vmatprep.subr.mxu0 0.0
    %3491 = vmatpush1.msra.mxu0 0.0
    %3492 = vmatprep.subr.mxu0 0.0
    %3493 = vmatpush1.msra.mxu0 0.0
    %3494 = vmatprep.subr.mxu0 0.0
    %3495 = vmatpush1.msra.mxu0 0.0
    %3496 = vmatprep.subr.mxu0 0.0
    %3497 = vmatpush1.msra.mxu0 0.0
    %3498 = vmatprep.subr.mxu0 0.0
    %3499 = vmatpush1.msra.mxu0 0.0
    %3500 = vmatprep.subr.mxu0 0.0
    %3501 = vmatpush1.msra.mxu0 0.0
    %3502 = vmatprep.subr.mxu0 0.0
    %3503 = vmatpush1.msra.mxu0 0.0
    %3504 = vmatprep.subr.mxu0 0.0
    %3505 = vmatpush1.msra.mxu0 0.0
    %3506 = vmatprep.subr.mxu0 0.0
    %3507 = vmatpush1.msra.mxu0 %v3476
    %3508 = vmatprep.subr.mxu0 0.0
    %3509 = vmatpush1.msra.mxu0 %v3475
    %3510 = vmatprep.subr.mxu0 0.0
    %3511 = vmatpush1.msra.mxu0 %v3474
    %3512 = vmatprep.subr.mxu0 0.0
    %3513 = vmatpush1.msra.mxu0 %v3473
    %3514 = vmatprep.subr.mxu0 0.0
    %3515 = vmatpush1.msra.mxu0 %v3472
    %3516 = vmatprep.subr.mxu0 0.0
    %3517 = vmatpush1.msra.mxu0 %v3471
    %3518 = vmatprep.subr.mxu0 0.0
    %3519 = vmatpush1.msra.mxu0 %v3470
    %3520 = vmatprep.subr.mxu0 0.0
    %3521 = vmatpush1.msra.mxu0 %v3469
    %3522 = vmatprep.subr.mxu0 0.0
    %3523 = vmatpush2.msra.mxu0 0.0
    %3524 = vmatprep.subr.mxu0 0.0
    %3525 = vmatpush2.msra.mxu0 0.0
    %3526 = vmatprep.subr.mxu0 0.0
    %3527 = vmatpush2.msra.mxu0 0.0
    %3528 = vmatprep.subr.mxu0 0.0
    %3529 = vmatpush2.msra.mxu0 0.0
    %3530 = vmatprep.subr.mxu0 0.0
    %3531 = vmatpush2.msra.mxu0 0.0
    %3532 = vmatprep.subr.mxu0 0.0
    %3533 = vmatpush2.msra.mxu0 0.0
    %3534 = vmatprep.subr.mxu0 0.0
    %3535 = vmatpush2.msra.mxu0 0.0
    %3536 = vmatprep.subr.mxu0 0.0
    %3537 = vmatpush2.msra.mxu0 0.0
    %3538 = vmatprep.subr.mxu0 0.0
    %3539 = vmatpush2.msra.mxu0 0.0
    %3540 = vmatprep.subr.mxu0 0.0
    %3541 = vmatpush2.msra.mxu0 0.0
    %3542 = vmatprep.subr.mxu0 0.0
    %3543 = vmatpush2.msra.mxu0 0.0
    %3544 = vmatprep.subr.mxu0 0.0
    %3545 = vmatpush2.msra.mxu0 0.0
    %3546 = vmatprep.subr.mxu0 0.0
    %3547 = vmatpush2.msra.mxu0 0.0
    %3548 = vmatprep.subr.mxu0 0.0
    %3549 = vmatpush2.msra.mxu0 0.0
    %3550 = vmatprep.subr.mxu0 0.0
    %3551 = vmatpush2.msra.mxu0 0.0
    %3552 = vmatprep.subr.mxu0 0.0
    %3553 = vmatpush2.msra.mxu0 0.0
    %3554 = vmatprep.mubr.f32.mxu0 0.0
    %3555 = vmatmul.mubr.f32.gmra.mxu0 %v3479
    %v3556 = vpop.f32.mrf.mxu0
    %v3557 = vadd.f32 0.0, %v3556
    %v3558 = vpop.f32.mrf.mxu0
    %3559 = vmatprep.mubr.f32.mxu0 0.0
    %3560 = vmatmul.mubr.f32.gmra.mxu0 %v3482
    %v3561 = vpop.f32.mrf.mxu0
    %v3562 = vadd.f32 0.0, %v3561
    %v3563 = vpop.f32.mrf.mxu0
    %3564 = vmatprep.mubr.f32.mxu0 0.0
    %3565 = vmatmul.mubr.f32.gmra.mxu0 %v3485
    %v3566 = vpop.f32.mrf.mxu0
    %v3567 = vadd.f32 0.0, %v3566
    %v3568 = vpop.f32.mrf.mxu0
    %3569 = vmatprep.mubr.f32.mxu0 0.0
    %3570 = vmatmul.mubr.f32.gmra.mxu0 %v3488
    %v3571 = vpop.f32.mrf.mxu0
    %v3572 = vadd.f32 0.0, %v3571
    %v3573 = vpop.f32.mrf.mxu0
    %3574 = vdwg.mxu0
    %v3575 = vadd.f32 %v3317, %v3557
    %v3576 = vadd.f32 %v3318, %v3562
    %v3577 = vadd.f32 %v3319, %v3567
    %v3578 = vadd.f32 %v3320, %v3572
    %s3579 = scalar_lea.vmem %s8, 1
    %v3580 = vld [vmem:[%s3579] sm:$0x1]
    %v3581 = vmul.f32 %v3575, %v3575
    %v3582 = vmul.f32 %v3576, %v3576
    %v3583 = vmul.f32 %v3577, %v3577
    %v3584 = vmul.f32 %v3578, %v3578
    %v3585 = vsel %vm248, %v3581, 0.0
    %3586 = vadd.xlane.f32.xlu0 %v3585
    %v3587 = vpop.xlane.xlu0 %3586
    %v3588 = vsel %vm248, %v3582, 0.0
    %3589 = vadd.xlane.f32.xlu0 %v3588
    %v3590 = vpop.xlane.xlu0 %3589
    %v3591 = vsel %vm248, %v3583, 0.0
    %3592 = vadd.xlane.f32.xlu0 %v3591
    %v3593 = vpop.xlane.xlu0 %3592
    %v3594 = vsel %vm248, %v3584, 0.0
    %3595 = vadd.xlane.f32.xlu0 %v3594
    %v3596 = vpop.xlane.xlu0 %3595
    %v3597 = vmul.f32 %v3587, %v261
    %v3598 = vmul.f32 %v3590, %v261
    %v3599 = vmul.f32 %v3593, %v261
    %v3600 = vmul.f32 %v3596, %v261
    %v3601 = vadd.f32 %v3597, 1e-06
    %v3602 = vadd.f32 %v3598, 1e-06
    %v3603 = vadd.f32 %v3599, 1e-06
    %v3604 = vadd.f32 %v3600, 1e-06
    %v3605 = vrsqrt.pop %v3601
    %v3606 = vrsqrt.pop %v3602
    %v3607 = vrsqrt.pop %v3603
    %v3608 = vrsqrt.pop %v3604
    %v3609 = vmul.f32 %v3575, %v3605
    %v3610 = vmul.f32 %v3576, %v3606
    %v3611 = vmul.f32 %v3577, %v3607
    %v3612 = vmul.f32 %v3578, %v3608
    %v3614 = vlaneseq
    %v3615 = vshrl.u32 %v3614, 7
    %v3616 = vsub.s32 0, %v3615
    %v3617 = vrot.slane %v3580, %v3616
    %v3619 = vmul.f32 %v3609, %v3617
    %v3620 = vmul.f32 %v3610, %v3617
    %v3621 = vmul.f32 %v3611, %v3617
    %v3622 = vmul.f32 %v3612, %v3617
    %s3623 = scalar_lea.vmem %s9, 128
    %v3624 = vld [vmem:[%s3623] sm:$0xff]
    %v3625 = vld [vmem:[%s3623 + $0x8] sm:$0xff]
    %v3626 = vld [vmem:[%s3623 + $0x10] sm:$0xff]
    %v3627 = vld [vmem:[%s3623 + $0x18] sm:$0xff]
    %v3629 = vsel %vm248, %v3619, 0
    %v3632 = vsel %vm248, %v3620, 0
    %v3635 = vsel %vm248, %v3621, 0
    %v3638 = vsel %vm248, %v3622, 0
    %3640 = vmatprep.subr.mxu0 0.0
    %3641 = vmatpush1.msra.mxu0 0.0
    %3642 = vmatprep.subr.mxu0 0.0
    %3643 = vmatpush1.msra.mxu0 0.0
    %3644 = vmatprep.subr.mxu0 0.0
    %3645 = vmatpush1.msra.mxu0 0.0
    %3646 = vmatprep.subr.mxu0 0.0
    %3647 = vmatpush1.msra.mxu0 0.0
    %3648 = vmatprep.subr.mxu0 0.0
    %3649 = vmatpush1.msra.mxu0 0.0
    %3650 = vmatprep.subr.mxu0 0.0
    %3651 = vmatpush1.msra.mxu0 0.0
    %3652 = vmatprep.subr.mxu0 0.0
    %3653 = vmatpush1.msra.mxu0 0.0
    %3654 = vmatprep.subr.mxu0 0.0
    %3655 = vmatpush1.msra.mxu0 0.0
    %3656 = vmatprep.subr.mxu0 0.0
    %3657 = vmatpush1.msra.mxu0 0.0
    %3658 = vmatprep.subr.mxu0 0.0
    %3659 = vmatpush1.msra.mxu0 0.0
    %3660 = vmatprep.subr.mxu0 0.0
    %3661 = vmatpush1.msra.mxu0 0.0
    %3662 = vmatprep.subr.mxu0 0.0
    %3663 = vmatpush1.msra.mxu0 0.0
    %3664 = vmatprep.subr.mxu0 0.0
    %3665 = vmatpush1.msra.mxu0 %v3627
    %3666 = vmatprep.subr.mxu0 0.0
    %3667 = vmatpush1.msra.mxu0 %v3626
    %3668 = vmatprep.subr.mxu0 0.0
    %3669 = vmatpush1.msra.mxu0 %v3625
    %3670 = vmatprep.subr.mxu0 0.0
    %3671 = vmatpush1.msra.mxu0 %v3624
    %3672 = vmatprep.subr.mxu0 0.0
    %3673 = vmatpush2.msra.mxu0 0.0
    %3674 = vmatprep.subr.mxu0 0.0
    %3675 = vmatpush2.msra.mxu0 0.0
    %3676 = vmatprep.subr.mxu0 0.0
    %3677 = vmatpush2.msra.mxu0 0.0
    %3678 = vmatprep.subr.mxu0 0.0
    %3679 = vmatpush2.msra.mxu0 0.0
    %3680 = vmatprep.subr.mxu0 0.0
    %3681 = vmatpush2.msra.mxu0 0.0
    %3682 = vmatprep.subr.mxu0 0.0
    %3683 = vmatpush2.msra.mxu0 0.0
    %3684 = vmatprep.subr.mxu0 0.0
    %3685 = vmatpush2.msra.mxu0 0.0
    %3686 = vmatprep.subr.mxu0 0.0
    %3687 = vmatpush2.msra.mxu0 0.0
    %3688 = vmatprep.subr.mxu0 0.0
    %3689 = vmatpush2.msra.mxu0 0.0
    %3690 = vmatprep.subr.mxu0 0.0
    %3691 = vmatpush2.msra.mxu0 0.0
    %3692 = vmatprep.subr.mxu0 0.0
    %3693 = vmatpush2.msra.mxu0 0.0
    %3694 = vmatprep.subr.mxu0 0.0
    %3695 = vmatpush2.msra.mxu0 0.0
    %3696 = vmatprep.subr.mxu0 0.0
    %3697 = vmatpush2.msra.mxu0 0.0
    %3698 = vmatprep.subr.mxu0 0.0
    %3699 = vmatpush2.msra.mxu0 0.0
    %3700 = vmatprep.subr.mxu0 0.0
    %3701 = vmatpush2.msra.mxu0 0.0
    %3702 = vmatprep.subr.mxu0 0.0
    %3703 = vmatpush2.msra.mxu0 0.0
    %3704 = vmatprep.mubr.f32.mxu0 0.0
    %3705 = vmatmul.mubr.f32.gmra.mxu0 %v3629
    %v3706 = vpop.f32.mrf.mxu0
    %v3707 = vadd.f32 0.0, %v3706
    %v3708 = vpop.f32.mrf.mxu0
    %3709 = vmatprep.mubr.f32.mxu0 0.0
    %3710 = vmatmul.mubr.f32.gmra.mxu0 %v3632
    %v3711 = vpop.f32.mrf.mxu0
    %v3712 = vadd.f32 0.0, %v3711
    %v3713 = vpop.f32.mrf.mxu0
    %3714 = vmatprep.mubr.f32.mxu0 0.0
    %3715 = vmatmul.mubr.f32.gmra.mxu0 %v3635
    %v3716 = vpop.f32.mrf.mxu0
    %v3717 = vadd.f32 0.0, %v3716
    %v3718 = vpop.f32.mrf.mxu0
    %3719 = vmatprep.mubr.f32.mxu0 0.0
    %3720 = vmatmul.mubr.f32.gmra.mxu0 %v3638
    %v3721 = vpop.f32.mrf.mxu0
    %v3722 = vadd.f32 0.0, %v3721
    %v3723 = vpop.f32.mrf.mxu0
    %3724 = vdwg.mxu0
    %s3725 = scalar_lea.vmem %s10, 128
    %v3726 = vld [vmem:[%s3725] sm:$0xff]
    %v3727 = vld [vmem:[%s3725 + $0x8] sm:$0xff]
    %v3728 = vld [vmem:[%s3725 + $0x10] sm:$0xff]
    %v3729 = vld [vmem:[%s3725 + $0x18] sm:$0xff]
    %3730 = vmatprep.subr.mxu0 0.0
    %3731 = vmatpush1.msra.mxu0 0.0
    %3732 = vmatprep.subr.mxu0 0.0
    %3733 = vmatpush1.msra.mxu0 0.0
    %3734 = vmatprep.subr.mxu0 0.0
    %3735 = vmatpush1.msra.mxu0 0.0
    %3736 = vmatprep.subr.mxu0 0.0
    %3737 = vmatpush1.msra.mxu0 0.0
    %3738 = vmatprep.subr.mxu0 0.0
    %3739 = vmatpush1.msra.mxu0 0.0
    %3740 = vmatprep.subr.mxu0 0.0
    %3741 = vmatpush1.msra.mxu0 0.0
    %3742 = vmatprep.subr.mxu0 0.0
    %3743 = vmatpush1.msra.mxu0 0.0
    %3744 = vmatprep.subr.mxu0 0.0
    %3745 = vmatpush1.msra.mxu0 0.0
    %3746 = vmatprep.subr.mxu0 0.0
    %3747 = vmatpush1.msra.mxu0 0.0
    %3748 = vmatprep.subr.mxu0 0.0
    %3749 = vmatpush1.msra.mxu0 0.0
    %3750 = vmatprep.subr.mxu0 0.0
    %3751 = vmatpush1.msra.mxu0 0.0
    %3752 = vmatprep.subr.mxu0 0.0
    %3753 = vmatpush1.msra.mxu0 0.0
    %3754 = vmatprep.subr.mxu0 0.0
    %3755 = vmatpush1.msra.mxu0 %v3729
    %3756 = vmatprep.subr.mxu0 0.0
    %3757 = vmatpush1.msra.mxu0 %v3728
    %3758 = vmatprep.subr.mxu0 0.0
    %3759 = vmatpush1.msra.mxu0 %v3727
    %3760 = vmatprep.subr.mxu0 0.0
    %3761 = vmatpush1.msra.mxu0 %v3726
    %3762 = vmatprep.subr.mxu0 0.0
    %3763 = vmatpush2.msra.mxu0 0.0
    %3764 = vmatprep.subr.mxu0 0.0
    %3765 = vmatpush2.msra.mxu0 0.0
    %3766 = vmatprep.subr.mxu0 0.0
    %3767 = vmatpush2.msra.mxu0 0.0
    %3768 = vmatprep.subr.mxu0 0.0
    %3769 = vmatpush2.msra.mxu0 0.0
    %3770 = vmatprep.subr.mxu0 0.0
    %3771 = vmatpush2.msra.mxu0 0.0
    %3772 = vmatprep.subr.mxu0 0.0
    %3773 = vmatpush2.msra.mxu0 0.0
    %3774 = vmatprep.subr.mxu0 0.0
    %3775 = vmatpush2.msra.mxu0 0.0
    %3776 = vmatprep.subr.mxu0 0.0
    %3777 = vmatpush2.msra.mxu0 0.0
    %3778 = vmatprep.subr.mxu0 0.0
    %3779 = vmatpush2.msra.mxu0 0.0
    %3780 = vmatprep.subr.mxu0 0.0
    %3781 = vmatpush2.msra.mxu0 0.0
    %3782 = vmatprep.subr.mxu0 0.0
    %3783 = vmatpush2.msra.mxu0 0.0
    %3784 = vmatprep.subr.mxu0 0.0
    %3785 = vmatpush2.msra.mxu0 0.0
    %3786 = vmatprep.subr.mxu0 0.0
    %3787 = vmatpush2.msra.mxu0 0.0
    %3788 = vmatprep.subr.mxu0 0.0
    %3789 = vmatpush2.msra.mxu0 0.0
    %3790 = vmatprep.subr.mxu0 0.0
    %3791 = vmatpush2.msra.mxu0 0.0
    %3792 = vmatprep.subr.mxu0 0.0
    %3793 = vmatpush2.msra.mxu0 0.0
    %3794 = vmatprep.mubr.f32.mxu0 0.0
    %3795 = vmatmul.mubr.f32.gmra.mxu0 %v3629
    %v3796 = vpop.f32.mrf.mxu0
    %v3797 = vadd.f32 0.0, %v3796
    %v3798 = vpop.f32.mrf.mxu0
    %3799 = vmatprep.mubr.f32.mxu0 0.0
    %3800 = vmatmul.mubr.f32.gmra.mxu0 %v3632
    %v3801 = vpop.f32.mrf.mxu0
    %v3802 = vadd.f32 0.0, %v3801
    %v3803 = vpop.f32.mrf.mxu0
    %3804 = vmatprep.mubr.f32.mxu0 0.0
    %3805 = vmatmul.mubr.f32.gmra.mxu0 %v3635
    %v3806 = vpop.f32.mrf.mxu0
    %v3807 = vadd.f32 0.0, %v3806
    %v3808 = vpop.f32.mrf.mxu0
    %3809 = vmatprep.mubr.f32.mxu0 0.0
    %3810 = vmatmul.mubr.f32.gmra.mxu0 %v3638
    %v3811 = vpop.f32.mrf.mxu0
    %v3812 = vadd.f32 0.0, %v3811
    %v3813 = vpop.f32.mrf.mxu0
    %3814 = vdwg.mxu0
    %s3815 = scalar_lea.vmem %s11, 128
    %v3816 = vld [vmem:[%s3815] sm:$0xff]
    %v3817 = vld [vmem:[%s3815 + $0x8] sm:$0xff]
    %v3818 = vld [vmem:[%s3815 + $0x10] sm:$0xff]
    %v3819 = vld [vmem:[%s3815 + $0x18] sm:$0xff]
    %3820 = vmatprep.subr.mxu0 0.0
    %3821 = vmatpush1.msra.mxu0 0.0
    %3822 = vmatprep.subr.mxu0 0.0
    %3823 = vmatpush1.msra.mxu0 0.0
    %3824 = vmatprep.subr.mxu0 0.0
    %3825 = vmatpush1.msra.mxu0 0.0
    %3826 = vmatprep.subr.mxu0 0.0
    %3827 = vmatpush1.msra.mxu0 0.0
    %3828 = vmatprep.subr.mxu0 0.0
    %3829 = vmatpush1.msra.mxu0 0.0
    %3830 = vmatprep.subr.mxu0 0.0
    %3831 = vmatpush1.msra.mxu0 0.0
    %3832 = vmatprep.subr.mxu0 0.0
    %3833 = vmatpush1.msra.mxu0 0.0
    %3834 = vmatprep.subr.mxu0 0.0
    %3835 = vmatpush1.msra.mxu0 0.0
    %3836 = vmatprep.subr.mxu0 0.0
    %3837 = vmatpush1.msra.mxu0 0.0
    %3838 = vmatprep.subr.mxu0 0.0
    %3839 = vmatpush1.msra.mxu0 0.0
    %3840 = vmatprep.subr.mxu0 0.0
    %3841 = vmatpush1.msra.mxu0 0.0
    %3842 = vmatprep.subr.mxu0 0.0
    %3843 = vmatpush1.msra.mxu0 0.0
    %3844 = vmatprep.subr.mxu0 0.0
    %3845 = vmatpush1.msra.mxu0 %v3819
    %3846 = vmatprep.subr.mxu0 0.0
    %3847 = vmatpush1.msra.mxu0 %v3818
    %3848 = vmatprep.subr.mxu0 0.0
    %3849 = vmatpush1.msra.mxu0 %v3817
    %3850 = vmatprep.subr.mxu0 0.0
    %3851 = vmatpush1.msra.mxu0 %v3816
    %3852 = vmatprep.subr.mxu0 0.0
    %3853 = vmatpush2.msra.mxu0 0.0
    %3854 = vmatprep.subr.mxu0 0.0
    %3855 = vmatpush2.msra.mxu0 0.0
    %3856 = vmatprep.subr.mxu0 0.0
    %3857 = vmatpush2.msra.mxu0 0.0
    %3858 = vmatprep.subr.mxu0 0.0
    %3859 = vmatpush2.msra.mxu0 0.0
    %3860 = vmatprep.subr.mxu0 0.0
    %3861 = vmatpush2.msra.mxu0 0.0
    %3862 = vmatprep.subr.mxu0 0.0
    %3863 = vmatpush2.msra.mxu0 0.0
    %3864 = vmatprep.subr.mxu0 0.0
    %3865 = vmatpush2.msra.mxu0 0.0
    %3866 = vmatprep.subr.mxu0 0.0
    %3867 = vmatpush2.msra.mxu0 0.0
    %3868 = vmatprep.subr.mxu0 0.0
    %3869 = vmatpush2.msra.mxu0 0.0
    %3870 = vmatprep.subr.mxu0 0.0
    %3871 = vmatpush2.msra.mxu0 0.0
    %3872 = vmatprep.subr.mxu0 0.0
    %3873 = vmatpush2.msra.mxu0 0.0
    %3874 = vmatprep.subr.mxu0 0.0
    %3875 = vmatpush2.msra.mxu0 0.0
    %3876 = vmatprep.subr.mxu0 0.0
    %3877 = vmatpush2.msra.mxu0 0.0
    %3878 = vmatprep.subr.mxu0 0.0
    %3879 = vmatpush2.msra.mxu0 0.0
    %3880 = vmatprep.subr.mxu0 0.0
    %3881 = vmatpush2.msra.mxu0 0.0
    %3882 = vmatprep.subr.mxu0 0.0
    %3883 = vmatpush2.msra.mxu0 0.0
    %3884 = vmatprep.mubr.f32.mxu0 0.0
    %3885 = vmatmul.mubr.f32.gmra.mxu0 %v3629
    %v3886 = vpop.f32.mrf.mxu0
    %v3887 = vadd.f32 0.0, %v3886
    %v3888 = vpop.f32.mrf.mxu0
    %3889 = vmatprep.mubr.f32.mxu0 0.0
    %3890 = vmatmul.mubr.f32.gmra.mxu0 %v3632
    %v3891 = vpop.f32.mrf.mxu0
    %v3892 = vadd.f32 0.0, %v3891
    %v3893 = vpop.f32.mrf.mxu0
    %3894 = vmatprep.mubr.f32.mxu0 0.0
    %3895 = vmatmul.mubr.f32.gmra.mxu0 %v3635
    %v3896 = vpop.f32.mrf.mxu0
    %v3897 = vadd.f32 0.0, %v3896
    %v3898 = vpop.f32.mrf.mxu0
    %3899 = vmatprep.mubr.f32.mxu0 0.0
    %3900 = vmatmul.mubr.f32.gmra.mxu0 %v3638
    %v3901 = vpop.f32.mrf.mxu0
    %v3902 = vadd.f32 0.0, %v3901
    %v3903 = vpop.f32.mrf.mxu0
    %3904 = vdwg.mxu0
    %v3906 = vsel %vm567, %v3707, 0
    %v3909 = vsel %vm567, %v3712, 0
    %v3912 = vsel %vm567, %v3797, 0
    %v3915 = vsel %vm567, %v3802, 0
    %3917 = vmatprep.subr.mxu0 0.0
    %3918 = vmatpush1.xpose.msra.mxu0 0.0
    %3919 = vmatprep.subr.mxu0 0.0
    %3920 = vmatpush1.xpose.msra.mxu0 0.0
    %3921 = vmatprep.subr.mxu0 0.0
    %3922 = vmatpush1.xpose.msra.mxu0 0.0
    %3923 = vmatprep.subr.mxu0 0.0
    %3924 = vmatpush1.xpose.msra.mxu0 0.0
    %3925 = vmatprep.subr.mxu0 0.0
    %3926 = vmatpush1.xpose.msra.mxu0 0.0
    %3927 = vmatprep.subr.mxu0 0.0
    %3928 = vmatpush1.xpose.msra.mxu0 0.0
    %3929 = vmatprep.subr.mxu0 0.0
    %3930 = vmatpush1.xpose.msra.mxu0 0.0
    %3931 = vmatprep.subr.mxu0 0.0
    %3932 = vmatpush1.xpose.msra.mxu0 0.0
    %3933 = vmatprep.subr.mxu0 0.0
    %3934 = vmatpush1.xpose.msra.mxu0 0.0
    %3935 = vmatprep.subr.mxu0 0.0
    %3936 = vmatpush1.xpose.msra.mxu0 0.0
    %3937 = vmatprep.subr.mxu0 0.0
    %3938 = vmatpush1.xpose.msra.mxu0 0.0
    %3939 = vmatprep.subr.mxu0 0.0
    %3940 = vmatpush1.xpose.msra.mxu0 0.0
    %3941 = vmatprep.subr.mxu0 0.0
    %3942 = vmatpush1.xpose.msra.mxu0 0.0
    %3943 = vmatprep.subr.mxu0 0.0
    %3944 = vmatpush1.xpose.msra.mxu0 0.0
    %3945 = vmatprep.subr.mxu0 0.0
    %3946 = vmatpush1.xpose.msra.mxu0 %v3915
    %3947 = vmatprep.subr.mxu0 0.0
    %3948 = vmatpush1.xpose.msra.mxu0 %v3912
    %3949 = vmatprep.subr.mxu0 0.0
    %3950 = vmatpush2.xpose.msra.mxu0 0.0
    %3951 = vmatprep.subr.mxu0 0.0
    %3952 = vmatpush2.xpose.msra.mxu0 0.0
    %3953 = vmatprep.subr.mxu0 0.0
    %3954 = vmatpush2.xpose.msra.mxu0 0.0
    %3955 = vmatprep.subr.mxu0 0.0
    %3956 = vmatpush2.xpose.msra.mxu0 0.0
    %3957 = vmatprep.subr.mxu0 0.0
    %3958 = vmatpush2.xpose.msra.mxu0 0.0
    %3959 = vmatprep.subr.mxu0 0.0
    %3960 = vmatpush2.xpose.msra.mxu0 0.0
    %3961 = vmatprep.subr.mxu0 0.0
    %3962 = vmatpush2.xpose.msra.mxu0 0.0
    %3963 = vmatprep.subr.mxu0 0.0
    %3964 = vmatpush2.xpose.msra.mxu0 0.0
    %3965 = vmatprep.subr.mxu0 0.0
    %3966 = vmatpush2.xpose.msra.mxu0 0.0
    %3967 = vmatprep.subr.mxu0 0.0
    %3968 = vmatpush2.xpose.msra.mxu0 0.0
    %3969 = vmatprep.subr.mxu0 0.0
    %3970 = vmatpush2.xpose.msra.mxu0 0.0
    %3971 = vmatprep.subr.mxu0 0.0
    %3972 = vmatpush2.xpose.msra.mxu0 0.0
    %3973 = vmatprep.subr.mxu0 0.0
    %3974 = vmatpush2.xpose.msra.mxu0 0.0
    %3975 = vmatprep.subr.mxu0 0.0
    %3976 = vmatpush2.xpose.msra.mxu0 0.0
    %3977 = vmatprep.subr.mxu0 0.0
    %3978 = vmatpush2.xpose.msra.mxu0 0.0
    %3979 = vmatprep.subr.mxu0 0.0
    %3980 = vmatpush2.xpose.msra.mxu0 0.0
    %3981 = vmatprep.mubr.f32.mxu0 0.0
    %3982 = vmatmul.mubr.f32.gmra.mxu0 %v3906
    %v3983 = vpop.f32.mrf.mxu0
    %v3984 = vadd.f32 0.0, %v3983
    %v3985 = vpop.f32.mrf.mxu0
    %3986 = vmatprep.mubr.f32.mxu0 0.0
    %3987 = vmatmul.mubr.f32.gmra.mxu0 %v3909
    %v3988 = vpop.f32.mrf.mxu0
    %v3989 = vadd.f32 0.0, %v3988
    %v3990 = vpop.f32.mrf.mxu0
    %3991 = vdwg.mxu0
    %v3993 = vsel %vm567, %v3717, 0
    %v3996 = vsel %vm567, %v3722, 0
    %v3999 = vsel %vm567, %v3807, 0
    %v4002 = vsel %vm567, %v3812, 0
    %4004 = vmatprep.subr.mxu0 0.0
    %4005 = vmatpush1.xpose.msra.mxu0 0.0
    %4006 = vmatprep.subr.mxu0 0.0
    %4007 = vmatpush1.xpose.msra.mxu0 0.0
    %4008 = vmatprep.subr.mxu0 0.0
    %4009 = vmatpush1.xpose.msra.mxu0 0.0
    %4010 = vmatprep.subr.mxu0 0.0
    %4011 = vmatpush1.xpose.msra.mxu0 0.0
    %4012 = vmatprep.subr.mxu0 0.0
    %4013 = vmatpush1.xpose.msra.mxu0 0.0
    %4014 = vmatprep.subr.mxu0 0.0
    %4015 = vmatpush1.xpose.msra.mxu0 0.0
    %4016 = vmatprep.subr.mxu0 0.0
    %4017 = vmatpush1.xpose.msra.mxu0 0.0
    %4018 = vmatprep.subr.mxu0 0.0
    %4019 = vmatpush1.xpose.msra.mxu0 0.0
    %4020 = vmatprep.subr.mxu0 0.0
    %4021 = vmatpush1.xpose.msra.mxu0 0.0
    %4022 = vmatprep.subr.mxu0 0.0
    %4023 = vmatpush1.xpose.msra.mxu0 0.0
    %4024 = vmatprep.subr.mxu0 0.0
    %4025 = vmatpush1.xpose.msra.mxu0 0.0
    %4026 = vmatprep.subr.mxu0 0.0
    %4027 = vmatpush1.xpose.msra.mxu0 0.0
    %4028 = vmatprep.subr.mxu0 0.0
    %4029 = vmatpush1.xpose.msra.mxu0 0.0
    %4030 = vmatprep.subr.mxu0 0.0
    %4031 = vmatpush1.xpose.msra.mxu0 0.0
    %4032 = vmatprep.subr.mxu0 0.0
    %4033 = vmatpush1.xpose.msra.mxu0 %v4002
    %4034 = vmatprep.subr.mxu0 0.0
    %4035 = vmatpush1.xpose.msra.mxu0 %v3999
    %4036 = vmatprep.subr.mxu0 0.0
    %4037 = vmatpush2.xpose.msra.mxu0 0.0
    %4038 = vmatprep.subr.mxu0 0.0
    %4039 = vmatpush2.xpose.msra.mxu0 0.0
    %4040 = vmatprep.subr.mxu0 0.0
    %4041 = vmatpush2.xpose.msra.mxu0 0.0
    %4042 = vmatprep.subr.mxu0 0.0
    %4043 = vmatpush2.xpose.msra.mxu0 0.0
    %4044 = vmatprep.subr.mxu0 0.0
    %4045 = vmatpush2.xpose.msra.mxu0 0.0
    %4046 = vmatprep.subr.mxu0 0.0
    %4047 = vmatpush2.xpose.msra.mxu0 0.0
    %4048 = vmatprep.subr.mxu0 0.0
    %4049 = vmatpush2.xpose.msra.mxu0 0.0
    %4050 = vmatprep.subr.mxu0 0.0
    %4051 = vmatpush2.xpose.msra.mxu0 0.0
    %4052 = vmatprep.subr.mxu0 0.0
    %4053 = vmatpush2.xpose.msra.mxu0 0.0
    %4054 = vmatprep.subr.mxu0 0.0
    %4055 = vmatpush2.xpose.msra.mxu0 0.0
    %4056 = vmatprep.subr.mxu0 0.0
    %4057 = vmatpush2.xpose.msra.mxu0 0.0
    %4058 = vmatprep.subr.mxu0 0.0
    %4059 = vmatpush2.xpose.msra.mxu0 0.0
    %4060 = vmatprep.subr.mxu0 0.0
    %4061 = vmatpush2.xpose.msra.mxu0 0.0
    %4062 = vmatprep.subr.mxu0 0.0
    %4063 = vmatpush2.xpose.msra.mxu0 0.0
    %4064 = vmatprep.subr.mxu0 0.0
    %4065 = vmatpush2.xpose.msra.mxu0 0.0
    %4066 = vmatprep.subr.mxu0 0.0
    %4067 = vmatpush2.xpose.msra.mxu0 0.0
    %4068 = vmatprep.mubr.f32.mxu0 0.0
    %4069 = vmatmul.mubr.f32.gmra.mxu0 %v3993
    %v4070 = vpop.f32.mrf.mxu0
    %v4071 = vadd.f32 0.0, %v4070
    %v4072 = vpop.f32.mrf.mxu0
    %4073 = vmatprep.mubr.f32.mxu0 0.0
    %4074 = vmatmul.mubr.f32.gmra.mxu0 %v3996
    %v4075 = vpop.f32.mrf.mxu0
    %v4076 = vadd.f32 0.0, %v4075
    %v4077 = vpop.f32.mrf.mxu0
    %4078 = vdwg.mxu0
    %s4079 = scalar_lea.vmem %s9, 160
    %v4080 = vld [vmem:[%s4079] sm:$0xff]
    %v4081 = vld [vmem:[%s4079 + $0x8] sm:$0xff]
    %v4082 = vld [vmem:[%s4079 + $0x10] sm:$0xff]
    %v4083 = vld [vmem:[%s4079 + $0x18] sm:$0xff]
    %4084 = vmatprep.subr.mxu0 0.0
    %4085 = vmatpush1.msra.mxu0 0.0
    %4086 = vmatprep.subr.mxu0 0.0
    %4087 = vmatpush1.msra.mxu0 0.0
    %4088 = vmatprep.subr.mxu0 0.0
    %4089 = vmatpush1.msra.mxu0 0.0
    %4090 = vmatprep.subr.mxu0 0.0
    %4091 = vmatpush1.msra.mxu0 0.0
    %4092 = vmatprep.subr.mxu0 0.0
    %4093 = vmatpush1.msra.mxu0 0.0
    %4094 = vmatprep.subr.mxu0 0.0
    %4095 = vmatpush1.msra.mxu0 0.0
    %4096 = vmatprep.subr.mxu0 0.0
    %4097 = vmatpush1.msra.mxu0 0.0
    %4098 = vmatprep.subr.mxu0 0.0
    %4099 = vmatpush1.msra.mxu0 0.0
    %4100 = vmatprep.subr.mxu0 0.0
    %4101 = vmatpush1.msra.mxu0 0.0
    %4102 = vmatprep.subr.mxu0 0.0
    %4103 = vmatpush1.msra.mxu0 0.0
    %4104 = vmatprep.subr.mxu0 0.0
    %4105 = vmatpush1.msra.mxu0 0.0
    %4106 = vmatprep.subr.mxu0 0.0
    %4107 = vmatpush1.msra.mxu0 0.0
    %4108 = vmatprep.subr.mxu0 0.0
    %4109 = vmatpush1.msra.mxu0 %v4083
    %4110 = vmatprep.subr.mxu0 0.0
    %4111 = vmatpush1.msra.mxu0 %v4082
    %4112 = vmatprep.subr.mxu0 0.0
    %4113 = vmatpush1.msra.mxu0 %v4081
    %4114 = vmatprep.subr.mxu0 0.0
    %4115 = vmatpush1.msra.mxu0 %v4080
    %4116 = vmatprep.subr.mxu0 0.0
    %4117 = vmatpush2.msra.mxu0 0.0
    %4118 = vmatprep.subr.mxu0 0.0
    %4119 = vmatpush2.msra.mxu0 0.0
    %4120 = vmatprep.subr.mxu0 0.0
    %4121 = vmatpush2.msra.mxu0 0.0
    %4122 = vmatprep.subr.mxu0 0.0
    %4123 = vmatpush2.msra.mxu0 0.0
    %4124 = vmatprep.subr.mxu0 0.0
    %4125 = vmatpush2.msra.mxu0 0.0
    %4126 = vmatprep.subr.mxu0 0.0
    %4127 = vmatpush2.msra.mxu0 0.0
    %4128 = vmatprep.subr.mxu0 0.0
    %4129 = vmatpush2.msra.mxu0 0.0
    %4130 = vmatprep.subr.mxu0 0.0
    %4131 = vmatpush2.msra.mxu0 0.0
    %4132 = vmatprep.subr.mxu0 0.0
    %4133 = vmatpush2.msra.mxu0 0.0
    %4134 = vmatprep.subr.mxu0 0.0
    %4135 = vmatpush2.msra.mxu0 0.0
    %4136 = vmatprep.subr.mxu0 0.0
    %4137 = vmatpush2.msra.mxu0 0.0
    %4138 = vmatprep.subr.mxu0 0.0
    %4139 = vmatpush2.msra.mxu0 0.0
    %4140 = vmatprep.subr.mxu0 0.0
    %4141 = vmatpush2.msra.mxu0 0.0
    %4142 = vmatprep.subr.mxu0 0.0
    %4143 = vmatpush2.msra.mxu0 0.0
    %4144 = vmatprep.subr.mxu0 0.0
    %4145 = vmatpush2.msra.mxu0 0.0
    %4146 = vmatprep.subr.mxu0 0.0
    %4147 = vmatpush2.msra.mxu0 0.0
    %4148 = vmatprep.mubr.f32.mxu0 0.0
    %4149 = vmatmul.mubr.f32.gmra.mxu0 %v3629
    %v4150 = vpop.f32.mrf.mxu0
    %v4151 = vadd.f32 0.0, %v4150
    %v4152 = vpop.f32.mrf.mxu0
    %4153 = vmatprep.mubr.f32.mxu0 0.0
    %4154 = vmatmul.mubr.f32.gmra.mxu0 %v3632
    %v4155 = vpop.f32.mrf.mxu0
    %v4156 = vadd.f32 0.0, %v4155
    %v4157 = vpop.f32.mrf.mxu0
    %4158 = vmatprep.mubr.f32.mxu0 0.0
    %4159 = vmatmul.mubr.f32.gmra.mxu0 %v3635
    %v4160 = vpop.f32.mrf.mxu0
    %v4161 = vadd.f32 0.0, %v4160
    %v4162 = vpop.f32.mrf.mxu0
    %4163 = vmatprep.mubr.f32.mxu0 0.0
    %4164 = vmatmul.mubr.f32.gmra.mxu0 %v3638
    %v4165 = vpop.f32.mrf.mxu0
    %v4166 = vadd.f32 0.0, %v4165
    %v4167 = vpop.f32.mrf.mxu0
    %4168 = vdwg.mxu0
    %s4169 = scalar_lea.vmem %s10, 160
    %v4170 = vld [vmem:[%s4169] sm:$0xff]
    %v4171 = vld [vmem:[%s4169 + $0x8] sm:$0xff]
    %v4172 = vld [vmem:[%s4169 + $0x10] sm:$0xff]
    %v4173 = vld [vmem:[%s4169 + $0x18] sm:$0xff]
    %4174 = vmatprep.subr.mxu0 0.0
    %4175 = vmatpush1.msra.mxu0 0.0
    %4176 = vmatprep.subr.mxu0 0.0
    %4177 = vmatpush1.msra.mxu0 0.0
    %4178 = vmatprep.subr.mxu0 0.0
    %4179 = vmatpush1.msra.mxu0 0.0
    %4180 = vmatprep.subr.mxu0 0.0
    %4181 = vmatpush1.msra.mxu0 0.0
    %4182 = vmatprep.subr.mxu0 0.0
    %4183 = vmatpush1.msra.mxu0 0.0
    %4184 = vmatprep.subr.mxu0 0.0
    %4185 = vmatpush1.msra.mxu0 0.0
    %4186 = vmatprep.subr.mxu0 0.0
    %4187 = vmatpush1.msra.mxu0 0.0
    %4188 = vmatprep.subr.mxu0 0.0
    %4189 = vmatpush1.msra.mxu0 0.0
    %4190 = vmatprep.subr.mxu0 0.0
    %4191 = vmatpush1.msra.mxu0 0.0
    %4192 = vmatprep.subr.mxu0 0.0
    %4193 = vmatpush1.msra.mxu0 0.0
    %4194 = vmatprep.subr.mxu0 0.0
    %4195 = vmatpush1.msra.mxu0 0.0
    %4196 = vmatprep.subr.mxu0 0.0
    %4197 = vmatpush1.msra.mxu0 0.0
    %4198 = vmatprep.subr.mxu0 0.0
    %4199 = vmatpush1.msra.mxu0 %v4173
    %4200 = vmatprep.subr.mxu0 0.0
    %4201 = vmatpush1.msra.mxu0 %v4172
    %4202 = vmatprep.subr.mxu0 0.0
    %4203 = vmatpush1.msra.mxu0 %v4171
    %4204 = vmatprep.subr.mxu0 0.0
    %4205 = vmatpush1.msra.mxu0 %v4170
    %4206 = vmatprep.subr.mxu0 0.0
    %4207 = vmatpush2.msra.mxu0 0.0
    %4208 = vmatprep.subr.mxu0 0.0
    %4209 = vmatpush2.msra.mxu0 0.0
    %4210 = vmatprep.subr.mxu0 0.0
    %4211 = vmatpush2.msra.mxu0 0.0
    %4212 = vmatprep.subr.mxu0 0.0
    %4213 = vmatpush2.msra.mxu0 0.0
    %4214 = vmatprep.subr.mxu0 0.0
    %4215 = vmatpush2.msra.mxu0 0.0
    %4216 = vmatprep.subr.mxu0 0.0
    %4217 = vmatpush2.msra.mxu0 0.0
    %4218 = vmatprep.subr.mxu0 0.0
    %4219 = vmatpush2.msra.mxu0 0.0
    %4220 = vmatprep.subr.mxu0 0.0
    %4221 = vmatpush2.msra.mxu0 0.0
    %4222 = vmatprep.subr.mxu0 0.0
    %4223 = vmatpush2.msra.mxu0 0.0
    %4224 = vmatprep.subr.mxu0 0.0
    %4225 = vmatpush2.msra.mxu0 0.0
    %4226 = vmatprep.subr.mxu0 0.0
    %4227 = vmatpush2.msra.mxu0 0.0
    %4228 = vmatprep.subr.mxu0 0.0
    %4229 = vmatpush2.msra.mxu0 0.0
    %4230 = vmatprep.subr.mxu0 0.0
    %4231 = vmatpush2.msra.mxu0 0.0
    %4232 = vmatprep.subr.mxu0 0.0
    %4233 = vmatpush2.msra.mxu0 0.0
    %4234 = vmatprep.subr.mxu0 0.0
    %4235 = vmatpush2.msra.mxu0 0.0
    %4236 = vmatprep.subr.mxu0 0.0
    %4237 = vmatpush2.msra.mxu0 0.0
    %4238 = vmatprep.mubr.f32.mxu0 0.0
    %4239 = vmatmul.mubr.f32.gmra.mxu0 %v3629
    %v4240 = vpop.f32.mrf.mxu0
    %v4241 = vadd.f32 0.0, %v4240
    %v4242 = vpop.f32.mrf.mxu0
    %4243 = vmatprep.mubr.f32.mxu0 0.0
    %4244 = vmatmul.mubr.f32.gmra.mxu0 %v3632
    %v4245 = vpop.f32.mrf.mxu0
    %v4246 = vadd.f32 0.0, %v4245
    %v4247 = vpop.f32.mrf.mxu0
    %4248 = vmatprep.mubr.f32.mxu0 0.0
    %4249 = vmatmul.mubr.f32.gmra.mxu0 %v3635
    %v4250 = vpop.f32.mrf.mxu0
    %v4251 = vadd.f32 0.0, %v4250
    %v4252 = vpop.f32.mrf.mxu0
    %4253 = vmatprep.mubr.f32.mxu0 0.0
    %4254 = vmatmul.mubr.f32.gmra.mxu0 %v3638
    %v4255 = vpop.f32.mrf.mxu0
    %v4256 = vadd.f32 0.0, %v4255
    %v4257 = vpop.f32.mrf.mxu0
    %4258 = vdwg.mxu0
    %s4259 = scalar_lea.vmem %s11, 160
    %v4260 = vld [vmem:[%s4259] sm:$0xff]
    %v4261 = vld [vmem:[%s4259 + $0x8] sm:$0xff]
    %v4262 = vld [vmem:[%s4259 + $0x10] sm:$0xff]
    %v4263 = vld [vmem:[%s4259 + $0x18] sm:$0xff]
    %4264 = vmatprep.subr.mxu0 0.0
    %4265 = vmatpush1.msra.mxu0 0.0
    %4266 = vmatprep.subr.mxu0 0.0
    %4267 = vmatpush1.msra.mxu0 0.0
    %4268 = vmatprep.subr.mxu0 0.0
    %4269 = vmatpush1.msra.mxu0 0.0
    %4270 = vmatprep.subr.mxu0 0.0
    %4271 = vmatpush1.msra.mxu0 0.0
    %4272 = vmatprep.subr.mxu0 0.0
    %4273 = vmatpush1.msra.mxu0 0.0
    %4274 = vmatprep.subr.mxu0 0.0
    %4275 = vmatpush1.msra.mxu0 0.0
    %4276 = vmatprep.subr.mxu0 0.0
    %4277 = vmatpush1.msra.mxu0 0.0
    %4278 = vmatprep.subr.mxu0 0.0
    %4279 = vmatpush1.msra.mxu0 0.0
    %4280 = vmatprep.subr.mxu0 0.0
    %4281 = vmatpush1.msra.mxu0 0.0
    %4282 = vmatprep.subr.mxu0 0.0
    %4283 = vmatpush1.msra.mxu0 0.0
    %4284 = vmatprep.subr.mxu0 0.0
    %4285 = vmatpush1.msra.mxu0 0.0
    %4286 = vmatprep.subr.mxu0 0.0
    %4287 = vmatpush1.msra.mxu0 0.0
    %4288 = vmatprep.subr.mxu0 0.0
    %4289 = vmatpush1.msra.mxu0 %v4263
    %4290 = vmatprep.subr.mxu0 0.0
    %4291 = vmatpush1.msra.mxu0 %v4262
    %4292 = vmatprep.subr.mxu0 0.0
    %4293 = vmatpush1.msra.mxu0 %v4261
    %4294 = vmatprep.subr.mxu0 0.0
    %4295 = vmatpush1.msra.mxu0 %v4260
    %4296 = vmatprep.subr.mxu0 0.0
    %4297 = vmatpush2.msra.mxu0 0.0
    %4298 = vmatprep.subr.mxu0 0.0
    %4299 = vmatpush2.msra.mxu0 0.0
    %4300 = vmatprep.subr.mxu0 0.0
    %4301 = vmatpush2.msra.mxu0 0.0
    %4302 = vmatprep.subr.mxu0 0.0
    %4303 = vmatpush2.msra.mxu0 0.0
    %4304 = vmatprep.subr.mxu0 0.0
    %4305 = vmatpush2.msra.mxu0 0.0
    %4306 = vmatprep.subr.mxu0 0.0
    %4307 = vmatpush2.msra.mxu0 0.0
    %4308 = vmatprep.subr.mxu0 0.0
    %4309 = vmatpush2.msra.mxu0 0.0
    %4310 = vmatprep.subr.mxu0 0.0
    %4311 = vmatpush2.msra.mxu0 0.0
    %4312 = vmatprep.subr.mxu0 0.0
    %4313 = vmatpush2.msra.mxu0 0.0
    %4314 = vmatprep.subr.mxu0 0.0
    %4315 = vmatpush2.msra.mxu0 0.0
    %4316 = vmatprep.subr.mxu0 0.0
    %4317 = vmatpush2.msra.mxu0 0.0
    %4318 = vmatprep.subr.mxu0 0.0
    %4319 = vmatpush2.msra.mxu0 0.0
    %4320 = vmatprep.subr.mxu0 0.0
    %4321 = vmatpush2.msra.mxu0 0.0
    %4322 = vmatprep.subr.mxu0 0.0
    %4323 = vmatpush2.msra.mxu0 0.0
    %4324 = vmatprep.subr.mxu0 0.0
    %4325 = vmatpush2.msra.mxu0 0.0
    %4326 = vmatprep.subr.mxu0 0.0
    %4327 = vmatpush2.msra.mxu0 0.0
    %4328 = vmatprep.mubr.f32.mxu0 0.0
    %4329 = vmatmul.mubr.f32.gmra.mxu0 %v3629
    %v4330 = vpop.f32.mrf.mxu0
    %v4331 = vadd.f32 0.0, %v4330
    %v4332 = vpop.f32.mrf.mxu0
    %4333 = vmatprep.mubr.f32.mxu0 0.0
    %4334 = vmatmul.mubr.f32.gmra.mxu0 %v3632
    %v4335 = vpop.f32.mrf.mxu0
    %v4336 = vadd.f32 0.0, %v4335
    %v4337 = vpop.f32.mrf.mxu0
    %4338 = vmatprep.mubr.f32.mxu0 0.0
    %4339 = vmatmul.mubr.f32.gmra.mxu0 %v3635
    %v4340 = vpop.f32.mrf.mxu0
    %v4341 = vadd.f32 0.0, %v4340
    %v4342 = vpop.f32.mrf.mxu0
    %4343 = vmatprep.mubr.f32.mxu0 0.0
    %4344 = vmatmul.mubr.f32.gmra.mxu0 %v3638
    %v4345 = vpop.f32.mrf.mxu0
    %v4346 = vadd.f32 0.0, %v4345
    %v4347 = vpop.f32.mrf.mxu0
    %4348 = vdwg.mxu0
    %v4350 = vsel %vm567, %v4151, 0
    %v4353 = vsel %vm567, %v4156, 0
    %v4356 = vsel %vm567, %v4241, 0
    %v4359 = vsel %vm567, %v4246, 0
    %4361 = vmatprep.subr.mxu0 0.0
    %4362 = vmatpush1.xpose.msra.mxu0 0.0
    %4363 = vmatprep.subr.mxu0 0.0
    %4364 = vmatpush1.xpose.msra.mxu0 0.0
    %4365 = vmatprep.subr.mxu0 0.0
    %4366 = vmatpush1.xpose.msra.mxu0 0.0
    %4367 = vmatprep.subr.mxu0 0.0
    %4368 = vmatpush1.xpose.msra.mxu0 0.0
    %4369 = vmatprep.subr.mxu0 0.0
    %4370 = vmatpush1.xpose.msra.mxu0 0.0
    %4371 = vmatprep.subr.mxu0 0.0
    %4372 = vmatpush1.xpose.msra.mxu0 0.0
    %4373 = vmatprep.subr.mxu0 0.0
    %4374 = vmatpush1.xpose.msra.mxu0 0.0
    %4375 = vmatprep.subr.mxu0 0.0
    %4376 = vmatpush1.xpose.msra.mxu0 0.0
    %4377 = vmatprep.subr.mxu0 0.0
    %4378 = vmatpush1.xpose.msra.mxu0 0.0
    %4379 = vmatprep.subr.mxu0 0.0
    %4380 = vmatpush1.xpose.msra.mxu0 0.0
    %4381 = vmatprep.subr.mxu0 0.0
    %4382 = vmatpush1.xpose.msra.mxu0 0.0
    %4383 = vmatprep.subr.mxu0 0.0
    %4384 = vmatpush1.xpose.msra.mxu0 0.0
    %4385 = vmatprep.subr.mxu0 0.0
    %4386 = vmatpush1.xpose.msra.mxu0 0.0
    %4387 = vmatprep.subr.mxu0 0.0
    %4388 = vmatpush1.xpose.msra.mxu0 0.0
    %4389 = vmatprep.subr.mxu0 0.0
    %4390 = vmatpush1.xpose.msra.mxu0 %v4359
    %4391 = vmatprep.subr.mxu0 0.0
    %4392 = vmatpush1.xpose.msra.mxu0 %v4356
    %4393 = vmatprep.subr.mxu0 0.0
    %4394 = vmatpush2.xpose.msra.mxu0 0.0
    %4395 = vmatprep.subr.mxu0 0.0
    %4396 = vmatpush2.xpose.msra.mxu0 0.0
    %4397 = vmatprep.subr.mxu0 0.0
    %4398 = vmatpush2.xpose.msra.mxu0 0.0
    %4399 = vmatprep.subr.mxu0 0.0
    %4400 = vmatpush2.xpose.msra.mxu0 0.0
    %4401 = vmatprep.subr.mxu0 0.0
    %4402 = vmatpush2.xpose.msra.mxu0 0.0
    %4403 = vmatprep.subr.mxu0 0.0
    %4404 = vmatpush2.xpose.msra.mxu0 0.0
    %4405 = vmatprep.subr.mxu0 0.0
    %4406 = vmatpush2.xpose.msra.mxu0 0.0
    %4407 = vmatprep.subr.mxu0 0.0
    %4408 = vmatpush2.xpose.msra.mxu0 0.0
    %4409 = vmatprep.subr.mxu0 0.0
    %4410 = vmatpush2.xpose.msra.mxu0 0.0
    %4411 = vmatprep.subr.mxu0 0.0
    %4412 = vmatpush2.xpose.msra.mxu0 0.0
    %4413 = vmatprep.subr.mxu0 0.0
    %4414 = vmatpush2.xpose.msra.mxu0 0.0
    %4415 = vmatprep.subr.mxu0 0.0
    %4416 = vmatpush2.xpose.msra.mxu0 0.0
    %4417 = vmatprep.subr.mxu0 0.0
    %4418 = vmatpush2.xpose.msra.mxu0 0.0
    %4419 = vmatprep.subr.mxu0 0.0
    %4420 = vmatpush2.xpose.msra.mxu0 0.0
    %4421 = vmatprep.subr.mxu0 0.0
    %4422 = vmatpush2.xpose.msra.mxu0 0.0
    %4423 = vmatprep.subr.mxu0 0.0
    %4424 = vmatpush2.xpose.msra.mxu0 0.0
    %4425 = vmatprep.mubr.f32.mxu0 0.0
    %4426 = vmatmul.mubr.f32.gmra.mxu0 %v4350
    %v4427 = vpop.f32.mrf.mxu0
    %v4428 = vadd.f32 0.0, %v4427
    %v4429 = vpop.f32.mrf.mxu0
    %4430 = vmatprep.mubr.f32.mxu0 0.0
    %4431 = vmatmul.mubr.f32.gmra.mxu0 %v4353
    %v4432 = vpop.f32.mrf.mxu0
    %v4433 = vadd.f32 0.0, %v4432
    %v4434 = vpop.f32.mrf.mxu0
    %4435 = vdwg.mxu0
    %v4437 = vsel %vm567, %v4161, 0
    %v4440 = vsel %vm567, %v4166, 0
    %v4443 = vsel %vm567, %v4251, 0
    %v4446 = vsel %vm567, %v4256, 0
    %4448 = vmatprep.subr.mxu0 0.0
    %4449 = vmatpush1.xpose.msra.mxu0 0.0
    %4450 = vmatprep.subr.mxu0 0.0
    %4451 = vmatpush1.xpose.msra.mxu0 0.0
    %4452 = vmatprep.subr.mxu0 0.0
    %4453 = vmatpush1.xpose.msra.mxu0 0.0
    %4454 = vmatprep.subr.mxu0 0.0
    %4455 = vmatpush1.xpose.msra.mxu0 0.0
    %4456 = vmatprep.subr.mxu0 0.0
    %4457 = vmatpush1.xpose.msra.mxu0 0.0
    %4458 = vmatprep.subr.mxu0 0.0
    %4459 = vmatpush1.xpose.msra.mxu0 0.0
    %4460 = vmatprep.subr.mxu0 0.0
    %4461 = vmatpush1.xpose.msra.mxu0 0.0
    %4462 = vmatprep.subr.mxu0 0.0
    %4463 = vmatpush1.xpose.msra.mxu0 0.0
    %4464 = vmatprep.subr.mxu0 0.0
    %4465 = vmatpush1.xpose.msra.mxu0 0.0
    %4466 = vmatprep.subr.mxu0 0.0
    %4467 = vmatpush1.xpose.msra.mxu0 0.0
    %4468 = vmatprep.subr.mxu0 0.0
    %4469 = vmatpush1.xpose.msra.mxu0 0.0
    %4470 = vmatprep.subr.mxu0 0.0
    %4471 = vmatpush1.xpose.msra.mxu0 0.0
    %4472 = vmatprep.subr.mxu0 0.0
    %4473 = vmatpush1.xpose.msra.mxu0 0.0
    %4474 = vmatprep.subr.mxu0 0.0
    %4475 = vmatpush1.xpose.msra.mxu0 0.0
    %4476 = vmatprep.subr.mxu0 0.0
    %4477 = vmatpush1.xpose.msra.mxu0 %v4446
    %4478 = vmatprep.subr.mxu0 0.0
    %4479 = vmatpush1.xpose.msra.mxu0 %v4443
    %4480 = vmatprep.subr.mxu0 0.0
    %4481 = vmatpush2.xpose.msra.mxu0 0.0
    %4482 = vmatprep.subr.mxu0 0.0
    %4483 = vmatpush2.xpose.msra.mxu0 0.0
    %4484 = vmatprep.subr.mxu0 0.0
    %4485 = vmatpush2.xpose.msra.mxu0 0.0
    %4486 = vmatprep.subr.mxu0 0.0
    %4487 = vmatpush2.xpose.msra.mxu0 0.0
    %4488 = vmatprep.subr.mxu0 0.0
    %4489 = vmatpush2.xpose.msra.mxu0 0.0
    %4490 = vmatprep.subr.mxu0 0.0
    %4491 = vmatpush2.xpose.msra.mxu0 0.0
    %4492 = vmatprep.subr.mxu0 0.0
    %4493 = vmatpush2.xpose.msra.mxu0 0.0
    %4494 = vmatprep.subr.mxu0 0.0
    %4495 = vmatpush2.xpose.msra.mxu0 0.0
    %4496 = vmatprep.subr.mxu0 0.0
    %4497 = vmatpush2.xpose.msra.mxu0 0.0
    %4498 = vmatprep.subr.mxu0 0.0
    %4499 = vmatpush2.xpose.msra.mxu0 0.0
    %4500 = vmatprep.subr.mxu0 0.0
    %4501 = vmatpush2.xpose.msra.mxu0 0.0
    %4502 = vmatprep.subr.mxu0 0.0
    %4503 = vmatpush2.xpose.msra.mxu0 0.0
    %4504 = vmatprep.subr.mxu0 0.0
    %4505 = vmatpush2.xpose.msra.mxu0 0.0
    %4506 = vmatprep.subr.mxu0 0.0
    %4507 = vmatpush2.xpose.msra.mxu0 0.0
    %4508 = vmatprep.subr.mxu0 0.0
    %4509 = vmatpush2.xpose.msra.mxu0 0.0
    %4510 = vmatprep.subr.mxu0 0.0
    %4511 = vmatpush2.xpose.msra.mxu0 0.0
    %4512 = vmatprep.mubr.f32.mxu0 0.0
    %4513 = vmatmul.mubr.f32.gmra.mxu0 %v4437
    %v4514 = vpop.f32.mrf.mxu0
    %v4515 = vadd.f32 0.0, %v4514
    %v4516 = vpop.f32.mrf.mxu0
    %4517 = vmatprep.mubr.f32.mxu0 0.0
    %4518 = vmatmul.mubr.f32.gmra.mxu0 %v4440
    %v4519 = vpop.f32.mrf.mxu0
    %v4520 = vadd.f32 0.0, %v4519
    %v4521 = vpop.f32.mrf.mxu0
    %4522 = vdwg.mxu0
    %s4523 = scalar_lea.vmem %s9, 192
    %v4524 = vld [vmem:[%s4523] sm:$0xff]
    %v4525 = vld [vmem:[%s4523 + $0x8] sm:$0xff]
    %v4526 = vld [vmem:[%s4523 + $0x10] sm:$0xff]
    %v4527 = vld [vmem:[%s4523 + $0x18] sm:$0xff]
    %4528 = vmatprep.subr.mxu0 0.0
    %4529 = vmatpush1.msra.mxu0 0.0
    %4530 = vmatprep.subr.mxu0 0.0
    %4531 = vmatpush1.msra.mxu0 0.0
    %4532 = vmatprep.subr.mxu0 0.0
    %4533 = vmatpush1.msra.mxu0 0.0
    %4534 = vmatprep.subr.mxu0 0.0
    %4535 = vmatpush1.msra.mxu0 0.0
    %4536 = vmatprep.subr.mxu0 0.0
    %4537 = vmatpush1.msra.mxu0 0.0
    %4538 = vmatprep.subr.mxu0 0.0
    %4539 = vmatpush1.msra.mxu0 0.0
    %4540 = vmatprep.subr.mxu0 0.0
    %4541 = vmatpush1.msra.mxu0 0.0
    %4542 = vmatprep.subr.mxu0 0.0
    %4543 = vmatpush1.msra.mxu0 0.0
    %4544 = vmatprep.subr.mxu0 0.0
    %4545 = vmatpush1.msra.mxu0 0.0
    %4546 = vmatprep.subr.mxu0 0.0
    %4547 = vmatpush1.msra.mxu0 0.0
    %4548 = vmatprep.subr.mxu0 0.0
    %4549 = vmatpush1.msra.mxu0 0.0
    %4550 = vmatprep.subr.mxu0 0.0
    %4551 = vmatpush1.msra.mxu0 0.0
    %4552 = vmatprep.subr.mxu0 0.0
    %4553 = vmatpush1.msra.mxu0 %v4527
    %4554 = vmatprep.subr.mxu0 0.0
    %4555 = vmatpush1.msra.mxu0 %v4526
    %4556 = vmatprep.subr.mxu0 0.0
    %4557 = vmatpush1.msra.mxu0 %v4525
    %4558 = vmatprep.subr.mxu0 0.0
    %4559 = vmatpush1.msra.mxu0 %v4524
    %4560 = vmatprep.subr.mxu0 0.0
    %4561 = vmatpush2.msra.mxu0 0.0
    %4562 = vmatprep.subr.mxu0 0.0
    %4563 = vmatpush2.msra.mxu0 0.0
    %4564 = vmatprep.subr.mxu0 0.0
    %4565 = vmatpush2.msra.mxu0 0.0
    %4566 = vmatprep.subr.mxu0 0.0
    %4567 = vmatpush2.msra.mxu0 0.0
    %4568 = vmatprep.subr.mxu0 0.0
    %4569 = vmatpush2.msra.mxu0 0.0
    %4570 = vmatprep.subr.mxu0 0.0
    %4571 = vmatpush2.msra.mxu0 0.0
    %4572 = vmatprep.subr.mxu0 0.0
    %4573 = vmatpush2.msra.mxu0 0.0
    %4574 = vmatprep.subr.mxu0 0.0
    %4575 = vmatpush2.msra.mxu0 0.0
    %4576 = vmatprep.subr.mxu0 0.0
    %4577 = vmatpush2.msra.mxu0 0.0
    %4578 = vmatprep.subr.mxu0 0.0
    %4579 = vmatpush2.msra.mxu0 0.0
    %4580 = vmatprep.subr.mxu0 0.0
    %4581 = vmatpush2.msra.mxu0 0.0
    %4582 = vmatprep.subr.mxu0 0.0
    %4583 = vmatpush2.msra.mxu0 0.0
    %4584 = vmatprep.subr.mxu0 0.0
    %4585 = vmatpush2.msra.mxu0 0.0
    %4586 = vmatprep.subr.mxu0 0.0
    %4587 = vmatpush2.msra.mxu0 0.0
    %4588 = vmatprep.subr.mxu0 0.0
    %4589 = vmatpush2.msra.mxu0 0.0
    %4590 = vmatprep.subr.mxu0 0.0
    %4591 = vmatpush2.msra.mxu0 0.0
    %4592 = vmatprep.mubr.f32.mxu0 0.0
    %4593 = vmatmul.mubr.f32.gmra.mxu0 %v3629
    %v4594 = vpop.f32.mrf.mxu0
    %v4595 = vadd.f32 0.0, %v4594
    %v4596 = vpop.f32.mrf.mxu0
    %4597 = vmatprep.mubr.f32.mxu0 0.0
    %4598 = vmatmul.mubr.f32.gmra.mxu0 %v3632
    %v4599 = vpop.f32.mrf.mxu0
    %v4600 = vadd.f32 0.0, %v4599
    %v4601 = vpop.f32.mrf.mxu0
    %4602 = vmatprep.mubr.f32.mxu0 0.0
    %4603 = vmatmul.mubr.f32.gmra.mxu0 %v3635
    %v4604 = vpop.f32.mrf.mxu0
    %v4605 = vadd.f32 0.0, %v4604
    %v4606 = vpop.f32.mrf.mxu0
    %4607 = vmatprep.mubr.f32.mxu0 0.0
    %4608 = vmatmul.mubr.f32.gmra.mxu0 %v3638
    %v4609 = vpop.f32.mrf.mxu0
    %v4610 = vadd.f32 0.0, %v4609
    %v4611 = vpop.f32.mrf.mxu0
    %4612 = vdwg.mxu0
    %s4613 = scalar_lea.vmem %s10, 192
    %v4614 = vld [vmem:[%s4613] sm:$0xff]
    %v4615 = vld [vmem:[%s4613 + $0x8] sm:$0xff]
    %v4616 = vld [vmem:[%s4613 + $0x10] sm:$0xff]
    %v4617 = vld [vmem:[%s4613 + $0x18] sm:$0xff]
    %4618 = vmatprep.subr.mxu0 0.0
    %4619 = vmatpush1.msra.mxu0 0.0
    %4620 = vmatprep.subr.mxu0 0.0
    %4621 = vmatpush1.msra.mxu0 0.0
    %4622 = vmatprep.subr.mxu0 0.0
    %4623 = vmatpush1.msra.mxu0 0.0
    %4624 = vmatprep.subr.mxu0 0.0
    %4625 = vmatpush1.msra.mxu0 0.0
    %4626 = vmatprep.subr.mxu0 0.0
    %4627 = vmatpush1.msra.mxu0 0.0
    %4628 = vmatprep.subr.mxu0 0.0
    %4629 = vmatpush1.msra.mxu0 0.0
    %4630 = vmatprep.subr.mxu0 0.0
    %4631 = vmatpush1.msra.mxu0 0.0
    %4632 = vmatprep.subr.mxu0 0.0
    %4633 = vmatpush1.msra.mxu0 0.0
    %4634 = vmatprep.subr.mxu0 0.0
    %4635 = vmatpush1.msra.mxu0 0.0
    %4636 = vmatprep.subr.mxu0 0.0
    %4637 = vmatpush1.msra.mxu0 0.0
    %4638 = vmatprep.subr.mxu0 0.0
    %4639 = vmatpush1.msra.mxu0 0.0
    %4640 = vmatprep.subr.mxu0 0.0
    %4641 = vmatpush1.msra.mxu0 0.0
    %4642 = vmatprep.subr.mxu0 0.0
    %4643 = vmatpush1.msra.mxu0 %v4617
    %4644 = vmatprep.subr.mxu0 0.0
    %4645 = vmatpush1.msra.mxu0 %v4616
    %4646 = vmatprep.subr.mxu0 0.0
    %4647 = vmatpush1.msra.mxu0 %v4615
    %4648 = vmatprep.subr.mxu0 0.0
    %4649 = vmatpush1.msra.mxu0 %v4614
    %4650 = vmatprep.subr.mxu0 0.0
    %4651 = vmatpush2.msra.mxu0 0.0
    %4652 = vmatprep.subr.mxu0 0.0
    %4653 = vmatpush2.msra.mxu0 0.0
    %4654 = vmatprep.subr.mxu0 0.0
    %4655 = vmatpush2.msra.mxu0 0.0
    %4656 = vmatprep.subr.mxu0 0.0
    %4657 = vmatpush2.msra.mxu0 0.0
    %4658 = vmatprep.subr.mxu0 0.0
    %4659 = vmatpush2.msra.mxu0 0.0
    %4660 = vmatprep.subr.mxu0 0.0
    %4661 = vmatpush2.msra.mxu0 0.0
    %4662 = vmatprep.subr.mxu0 0.0
    %4663 = vmatpush2.msra.mxu0 0.0
    %4664 = vmatprep.subr.mxu0 0.0
    %4665 = vmatpush2.msra.mxu0 0.0
    %4666 = vmatprep.subr.mxu0 0.0
    %4667 = vmatpush2.msra.mxu0 0.0
    %4668 = vmatprep.subr.mxu0 0.0
    %4669 = vmatpush2.msra.mxu0 0.0
    %4670 = vmatprep.subr.mxu0 0.0
    %4671 = vmatpush2.msra.mxu0 0.0
    %4672 = vmatprep.subr.mxu0 0.0
    %4673 = vmatpush2.msra.mxu0 0.0
    %4674 = vmatprep.subr.mxu0 0.0
    %4675 = vmatpush2.msra.mxu0 0.0
    %4676 = vmatprep.subr.mxu0 0.0
    %4677 = vmatpush2.msra.mxu0 0.0
    %4678 = vmatprep.subr.mxu0 0.0
    %4679 = vmatpush2.msra.mxu0 0.0
    %4680 = vmatprep.subr.mxu0 0.0
    %4681 = vmatpush2.msra.mxu0 0.0
    %4682 = vmatprep.mubr.f32.mxu0 0.0
    %4683 = vmatmul.mubr.f32.gmra.mxu0 %v3629
    %v4684 = vpop.f32.mrf.mxu0
    %v4685 = vadd.f32 0.0, %v4684
    %v4686 = vpop.f32.mrf.mxu0
    %4687 = vmatprep.mubr.f32.mxu0 0.0
    %4688 = vmatmul.mubr.f32.gmra.mxu0 %v3632
    %v4689 = vpop.f32.mrf.mxu0
    %v4690 = vadd.f32 0.0, %v4689
    %v4691 = vpop.f32.mrf.mxu0
    %4692 = vmatprep.mubr.f32.mxu0 0.0
    %4693 = vmatmul.mubr.f32.gmra.mxu0 %v3635
    %v4694 = vpop.f32.mrf.mxu0
    %v4695 = vadd.f32 0.0, %v4694
    %v4696 = vpop.f32.mrf.mxu0
    %4697 = vmatprep.mubr.f32.mxu0 0.0
    %4698 = vmatmul.mubr.f32.gmra.mxu0 %v3638
    %v4699 = vpop.f32.mrf.mxu0
    %v4700 = vadd.f32 0.0, %v4699
    %v4701 = vpop.f32.mrf.mxu0
    %4702 = vdwg.mxu0
    %s4703 = scalar_lea.vmem %s11, 192
    %v4704 = vld [vmem:[%s4703] sm:$0xff]
    %v4705 = vld [vmem:[%s4703 + $0x8] sm:$0xff]
    %v4706 = vld [vmem:[%s4703 + $0x10] sm:$0xff]
    %v4707 = vld [vmem:[%s4703 + $0x18] sm:$0xff]
    %4708 = vmatprep.subr.mxu0 0.0
    %4709 = vmatpush1.msra.mxu0 0.0
    %4710 = vmatprep.subr.mxu0 0.0
    %4711 = vmatpush1.msra.mxu0 0.0
    %4712 = vmatprep.subr.mxu0 0.0
    %4713 = vmatpush1.msra.mxu0 0.0
    %4714 = vmatprep.subr.mxu0 0.0
    %4715 = vmatpush1.msra.mxu0 0.0
    %4716 = vmatprep.subr.mxu0 0.0
    %4717 = vmatpush1.msra.mxu0 0.0
    %4718 = vmatprep.subr.mxu0 0.0
    %4719 = vmatpush1.msra.mxu0 0.0
    %4720 = vmatprep.subr.mxu0 0.0
    %4721 = vmatpush1.msra.mxu0 0.0
    %4722 = vmatprep.subr.mxu0 0.0
    %4723 = vmatpush1.msra.mxu0 0.0
    %4724 = vmatprep.subr.mxu0 0.0
    %4725 = vmatpush1.msra.mxu0 0.0
    %4726 = vmatprep.subr.mxu0 0.0
    %4727 = vmatpush1.msra.mxu0 0.0
    %4728 = vmatprep.subr.mxu0 0.0
    %4729 = vmatpush1.msra.mxu0 0.0
    %4730 = vmatprep.subr.mxu0 0.0
    %4731 = vmatpush1.msra.mxu0 0.0
    %4732 = vmatprep.subr.mxu0 0.0
    %4733 = vmatpush1.msra.mxu0 %v4707
    %4734 = vmatprep.subr.mxu0 0.0
    %4735 = vmatpush1.msra.mxu0 %v4706
    %4736 = vmatprep.subr.mxu0 0.0
    %4737 = vmatpush1.msra.mxu0 %v4705
    %4738 = vmatprep.subr.mxu0 0.0
    %4739 = vmatpush1.msra.mxu0 %v4704
    %4740 = vmatprep.subr.mxu0 0.0
    %4741 = vmatpush2.msra.mxu0 0.0
    %4742 = vmatprep.subr.mxu0 0.0
    %4743 = vmatpush2.msra.mxu0 0.0
    %4744 = vmatprep.subr.mxu0 0.0
    %4745 = vmatpush2.msra.mxu0 0.0
    %4746 = vmatprep.subr.mxu0 0.0
    %4747 = vmatpush2.msra.mxu0 0.0
    %4748 = vmatprep.subr.mxu0 0.0
    %4749 = vmatpush2.msra.mxu0 0.0
    %4750 = vmatprep.subr.mxu0 0.0
    %4751 = vmatpush2.msra.mxu0 0.0
    %4752 = vmatprep.subr.mxu0 0.0
    %4753 = vmatpush2.msra.mxu0 0.0
    %4754 = vmatprep.subr.mxu0 0.0
    %4755 = vmatpush2.msra.mxu0 0.0
    %4756 = vmatprep.subr.mxu0 0.0
    %4757 = vmatpush2.msra.mxu0 0.0
    %4758 = vmatprep.subr.mxu0 0.0
    %4759 = vmatpush2.msra.mxu0 0.0
    %4760 = vmatprep.subr.mxu0 0.0
    %4761 = vmatpush2.msra.mxu0 0.0
    %4762 = vmatprep.subr.mxu0 0.0
    %4763 = vmatpush2.msra.mxu0 0.0
    %4764 = vmatprep.subr.mxu0 0.0
    %4765 = vmatpush2.msra.mxu0 0.0
    %4766 = vmatprep.subr.mxu0 0.0
    %4767 = vmatpush2.msra.mxu0 0.0
    %4768 = vmatprep.subr.mxu0 0.0
    %4769 = vmatpush2.msra.mxu0 0.0
    %4770 = vmatprep.subr.mxu0 0.0
    %4771 = vmatpush2.msra.mxu0 0.0
    %4772 = vmatprep.mubr.f32.mxu0 0.0
    %4773 = vmatmul.mubr.f32.gmra.mxu0 %v3629
    %v4774 = vpop.f32.mrf.mxu0
    %v4775 = vadd.f32 0.0, %v4774
    %v4776 = vpop.f32.mrf.mxu0
    %4777 = vmatprep.mubr.f32.mxu0 0.0
    %4778 = vmatmul.mubr.f32.gmra.mxu0 %v3632
    %v4779 = vpop.f32.mrf.mxu0
    %v4780 = vadd.f32 0.0, %v4779
    %v4781 = vpop.f32.mrf.mxu0
    %4782 = vmatprep.mubr.f32.mxu0 0.0
    %4783 = vmatmul.mubr.f32.gmra.mxu0 %v3635
    %v4784 = vpop.f32.mrf.mxu0
    %v4785 = vadd.f32 0.0, %v4784
    %v4786 = vpop.f32.mrf.mxu0
    %4787 = vmatprep.mubr.f32.mxu0 0.0
    %4788 = vmatmul.mubr.f32.gmra.mxu0 %v3638
    %v4789 = vpop.f32.mrf.mxu0
    %v4790 = vadd.f32 0.0, %v4789
    %v4791 = vpop.f32.mrf.mxu0
    %4792 = vdwg.mxu0
    %v4794 = vsel %vm567, %v4595, 0
    %v4797 = vsel %vm567, %v4600, 0
    %v4800 = vsel %vm567, %v4685, 0
    %v4803 = vsel %vm567, %v4690, 0
    %4805 = vmatprep.subr.mxu0 0.0
    %4806 = vmatpush1.xpose.msra.mxu0 0.0
    %4807 = vmatprep.subr.mxu0 0.0
    %4808 = vmatpush1.xpose.msra.mxu0 0.0
    %4809 = vmatprep.subr.mxu0 0.0
    %4810 = vmatpush1.xpose.msra.mxu0 0.0
    %4811 = vmatprep.subr.mxu0 0.0
    %4812 = vmatpush1.xpose.msra.mxu0 0.0
    %4813 = vmatprep.subr.mxu0 0.0
    %4814 = vmatpush1.xpose.msra.mxu0 0.0
    %4815 = vmatprep.subr.mxu0 0.0
    %4816 = vmatpush1.xpose.msra.mxu0 0.0
    %4817 = vmatprep.subr.mxu0 0.0
    %4818 = vmatpush1.xpose.msra.mxu0 0.0
    %4819 = vmatprep.subr.mxu0 0.0
    %4820 = vmatpush1.xpose.msra.mxu0 0.0
    %4821 = vmatprep.subr.mxu0 0.0
    %4822 = vmatpush1.xpose.msra.mxu0 0.0
    %4823 = vmatprep.subr.mxu0 0.0
    %4824 = vmatpush1.xpose.msra.mxu0 0.0
    %4825 = vmatprep.subr.mxu0 0.0
    %4826 = vmatpush1.xpose.msra.mxu0 0.0
    %4827 = vmatprep.subr.mxu0 0.0
    %4828 = vmatpush1.xpose.msra.mxu0 0.0
    %4829 = vmatprep.subr.mxu0 0.0
    %4830 = vmatpush1.xpose.msra.mxu0 0.0
    %4831 = vmatprep.subr.mxu0 0.0
    %4832 = vmatpush1.xpose.msra.mxu0 0.0
    %4833 = vmatprep.subr.mxu0 0.0
    %4834 = vmatpush1.xpose.msra.mxu0 %v4803
    %4835 = vmatprep.subr.mxu0 0.0
    %4836 = vmatpush1.xpose.msra.mxu0 %v4800
    %4837 = vmatprep.subr.mxu0 0.0
    %4838 = vmatpush2.xpose.msra.mxu0 0.0
    %4839 = vmatprep.subr.mxu0 0.0
    %4840 = vmatpush2.xpose.msra.mxu0 0.0
    %4841 = vmatprep.subr.mxu0 0.0
    %4842 = vmatpush2.xpose.msra.mxu0 0.0
    %4843 = vmatprep.subr.mxu0 0.0
    %4844 = vmatpush2.xpose.msra.mxu0 0.0
    %4845 = vmatprep.subr.mxu0 0.0
    %4846 = vmatpush2.xpose.msra.mxu0 0.0
    %4847 = vmatprep.subr.mxu0 0.0
    %4848 = vmatpush2.xpose.msra.mxu0 0.0
    %4849 = vmatprep.subr.mxu0 0.0
    %4850 = vmatpush2.xpose.msra.mxu0 0.0
    %4851 = vmatprep.subr.mxu0 0.0
    %4852 = vmatpush2.xpose.msra.mxu0 0.0
    %4853 = vmatprep.subr.mxu0 0.0
    %4854 = vmatpush2.xpose.msra.mxu0 0.0
    %4855 = vmatprep.subr.mxu0 0.0
    %4856 = vmatpush2.xpose.msra.mxu0 0.0
    %4857 = vmatprep.subr.mxu0 0.0
    %4858 = vmatpush2.xpose.msra.mxu0 0.0
    %4859 = vmatprep.subr.mxu0 0.0
    %4860 = vmatpush2.xpose.msra.mxu0 0.0
    %4861 = vmatprep.subr.mxu0 0.0
    %4862 = vmatpush2.xpose.msra.mxu0 0.0
    %4863 = vmatprep.subr.mxu0 0.0
    %4864 = vmatpush2.xpose.msra.mxu0 0.0
    %4865 = vmatprep.subr.mxu0 0.0
    %4866 = vmatpush2.xpose.msra.mxu0 0.0
    %4867 = vmatprep.subr.mxu0 0.0
    %4868 = vmatpush2.xpose.msra.mxu0 0.0
    %4869 = vmatprep.mubr.f32.mxu0 0.0
    %4870 = vmatmul.mubr.f32.gmra.mxu0 %v4794
    %v4871 = vpop.f32.mrf.mxu0
    %v4872 = vadd.f32 0.0, %v4871
    %v4873 = vpop.f32.mrf.mxu0
    %4874 = vmatprep.mubr.f32.mxu0 0.0
    %4875 = vmatmul.mubr.f32.gmra.mxu0 %v4797
    %v4876 = vpop.f32.mrf.mxu0
    %v4877 = vadd.f32 0.0, %v4876
    %v4878 = vpop.f32.mrf.mxu0
    %4879 = vdwg.mxu0
    %v4881 = vsel %vm567, %v4605, 0
    %v4884 = vsel %vm567, %v4610, 0
    %v4887 = vsel %vm567, %v4695, 0
    %v4890 = vsel %vm567, %v4700, 0
    %4892 = vmatprep.subr.mxu0 0.0
    %4893 = vmatpush1.xpose.msra.mxu0 0.0
    %4894 = vmatprep.subr.mxu0 0.0
    %4895 = vmatpush1.xpose.msra.mxu0 0.0
    %4896 = vmatprep.subr.mxu0 0.0
    %4897 = vmatpush1.xpose.msra.mxu0 0.0
    %4898 = vmatprep.subr.mxu0 0.0
    %4899 = vmatpush1.xpose.msra.mxu0 0.0
    %4900 = vmatprep.subr.mxu0 0.0
    %4901 = vmatpush1.xpose.msra.mxu0 0.0
    %4902 = vmatprep.subr.mxu0 0.0
    %4903 = vmatpush1.xpose.msra.mxu0 0.0
    %4904 = vmatprep.subr.mxu0 0.0
    %4905 = vmatpush1.xpose.msra.mxu0 0.0
    %4906 = vmatprep.subr.mxu0 0.0
    %4907 = vmatpush1.xpose.msra.mxu0 0.0
    %4908 = vmatprep.subr.mxu0 0.0
    %4909 = vmatpush1.xpose.msra.mxu0 0.0
    %4910 = vmatprep.subr.mxu0 0.0
    %4911 = vmatpush1.xpose.msra.mxu0 0.0
    %4912 = vmatprep.subr.mxu0 0.0
    %4913 = vmatpush1.xpose.msra.mxu0 0.0
    %4914 = vmatprep.subr.mxu0 0.0
    %4915 = vmatpush1.xpose.msra.mxu0 0.0
    %4916 = vmatprep.subr.mxu0 0.0
    %4917 = vmatpush1.xpose.msra.mxu0 0.0
    %4918 = vmatprep.subr.mxu0 0.0
    %4919 = vmatpush1.xpose.msra.mxu0 0.0
    %4920 = vmatprep.subr.mxu0 0.0
    %4921 = vmatpush1.xpose.msra.mxu0 %v4890
    %4922 = vmatprep.subr.mxu0 0.0
    %4923 = vmatpush1.xpose.msra.mxu0 %v4887
    %4924 = vmatprep.subr.mxu0 0.0
    %4925 = vmatpush2.xpose.msra.mxu0 0.0
    %4926 = vmatprep.subr.mxu0 0.0
    %4927 = vmatpush2.xpose.msra.mxu0 0.0
    %4928 = vmatprep.subr.mxu0 0.0
    %4929 = vmatpush2.xpose.msra.mxu0 0.0
    %4930 = vmatprep.subr.mxu0 0.0
    %4931 = vmatpush2.xpose.msra.mxu0 0.0
    %4932 = vmatprep.subr.mxu0 0.0
    %4933 = vmatpush2.xpose.msra.mxu0 0.0
    %4934 = vmatprep.subr.mxu0 0.0
    %4935 = vmatpush2.xpose.msra.mxu0 0.0
    %4936 = vmatprep.subr.mxu0 0.0
    %4937 = vmatpush2.xpose.msra.mxu0 0.0
    %4938 = vmatprep.subr.mxu0 0.0
    %4939 = vmatpush2.xpose.msra.mxu0 0.0
    %4940 = vmatprep.subr.mxu0 0.0
    %4941 = vmatpush2.xpose.msra.mxu0 0.0
    %4942 = vmatprep.subr.mxu0 0.0
    %4943 = vmatpush2.xpose.msra.mxu0 0.0
    %4944 = vmatprep.subr.mxu0 0.0
    %4945 = vmatpush2.xpose.msra.mxu0 0.0
    %4946 = vmatprep.subr.mxu0 0.0
    %4947 = vmatpush2.xpose.msra.mxu0 0.0
    %4948 = vmatprep.subr.mxu0 0.0
    %4949 = vmatpush2.xpose.msra.mxu0 0.0
    %4950 = vmatprep.subr.mxu0 0.0
    %4951 = vmatpush2.xpose.msra.mxu0 0.0
    %4952 = vmatprep.subr.mxu0 0.0
    %4953 = vmatpush2.xpose.msra.mxu0 0.0
    %4954 = vmatprep.subr.mxu0 0.0
    %4955 = vmatpush2.xpose.msra.mxu0 0.0
    %4956 = vmatprep.mubr.f32.mxu0 0.0
    %4957 = vmatmul.mubr.f32.gmra.mxu0 %v4881
    %v4958 = vpop.f32.mrf.mxu0
    %v4959 = vadd.f32 0.0, %v4958
    %v4960 = vpop.f32.mrf.mxu0
    %4961 = vmatprep.mubr.f32.mxu0 0.0
    %4962 = vmatmul.mubr.f32.gmra.mxu0 %v4884
    %v4963 = vpop.f32.mrf.mxu0
    %v4964 = vadd.f32 0.0, %v4963
    %v4965 = vpop.f32.mrf.mxu0
    %4966 = vdwg.mxu0
    %s4967 = scalar_lea.vmem %s9, 224
    %v4968 = vld [vmem:[%s4967] sm:$0xff]
    %v4969 = vld [vmem:[%s4967 + $0x8] sm:$0xff]
    %v4970 = vld [vmem:[%s4967 + $0x10] sm:$0xff]
    %v4971 = vld [vmem:[%s4967 + $0x18] sm:$0xff]
    %4972 = vmatprep.subr.mxu0 0.0
    %4973 = vmatpush1.msra.mxu0 0.0
    %4974 = vmatprep.subr.mxu0 0.0
    %4975 = vmatpush1.msra.mxu0 0.0
    %4976 = vmatprep.subr.mxu0 0.0
    %4977 = vmatpush1.msra.mxu0 0.0
    %4978 = vmatprep.subr.mxu0 0.0
    %4979 = vmatpush1.msra.mxu0 0.0
    %4980 = vmatprep.subr.mxu0 0.0
    %4981 = vmatpush1.msra.mxu0 0.0
    %4982 = vmatprep.subr.mxu0 0.0
    %4983 = vmatpush1.msra.mxu0 0.0
    %4984 = vmatprep.subr.mxu0 0.0
    %4985 = vmatpush1.msra.mxu0 0.0
    %4986 = vmatprep.subr.mxu0 0.0
    %4987 = vmatpush1.msra.mxu0 0.0
    %4988 = vmatprep.subr.mxu0 0.0
    %4989 = vmatpush1.msra.mxu0 0.0
    %4990 = vmatprep.subr.mxu0 0.0
    %4991 = vmatpush1.msra.mxu0 0.0
    %4992 = vmatprep.subr.mxu0 0.0
    %4993 = vmatpush1.msra.mxu0 0.0
    %4994 = vmatprep.subr.mxu0 0.0
    %4995 = vmatpush1.msra.mxu0 0.0
    %4996 = vmatprep.subr.mxu0 0.0
    %4997 = vmatpush1.msra.mxu0 %v4971
    %4998 = vmatprep.subr.mxu0 0.0
    %4999 = vmatpush1.msra.mxu0 %v4970
    %5000 = vmatprep.subr.mxu0 0.0
    %5001 = vmatpush1.msra.mxu0 %v4969
    %5002 = vmatprep.subr.mxu0 0.0
    %5003 = vmatpush1.msra.mxu0 %v4968
    %5004 = vmatprep.subr.mxu0 0.0
    %5005 = vmatpush2.msra.mxu0 0.0
    %5006 = vmatprep.subr.mxu0 0.0
    %5007 = vmatpush2.msra.mxu0 0.0
    %5008 = vmatprep.subr.mxu0 0.0
    %5009 = vmatpush2.msra.mxu0 0.0
    %5010 = vmatprep.subr.mxu0 0.0
    %5011 = vmatpush2.msra.mxu0 0.0
    %5012 = vmatprep.subr.mxu0 0.0
    %5013 = vmatpush2.msra.mxu0 0.0
    %5014 = vmatprep.subr.mxu0 0.0
    %5015 = vmatpush2.msra.mxu0 0.0
    %5016 = vmatprep.subr.mxu0 0.0
    %5017 = vmatpush2.msra.mxu0 0.0
    %5018 = vmatprep.subr.mxu0 0.0
    %5019 = vmatpush2.msra.mxu0 0.0
    %5020 = vmatprep.subr.mxu0 0.0
    %5021 = vmatpush2.msra.mxu0 0.0
    %5022 = vmatprep.subr.mxu0 0.0
    %5023 = vmatpush2.msra.mxu0 0.0
    %5024 = vmatprep.subr.mxu0 0.0
    %5025 = vmatpush2.msra.mxu0 0.0
    %5026 = vmatprep.subr.mxu0 0.0
    %5027 = vmatpush2.msra.mxu0 0.0
    %5028 = vmatprep.subr.mxu0 0.0
    %5029 = vmatpush2.msra.mxu0 0.0
    %5030 = vmatprep.subr.mxu0 0.0
    %5031 = vmatpush2.msra.mxu0 0.0
    %5032 = vmatprep.subr.mxu0 0.0
    %5033 = vmatpush2.msra.mxu0 0.0
    %5034 = vmatprep.subr.mxu0 0.0
    %5035 = vmatpush2.msra.mxu0 0.0
    %5036 = vmatprep.mubr.f32.mxu0 0.0
    %5037 = vmatmul.mubr.f32.gmra.mxu0 %v3629
    %v5038 = vpop.f32.mrf.mxu0
    %v5039 = vadd.f32 0.0, %v5038
    %v5040 = vpop.f32.mrf.mxu0
    %5041 = vmatprep.mubr.f32.mxu0 0.0
    %5042 = vmatmul.mubr.f32.gmra.mxu0 %v3632
    %v5043 = vpop.f32.mrf.mxu0
    %v5044 = vadd.f32 0.0, %v5043
    %v5045 = vpop.f32.mrf.mxu0
    %5046 = vmatprep.mubr.f32.mxu0 0.0
    %5047 = vmatmul.mubr.f32.gmra.mxu0 %v3635
    %v5048 = vpop.f32.mrf.mxu0
    %v5049 = vadd.f32 0.0, %v5048
    %v5050 = vpop.f32.mrf.mxu0
    %5051 = vmatprep.mubr.f32.mxu0 0.0
    %5052 = vmatmul.mubr.f32.gmra.mxu0 %v3638
    %v5053 = vpop.f32.mrf.mxu0
    %v5054 = vadd.f32 0.0, %v5053
    %v5055 = vpop.f32.mrf.mxu0
    %5056 = vdwg.mxu0
    %s5057 = scalar_lea.vmem %s10, 224
    %v5058 = vld [vmem:[%s5057] sm:$0xff]
    %v5059 = vld [vmem:[%s5057 + $0x8] sm:$0xff]
    %v5060 = vld [vmem:[%s5057 + $0x10] sm:$0xff]
    %v5061 = vld [vmem:[%s5057 + $0x18] sm:$0xff]
    %5062 = vmatprep.subr.mxu0 0.0
    %5063 = vmatpush1.msra.mxu0 0.0
    %5064 = vmatprep.subr.mxu0 0.0
    %5065 = vmatpush1.msra.mxu0 0.0
    %5066 = vmatprep.subr.mxu0 0.0
    %5067 = vmatpush1.msra.mxu0 0.0
    %5068 = vmatprep.subr.mxu0 0.0
    %5069 = vmatpush1.msra.mxu0 0.0
    %5070 = vmatprep.subr.mxu0 0.0
    %5071 = vmatpush1.msra.mxu0 0.0
    %5072 = vmatprep.subr.mxu0 0.0
    %5073 = vmatpush1.msra.mxu0 0.0
    %5074 = vmatprep.subr.mxu0 0.0
    %5075 = vmatpush1.msra.mxu0 0.0
    %5076 = vmatprep.subr.mxu0 0.0
    %5077 = vmatpush1.msra.mxu0 0.0
    %5078 = vmatprep.subr.mxu0 0.0
    %5079 = vmatpush1.msra.mxu0 0.0
    %5080 = vmatprep.subr.mxu0 0.0
    %5081 = vmatpush1.msra.mxu0 0.0
    %5082 = vmatprep.subr.mxu0 0.0
    %5083 = vmatpush1.msra.mxu0 0.0
    %5084 = vmatprep.subr.mxu0 0.0
    %5085 = vmatpush1.msra.mxu0 0.0
    %5086 = vmatprep.subr.mxu0 0.0
    %5087 = vmatpush1.msra.mxu0 %v5061
    %5088 = vmatprep.subr.mxu0 0.0
    %5089 = vmatpush1.msra.mxu0 %v5060
    %5090 = vmatprep.subr.mxu0 0.0
    %5091 = vmatpush1.msra.mxu0 %v5059
    %5092 = vmatprep.subr.mxu0 0.0
    %5093 = vmatpush1.msra.mxu0 %v5058
    %5094 = vmatprep.subr.mxu0 0.0
    %5095 = vmatpush2.msra.mxu0 0.0
    %5096 = vmatprep.subr.mxu0 0.0
    %5097 = vmatpush2.msra.mxu0 0.0
    %5098 = vmatprep.subr.mxu0 0.0
    %5099 = vmatpush2.msra.mxu0 0.0
    %5100 = vmatprep.subr.mxu0 0.0
    %5101 = vmatpush2.msra.mxu0 0.0
    %5102 = vmatprep.subr.mxu0 0.0
    %5103 = vmatpush2.msra.mxu0 0.0
    %5104 = vmatprep.subr.mxu0 0.0
    %5105 = vmatpush2.msra.mxu0 0.0
    %5106 = vmatprep.subr.mxu0 0.0
    %5107 = vmatpush2.msra.mxu0 0.0
    %5108 = vmatprep.subr.mxu0 0.0
    %5109 = vmatpush2.msra.mxu0 0.0
    %5110 = vmatprep.subr.mxu0 0.0
    %5111 = vmatpush2.msra.mxu0 0.0
    %5112 = vmatprep.subr.mxu0 0.0
    %5113 = vmatpush2.msra.mxu0 0.0
    %5114 = vmatprep.subr.mxu0 0.0
    %5115 = vmatpush2.msra.mxu0 0.0
    %5116 = vmatprep.subr.mxu0 0.0
    %5117 = vmatpush2.msra.mxu0 0.0
    %5118 = vmatprep.subr.mxu0 0.0
    %5119 = vmatpush2.msra.mxu0 0.0
    %5120 = vmatprep.subr.mxu0 0.0
    %5121 = vmatpush2.msra.mxu0 0.0
    %5122 = vmatprep.subr.mxu0 0.0
    %5123 = vmatpush2.msra.mxu0 0.0
    %5124 = vmatprep.subr.mxu0 0.0
    %5125 = vmatpush2.msra.mxu0 0.0
    %5126 = vmatprep.mubr.f32.mxu0 0.0
    %5127 = vmatmul.mubr.f32.gmra.mxu0 %v3629
    %v5128 = vpop.f32.mrf.mxu0
    %v5129 = vadd.f32 0.0, %v5128
    %v5130 = vpop.f32.mrf.mxu0
    %5131 = vmatprep.mubr.f32.mxu0 0.0
    %5132 = vmatmul.mubr.f32.gmra.mxu0 %v3632
    %v5133 = vpop.f32.mrf.mxu0
    %v5134 = vadd.f32 0.0, %v5133
    %v5135 = vpop.f32.mrf.mxu0
    %5136 = vmatprep.mubr.f32.mxu0 0.0
    %5137 = vmatmul.mubr.f32.gmra.mxu0 %v3635
    %v5138 = vpop.f32.mrf.mxu0
    %v5139 = vadd.f32 0.0, %v5138
    %v5140 = vpop.f32.mrf.mxu0
    %5141 = vmatprep.mubr.f32.mxu0 0.0
    %5142 = vmatmul.mubr.f32.gmra.mxu0 %v3638
    %v5143 = vpop.f32.mrf.mxu0
    %v5144 = vadd.f32 0.0, %v5143
    %v5145 = vpop.f32.mrf.mxu0
    %5146 = vdwg.mxu0
    %s5147 = scalar_lea.vmem %s11, 224
    %v5148 = vld [vmem:[%s5147] sm:$0xff]
    %v5149 = vld [vmem:[%s5147 + $0x8] sm:$0xff]
    %v5150 = vld [vmem:[%s5147 + $0x10] sm:$0xff]
    %v5151 = vld [vmem:[%s5147 + $0x18] sm:$0xff]
    %5152 = vmatprep.subr.mxu0 0.0
    %5153 = vmatpush1.msra.mxu0 0.0
    %5154 = vmatprep.subr.mxu0 0.0
    %5155 = vmatpush1.msra.mxu0 0.0
    %5156 = vmatprep.subr.mxu0 0.0
    %5157 = vmatpush1.msra.mxu0 0.0
    %5158 = vmatprep.subr.mxu0 0.0
    %5159 = vmatpush1.msra.mxu0 0.0
    %5160 = vmatprep.subr.mxu0 0.0
    %5161 = vmatpush1.msra.mxu0 0.0
    %5162 = vmatprep.subr.mxu0 0.0
    %5163 = vmatpush1.msra.mxu0 0.0
    %5164 = vmatprep.subr.mxu0 0.0
    %5165 = vmatpush1.msra.mxu0 0.0
    %5166 = vmatprep.subr.mxu0 0.0
    %5167 = vmatpush1.msra.mxu0 0.0
    %5168 = vmatprep.subr.mxu0 0.0
    %5169 = vmatpush1.msra.mxu0 0.0
    %5170 = vmatprep.subr.mxu0 0.0
    %5171 = vmatpush1.msra.mxu0 0.0
    %5172 = vmatprep.subr.mxu0 0.0
    %5173 = vmatpush1.msra.mxu0 0.0
    %5174 = vmatprep.subr.mxu0 0.0
    %5175 = vmatpush1.msra.mxu0 0.0
    %5176 = vmatprep.subr.mxu0 0.0
    %5177 = vmatpush1.msra.mxu0 %v5151
    %5178 = vmatprep.subr.mxu0 0.0
    %5179 = vmatpush1.msra.mxu0 %v5150
    %5180 = vmatprep.subr.mxu0 0.0
    %5181 = vmatpush1.msra.mxu0 %v5149
    %5182 = vmatprep.subr.mxu0 0.0
    %5183 = vmatpush1.msra.mxu0 %v5148
    %5184 = vmatprep.subr.mxu0 0.0
    %5185 = vmatpush2.msra.mxu0 0.0
    %5186 = vmatprep.subr.mxu0 0.0
    %5187 = vmatpush2.msra.mxu0 0.0
    %5188 = vmatprep.subr.mxu0 0.0
    %5189 = vmatpush2.msra.mxu0 0.0
    %5190 = vmatprep.subr.mxu0 0.0
    %5191 = vmatpush2.msra.mxu0 0.0
    %5192 = vmatprep.subr.mxu0 0.0
    %5193 = vmatpush2.msra.mxu0 0.0
    %5194 = vmatprep.subr.mxu0 0.0
    %5195 = vmatpush2.msra.mxu0 0.0
    %5196 = vmatprep.subr.mxu0 0.0
    %5197 = vmatpush2.msra.mxu0 0.0
    %5198 = vmatprep.subr.mxu0 0.0
    %5199 = vmatpush2.msra.mxu0 0.0
    %5200 = vmatprep.subr.mxu0 0.0
    %5201 = vmatpush2.msra.mxu0 0.0
    %5202 = vmatprep.subr.mxu0 0.0
    %5203 = vmatpush2.msra.mxu0 0.0
    %5204 = vmatprep.subr.mxu0 0.0
    %5205 = vmatpush2.msra.mxu0 0.0
    %5206 = vmatprep.subr.mxu0 0.0
    %5207 = vmatpush2.msra.mxu0 0.0
    %5208 = vmatprep.subr.mxu0 0.0
    %5209 = vmatpush2.msra.mxu0 0.0
    %5210 = vmatprep.subr.mxu0 0.0
    %5211 = vmatpush2.msra.mxu0 0.0
    %5212 = vmatprep.subr.mxu0 0.0
    %5213 = vmatpush2.msra.mxu0 0.0
    %5214 = vmatprep.subr.mxu0 0.0
    %5215 = vmatpush2.msra.mxu0 0.0
    %5216 = vmatprep.mubr.f32.mxu0 0.0
    %5217 = vmatmul.mubr.f32.gmra.mxu0 %v3629
    %v5218 = vpop.f32.mrf.mxu0
    %v5219 = vadd.f32 0.0, %v5218
    %v5220 = vpop.f32.mrf.mxu0
    %5221 = vmatprep.mubr.f32.mxu0 0.0
    %5222 = vmatmul.mubr.f32.gmra.mxu0 %v3632
    %v5223 = vpop.f32.mrf.mxu0
    %v5224 = vadd.f32 0.0, %v5223
    %v5225 = vpop.f32.mrf.mxu0
    %5226 = vmatprep.mubr.f32.mxu0 0.0
    %5227 = vmatmul.mubr.f32.gmra.mxu0 %v3635
    %v5228 = vpop.f32.mrf.mxu0
    %v5229 = vadd.f32 0.0, %v5228
    %v5230 = vpop.f32.mrf.mxu0
    %5231 = vmatprep.mubr.f32.mxu0 0.0
    %5232 = vmatmul.mubr.f32.gmra.mxu0 %v3638
    %v5233 = vpop.f32.mrf.mxu0
    %v5234 = vadd.f32 0.0, %v5233
    %v5235 = vpop.f32.mrf.mxu0
    %5236 = vdwg.mxu0
    %v5238 = vsel %vm567, %v5039, 0
    %v5241 = vsel %vm567, %v5044, 0
    %v5244 = vsel %vm567, %v5129, 0
    %v5247 = vsel %vm567, %v5134, 0
    %5249 = vmatprep.subr.mxu0 0.0
    %5250 = vmatpush1.xpose.msra.mxu0 0.0
    %5251 = vmatprep.subr.mxu0 0.0
    %5252 = vmatpush1.xpose.msra.mxu0 0.0
    %5253 = vmatprep.subr.mxu0 0.0
    %5254 = vmatpush1.xpose.msra.mxu0 0.0
    %5255 = vmatprep.subr.mxu0 0.0
    %5256 = vmatpush1.xpose.msra.mxu0 0.0
    %5257 = vmatprep.subr.mxu0 0.0
    %5258 = vmatpush1.xpose.msra.mxu0 0.0
    %5259 = vmatprep.subr.mxu0 0.0
    %5260 = vmatpush1.xpose.msra.mxu0 0.0
    %5261 = vmatprep.subr.mxu0 0.0
    %5262 = vmatpush1.xpose.msra.mxu0 0.0
    %5263 = vmatprep.subr.mxu0 0.0
    %5264 = vmatpush1.xpose.msra.mxu0 0.0
    %5265 = vmatprep.subr.mxu0 0.0
    %5266 = vmatpush1.xpose.msra.mxu0 0.0
    %5267 = vmatprep.subr.mxu0 0.0
    %5268 = vmatpush1.xpose.msra.mxu0 0.0
    %5269 = vmatprep.subr.mxu0 0.0
    %5270 = vmatpush1.xpose.msra.mxu0 0.0
    %5271 = vmatprep.subr.mxu0 0.0
    %5272 = vmatpush1.xpose.msra.mxu0 0.0
    %5273 = vmatprep.subr.mxu0 0.0
    %5274 = vmatpush1.xpose.msra.mxu0 0.0
    %5275 = vmatprep.subr.mxu0 0.0
    %5276 = vmatpush1.xpose.msra.mxu0 0.0
    %5277 = vmatprep.subr.mxu0 0.0
    %5278 = vmatpush1.xpose.msra.mxu0 %v5247
    %5279 = vmatprep.subr.mxu0 0.0
    %5280 = vmatpush1.xpose.msra.mxu0 %v5244
    %5281 = vmatprep.subr.mxu0 0.0
    %5282 = vmatpush2.xpose.msra.mxu0 0.0
    %5283 = vmatprep.subr.mxu0 0.0
    %5284 = vmatpush2.xpose.msra.mxu0 0.0
    %5285 = vmatprep.subr.mxu0 0.0
    %5286 = vmatpush2.xpose.msra.mxu0 0.0
    %5287 = vmatprep.subr.mxu0 0.0
    %5288 = vmatpush2.xpose.msra.mxu0 0.0
    %5289 = vmatprep.subr.mxu0 0.0
    %5290 = vmatpush2.xpose.msra.mxu0 0.0
    %5291 = vmatprep.subr.mxu0 0.0
    %5292 = vmatpush2.xpose.msra.mxu0 0.0
    %5293 = vmatprep.subr.mxu0 0.0
    %5294 = vmatpush2.xpose.msra.mxu0 0.0
    %5295 = vmatprep.subr.mxu0 0.0
    %5296 = vmatpush2.xpose.msra.mxu0 0.0
    %5297 = vmatprep.subr.mxu0 0.0
    %5298 = vmatpush2.xpose.msra.mxu0 0.0
    %5299 = vmatprep.subr.mxu0 0.0
    %5300 = vmatpush2.xpose.msra.mxu0 0.0
    %5301 = vmatprep.subr.mxu0 0.0
    %5302 = vmatpush2.xpose.msra.mxu0 0.0
    %5303 = vmatprep.subr.mxu0 0.0
    %5304 = vmatpush2.xpose.msra.mxu0 0.0
    %5305 = vmatprep.subr.mxu0 0.0
    %5306 = vmatpush2.xpose.msra.mxu0 0.0
    %5307 = vmatprep.subr.mxu0 0.0
    %5308 = vmatpush2.xpose.msra.mxu0 0.0
    %5309 = vmatprep.subr.mxu0 0.0
    %5310 = vmatpush2.xpose.msra.mxu0 0.0
    %5311 = vmatprep.subr.mxu0 0.0
    %5312 = vmatpush2.xpose.msra.mxu0 0.0
    %5313 = vmatprep.mubr.f32.mxu0 0.0
    %5314 = vmatmul.mubr.f32.gmra.mxu0 %v5238
    %v5315 = vpop.f32.mrf.mxu0
    %v5316 = vadd.f32 0.0, %v5315
    %v5317 = vpop.f32.mrf.mxu0
    %5318 = vmatprep.mubr.f32.mxu0 0.0
    %5319 = vmatmul.mubr.f32.gmra.mxu0 %v5241
    %v5320 = vpop.f32.mrf.mxu0
    %v5321 = vadd.f32 0.0, %v5320
    %v5322 = vpop.f32.mrf.mxu0
    %5323 = vdwg.mxu0
    %v5325 = vsel %vm567, %v5049, 0
    %v5328 = vsel %vm567, %v5054, 0
    %v5331 = vsel %vm567, %v5139, 0
    %v5334 = vsel %vm567, %v5144, 0
    %5336 = vmatprep.subr.mxu0 0.0
    %5337 = vmatpush1.xpose.msra.mxu0 0.0
    %5338 = vmatprep.subr.mxu0 0.0
    %5339 = vmatpush1.xpose.msra.mxu0 0.0
    %5340 = vmatprep.subr.mxu0 0.0
    %5341 = vmatpush1.xpose.msra.mxu0 0.0
    %5342 = vmatprep.subr.mxu0 0.0
    %5343 = vmatpush1.xpose.msra.mxu0 0.0
    %5344 = vmatprep.subr.mxu0 0.0
    %5345 = vmatpush1.xpose.msra.mxu0 0.0
    %5346 = vmatprep.subr.mxu0 0.0
    %5347 = vmatpush1.xpose.msra.mxu0 0.0
    %5348 = vmatprep.subr.mxu0 0.0
    %5349 = vmatpush1.xpose.msra.mxu0 0.0
    %5350 = vmatprep.subr.mxu0 0.0
    %5351 = vmatpush1.xpose.msra.mxu0 0.0
    %5352 = vmatprep.subr.mxu0 0.0
    %5353 = vmatpush1.xpose.msra.mxu0 0.0
    %5354 = vmatprep.subr.mxu0 0.0
    %5355 = vmatpush1.xpose.msra.mxu0 0.0
    %5356 = vmatprep.subr.mxu0 0.0
    %5357 = vmatpush1.xpose.msra.mxu0 0.0
    %5358 = vmatprep.subr.mxu0 0.0
    %5359 = vmatpush1.xpose.msra.mxu0 0.0
    %5360 = vmatprep.subr.mxu0 0.0
    %5361 = vmatpush1.xpose.msra.mxu0 0.0
    %5362 = vmatprep.subr.mxu0 0.0
    %5363 = vmatpush1.xpose.msra.mxu0 0.0
    %5364 = vmatprep.subr.mxu0 0.0
    %5365 = vmatpush1.xpose.msra.mxu0 %v5334
    %5366 = vmatprep.subr.mxu0 0.0
    %5367 = vmatpush1.xpose.msra.mxu0 %v5331
    %5368 = vmatprep.subr.mxu0 0.0
    %5369 = vmatpush2.xpose.msra.mxu0 0.0
    %5370 = vmatprep.subr.mxu0 0.0
    %5371 = vmatpush2.xpose.msra.mxu0 0.0
    %5372 = vmatprep.subr.mxu0 0.0
    %5373 = vmatpush2.xpose.msra.mxu0 0.0
    %5374 = vmatprep.subr.mxu0 0.0
    %5375 = vmatpush2.xpose.msra.mxu0 0.0
    %5376 = vmatprep.subr.mxu0 0.0
    %5377 = vmatpush2.xpose.msra.mxu0 0.0
    %5378 = vmatprep.subr.mxu0 0.0
    %5379 = vmatpush2.xpose.msra.mxu0 0.0
    %5380 = vmatprep.subr.mxu0 0.0
    %5381 = vmatpush2.xpose.msra.mxu0 0.0
    %5382 = vmatprep.subr.mxu0 0.0
    %5383 = vmatpush2.xpose.msra.mxu0 0.0
    %5384 = vmatprep.subr.mxu0 0.0
    %5385 = vmatpush2.xpose.msra.mxu0 0.0
    %5386 = vmatprep.subr.mxu0 0.0
    %5387 = vmatpush2.xpose.msra.mxu0 0.0
    %5388 = vmatprep.subr.mxu0 0.0
    %5389 = vmatpush2.xpose.msra.mxu0 0.0
    %5390 = vmatprep.subr.mxu0 0.0
    %5391 = vmatpush2.xpose.msra.mxu0 0.0
    %5392 = vmatprep.subr.mxu0 0.0
    %5393 = vmatpush2.xpose.msra.mxu0 0.0
    %5394 = vmatprep.subr.mxu0 0.0
    %5395 = vmatpush2.xpose.msra.mxu0 0.0
    %5396 = vmatprep.subr.mxu0 0.0
    %5397 = vmatpush2.xpose.msra.mxu0 0.0
    %5398 = vmatprep.subr.mxu0 0.0
    %5399 = vmatpush2.xpose.msra.mxu0 0.0
    %5400 = vmatprep.mubr.f32.mxu0 0.0
    %5401 = vmatmul.mubr.f32.gmra.mxu0 %v5325
    %v5402 = vpop.f32.mrf.mxu0
    %v5403 = vadd.f32 0.0, %v5402
    %v5404 = vpop.f32.mrf.mxu0
    %5405 = vmatprep.mubr.f32.mxu0 0.0
    %5406 = vmatmul.mubr.f32.gmra.mxu0 %v5328
    %v5407 = vpop.f32.mrf.mxu0
    %v5408 = vadd.f32 0.0, %v5407
    %v5409 = vpop.f32.mrf.mxu0
    %5410 = vdwg.mxu0
    %v5411 = vadd.f32 %v3984, %v227
    %v5412 = vadd.f32 %v3989, %v228
    %v5413 = vadd.f32 %v4071, %v229
    %v5414 = vadd.f32 %v4076, %v230
    %v5415 = vadd.f32 %v4428, %v231
    %v5416 = vadd.f32 %v4433, %v232
    %v5417 = vadd.f32 %v4515, %v233
    %v5418 = vadd.f32 %v4520, %v234
    %v5419 = vadd.f32 %v4872, %v235
    %v5420 = vadd.f32 %v4877, %v236
    %v5421 = vadd.f32 %v4959, %v237
    %v5422 = vadd.f32 %v4964, %v238
    %v5423 = vadd.f32 %v5316, %v239
    %v5424 = vadd.f32 %v5321, %v240
    %v5425 = vadd.f32 %v5403, %v241
    %v5426 = vadd.f32 %v5408, %v242
    %v5427 = vsel %vm77, %v5411, -inf
    %5428 = vmax.xlane.f32.xlu0 %v5427
    %v5429 = vpop.xlane.xlu0 %5428
    %v5430 = vsel %vm77, %v5412, -inf
    %5431 = vmax.xlane.f32.xlu0 %v5430
    %v5432 = vpop.xlane.xlu0 %5431
    %v5433 = vsel %vm77, %v5413, -inf
    %5434 = vmax.xlane.f32.xlu0 %v5433
    %v5435 = vpop.xlane.xlu0 %5434
    %v5436 = vsel %vm77, %v5414, -inf
    %5437 = vmax.xlane.f32.xlu0 %v5436
    %v5438 = vpop.xlane.xlu0 %5437
    %v5439 = vsel %vm77, %v5415, -inf
    %5440 = vmax.xlane.f32.xlu0 %v5439
    %v5441 = vpop.xlane.xlu0 %5440
    %v5442 = vsel %vm77, %v5416, -inf
    %5443 = vmax.xlane.f32.xlu0 %v5442
    %v5444 = vpop.xlane.xlu0 %5443
    %v5445 = vsel %vm77, %v5417, -inf
    %5446 = vmax.xlane.f32.xlu0 %v5445
    %v5447 = vpop.xlane.xlu0 %5446
    %v5448 = vsel %vm77, %v5418, -inf
    %5449 = vmax.xlane.f32.xlu0 %v5448
    %v5450 = vpop.xlane.xlu0 %5449
    %v5451 = vsel %vm77, %v5419, -inf
    %5452 = vmax.xlane.f32.xlu0 %v5451
    %v5453 = vpop.xlane.xlu0 %5452
    %v5454 = vsel %vm77, %v5420, -inf
    %5455 = vmax.xlane.f32.xlu0 %v5454
    %v5456 = vpop.xlane.xlu0 %5455
    %v5457 = vsel %vm77, %v5421, -inf
    %5458 = vmax.xlane.f32.xlu0 %v5457
    %v5459 = vpop.xlane.xlu0 %5458
    %v5460 = vsel %vm77, %v5422, -inf
    %5461 = vmax.xlane.f32.xlu0 %v5460
    %v5462 = vpop.xlane.xlu0 %5461
    %v5463 = vsel %vm77, %v5423, -inf
    %5464 = vmax.xlane.f32.xlu0 %v5463
    %v5465 = vpop.xlane.xlu0 %5464
    %v5466 = vsel %vm77, %v5424, -inf
    %5467 = vmax.xlane.f32.xlu0 %v5466
    %v5468 = vpop.xlane.xlu0 %5467
    %v5469 = vsel %vm77, %v5425, -inf
    %5470 = vmax.xlane.f32.xlu0 %v5469
    %v5471 = vpop.xlane.xlu0 %5470
    %v5472 = vsel %vm77, %v5426, -inf
    %5473 = vmax.xlane.f32.xlu0 %v5472
    %v5474 = vpop.xlane.xlu0 %5473
    %v5475 = vsub.f32 %v5411, %v5429
    %v5476 = vsub.f32 %v5412, %v5432
    %v5477 = vsub.f32 %v5413, %v5435
    %v5478 = vsub.f32 %v5414, %v5438
    %v5479 = vsub.f32 %v5415, %v5441
    %v5480 = vsub.f32 %v5416, %v5444
    %v5481 = vsub.f32 %v5417, %v5447
    %v5482 = vsub.f32 %v5418, %v5450
    %v5483 = vsub.f32 %v5419, %v5453
    %v5484 = vsub.f32 %v5420, %v5456
    %v5485 = vsub.f32 %v5421, %v5459
    %v5486 = vsub.f32 %v5422, %v5462
    %v5487 = vsub.f32 %v5423, %v5465
    %v5488 = vsub.f32 %v5424, %v5468
    %v5489 = vsub.f32 %v5425, %v5471
    %v5490 = vsub.f32 %v5426, %v5474
    %v5491 = vmul.f32 %v5475, 1.442695
    %v5492 = vpow.pop %v5491
    %v5493 = vmul.f32 %v5476, 1.442695
    %v5494 = vpow.pop %v5493
    %v5495 = vmul.f32 %v5477, 1.442695
    %v5496 = vpow.pop %v5495
    %v5497 = vmul.f32 %v5478, 1.442695
    %v5498 = vpow.pop %v5497
    %v5499 = vmul.f32 %v5479, 1.442695
    %v5500 = vpow.pop %v5499
    %v5501 = vmul.f32 %v5480, 1.442695
    %v5502 = vpow.pop %v5501
    %v5503 = vmul.f32 %v5481, 1.442695
    %v5504 = vpow.pop %v5503
    %v5505 = vmul.f32 %v5482, 1.442695
    %v5506 = vpow.pop %v5505
    %v5507 = vmul.f32 %v5483, 1.442695
    %v5508 = vpow.pop %v5507
    %v5509 = vmul.f32 %v5484, 1.442695
    %v5510 = vpow.pop %v5509
    %v5511 = vmul.f32 %v5485, 1.442695
    %v5512 = vpow.pop %v5511
    %v5513 = vmul.f32 %v5486, 1.442695
    %v5514 = vpow.pop %v5513
    %v5515 = vmul.f32 %v5487, 1.442695
    %v5516 = vpow.pop %v5515
    %v5517 = vmul.f32 %v5488, 1.442695
    %v5518 = vpow.pop %v5517
    %v5519 = vmul.f32 %v5489, 1.442695
    %v5520 = vpow.pop %v5519
    %v5521 = vmul.f32 %v5490, 1.442695
    %v5522 = vpow.pop %v5521
    %v5523 = vsel %vm77, %v5492, 0.0
    %5524 = vadd.xlane.f32.xlu0 %v5523
    %v5525 = vpop.xlane.xlu0 %5524
    %v5526 = vsel %vm77, %v5494, 0.0
    %5527 = vadd.xlane.f32.xlu0 %v5526
    %v5528 = vpop.xlane.xlu0 %5527
    %v5529 = vsel %vm77, %v5496, 0.0
    %5530 = vadd.xlane.f32.xlu0 %v5529
    %v5531 = vpop.xlane.xlu0 %5530
    %v5532 = vsel %vm77, %v5498, 0.0
    %5533 = vadd.xlane.f32.xlu0 %v5532
    %v5534 = vpop.xlane.xlu0 %5533
    %v5535 = vsel %vm77, %v5500, 0.0
    %5536 = vadd.xlane.f32.xlu0 %v5535
    %v5537 = vpop.xlane.xlu0 %5536
    %v5538 = vsel %vm77, %v5502, 0.0
    %5539 = vadd.xlane.f32.xlu0 %v5538
    %v5540 = vpop.xlane.xlu0 %5539
    %v5541 = vsel %vm77, %v5504, 0.0
    %5542 = vadd.xlane.f32.xlu0 %v5541
    %v5543 = vpop.xlane.xlu0 %5542
    %v5544 = vsel %vm77, %v5506, 0.0
    %5545 = vadd.xlane.f32.xlu0 %v5544
    %v5546 = vpop.xlane.xlu0 %5545
    %v5547 = vsel %vm77, %v5508, 0.0
    %5548 = vadd.xlane.f32.xlu0 %v5547
    %v5549 = vpop.xlane.xlu0 %5548
    %v5550 = vsel %vm77, %v5510, 0.0
    %5551 = vadd.xlane.f32.xlu0 %v5550
    %v5552 = vpop.xlane.xlu0 %5551
    %v5553 = vsel %vm77, %v5512, 0.0
    %5554 = vadd.xlane.f32.xlu0 %v5553
    %v5555 = vpop.xlane.xlu0 %5554
    %v5556 = vsel %vm77, %v5514, 0.0
    %5557 = vadd.xlane.f32.xlu0 %v5556
    %v5558 = vpop.xlane.xlu0 %5557
    %v5559 = vsel %vm77, %v5516, 0.0
    %5560 = vadd.xlane.f32.xlu0 %v5559
    %v5561 = vpop.xlane.xlu0 %5560
    %v5562 = vsel %vm77, %v5518, 0.0
    %5563 = vadd.xlane.f32.xlu0 %v5562
    %v5564 = vpop.xlane.xlu0 %5563
    %v5565 = vsel %vm77, %v5520, 0.0
    %5566 = vadd.xlane.f32.xlu0 %v5565
    %v5567 = vpop.xlane.xlu0 %5566
    %v5568 = vsel %vm77, %v5522, 0.0
    %5569 = vadd.xlane.f32.xlu0 %v5568
    %v5570 = vpop.xlane.xlu0 %5569
    %v5571 = vrcp.pop %v5525
    %v5572 = vmul.f32 %v5492, %v5571
    %v5573 = vrcp.pop %v5528
    %v5574 = vmul.f32 %v5494, %v5573
    %v5575 = vrcp.pop %v5531
    %v5576 = vmul.f32 %v5496, %v5575
    %v5577 = vrcp.pop %v5534
    %v5578 = vmul.f32 %v5498, %v5577
    %v5579 = vrcp.pop %v5537
    %v5580 = vmul.f32 %v5500, %v5579
    %v5581 = vrcp.pop %v5540
    %v5582 = vmul.f32 %v5502, %v5581
    %v5583 = vrcp.pop %v5543
    %v5584 = vmul.f32 %v5504, %v5583
    %v5585 = vrcp.pop %v5546
    %v5586 = vmul.f32 %v5506, %v5585
    %v5587 = vrcp.pop %v5549
    %v5588 = vmul.f32 %v5508, %v5587
    %v5589 = vrcp.pop %v5552
    %v5590 = vmul.f32 %v5510, %v5589
    %v5591 = vrcp.pop %v5555
    %v5592 = vmul.f32 %v5512, %v5591
    %v5593 = vrcp.pop %v5558
    %v5594 = vmul.f32 %v5514, %v5593
    %v5595 = vrcp.pop %v5561
    %v5596 = vmul.f32 %v5516, %v5595
    %v5597 = vrcp.pop %v5564
    %v5598 = vmul.f32 %v5518, %v5597
    %v5599 = vrcp.pop %v5567
    %v5600 = vmul.f32 %v5520, %v5599
    %v5601 = vrcp.pop %v5570
    %v5602 = vmul.f32 %v5522, %v5601
    %v5604 = vsel %vm77, %v5572, 0
    %v5607 = vsel %vm77, %v5574, 0
    %5609 = vmatprep.subr.mxu0 0.0
    %5610 = vmatpush1.msra.mxu0 0.0
    %5611 = vmatprep.subr.mxu0 0.0
    %5612 = vmatpush1.msra.mxu0 0.0
    %5613 = vmatprep.subr.mxu0 0.0
    %5614 = vmatpush1.msra.mxu0 0.0
    %5615 = vmatprep.subr.mxu0 0.0
    %5616 = vmatpush1.msra.mxu0 0.0
    %5617 = vmatprep.subr.mxu0 0.0
    %5618 = vmatpush1.msra.mxu0 0.0
    %5619 = vmatprep.subr.mxu0 0.0
    %5620 = vmatpush1.msra.mxu0 0.0
    %5621 = vmatprep.subr.mxu0 0.0
    %5622 = vmatpush1.msra.mxu0 0.0
    %5623 = vmatprep.subr.mxu0 0.0
    %5624 = vmatpush1.msra.mxu0 0.0
    %5625 = vmatprep.subr.mxu0 0.0
    %5626 = vmatpush1.msra.mxu0 0.0
    %5627 = vmatprep.subr.mxu0 0.0
    %5628 = vmatpush1.msra.mxu0 0.0
    %5629 = vmatprep.subr.mxu0 0.0
    %5630 = vmatpush1.msra.mxu0 0.0
    %5631 = vmatprep.subr.mxu0 0.0
    %5632 = vmatpush1.msra.mxu0 0.0
    %5633 = vmatprep.subr.mxu0 0.0
    %5634 = vmatpush1.msra.mxu0 0.0
    %5635 = vmatprep.subr.mxu0 0.0
    %5636 = vmatpush1.msra.mxu0 0.0
    %5637 = vmatprep.subr.mxu0 0.0
    %5638 = vmatpush1.msra.mxu0 %v3892
    %5639 = vmatprep.subr.mxu0 0.0
    %5640 = vmatpush1.msra.mxu0 %v3887
    %5641 = vmatprep.subr.mxu0 0.0
    %5642 = vmatpush2.msra.mxu0 0.0
    %5643 = vmatprep.subr.mxu0 0.0
    %5644 = vmatpush2.msra.mxu0 0.0
    %5645 = vmatprep.subr.mxu0 0.0
    %5646 = vmatpush2.msra.mxu0 0.0
    %5647 = vmatprep.subr.mxu0 0.0
    %5648 = vmatpush2.msra.mxu0 0.0
    %5649 = vmatprep.subr.mxu0 0.0
    %5650 = vmatpush2.msra.mxu0 0.0
    %5651 = vmatprep.subr.mxu0 0.0
    %5652 = vmatpush2.msra.mxu0 0.0
    %5653 = vmatprep.subr.mxu0 0.0
    %5654 = vmatpush2.msra.mxu0 0.0
    %5655 = vmatprep.subr.mxu0 0.0
    %5656 = vmatpush2.msra.mxu0 0.0
    %5657 = vmatprep.subr.mxu0 0.0
    %5658 = vmatpush2.msra.mxu0 0.0
    %5659 = vmatprep.subr.mxu0 0.0
    %5660 = vmatpush2.msra.mxu0 0.0
    %5661 = vmatprep.subr.mxu0 0.0
    %5662 = vmatpush2.msra.mxu0 0.0
    %5663 = vmatprep.subr.mxu0 0.0
    %5664 = vmatpush2.msra.mxu0 0.0
    %5665 = vmatprep.subr.mxu0 0.0
    %5666 = vmatpush2.msra.mxu0 0.0
    %5667 = vmatprep.subr.mxu0 0.0
    %5668 = vmatpush2.msra.mxu0 0.0
    %5669 = vmatprep.subr.mxu0 0.0
    %5670 = vmatpush2.msra.mxu0 0.0
    %5671 = vmatprep.subr.mxu0 0.0
    %5672 = vmatpush2.msra.mxu0 0.0
    %5673 = vmatprep.mubr.f32.mxu0 0.0
    %5674 = vmatmul.mubr.f32.gmra.mxu0 %v5604
    %v5675 = vpop.f32.mrf.mxu0
    %v5676 = vadd.f32 0.0, %v5675
    %v5677 = vpop.f32.mrf.mxu0
    %5678 = vmatprep.mubr.f32.mxu0 0.0
    %5679 = vmatmul.mubr.f32.gmra.mxu0 %v5607
    %v5680 = vpop.f32.mrf.mxu0
    %v5681 = vadd.f32 0.0, %v5680
    %v5682 = vpop.f32.mrf.mxu0
    %5683 = vdwg.mxu0
    %v5685 = vsel %vm77, %v5576, 0
    %v5688 = vsel %vm77, %v5578, 0
    %5690 = vmatprep.subr.mxu0 0.0
    %5691 = vmatpush1.msra.mxu0 0.0
    %5692 = vmatprep.subr.mxu0 0.0
    %5693 = vmatpush1.msra.mxu0 0.0
    %5694 = vmatprep.subr.mxu0 0.0
    %5695 = vmatpush1.msra.mxu0 0.0
    %5696 = vmatprep.subr.mxu0 0.0
    %5697 = vmatpush1.msra.mxu0 0.0
    %5698 = vmatprep.subr.mxu0 0.0
    %5699 = vmatpush1.msra.mxu0 0.0
    %5700 = vmatprep.subr.mxu0 0.0
    %5701 = vmatpush1.msra.mxu0 0.0
    %5702 = vmatprep.subr.mxu0 0.0
    %5703 = vmatpush1.msra.mxu0 0.0
    %5704 = vmatprep.subr.mxu0 0.0
    %5705 = vmatpush1.msra.mxu0 0.0
    %5706 = vmatprep.subr.mxu0 0.0
    %5707 = vmatpush1.msra.mxu0 0.0
    %5708 = vmatprep.subr.mxu0 0.0
    %5709 = vmatpush1.msra.mxu0 0.0
    %5710 = vmatprep.subr.mxu0 0.0
    %5711 = vmatpush1.msra.mxu0 0.0
    %5712 = vmatprep.subr.mxu0 0.0
    %5713 = vmatpush1.msra.mxu0 0.0
    %5714 = vmatprep.subr.mxu0 0.0
    %5715 = vmatpush1.msra.mxu0 0.0
    %5716 = vmatprep.subr.mxu0 0.0
    %5717 = vmatpush1.msra.mxu0 0.0
    %5718 = vmatprep.subr.mxu0 0.0
    %5719 = vmatpush1.msra.mxu0 %v3902
    %5720 = vmatprep.subr.mxu0 0.0
    %5721 = vmatpush1.msra.mxu0 %v3897
    %5722 = vmatprep.subr.mxu0 0.0
    %5723 = vmatpush2.msra.mxu0 0.0
    %5724 = vmatprep.subr.mxu0 0.0
    %5725 = vmatpush2.msra.mxu0 0.0
    %5726 = vmatprep.subr.mxu0 0.0
    %5727 = vmatpush2.msra.mxu0 0.0
    %5728 = vmatprep.subr.mxu0 0.0
    %5729 = vmatpush2.msra.mxu0 0.0
    %5730 = vmatprep.subr.mxu0 0.0
    %5731 = vmatpush2.msra.mxu0 0.0
    %5732 = vmatprep.subr.mxu0 0.0
    %5733 = vmatpush2.msra.mxu0 0.0
    %5734 = vmatprep.subr.mxu0 0.0
    %5735 = vmatpush2.msra.mxu0 0.0
    %5736 = vmatprep.subr.mxu0 0.0
    %5737 = vmatpush2.msra.mxu0 0.0
    %5738 = vmatprep.subr.mxu0 0.0
    %5739 = vmatpush2.msra.mxu0 0.0
    %5740 = vmatprep.subr.mxu0 0.0
    %5741 = vmatpush2.msra.mxu0 0.0
    %5742 = vmatprep.subr.mxu0 0.0
    %5743 = vmatpush2.msra.mxu0 0.0
    %5744 = vmatprep.subr.mxu0 0.0
    %5745 = vmatpush2.msra.mxu0 0.0
    %5746 = vmatprep.subr.mxu0 0.0
    %5747 = vmatpush2.msra.mxu0 0.0
    %5748 = vmatprep.subr.mxu0 0.0
    %5749 = vmatpush2.msra.mxu0 0.0
    %5750 = vmatprep.subr.mxu0 0.0
    %5751 = vmatpush2.msra.mxu0 0.0
    %5752 = vmatprep.subr.mxu0 0.0
    %5753 = vmatpush2.msra.mxu0 0.0
    %5754 = vmatprep.mubr.f32.mxu0 0.0
    %5755 = vmatmul.mubr.f32.gmra.mxu0 %v5685
    %v5756 = vpop.f32.mrf.mxu0
    %v5757 = vadd.f32 0.0, %v5756
    %v5758 = vpop.f32.mrf.mxu0
    %5759 = vmatprep.mubr.f32.mxu0 0.0
    %5760 = vmatmul.mubr.f32.gmra.mxu0 %v5688
    %v5761 = vpop.f32.mrf.mxu0
    %v5762 = vadd.f32 0.0, %v5761
    %v5763 = vpop.f32.mrf.mxu0
    %5764 = vdwg.mxu0
    %v5766 = vsel %vm77, %v5580, 0
    %v5769 = vsel %vm77, %v5582, 0
    %5771 = vmatprep.subr.mxu0 0.0
    %5772 = vmatpush1.msra.mxu0 0.0
    %5773 = vmatprep.subr.mxu0 0.0
    %5774 = vmatpush1.msra.mxu0 0.0
    %5775 = vmatprep.subr.mxu0 0.0
    %5776 = vmatpush1.msra.mxu0 0.0
    %5777 = vmatprep.subr.mxu0 0.0
    %5778 = vmatpush1.msra.mxu0 0.0
    %5779 = vmatprep.subr.mxu0 0.0
    %5780 = vmatpush1.msra.mxu0 0.0
    %5781 = vmatprep.subr.mxu0 0.0
    %5782 = vmatpush1.msra.mxu0 0.0
    %5783 = vmatprep.subr.mxu0 0.0
    %5784 = vmatpush1.msra.mxu0 0.0
    %5785 = vmatprep.subr.mxu0 0.0
    %5786 = vmatpush1.msra.mxu0 0.0
    %5787 = vmatprep.subr.mxu0 0.0
    %5788 = vmatpush1.msra.mxu0 0.0
    %5789 = vmatprep.subr.mxu0 0.0
    %5790 = vmatpush1.msra.mxu0 0.0
    %5791 = vmatprep.subr.mxu0 0.0
    %5792 = vmatpush1.msra.mxu0 0.0
    %5793 = vmatprep.subr.mxu0 0.0
    %5794 = vmatpush1.msra.mxu0 0.0
    %5795 = vmatprep.subr.mxu0 0.0
    %5796 = vmatpush1.msra.mxu0 0.0
    %5797 = vmatprep.subr.mxu0 0.0
    %5798 = vmatpush1.msra.mxu0 0.0
    %5799 = vmatprep.subr.mxu0 0.0
    %5800 = vmatpush1.msra.mxu0 %v4336
    %5801 = vmatprep.subr.mxu0 0.0
    %5802 = vmatpush1.msra.mxu0 %v4331
    %5803 = vmatprep.subr.mxu0 0.0
    %5804 = vmatpush2.msra.mxu0 0.0
    %5805 = vmatprep.subr.mxu0 0.0
    %5806 = vmatpush2.msra.mxu0 0.0
    %5807 = vmatprep.subr.mxu0 0.0
    %5808 = vmatpush2.msra.mxu0 0.0
    %5809 = vmatprep.subr.mxu0 0.0
    %5810 = vmatpush2.msra.mxu0 0.0
    %5811 = vmatprep.subr.mxu0 0.0
    %5812 = vmatpush2.msra.mxu0 0.0
    %5813 = vmatprep.subr.mxu0 0.0
    %5814 = vmatpush2.msra.mxu0 0.0
    %5815 = vmatprep.subr.mxu0 0.0
    %5816 = vmatpush2.msra.mxu0 0.0
    %5817 = vmatprep.subr.mxu0 0.0
    %5818 = vmatpush2.msra.mxu0 0.0
    %5819 = vmatprep.subr.mxu0 0.0
    %5820 = vmatpush2.msra.mxu0 0.0
    %5821 = vmatprep.subr.mxu0 0.0
    %5822 = vmatpush2.msra.mxu0 0.0
    %5823 = vmatprep.subr.mxu0 0.0
    %5824 = vmatpush2.msra.mxu0 0.0
    %5825 = vmatprep.subr.mxu0 0.0
    %5826 = vmatpush2.msra.mxu0 0.0
    %5827 = vmatprep.subr.mxu0 0.0
    %5828 = vmatpush2.msra.mxu0 0.0
    %5829 = vmatprep.subr.mxu0 0.0
    %5830 = vmatpush2.msra.mxu0 0.0
    %5831 = vmatprep.subr.mxu0 0.0
    %5832 = vmatpush2.msra.mxu0 0.0
    %5833 = vmatprep.subr.mxu0 0.0
    %5834 = vmatpush2.msra.mxu0 0.0
    %5835 = vmatprep.mubr.f32.mxu0 0.0
    %5836 = vmatmul.mubr.f32.gmra.mxu0 %v5766
    %v5837 = vpop.f32.mrf.mxu0
    %v5838 = vadd.f32 0.0, %v5837
    %v5839 = vpop.f32.mrf.mxu0
    %5840 = vmatprep.mubr.f32.mxu0 0.0
    %5841 = vmatmul.mubr.f32.gmra.mxu0 %v5769
    %v5842 = vpop.f32.mrf.mxu0
    %v5843 = vadd.f32 0.0, %v5842
    %v5844 = vpop.f32.mrf.mxu0
    %5845 = vdwg.mxu0
    %v5847 = vsel %vm77, %v5584, 0
    %v5850 = vsel %vm77, %v5586, 0
    %5852 = vmatprep.subr.mxu0 0.0
    %5853 = vmatpush1.msra.mxu0 0.0
    %5854 = vmatprep.subr.mxu0 0.0
    %5855 = vmatpush1.msra.mxu0 0.0
    %5856 = vmatprep.subr.mxu0 0.0
    %5857 = vmatpush1.msra.mxu0 0.0
    %5858 = vmatprep.subr.mxu0 0.0
    %5859 = vmatpush1.msra.mxu0 0.0
    %5860 = vmatprep.subr.mxu0 0.0
    %5861 = vmatpush1.msra.mxu0 0.0
    %5862 = vmatprep.subr.mxu0 0.0
    %5863 = vmatpush1.msra.mxu0 0.0
    %5864 = vmatprep.subr.mxu0 0.0
    %5865 = vmatpush1.msra.mxu0 0.0
    %5866 = vmatprep.subr.mxu0 0.0
    %5867 = vmatpush1.msra.mxu0 0.0
    %5868 = vmatprep.subr.mxu0 0.0
    %5869 = vmatpush1.msra.mxu0 0.0
    %5870 = vmatprep.subr.mxu0 0.0
    %5871 = vmatpush1.msra.mxu0 0.0
    %5872 = vmatprep.subr.mxu0 0.0
    %5873 = vmatpush1.msra.mxu0 0.0
    %5874 = vmatprep.subr.mxu0 0.0
    %5875 = vmatpush1.msra.mxu0 0.0
    %5876 = vmatprep.subr.mxu0 0.0
    %5877 = vmatpush1.msra.mxu0 0.0
    %5878 = vmatprep.subr.mxu0 0.0
    %5879 = vmatpush1.msra.mxu0 0.0
    %5880 = vmatprep.subr.mxu0 0.0
    %5881 = vmatpush1.msra.mxu0 %v4346
    %5882 = vmatprep.subr.mxu0 0.0
    %5883 = vmatpush1.msra.mxu0 %v4341
    %5884 = vmatprep.subr.mxu0 0.0
    %5885 = vmatpush2.msra.mxu0 0.0
    %5886 = vmatprep.subr.mxu0 0.0
    %5887 = vmatpush2.msra.mxu0 0.0
    %5888 = vmatprep.subr.mxu0 0.0
    %5889 = vmatpush2.msra.mxu0 0.0
    %5890 = vmatprep.subr.mxu0 0.0
    %5891 = vmatpush2.msra.mxu0 0.0
    %5892 = vmatprep.subr.mxu0 0.0
    %5893 = vmatpush2.msra.mxu0 0.0
    %5894 = vmatprep.subr.mxu0 0.0
    %5895 = vmatpush2.msra.mxu0 0.0
    %5896 = vmatprep.subr.mxu0 0.0
    %5897 = vmatpush2.msra.mxu0 0.0
    %5898 = vmatprep.subr.mxu0 0.0
    %5899 = vmatpush2.msra.mxu0 0.0
    %5900 = vmatprep.subr.mxu0 0.0
    %5901 = vmatpush2.msra.mxu0 0.0
    %5902 = vmatprep.subr.mxu0 0.0
    %5903 = vmatpush2.msra.mxu0 0.0
    %5904 = vmatprep.subr.mxu0 0.0
    %5905 = vmatpush2.msra.mxu0 0.0
    %5906 = vmatprep.subr.mxu0 0.0
    %5907 = vmatpush2.msra.mxu0 0.0
    %5908 = vmatprep.subr.mxu0 0.0
    %5909 = vmatpush2.msra.mxu0 0.0
    %5910 = vmatprep.subr.mxu0 0.0
    %5911 = vmatpush2.msra.mxu0 0.0
    %5912 = vmatprep.subr.mxu0 0.0
    %5913 = vmatpush2.msra.mxu0 0.0
    %5914 = vmatprep.subr.mxu0 0.0
    %5915 = vmatpush2.msra.mxu0 0.0
    %5916 = vmatprep.mubr.f32.mxu0 0.0
    %5917 = vmatmul.mubr.f32.gmra.mxu0 %v5847
    %v5918 = vpop.f32.mrf.mxu0
    %v5919 = vadd.f32 0.0, %v5918
    %v5920 = vpop.f32.mrf.mxu0
    %5921 = vmatprep.mubr.f32.mxu0 0.0
    %5922 = vmatmul.mubr.f32.gmra.mxu0 %v5850
    %v5923 = vpop.f32.mrf.mxu0
    %v5924 = vadd.f32 0.0, %v5923
    %v5925 = vpop.f32.mrf.mxu0
    %5926 = vdwg.mxu0
    %v5928 = vsel %vm77, %v5588, 0
    %v5931 = vsel %vm77, %v5590, 0
    %5933 = vmatprep.subr.mxu0 0.0
    %5934 = vmatpush1.msra.mxu0 0.0
    %5935 = vmatprep.subr.mxu0 0.0
    %5936 = vmatpush1.msra.mxu0 0.0
    %5937 = vmatprep.subr.mxu0 0.0
    %5938 = vmatpush1.msra.mxu0 0.0
    %5939 = vmatprep.subr.mxu0 0.0
    %5940 = vmatpush1.msra.mxu0 0.0
    %5941 = vmatprep.subr.mxu0 0.0
    %5942 = vmatpush1.msra.mxu0 0.0
    %5943 = vmatprep.subr.mxu0 0.0
    %5944 = vmatpush1.msra.mxu0 0.0
    %5945 = vmatprep.subr.mxu0 0.0
    %5946 = vmatpush1.msra.mxu0 0.0
    %5947 = vmatprep.subr.mxu0 0.0
    %5948 = vmatpush1.msra.mxu0 0.0
    %5949 = vmatprep.subr.mxu0 0.0
    %5950 = vmatpush1.msra.mxu0 0.0
    %5951 = vmatprep.subr.mxu0 0.0
    %5952 = vmatpush1.msra.mxu0 0.0
    %5953 = vmatprep.subr.mxu0 0.0
    %5954 = vmatpush1.msra.mxu0 0.0
    %5955 = vmatprep.subr.mxu0 0.0
    %5956 = vmatpush1.msra.mxu0 0.0
    %5957 = vmatprep.subr.mxu0 0.0
    %5958 = vmatpush1.msra.mxu0 0.0
    %5959 = vmatprep.subr.mxu0 0.0
    %5960 = vmatpush1.msra.mxu0 0.0
    %5961 = vmatprep.subr.mxu0 0.0
    %5962 = vmatpush1.msra.mxu0 %v4780
    %5963 = vmatprep.subr.mxu0 0.0
    %5964 = vmatpush1.msra.mxu0 %v4775
    %5965 = vmatprep.subr.mxu0 0.0
    %5966 = vmatpush2.msra.mxu0 0.0
    %5967 = vmatprep.subr.mxu0 0.0
    %5968 = vmatpush2.msra.mxu0 0.0
    %5969 = vmatprep.subr.mxu0 0.0
    %5970 = vmatpush2.msra.mxu0 0.0
    %5971 = vmatprep.subr.mxu0 0.0
    %5972 = vmatpush2.msra.mxu0 0.0
    %5973 = vmatprep.subr.mxu0 0.0
    %5974 = vmatpush2.msra.mxu0 0.0
    %5975 = vmatprep.subr.mxu0 0.0
    %5976 = vmatpush2.msra.mxu0 0.0
    %5977 = vmatprep.subr.mxu0 0.0
    %5978 = vmatpush2.msra.mxu0 0.0
    %5979 = vmatprep.subr.mxu0 0.0
    %5980 = vmatpush2.msra.mxu0 0.0
    %5981 = vmatprep.subr.mxu0 0.0
    %5982 = vmatpush2.msra.mxu0 0.0
    %5983 = vmatprep.subr.mxu0 0.0
    %5984 = vmatpush2.msra.mxu0 0.0
    %5985 = vmatprep.subr.mxu0 0.0
    %5986 = vmatpush2.msra.mxu0 0.0
    %5987 = vmatprep.subr.mxu0 0.0
    %5988 = vmatpush2.msra.mxu0 0.0
    %5989 = vmatprep.subr.mxu0 0.0
    %5990 = vmatpush2.msra.mxu0 0.0
    %5991 = vmatprep.subr.mxu0 0.0
    %5992 = vmatpush2.msra.mxu0 0.0
    %5993 = vmatprep.subr.mxu0 0.0
    %5994 = vmatpush2.msra.mxu0 0.0
    %5995 = vmatprep.subr.mxu0 0.0
    %5996 = vmatpush2.msra.mxu0 0.0
    %5997 = vmatprep.mubr.f32.mxu0 0.0
    %5998 = vmatmul.mubr.f32.gmra.mxu0 %v5928
    %v5999 = vpop.f32.mrf.mxu0
    %v6000 = vadd.f32 0.0, %v5999
    %v6001 = vpop.f32.mrf.mxu0
    %6002 = vmatprep.mubr.f32.mxu0 0.0
    %6003 = vmatmul.mubr.f32.gmra.mxu0 %v5931
    %v6004 = vpop.f32.mrf.mxu0
    %v6005 = vadd.f32 0.0, %v6004
    %v6006 = vpop.f32.mrf.mxu0
    %6007 = vdwg.mxu0
    %v6009 = vsel %vm77, %v5592, 0
    %v6012 = vsel %vm77, %v5594, 0
    %6014 = vmatprep.subr.mxu0 0.0
    %6015 = vmatpush1.msra.mxu0 0.0
    %6016 = vmatprep.subr.mxu0 0.0
    %6017 = vmatpush1.msra.mxu0 0.0
    %6018 = vmatprep.subr.mxu0 0.0
    %6019 = vmatpush1.msra.mxu0 0.0
    %6020 = vmatprep.subr.mxu0 0.0
    %6021 = vmatpush1.msra.mxu0 0.0
    %6022 = vmatprep.subr.mxu0 0.0
    %6023 = vmatpush1.msra.mxu0 0.0
    %6024 = vmatprep.subr.mxu0 0.0
    %6025 = vmatpush1.msra.mxu0 0.0
    %6026 = vmatprep.subr.mxu0 0.0
    %6027 = vmatpush1.msra.mxu0 0.0
    %6028 = vmatprep.subr.mxu0 0.0
    %6029 = vmatpush1.msra.mxu0 0.0
    %6030 = vmatprep.subr.mxu0 0.0
    %6031 = vmatpush1.msra.mxu0 0.0
    %6032 = vmatprep.subr.mxu0 0.0
    %6033 = vmatpush1.msra.mxu0 0.0
    %6034 = vmatprep.subr.mxu0 0.0
    %6035 = vmatpush1.msra.mxu0 0.0
    %6036 = vmatprep.subr.mxu0 0.0
    %6037 = vmatpush1.msra.mxu0 0.0
    %6038 = vmatprep.subr.mxu0 0.0
    %6039 = vmatpush1.msra.mxu0 0.0
    %6040 = vmatprep.subr.mxu0 0.0
    %6041 = vmatpush1.msra.mxu0 0.0
    %6042 = vmatprep.subr.mxu0 0.0
    %6043 = vmatpush1.msra.mxu0 %v4790
    %6044 = vmatprep.subr.mxu0 0.0
    %6045 = vmatpush1.msra.mxu0 %v4785
    %6046 = vmatprep.subr.mxu0 0.0
    %6047 = vmatpush2.msra.mxu0 0.0
    %6048 = vmatprep.subr.mxu0 0.0
    %6049 = vmatpush2.msra.mxu0 0.0
    %6050 = vmatprep.subr.mxu0 0.0
    %6051 = vmatpush2.msra.mxu0 0.0
    %6052 = vmatprep.subr.mxu0 0.0
    %6053 = vmatpush2.msra.mxu0 0.0
    %6054 = vmatprep.subr.mxu0 0.0
    %6055 = vmatpush2.msra.mxu0 0.0
    %6056 = vmatprep.subr.mxu0 0.0
    %6057 = vmatpush2.msra.mxu0 0.0
    %6058 = vmatprep.subr.mxu0 0.0
    %6059 = vmatpush2.msra.mxu0 0.0
    %6060 = vmatprep.subr.mxu0 0.0
    %6061 = vmatpush2.msra.mxu0 0.0
    %6062 = vmatprep.subr.mxu0 0.0
    %6063 = vmatpush2.msra.mxu0 0.0
    %6064 = vmatprep.subr.mxu0 0.0
    %6065 = vmatpush2.msra.mxu0 0.0
    %6066 = vmatprep.subr.mxu0 0.0
    %6067 = vmatpush2.msra.mxu0 0.0
    %6068 = vmatprep.subr.mxu0 0.0
    %6069 = vmatpush2.msra.mxu0 0.0
    %6070 = vmatprep.subr.mxu0 0.0
    %6071 = vmatpush2.msra.mxu0 0.0
    %6072 = vmatprep.subr.mxu0 0.0
    %6073 = vmatpush2.msra.mxu0 0.0
    %6074 = vmatprep.subr.mxu0 0.0
    %6075 = vmatpush2.msra.mxu0 0.0
    %6076 = vmatprep.subr.mxu0 0.0
    %6077 = vmatpush2.msra.mxu0 0.0
    %6078 = vmatprep.mubr.f32.mxu0 0.0
    %6079 = vmatmul.mubr.f32.gmra.mxu0 %v6009
    %v6080 = vpop.f32.mrf.mxu0
    %v6081 = vadd.f32 0.0, %v6080
    %v6082 = vpop.f32.mrf.mxu0
    %6083 = vmatprep.mubr.f32.mxu0 0.0
    %6084 = vmatmul.mubr.f32.gmra.mxu0 %v6012
    %v6085 = vpop.f32.mrf.mxu0
    %v6086 = vadd.f32 0.0, %v6085
    %v6087 = vpop.f32.mrf.mxu0
    %6088 = vdwg.mxu0
    %v6090 = vsel %vm77, %v5596, 0
    %v6093 = vsel %vm77, %v5598, 0
    %6095 = vmatprep.subr.mxu0 0.0
    %6096 = vmatpush1.msra.mxu0 0.0
    %6097 = vmatprep.subr.mxu0 0.0
    %6098 = vmatpush1.msra.mxu0 0.0
    %6099 = vmatprep.subr.mxu0 0.0
    %6100 = vmatpush1.msra.mxu0 0.0
    %6101 = vmatprep.subr.mxu0 0.0
    %6102 = vmatpush1.msra.mxu0 0.0
    %6103 = vmatprep.subr.mxu0 0.0
    %6104 = vmatpush1.msra.mxu0 0.0
    %6105 = vmatprep.subr.mxu0 0.0
    %6106 = vmatpush1.msra.mxu0 0.0
    %6107 = vmatprep.subr.mxu0 0.0
    %6108 = vmatpush1.msra.mxu0 0.0
    %6109 = vmatprep.subr.mxu0 0.0
    %6110 = vmatpush1.msra.mxu0 0.0
    %6111 = vmatprep.subr.mxu0 0.0
    %6112 = vmatpush1.msra.mxu0 0.0
    %6113 = vmatprep.subr.mxu0 0.0
    %6114 = vmatpush1.msra.mxu0 0.0
    %6115 = vmatprep.subr.mxu0 0.0
    %6116 = vmatpush1.msra.mxu0 0.0
    %6117 = vmatprep.subr.mxu0 0.0
    %6118 = vmatpush1.msra.mxu0 0.0
    %6119 = vmatprep.subr.mxu0 0.0
    %6120 = vmatpush1.msra.mxu0 0.0
    %6121 = vmatprep.subr.mxu0 0.0
    %6122 = vmatpush1.msra.mxu0 0.0
    %6123 = vmatprep.subr.mxu0 0.0
    %6124 = vmatpush1.msra.mxu0 %v5224
    %6125 = vmatprep.subr.mxu0 0.0
    %6126 = vmatpush1.msra.mxu0 %v5219
    %6127 = vmatprep.subr.mxu0 0.0
    %6128 = vmatpush2.msra.mxu0 0.0
    %6129 = vmatprep.subr.mxu0 0.0
    %6130 = vmatpush2.msra.mxu0 0.0
    %6131 = vmatprep.subr.mxu0 0.0
    %6132 = vmatpush2.msra.mxu0 0.0
    %6133 = vmatprep.subr.mxu0 0.0
    %6134 = vmatpush2.msra.mxu0 0.0
    %6135 = vmatprep.subr.mxu0 0.0
    %6136 = vmatpush2.msra.mxu0 0.0
    %6137 = vmatprep.subr.mxu0 0.0
    %6138 = vmatpush2.msra.mxu0 0.0
    %6139 = vmatprep.subr.mxu0 0.0
    %6140 = vmatpush2.msra.mxu0 0.0
    %6141 = vmatprep.subr.mxu0 0.0
    %6142 = vmatpush2.msra.mxu0 0.0
    %6143 = vmatprep.subr.mxu0 0.0
    %6144 = vmatpush2.msra.mxu0 0.0
    %6145 = vmatprep.subr.mxu0 0.0
    %6146 = vmatpush2.msra.mxu0 0.0
    %6147 = vmatprep.subr.mxu0 0.0
    %6148 = vmatpush2.msra.mxu0 0.0
    %6149 = vmatprep.subr.mxu0 0.0
    %6150 = vmatpush2.msra.mxu0 0.0
    %6151 = vmatprep.subr.mxu0 0.0
    %6152 = vmatpush2.msra.mxu0 0.0
    %6153 = vmatprep.subr.mxu0 0.0
    %6154 = vmatpush2.msra.mxu0 0.0
    %6155 = vmatprep.subr.mxu0 0.0
    %6156 = vmatpush2.msra.mxu0 0.0
    %6157 = vmatprep.subr.mxu0 0.0
    %6158 = vmatpush2.msra.mxu0 0.0
    %6159 = vmatprep.mubr.f32.mxu0 0.0
    %6160 = vmatmul.mubr.f32.gmra.mxu0 %v6090
    %v6161 = vpop.f32.mrf.mxu0
    %v6162 = vadd.f32 0.0, %v6161
    %v6163 = vpop.f32.mrf.mxu0
    %6164 = vmatprep.mubr.f32.mxu0 0.0
    %6165 = vmatmul.mubr.f32.gmra.mxu0 %v6093
    %v6166 = vpop.f32.mrf.mxu0
    %v6167 = vadd.f32 0.0, %v6166
    %v6168 = vpop.f32.mrf.mxu0
    %6169 = vdwg.mxu0
    %v6171 = vsel %vm77, %v5600, 0
    %v6174 = vsel %vm77, %v5602, 0
    %6176 = vmatprep.subr.mxu0 0.0
    %6177 = vmatpush1.msra.mxu0 0.0
    %6178 = vmatprep.subr.mxu0 0.0
    %6179 = vmatpush1.msra.mxu0 0.0
    %6180 = vmatprep.subr.mxu0 0.0
    %6181 = vmatpush1.msra.mxu0 0.0
    %6182 = vmatprep.subr.mxu0 0.0
    %6183 = vmatpush1.msra.mxu0 0.0
    %6184 = vmatprep.subr.mxu0 0.0
    %6185 = vmatpush1.msra.mxu0 0.0
    %6186 = vmatprep.subr.mxu0 0.0
    %6187 = vmatpush1.msra.mxu0 0.0
    %6188 = vmatprep.subr.mxu0 0.0
    %6189 = vmatpush1.msra.mxu0 0.0
    %6190 = vmatprep.subr.mxu0 0.0
    %6191 = vmatpush1.msra.mxu0 0.0
    %6192 = vmatprep.subr.mxu0 0.0
    %6193 = vmatpush1.msra.mxu0 0.0
    %6194 = vmatprep.subr.mxu0 0.0
    %6195 = vmatpush1.msra.mxu0 0.0
    %6196 = vmatprep.subr.mxu0 0.0
    %6197 = vmatpush1.msra.mxu0 0.0
    %6198 = vmatprep.subr.mxu0 0.0
    %6199 = vmatpush1.msra.mxu0 0.0
    %6200 = vmatprep.subr.mxu0 0.0
    %6201 = vmatpush1.msra.mxu0 0.0
    %6202 = vmatprep.subr.mxu0 0.0
    %6203 = vmatpush1.msra.mxu0 0.0
    %6204 = vmatprep.subr.mxu0 0.0
    %6205 = vmatpush1.msra.mxu0 %v5234
    %6206 = vmatprep.subr.mxu0 0.0
    %6207 = vmatpush1.msra.mxu0 %v5229
    %6208 = vmatprep.subr.mxu0 0.0
    %6209 = vmatpush2.msra.mxu0 0.0
    %6210 = vmatprep.subr.mxu0 0.0
    %6211 = vmatpush2.msra.mxu0 0.0
    %6212 = vmatprep.subr.mxu0 0.0
    %6213 = vmatpush2.msra.mxu0 0.0
    %6214 = vmatprep.subr.mxu0 0.0
    %6215 = vmatpush2.msra.mxu0 0.0
    %6216 = vmatprep.subr.mxu0 0.0
    %6217 = vmatpush2.msra.mxu0 0.0
    %6218 = vmatprep.subr.mxu0 0.0
    %6219 = vmatpush2.msra.mxu0 0.0
    %6220 = vmatprep.subr.mxu0 0.0
    %6221 = vmatpush2.msra.mxu0 0.0
    %6222 = vmatprep.subr.mxu0 0.0
    %6223 = vmatpush2.msra.mxu0 0.0
    %6224 = vmatprep.subr.mxu0 0.0
    %6225 = vmatpush2.msra.mxu0 0.0
    %6226 = vmatprep.subr.mxu0 0.0
    %6227 = vmatpush2.msra.mxu0 0.0
    %6228 = vmatprep.subr.mxu0 0.0
    %6229 = vmatpush2.msra.mxu0 0.0
    %6230 = vmatprep.subr.mxu0 0.0
    %6231 = vmatpush2.msra.mxu0 0.0
    %6232 = vmatprep.subr.mxu0 0.0
    %6233 = vmatpush2.msra.mxu0 0.0
    %6234 = vmatprep.subr.mxu0 0.0
    %6235 = vmatpush2.msra.mxu0 0.0
    %6236 = vmatprep.subr.mxu0 0.0
    %6237 = vmatpush2.msra.mxu0 0.0
    %6238 = vmatprep.subr.mxu0 0.0
    %6239 = vmatpush2.msra.mxu0 0.0
    %6240 = vmatprep.mubr.f32.mxu0 0.0
    %6241 = vmatmul.mubr.f32.gmra.mxu0 %v6171
    %v6242 = vpop.f32.mrf.mxu0
    %v6243 = vadd.f32 0.0, %v6242
    %v6244 = vpop.f32.mrf.mxu0
    %6245 = vmatprep.mubr.f32.mxu0 0.0
    %6246 = vmatmul.mubr.f32.gmra.mxu0 %v6174
    %v6247 = vpop.f32.mrf.mxu0
    %v6248 = vadd.f32 0.0, %v6247
    %v6249 = vpop.f32.mrf.mxu0
    %6250 = vdwg.mxu0
    %s6251 = scalar_lea.vmem %s12, 32
    %v6252 = vld [vmem:[%s6251] sm:$0xff]
    %s6253 = scalar_lea.vmem %s12, 40
    %v6254 = vld [vmem:[%s6253] sm:$0xff]
    %v6256 = vsel %vm567, %v5838, 0
    %v6259 = vsel %vm567, %v5843, 0
    %v6262 = vsel %vm567, %v5919, 0
    %v6265 = vsel %vm567, %v5924, 0
    %6267 = vmatprep.subr.mxu0 0.0
    %6268 = vmatpush1.msra.mxu0 0.0
    %6269 = vmatprep.subr.mxu0 0.0
    %6270 = vmatpush1.msra.mxu0 0.0
    %6271 = vmatprep.subr.mxu0 0.0
    %6272 = vmatpush1.msra.mxu0 0.0
    %6273 = vmatprep.subr.mxu0 0.0
    %6274 = vmatpush1.msra.mxu0 0.0
    %6275 = vmatprep.subr.mxu0 0.0
    %6276 = vmatpush1.msra.mxu0 0.0
    %6277 = vmatprep.subr.mxu0 0.0
    %6278 = vmatpush1.msra.mxu0 0.0
    %6279 = vmatprep.subr.mxu0 0.0
    %6280 = vmatpush1.msra.mxu0 0.0
    %6281 = vmatprep.subr.mxu0 0.0
    %6282 = vmatpush1.msra.mxu0 0.0
    %6283 = vmatprep.subr.mxu0 0.0
    %6284 = vmatpush1.msra.mxu0 0.0
    %6285 = vmatprep.subr.mxu0 0.0
    %6286 = vmatpush1.msra.mxu0 0.0
    %6287 = vmatprep.subr.mxu0 0.0
    %6288 = vmatpush1.msra.mxu0 0.0
    %6289 = vmatprep.subr.mxu0 0.0
    %6290 = vmatpush1.msra.mxu0 0.0
    %6291 = vmatprep.subr.mxu0 0.0
    %6292 = vmatpush1.msra.mxu0 0.0
    %6293 = vmatprep.subr.mxu0 0.0
    %6294 = vmatpush1.msra.mxu0 0.0
    %6295 = vmatprep.subr.mxu0 0.0
    %6296 = vmatpush1.msra.mxu0 0.0
    %6297 = vmatprep.subr.mxu0 0.0
    %6298 = vmatpush1.msra.mxu0 %v6254
    %6299 = vmatprep.subr.mxu0 0.0
    %6300 = vmatpush2.msra.mxu0 0.0
    %6301 = vmatprep.subr.mxu0 0.0
    %6302 = vmatpush2.msra.mxu0 0.0
    %6303 = vmatprep.subr.mxu0 0.0
    %6304 = vmatpush2.msra.mxu0 0.0
    %6305 = vmatprep.subr.mxu0 0.0
    %6306 = vmatpush2.msra.mxu0 0.0
    %6307 = vmatprep.subr.mxu0 0.0
    %6308 = vmatpush2.msra.mxu0 0.0
    %6309 = vmatprep.subr.mxu0 0.0
    %6310 = vmatpush2.msra.mxu0 0.0
    %6311 = vmatprep.subr.mxu0 0.0
    %6312 = vmatpush2.msra.mxu0 0.0
    %6313 = vmatprep.subr.mxu0 0.0
    %6314 = vmatpush2.msra.mxu0 0.0
    %6315 = vmatprep.subr.mxu0 0.0
    %6316 = vmatpush2.msra.mxu0 0.0
    %6317 = vmatprep.subr.mxu0 0.0
    %6318 = vmatpush2.msra.mxu0 0.0
    %6319 = vmatprep.subr.mxu0 0.0
    %6320 = vmatpush2.msra.mxu0 0.0
    %6321 = vmatprep.subr.mxu0 0.0
    %6322 = vmatpush2.msra.mxu0 0.0
    %6323 = vmatprep.subr.mxu0 0.0
    %6324 = vmatpush2.msra.mxu0 0.0
    %6325 = vmatprep.subr.mxu0 0.0
    %6326 = vmatpush2.msra.mxu0 0.0
    %6327 = vmatprep.subr.mxu0 0.0
    %6328 = vmatpush2.msra.mxu0 0.0
    %6329 = vmatprep.subr.mxu0 0.0
    %6330 = vmatpush2.msra.mxu0 0.0
    %6331 = vmatprep.mubr.f32.mxu0 0.0
    %6332 = vmatmul.mubr.f32.gmra.mxu0 %v6256
    %v6333 = vpop.f32.mrf.mxu0
    %v6334 = vadd.f32 0.0, %v6333
    %v6335 = vpop.f32.mrf.mxu0
    %6336 = vmatprep.mubr.f32.mxu0 0.0
    %6337 = vmatmul.mubr.f32.gmra.mxu0 %v6259
    %v6338 = vpop.f32.mrf.mxu0
    %v6339 = vadd.f32 0.0, %v6338
    %v6340 = vpop.f32.mrf.mxu0
    %6341 = vmatprep.mubr.f32.mxu0 0.0
    %6342 = vmatmul.mubr.f32.gmra.mxu0 %v6262
    %v6343 = vpop.f32.mrf.mxu0
    %v6344 = vadd.f32 0.0, %v6343
    %v6345 = vpop.f32.mrf.mxu0
    %6346 = vmatprep.mubr.f32.mxu0 0.0
    %6347 = vmatmul.mubr.f32.gmra.mxu0 %v6265
    %v6348 = vpop.f32.mrf.mxu0
    %v6349 = vadd.f32 0.0, %v6348
    %v6350 = vpop.f32.mrf.mxu0
    %6351 = vdwg.mxu0
    %v6353 = vsel %vm567, %v5676, 0
    %v6356 = vsel %vm567, %v5681, 0
    %v6359 = vsel %vm567, %v5757, 0
    %v6362 = vsel %vm567, %v5762, 0
    %6364 = vmatprep.subr.mxu0 0.0
    %6365 = vmatpush1.msra.mxu0 0.0
    %6366 = vmatprep.subr.mxu0 0.0
    %6367 = vmatpush1.msra.mxu0 0.0
    %6368 = vmatprep.subr.mxu0 0.0
    %6369 = vmatpush1.msra.mxu0 0.0
    %6370 = vmatprep.subr.mxu0 0.0
    %6371 = vmatpush1.msra.mxu0 0.0
    %6372 = vmatprep.subr.mxu0 0.0
    %6373 = vmatpush1.msra.mxu0 0.0
    %6374 = vmatprep.subr.mxu0 0.0
    %6375 = vmatpush1.msra.mxu0 0.0
    %6376 = vmatprep.subr.mxu0 0.0
    %6377 = vmatpush1.msra.mxu0 0.0
    %6378 = vmatprep.subr.mxu0 0.0
    %6379 = vmatpush1.msra.mxu0 0.0
    %6380 = vmatprep.subr.mxu0 0.0
    %6381 = vmatpush1.msra.mxu0 0.0
    %6382 = vmatprep.subr.mxu0 0.0
    %6383 = vmatpush1.msra.mxu0 0.0
    %6384 = vmatprep.subr.mxu0 0.0
    %6385 = vmatpush1.msra.mxu0 0.0
    %6386 = vmatprep.subr.mxu0 0.0
    %6387 = vmatpush1.msra.mxu0 0.0
    %6388 = vmatprep.subr.mxu0 0.0
    %6389 = vmatpush1.msra.mxu0 0.0
    %6390 = vmatprep.subr.mxu0 0.0
    %6391 = vmatpush1.msra.mxu0 0.0
    %6392 = vmatprep.subr.mxu0 0.0
    %6393 = vmatpush1.msra.mxu0 0.0
    %6394 = vmatprep.subr.mxu0 0.0
    %6395 = vmatpush1.msra.mxu0 %v6252
    %6396 = vmatprep.subr.mxu0 0.0
    %6397 = vmatpush2.msra.mxu0 0.0
    %6398 = vmatprep.subr.mxu0 0.0
    %6399 = vmatpush2.msra.mxu0 0.0
    %6400 = vmatprep.subr.mxu0 0.0
    %6401 = vmatpush2.msra.mxu0 0.0
    %6402 = vmatprep.subr.mxu0 0.0
    %6403 = vmatpush2.msra.mxu0 0.0
    %6404 = vmatprep.subr.mxu0 0.0
    %6405 = vmatpush2.msra.mxu0 0.0
    %6406 = vmatprep.subr.mxu0 0.0
    %6407 = vmatpush2.msra.mxu0 0.0
    %6408 = vmatprep.subr.mxu0 0.0
    %6409 = vmatpush2.msra.mxu0 0.0
    %6410 = vmatprep.subr.mxu0 0.0
    %6411 = vmatpush2.msra.mxu0 0.0
    %6412 = vmatprep.subr.mxu0 0.0
    %6413 = vmatpush2.msra.mxu0 0.0
    %6414 = vmatprep.subr.mxu0 0.0
    %6415 = vmatpush2.msra.mxu0 0.0
    %6416 = vmatprep.subr.mxu0 0.0
    %6417 = vmatpush2.msra.mxu0 0.0
    %6418 = vmatprep.subr.mxu0 0.0
    %6419 = vmatpush2.msra.mxu0 0.0
    %6420 = vmatprep.subr.mxu0 0.0
    %6421 = vmatpush2.msra.mxu0 0.0
    %6422 = vmatprep.subr.mxu0 0.0
    %6423 = vmatpush2.msra.mxu0 0.0
    %6424 = vmatprep.subr.mxu0 0.0
    %6425 = vmatpush2.msra.mxu0 0.0
    %6426 = vmatprep.subr.mxu0 0.0
    %6427 = vmatpush2.msra.mxu0 0.0
    %6428 = vmatprep.mubr.f32.mxu0 0.0
    %6429 = vmatmul.mubr.f32.gmra.mxu0 %v6353
    %v6430 = vpop.f32.mrf.mxu0
    %v6431 = vadd.f32 %v6334, %v6430
    %v6432 = vpop.f32.mrf.mxu0
    %6433 = vmatprep.mubr.f32.mxu0 0.0
    %6434 = vmatmul.mubr.f32.gmra.mxu0 %v6356
    %v6435 = vpop.f32.mrf.mxu0
    %v6436 = vadd.f32 %v6339, %v6435
    %v6437 = vpop.f32.mrf.mxu0
    %6438 = vmatprep.mubr.f32.mxu0 0.0
    %6439 = vmatmul.mubr.f32.gmra.mxu0 %v6359
    %v6440 = vpop.f32.mrf.mxu0
    %v6441 = vadd.f32 %v6344, %v6440
    %v6442 = vpop.f32.mrf.mxu0
    %6443 = vmatprep.mubr.f32.mxu0 0.0
    %6444 = vmatmul.mubr.f32.gmra.mxu0 %v6362
    %v6445 = vpop.f32.mrf.mxu0
    %v6446 = vadd.f32 %v6349, %v6445
    %v6447 = vpop.f32.mrf.mxu0
    %6448 = vdwg.mxu0
    %s6449 = scalar_lea.vmem %s12, 48
    %v6450 = vld [vmem:[%s6449] sm:$0xff]
    %v6452 = vsel %vm567, %v6000, 0
    %v6455 = vsel %vm567, %v6005, 0
    %v6458 = vsel %vm567, %v6081, 0
    %v6461 = vsel %vm567, %v6086, 0
    %6463 = vmatprep.subr.mxu0 0.0
    %6464 = vmatpush1.msra.mxu0 0.0
    %6465 = vmatprep.subr.mxu0 0.0
    %6466 = vmatpush1.msra.mxu0 0.0
    %6467 = vmatprep.subr.mxu0 0.0
    %6468 = vmatpush1.msra.mxu0 0.0
    %6469 = vmatprep.subr.mxu0 0.0
    %6470 = vmatpush1.msra.mxu0 0.0
    %6471 = vmatprep.subr.mxu0 0.0
    %6472 = vmatpush1.msra.mxu0 0.0
    %6473 = vmatprep.subr.mxu0 0.0
    %6474 = vmatpush1.msra.mxu0 0.0
    %6475 = vmatprep.subr.mxu0 0.0
    %6476 = vmatpush1.msra.mxu0 0.0
    %6477 = vmatprep.subr.mxu0 0.0
    %6478 = vmatpush1.msra.mxu0 0.0
    %6479 = vmatprep.subr.mxu0 0.0
    %6480 = vmatpush1.msra.mxu0 0.0
    %6481 = vmatprep.subr.mxu0 0.0
    %6482 = vmatpush1.msra.mxu0 0.0
    %6483 = vmatprep.subr.mxu0 0.0
    %6484 = vmatpush1.msra.mxu0 0.0
    %6485 = vmatprep.subr.mxu0 0.0
    %6486 = vmatpush1.msra.mxu0 0.0
    %6487 = vmatprep.subr.mxu0 0.0
    %6488 = vmatpush1.msra.mxu0 0.0
    %6489 = vmatprep.subr.mxu0 0.0
    %6490 = vmatpush1.msra.mxu0 0.0
    %6491 = vmatprep.subr.mxu0 0.0
    %6492 = vmatpush1.msra.mxu0 0.0
    %6493 = vmatprep.subr.mxu0 0.0
    %6494 = vmatpush1.msra.mxu0 %v6450
    %6495 = vmatprep.subr.mxu0 0.0
    %6496 = vmatpush2.msra.mxu0 0.0
    %6497 = vmatprep.subr.mxu0 0.0
    %6498 = vmatpush2.msra.mxu0 0.0
    %6499 = vmatprep.subr.mxu0 0.0
    %6500 = vmatpush2.msra.mxu0 0.0
    %6501 = vmatprep.subr.mxu0 0.0
    %6502 = vmatpush2.msra.mxu0 0.0
    %6503 = vmatprep.subr.mxu0 0.0
    %6504 = vmatpush2.msra.mxu0 0.0
    %6505 = vmatprep.subr.mxu0 0.0
    %6506 = vmatpush2.msra.mxu0 0.0
    %6507 = vmatprep.subr.mxu0 0.0
    %6508 = vmatpush2.msra.mxu0 0.0
    %6509 = vmatprep.subr.mxu0 0.0
    %6510 = vmatpush2.msra.mxu0 0.0
    %6511 = vmatprep.subr.mxu0 0.0
    %6512 = vmatpush2.msra.mxu0 0.0
    %6513 = vmatprep.subr.mxu0 0.0
    %6514 = vmatpush2.msra.mxu0 0.0
    %6515 = vmatprep.subr.mxu0 0.0
    %6516 = vmatpush2.msra.mxu0 0.0
    %6517 = vmatprep.subr.mxu0 0.0
    %6518 = vmatpush2.msra.mxu0 0.0
    %6519 = vmatprep.subr.mxu0 0.0
    %6520 = vmatpush2.msra.mxu0 0.0
    %6521 = vmatprep.subr.mxu0 0.0
    %6522 = vmatpush2.msra.mxu0 0.0
    %6523 = vmatprep.subr.mxu0 0.0
    %6524 = vmatpush2.msra.mxu0 0.0
    %6525 = vmatprep.subr.mxu0 0.0
    %6526 = vmatpush2.msra.mxu0 0.0
    %6527 = vmatprep.mubr.f32.mxu0 0.0
    %6528 = vmatmul.mubr.f32.gmra.mxu0 %v6452
    %v6529 = vpop.f32.mrf.mxu0
    %v6530 = vadd.f32 0.0, %v6529
    %v6531 = vpop.f32.mrf.mxu0
    %6532 = vmatprep.mubr.f32.mxu0 0.0
    %6533 = vmatmul.mubr.f32.gmra.mxu0 %v6455
    %v6534 = vpop.f32.mrf.mxu0
    %v6535 = vadd.f32 0.0, %v6534
    %v6536 = vpop.f32.mrf.mxu0
    %6537 = vmatprep.mubr.f32.mxu0 0.0
    %6538 = vmatmul.mubr.f32.gmra.mxu0 %v6458
    %v6539 = vpop.f32.mrf.mxu0
    %v6540 = vadd.f32 0.0, %v6539
    %v6541 = vpop.f32.mrf.mxu0
    %6542 = vmatprep.mubr.f32.mxu0 0.0
    %6543 = vmatmul.mubr.f32.gmra.mxu0 %v6461
    %v6544 = vpop.f32.mrf.mxu0
    %v6545 = vadd.f32 0.0, %v6544
    %v6546 = vpop.f32.mrf.mxu0
    %6547 = vdwg.mxu0
    %v6548 = vadd.f32 %v6431, %v6530
    %v6549 = vadd.f32 %v6436, %v6535
    %v6550 = vadd.f32 %v6441, %v6540
    %v6551 = vadd.f32 %v6446, %v6545
    %s6552 = scalar_lea.vmem %s12, 56
    %v6553 = vld [vmem:[%s6552] sm:$0xff]
    %v6555 = vsel %vm567, %v6162, 0
    %v6558 = vsel %vm567, %v6167, 0
    %v6561 = vsel %vm567, %v6243, 0
    %v6564 = vsel %vm567, %v6248, 0
    %6566 = vmatprep.subr.mxu0 0.0
    %6567 = vmatpush1.msra.mxu0 0.0
    %6568 = vmatprep.subr.mxu0 0.0
    %6569 = vmatpush1.msra.mxu0 0.0
    %6570 = vmatprep.subr.mxu0 0.0
    %6571 = vmatpush1.msra.mxu0 0.0
    %6572 = vmatprep.subr.mxu0 0.0
    %6573 = vmatpush1.msra.mxu0 0.0
    %6574 = vmatprep.subr.mxu0 0.0
    %6575 = vmatpush1.msra.mxu0 0.0
    %6576 = vmatprep.subr.mxu0 0.0
    %6577 = vmatpush1.msra.mxu0 0.0
    %6578 = vmatprep.subr.mxu0 0.0
    %6579 = vmatpush1.msra.mxu0 0.0
    %6580 = vmatprep.subr.mxu0 0.0
    %6581 = vmatpush1.msra.mxu0 0.0
    %6582 = vmatprep.subr.mxu0 0.0
    %6583 = vmatpush1.msra.mxu0 0.0
    %6584 = vmatprep.subr.mxu0 0.0
    %6585 = vmatpush1.msra.mxu0 0.0
    %6586 = vmatprep.subr.mxu0 0.0
    %6587 = vmatpush1.msra.mxu0 0.0
    %6588 = vmatprep.subr.mxu0 0.0
    %6589 = vmatpush1.msra.mxu0 0.0
    %6590 = vmatprep.subr.mxu0 0.0
    %6591 = vmatpush1.msra.mxu0 0.0
    %6592 = vmatprep.subr.mxu0 0.0
    %6593 = vmatpush1.msra.mxu0 0.0
    %6594 = vmatprep.subr.mxu0 0.0
    %6595 = vmatpush1.msra.mxu0 0.0
    %6596 = vmatprep.subr.mxu0 0.0
    %6597 = vmatpush1.msra.mxu0 %v6553
    %6598 = vmatprep.subr.mxu0 0.0
    %6599 = vmatpush2.msra.mxu0 0.0
    %6600 = vmatprep.subr.mxu0 0.0
    %6601 = vmatpush2.msra.mxu0 0.0
    %6602 = vmatprep.subr.mxu0 0.0
    %6603 = vmatpush2.msra.mxu0 0.0
    %6604 = vmatprep.subr.mxu0 0.0
    %6605 = vmatpush2.msra.mxu0 0.0
    %6606 = vmatprep.subr.mxu0 0.0
    %6607 = vmatpush2.msra.mxu0 0.0
    %6608 = vmatprep.subr.mxu0 0.0
    %6609 = vmatpush2.msra.mxu0 0.0
    %6610 = vmatprep.subr.mxu0 0.0
    %6611 = vmatpush2.msra.mxu0 0.0
    %6612 = vmatprep.subr.mxu0 0.0
    %6613 = vmatpush2.msra.mxu0 0.0
    %6614 = vmatprep.subr.mxu0 0.0
    %6615 = vmatpush2.msra.mxu0 0.0
    %6616 = vmatprep.subr.mxu0 0.0
    %6617 = vmatpush2.msra.mxu0 0.0
    %6618 = vmatprep.subr.mxu0 0.0
    %6619 = vmatpush2.msra.mxu0 0.0
    %6620 = vmatprep.subr.mxu0 0.0
    %6621 = vmatpush2.msra.mxu0 0.0
    %6622 = vmatprep.subr.mxu0 0.0
    %6623 = vmatpush2.msra.mxu0 0.0
    %6624 = vmatprep.subr.mxu0 0.0
    %6625 = vmatpush2.msra.mxu0 0.0
    %6626 = vmatprep.subr.mxu0 0.0
    %6627 = vmatpush2.msra.mxu0 0.0
    %6628 = vmatprep.subr.mxu0 0.0
    %6629 = vmatpush2.msra.mxu0 0.0
    %6630 = vmatprep.mubr.f32.mxu0 0.0
    %6631 = vmatmul.mubr.f32.gmra.mxu0 %v6555
    %v6632 = vpop.f32.mrf.mxu0
    %v6633 = vadd.f32 0.0, %v6632
    %v6634 = vpop.f32.mrf.mxu0
    %6635 = vmatprep.mubr.f32.mxu0 0.0
    %6636 = vmatmul.mubr.f32.gmra.mxu0 %v6558
    %v6637 = vpop.f32.mrf.mxu0
    %v6638 = vadd.f32 0.0, %v6637
    %v6639 = vpop.f32.mrf.mxu0
    %6640 = vmatprep.mubr.f32.mxu0 0.0
    %6641 = vmatmul.mubr.f32.gmra.mxu0 %v6561
    %v6642 = vpop.f32.mrf.mxu0
    %v6643 = vadd.f32 0.0, %v6642
    %v6644 = vpop.f32.mrf.mxu0
    %6645 = vmatprep.mubr.f32.mxu0 0.0
    %6646 = vmatmul.mubr.f32.gmra.mxu0 %v6564
    %v6647 = vpop.f32.mrf.mxu0
    %v6648 = vadd.f32 0.0, %v6647
    %v6649 = vpop.f32.mrf.mxu0
    %6650 = vdwg.mxu0
    %v6651 = vadd.f32 %v6548, %v6633
    %v6652 = vadd.f32 %v6549, %v6638
    %v6653 = vadd.f32 %v6550, %v6643
    %v6654 = vadd.f32 %v6551, %v6648
    %v6655 = vadd.f32 %v3575, %v6651
    %v6656 = vadd.f32 %v3576, %v6652
    %v6657 = vadd.f32 %v3577, %v6653
    %v6658 = vadd.f32 %v3578, %v6654
    %s6659 = scalar_lea.vmem %s13, 1
    %v6660 = vld [vmem:[%s6659] sm:$0x1]
    %v6661 = vmul.f32 %v6655, %v6655
    %v6662 = vmul.f32 %v6656, %v6656
    %v6663 = vmul.f32 %v6657, %v6657
    %v6664 = vmul.f32 %v6658, %v6658
    %v6665 = vsel %vm248, %v6661, 0.0
    %6666 = vadd.xlane.f32.xlu0 %v6665
    %v6667 = vpop.xlane.xlu0 %6666
    %v6668 = vsel %vm248, %v6662, 0.0
    %6669 = vadd.xlane.f32.xlu0 %v6668
    %v6670 = vpop.xlane.xlu0 %6669
    %v6671 = vsel %vm248, %v6663, 0.0
    %6672 = vadd.xlane.f32.xlu0 %v6671
    %v6673 = vpop.xlane.xlu0 %6672
    %v6674 = vsel %vm248, %v6664, 0.0
    %6675 = vadd.xlane.f32.xlu0 %v6674
    %v6676 = vpop.xlane.xlu0 %6675
    %v6677 = vmul.f32 %v6667, %v261
    %v6678 = vmul.f32 %v6670, %v261
    %v6679 = vmul.f32 %v6673, %v261
    %v6680 = vmul.f32 %v6676, %v261
    %v6681 = vadd.f32 %v6677, 1e-06
    %v6682 = vadd.f32 %v6678, 1e-06
    %v6683 = vadd.f32 %v6679, 1e-06
    %v6684 = vadd.f32 %v6680, 1e-06
    %v6685 = vrsqrt.pop %v6681
    %v6686 = vrsqrt.pop %v6682
    %v6687 = vrsqrt.pop %v6683
    %v6688 = vrsqrt.pop %v6684
    %v6689 = vmul.f32 %v6655, %v6685
    %v6690 = vmul.f32 %v6656, %v6686
    %v6691 = vmul.f32 %v6657, %v6687
    %v6692 = vmul.f32 %v6658, %v6688
    %v6694 = vlaneseq
    %v6695 = vshrl.u32 %v6694, 7
    %v6696 = vsub.s32 0, %v6695
    %v6697 = vrot.slane %v6660, %v6696
    %v6699 = vmul.f32 %v6689, %v6697
    %v6700 = vmul.f32 %v6690, %v6697
    %v6701 = vmul.f32 %v6691, %v6697
    %v6702 = vmul.f32 %v6692, %v6697
    %s6703 = scalar_lea.vmem %s14, 32
    %v6704 = vld [vmem:[%s6703] sm:$0xff]
    %v6705 = vld [vmem:[%s6703 + $0x8] sm:$0xff]
    %v6706 = vld [vmem:[%s6703 + $0x10] sm:$0xff]
    %v6707 = vld [vmem:[%s6703 + $0x18] sm:$0xff]
    %v6709 = vsel %vm248, %v6699, 0
    %v6712 = vsel %vm248, %v6700, 0
    %v6715 = vsel %vm248, %v6701, 0
    %v6718 = vsel %vm248, %v6702, 0
    %6720 = vmatprep.subr.mxu0 0.0
    %6721 = vmatpush1.msra.mxu0 0.0
    %6722 = vmatprep.subr.mxu0 0.0
    %6723 = vmatpush1.msra.mxu0 0.0
    %6724 = vmatprep.subr.mxu0 0.0
    %6725 = vmatpush1.msra.mxu0 0.0
    %6726 = vmatprep.subr.mxu0 0.0
    %6727 = vmatpush1.msra.mxu0 0.0
    %6728 = vmatprep.subr.mxu0 0.0
    %6729 = vmatpush1.msra.mxu0 0.0
    %6730 = vmatprep.subr.mxu0 0.0
    %6731 = vmatpush1.msra.mxu0 0.0
    %6732 = vmatprep.subr.mxu0 0.0
    %6733 = vmatpush1.msra.mxu0 0.0
    %6734 = vmatprep.subr.mxu0 0.0
    %6735 = vmatpush1.msra.mxu0 0.0
    %6736 = vmatprep.subr.mxu0 0.0
    %6737 = vmatpush1.msra.mxu0 0.0
    %6738 = vmatprep.subr.mxu0 0.0
    %6739 = vmatpush1.msra.mxu0 0.0
    %6740 = vmatprep.subr.mxu0 0.0
    %6741 = vmatpush1.msra.mxu0 0.0
    %6742 = vmatprep.subr.mxu0 0.0
    %6743 = vmatpush1.msra.mxu0 0.0
    %6744 = vmatprep.subr.mxu0 0.0
    %6745 = vmatpush1.msra.mxu0 %v6707
    %6746 = vmatprep.subr.mxu0 0.0
    %6747 = vmatpush1.msra.mxu0 %v6706
    %6748 = vmatprep.subr.mxu0 0.0
    %6749 = vmatpush1.msra.mxu0 %v6705
    %6750 = vmatprep.subr.mxu0 0.0
    %6751 = vmatpush1.msra.mxu0 %v6704
    %6752 = vmatprep.subr.mxu0 0.0
    %6753 = vmatpush2.msra.mxu0 0.0
    %6754 = vmatprep.subr.mxu0 0.0
    %6755 = vmatpush2.msra.mxu0 0.0
    %6756 = vmatprep.subr.mxu0 0.0
    %6757 = vmatpush2.msra.mxu0 0.0
    %6758 = vmatprep.subr.mxu0 0.0
    %6759 = vmatpush2.msra.mxu0 0.0
    %6760 = vmatprep.subr.mxu0 0.0
    %6761 = vmatpush2.msra.mxu0 0.0
    %6762 = vmatprep.subr.mxu0 0.0
    %6763 = vmatpush2.msra.mxu0 0.0
    %6764 = vmatprep.subr.mxu0 0.0
    %6765 = vmatpush2.msra.mxu0 0.0
    %6766 = vmatprep.subr.mxu0 0.0
    %6767 = vmatpush2.msra.mxu0 0.0
    %6768 = vmatprep.subr.mxu0 0.0
    %6769 = vmatpush2.msra.mxu0 0.0
    %6770 = vmatprep.subr.mxu0 0.0
    %6771 = vmatpush2.msra.mxu0 0.0
    %6772 = vmatprep.subr.mxu0 0.0
    %6773 = vmatpush2.msra.mxu0 0.0
    %6774 = vmatprep.subr.mxu0 0.0
    %6775 = vmatpush2.msra.mxu0 0.0
    %6776 = vmatprep.subr.mxu0 0.0
    %6777 = vmatpush2.msra.mxu0 0.0
    %6778 = vmatprep.subr.mxu0 0.0
    %6779 = vmatpush2.msra.mxu0 0.0
    %6780 = vmatprep.subr.mxu0 0.0
    %6781 = vmatpush2.msra.mxu0 0.0
    %6782 = vmatprep.subr.mxu0 0.0
    %6783 = vmatpush2.msra.mxu0 0.0
    %6784 = vmatprep.mubr.f32.mxu0 0.0
    %6785 = vmatmul.mubr.f32.gmra.mxu0 %v6709
    %v6786 = vpop.f32.mrf.mxu0
    %v6787 = vadd.f32 0.0, %v6786
    %v6788 = vpop.f32.mrf.mxu0
    %6789 = vmatprep.mubr.f32.mxu0 0.0
    %6790 = vmatmul.mubr.f32.gmra.mxu0 %v6712
    %v6791 = vpop.f32.mrf.mxu0
    %v6792 = vadd.f32 0.0, %v6791
    %v6793 = vpop.f32.mrf.mxu0
    %6794 = vmatprep.mubr.f32.mxu0 0.0
    %6795 = vmatmul.mubr.f32.gmra.mxu0 %v6715
    %v6796 = vpop.f32.mrf.mxu0
    %v6797 = vadd.f32 0.0, %v6796
    %v6798 = vpop.f32.mrf.mxu0
    %6799 = vmatprep.mubr.f32.mxu0 0.0
    %6800 = vmatmul.mubr.f32.gmra.mxu0 %v6718
    %v6801 = vpop.f32.mrf.mxu0
    %v6802 = vadd.f32 0.0, %v6801
    %v6803 = vpop.f32.mrf.mxu0
    %6804 = vdwg.mxu0
    %v6805 = vmax.f32 %v6787, 0.0
    %v6806 = vmax.f32 %v6792, 0.0
    %v6807 = vmax.f32 %v6797, 0.0
    %v6808 = vmax.f32 %v6802, 0.0
    %s6809 = scalar_lea.vmem %s15, 64
    %v6810 = vld [vmem:[%s6809] sm:$0xff]
    %v6811 = vld [vmem:[%s6809 + $0x8] sm:$0xff]
    %v6812 = vld [vmem:[%s6809 + $0x10] sm:$0xff]
    %v6813 = vld [vmem:[%s6809 + $0x18] sm:$0xff]
    %v6814 = vld [vmem:[%s6809 + $0x20] sm:$0xff]
    %v6815 = vld [vmem:[%s6809 + $0x28] sm:$0xff]
    %v6816 = vld [vmem:[%s6809 + $0x30] sm:$0xff]
    %v6817 = vld [vmem:[%s6809 + $0x38] sm:$0xff]
    %v6819 = vsel %vm3477, %v6805, 0
    %v6822 = vsel %vm3477, %v6806, 0
    %v6825 = vsel %vm3477, %v6807, 0
    %v6828 = vsel %vm3477, %v6808, 0
    %6830 = vmatprep.subr.mxu0 0.0
    %6831 = vmatpush1.msra.mxu0 0.0
    %6832 = vmatprep.subr.mxu0 0.0
    %6833 = vmatpush1.msra.mxu0 0.0
    %6834 = vmatprep.subr.mxu0 0.0
    %6835 = vmatpush1.msra.mxu0 0.0
    %6836 = vmatprep.subr.mxu0 0.0
    %6837 = vmatpush1.msra.mxu0 0.0
    %6838 = vmatprep.subr.mxu0 0.0
    %6839 = vmatpush1.msra.mxu0 0.0
    %6840 = vmatprep.subr.mxu0 0.0
    %6841 = vmatpush1.msra.mxu0 0.0
    %6842 = vmatprep.subr.mxu0 0.0
    %6843 = vmatpush1.msra.mxu0 0.0
    %6844 = vmatprep.subr.mxu0 0.0
    %6845 = vmatpush1.msra.mxu0 0.0
    %6846 = vmatprep.subr.mxu0 0.0
    %6847 = vmatpush1.msra.mxu0 %v6817
    %6848 = vmatprep.subr.mxu0 0.0
    %6849 = vmatpush1.msra.mxu0 %v6816
    %6850 = vmatprep.subr.mxu0 0.0
    %6851 = vmatpush1.msra.mxu0 %v6815
    %6852 = vmatprep.subr.mxu0 0.0
    %6853 = vmatpush1.msra.mxu0 %v6814
    %6854 = vmatprep.subr.mxu0 0.0
    %6855 = vmatpush1.msra.mxu0 %v6813
    %6856 = vmatprep.subr.mxu0 0.0
    %6857 = vmatpush1.msra.mxu0 %v6812
    %6858 = vmatprep.subr.mxu0 0.0
    %6859 = vmatpush1.msra.mxu0 %v6811
    %6860 = vmatprep.subr.mxu0 0.0
    %6861 = vmatpush1.msra.mxu0 %v6810
    %6862 = vmatprep.subr.mxu0 0.0
    %6863 = vmatpush2.msra.mxu0 0.0
    %6864 = vmatprep.subr.mxu0 0.0
    %6865 = vmatpush2.msra.mxu0 0.0
    %6866 = vmatprep.subr.mxu0 0.0
    %6867 = vmatpush2.msra.mxu0 0.0
    %6868 = vmatprep.subr.mxu0 0.0
    %6869 = vmatpush2.msra.mxu0 0.0
    %6870 = vmatprep.subr.mxu0 0.0
    %6871 = vmatpush2.msra.mxu0 0.0
    %6872 = vmatprep.subr.mxu0 0.0
    %6873 = vmatpush2.msra.mxu0 0.0
    %6874 = vmatprep.subr.mxu0 0.0
    %6875 = vmatpush2.msra.mxu0 0.0
    %6876 = vmatprep.subr.mxu0 0.0
    %6877 = vmatpush2.msra.mxu0 0.0
    %6878 = vmatprep.subr.mxu0 0.0
    %6879 = vmatpush2.msra.mxu0 0.0
    %6880 = vmatprep.subr.mxu0 0.0
    %6881 = vmatpush2.msra.mxu0 0.0
    %6882 = vmatprep.subr.mxu0 0.0
    %6883 = vmatpush2.msra.mxu0 0.0
    %6884 = vmatprep.subr.mxu0 0.0
    %6885 = vmatpush2.msra.mxu0 0.0
    %6886 = vmatprep.subr.mxu0 0.0
    %6887 = vmatpush2.msra.mxu0 0.0
    %6888 = vmatprep.subr.mxu0 0.0
    %6889 = vmatpush2.msra.mxu0 0.0
    %6890 = vmatprep.subr.mxu0 0.0
    %6891 = vmatpush2.msra.mxu0 0.0
    %6892 = vmatprep.subr.mxu0 0.0
    %6893 = vmatpush2.msra.mxu0 0.0
    %6894 = vmatprep.mubr.f32.mxu0 0.0
    %6895 = vmatmul.mubr.f32.gmra.mxu0 %v6819
    %v6896 = vpop.f32.mrf.mxu0
    %v6897 = vadd.f32 0.0, %v6896
    %v6898 = vpop.f32.mrf.mxu0
    %6899 = vmatprep.mubr.f32.mxu0 0.0
    %6900 = vmatmul.mubr.f32.gmra.mxu0 %v6822
    %v6901 = vpop.f32.mrf.mxu0
    %v6902 = vadd.f32 0.0, %v6901
    %v6903 = vpop.f32.mrf.mxu0
    %6904 = vmatprep.mubr.f32.mxu0 0.0
    %6905 = vmatmul.mubr.f32.gmra.mxu0 %v6825
    %v6906 = vpop.f32.mrf.mxu0
    %v6907 = vadd.f32 0.0, %v6906
    %v6908 = vpop.f32.mrf.mxu0
    %6909 = vmatprep.mubr.f32.mxu0 0.0
    %6910 = vmatmul.mubr.f32.gmra.mxu0 %v6828
    %v6911 = vpop.f32.mrf.mxu0
    %v6912 = vadd.f32 0.0, %v6911
    %v6913 = vpop.f32.mrf.mxu0
    %6914 = vdwg.mxu0
    %v6915 = vadd.f32 %v6655, %v6897
    %v6916 = vadd.f32 %v6656, %v6902
    %v6917 = vadd.f32 %v6657, %v6907
    %v6918 = vadd.f32 %v6658, %v6912
    %v6919 = vld [vmem:[%s16] sm:$0x1]
    %v6920 = vmul.f32 %v6915, %v6915
    %v6921 = vmul.f32 %v6916, %v6916
    %v6922 = vmul.f32 %v6917, %v6917
    %v6923 = vmul.f32 %v6918, %v6918
    %v6924 = vsel %vm248, %v6920, 0.0
    %6925 = vadd.xlane.f32.xlu0 %v6924
    %v6926 = vpop.xlane.xlu0 %6925
    %v6927 = vsel %vm248, %v6921, 0.0
    %6928 = vadd.xlane.f32.xlu0 %v6927
    %v6929 = vpop.xlane.xlu0 %6928
    %v6930 = vsel %vm248, %v6922, 0.0
    %6931 = vadd.xlane.f32.xlu0 %v6930
    %v6932 = vpop.xlane.xlu0 %6931
    %v6933 = vsel %vm248, %v6923, 0.0
    %6934 = vadd.xlane.f32.xlu0 %v6933
    %v6935 = vpop.xlane.xlu0 %6934
    %v6936 = vmul.f32 %v6926, %v261
    %v6937 = vmul.f32 %v6929, %v261
    %v6938 = vmul.f32 %v6932, %v261
    %v6939 = vmul.f32 %v6935, %v261
    %v6940 = vadd.f32 %v6936, 1e-06
    %v6941 = vadd.f32 %v6937, 1e-06
    %v6942 = vadd.f32 %v6938, 1e-06
    %v6943 = vadd.f32 %v6939, 1e-06
    %v6944 = vrsqrt.pop %v6940
    %v6945 = vrsqrt.pop %v6941
    %v6946 = vrsqrt.pop %v6942
    %v6947 = vrsqrt.pop %v6943
    %v6948 = vmul.f32 %v6915, %v6944
    %v6949 = vmul.f32 %v6916, %v6945
    %v6950 = vmul.f32 %v6917, %v6946
    %v6951 = vmul.f32 %v6918, %v6947
    %v6953 = vlaneseq
    %v6954 = vshrl.u32 %v6953, 7
    %v6955 = vsub.s32 0, %v6954
    %v6956 = vrot.slane %v6919, %v6955
    %v6958 = vmul.f32 %v6948, %v6956
    %v6959 = vmul.f32 %v6949, %v6956
    %v6960 = vmul.f32 %v6950, %v6956
    %v6961 = vmul.f32 %v6951, %v6956
    %v6962 = vld [vmem:[%s7] sm:$0xff]
    %v6963 = vld [vmem:[%s7 + $0x8] sm:$0xff]
    %6965 = vset.pattern.permute.xlu0 0
    %6966 = vperm.xlu0 %6965, %v6962
    %v6967 = vpop.permute.xlu0 %6966
    %6970 = vset.pattern.permute.xlu0 0
    %6971 = vperm.xlu0 %6970, %v6963
    %v6972 = vpop.permute.xlu0 %6971
    %v6974 = vmul.f32 %v6958, %v6967
    %v6975 = vmul.f32 %v6959, %v6972
    %v6976 = vmul.f32 %v6960, %v6967
    %v6977 = vmul.f32 %v6961, %v6972
    %v6978 = vsel %vm248, %v6974, 0.0
    %v6979 = vsel %vm248, %v6975, 0.0
    %v6980 = vadd.f32 %v6978, %v6979
    %v6981 = vrot.slane %v6980, 4
    %v6982 = vadd.f32 %v6980, %v6981
    %v6983 = vrot.slane %v6982, 2
    %v6984 = vadd.f32 %v6982, %v6983
    %v6985 = vrot.slane %v6984, 1
    %v6986 = vadd.f32 %v6984, %v6985
    %v6987 = vsel %vm248, %v6976, 0.0
    %v6988 = vsel %vm248, %v6977, 0.0
    %v6989 = vadd.f32 %v6987, %v6988
    %v6990 = vrot.slane %v6989, 4
    %v6991 = vadd.f32 %v6989, %v6990
    %v6992 = vrot.slane %v6991, 2
    %v6993 = vadd.f32 %v6991, %v6992
    %v6994 = vrot.slane %v6993, 1
    %v6995 = vadd.f32 %v6993, %v6994
    %v6996 = vmax.f32 %v6986, -10000.0
    %v6997 = vmax.f32 %v6995, -10000.0
    %v6998 = vmin.f32 %v6996, 10000.0
    %v6999 = vmin.f32 %v6997, 10000.0
    %vm7002 = vcmask 1041409
    %v7003 = vsel %vm7002, %v6999, %v6998
    %vm7005 = vcmask 254976
    %7006 = vst.msk [vmem:[#allocation4] sm:$0x3] %vm7005, %v7003
    %v7007 = vld [vmem:[%s17] sm:$0xff]
    %v7008 = vld [vmem:[%s17 + $0x8] sm:$0xff]
    %v7009 = vld [vmem:[%s17 + $0x10] sm:$0xff]
    %v7010 = vld [vmem:[%s17 + $0x18] sm:$0xff]
    %v7011 = vld [vmem:[%s18] sm:$0x1]
    %v7013 = vlaneseq
    %v7014 = vshrl.u32 %v7013, 7
    %v7015 = vsub.s32 0, %v7014
    %v7016 = vrot.slane %v7011, %v7015
    %v7018 = vsel %vm248, %v7003, 0
    %7020 = vmatprep.subr.mxu0 0.0
    %7021 = vmatpush1.msra.mxu0 0.0
    %7022 = vmatprep.subr.mxu0 0.0
    %7023 = vmatpush1.msra.mxu0 0.0
    %7024 = vmatprep.subr.mxu0 0.0
    %7025 = vmatpush1.msra.mxu0 0.0
    %7026 = vmatprep.subr.mxu0 0.0
    %7027 = vmatpush1.msra.mxu0 0.0
    %7028 = vmatprep.subr.mxu0 0.0
    %7029 = vmatpush1.msra.mxu0 0.0
    %7030 = vmatprep.subr.mxu0 0.0
    %7031 = vmatpush1.msra.mxu0 0.0
    %7032 = vmatprep.subr.mxu0 0.0
    %7033 = vmatpush1.msra.mxu0 0.0
    %7034 = vmatprep.subr.mxu0 0.0
    %7035 = vmatpush1.msra.mxu0 0.0
    %7036 = vmatprep.subr.mxu0 0.0
    %7037 = vmatpush1.msra.mxu0 0.0
    %7038 = vmatprep.subr.mxu0 0.0
    %7039 = vmatpush1.msra.mxu0 0.0
    %7040 = vmatprep.subr.mxu0 0.0
    %7041 = vmatpush1.msra.mxu0 0.0
    %7042 = vmatprep.subr.mxu0 0.0
    %7043 = vmatpush1.msra.mxu0 0.0
    %7044 = vmatprep.subr.mxu0 0.0
    %7045 = vmatpush1.msra.mxu0 %v7010
    %7046 = vmatprep.subr.mxu0 0.0
    %7047 = vmatpush1.msra.mxu0 %v7009
    %7048 = vmatprep.subr.mxu0 0.0
    %7049 = vmatpush1.msra.mxu0 %v7008
    %7050 = vmatprep.subr.mxu0 0.0
    %7051 = vmatpush1.msra.mxu0 %v7007
    %7052 = vmatprep.subr.mxu0 0.0
    %7053 = vmatpush2.msra.mxu0 0.0
    %7054 = vmatprep.subr.mxu0 0.0
    %7055 = vmatpush2.msra.mxu0 0.0
    %7056 = vmatprep.subr.mxu0 0.0
    %7057 = vmatpush2.msra.mxu0 0.0
    %7058 = vmatprep.subr.mxu0 0.0
    %7059 = vmatpush2.msra.mxu0 0.0
    %7060 = vmatprep.subr.mxu0 0.0
    %7061 = vmatpush2.msra.mxu0 0.0
    %7062 = vmatprep.subr.mxu0 0.0
    %7063 = vmatpush2.msra.mxu0 0.0
    %7064 = vmatprep.subr.mxu0 0.0
    %7065 = vmatpush2.msra.mxu0 0.0
    %7066 = vmatprep.subr.mxu0 0.0
    %7067 = vmatpush2.msra.mxu0 0.0
    %7068 = vmatprep.subr.mxu0 0.0
    %7069 = vmatpush2.msra.mxu0 0.0
    %7070 = vmatprep.subr.mxu0 0.0
    %7071 = vmatpush2.msra.mxu0 0.0
    %7072 = vmatprep.subr.mxu0 0.0
    %7073 = vmatpush2.msra.mxu0 0.0
    %7074 = vmatprep.subr.mxu0 0.0
    %7075 = vmatpush2.msra.mxu0 0.0
    %7076 = vmatprep.subr.mxu0 0.0
    %7077 = vmatpush2.msra.mxu0 0.0
    %7078 = vmatprep.subr.mxu0 0.0
    %7079 = vmatpush2.msra.mxu0 0.0
    %7080 = vmatprep.subr.mxu0 0.0
    %7081 = vmatpush2.msra.mxu0 0.0
    %7082 = vmatprep.subr.mxu0 0.0
    %7083 = vmatpush2.msra.mxu0 0.0
    %7084 = vmatprep.mubr.f32.mxu0 0.0
    %7085 = vmatmul.mubr.f32.gmra.mxu0 %v7018
    %v7086 = vpop.f32.mrf.mxu0
    %v7087 = vadd.f32 %v7016, %v7086
    %v7088 = vpop.f32.mrf.mxu0
    %7089 = vdwg.mxu0
    %vm7090 = vcmask 9216
    %7091 = vst.msk [vmem:[#allocation2] sm:$0x3] %vm7090, %v7087
    // Predicated region
    $region78: #{forward.1} parent=1 // pred_check
      _
    $region79: #{forward.1} parent=1 // pred_check_branch
      %7093 = sbr.rel (0) target = $region81
    $region80: #{forward.1} parent=1 // pred_region
      %s7095 = ssub.s32 32, 32
      %7096 = vsyncadd [#allocation3], %s7095
      %s7098 = sshll.u32 [#allocation2], 4
      %s7099 = int_to_ptr.vmem [resolvable:$true] %s7098
      %7101 = dma.vmem_to_hbm [thread:$0]  %s7099, 32, %s19, [#allocation3]
    $region81: #{forward.1} parent=1 // pred_fallthru
      _
    // Predicated region
    $region82: #{forward.1} parent=1 // pred_check
      _
    $region83: #{forward.1} parent=1 // pred_check_branch
      %7103 = sbr.rel (0) target = $region85
    $region84: #{forward.1} parent=1 // pred_region
      %s7105 = ssub.s32 32, 32
      %7106 = vsyncadd [#allocation5], %s7105
      %s7108 = sshll.u32 [#allocation4], 4
      %s7109 = int_to_ptr.vmem [resolvable:$true] %s7108
      %7111 = dma.vmem_to_hbm [thread:$0]  %s7109, 32, %s20, [#allocation5]
    $region85: #{forward.1} parent=1 // pred_fallthru
      _
    // Predicated region
    $region86: #{forward.1} parent=1 // pred_check
      _
    $region87: #{forward.1} parent=1 // pred_check_branch
      %7113 = sbr.rel (0) target = $region89
    $region88: #{forward.1} parent=1 // pred_region
      %7114 = dma.done [#allocation3], 32
    $region89: #{forward.1} parent=1 // pred_fallthru
      _
    // Predicated region
    $region90: #{forward.1} parent=1 // pred_check
      _
    $region91: #{forward.1} parent=1 // pred_check_branch
      %7116 = sbr.rel (0) target = $region93
    $region92: #{forward.1} parent=1 // pred_region
      %7117 = dma.done [#allocation5], 32
    $region93: #{forward.1} parent=1 // pred_fallthru
      _
    %7118 = vsyncpa [#allocation3], 1
    %7119 = vsyncpa [#allocation5], 1

</llo_original>
